<compile_context>
chip_gen: v7x
topology: tpu7x:2x2x1
jax: 0.10.0
libtpu: 0.0.40
codegen_flags: <defaults>
</compile_context>

<pallas_src>
import functools
import math

import jax
import jax.numpy as jnp
from jax.experimental import pallas as pl
from jax.experimental.pallas import tpu as pltpu


# ----------------------------------------------------------------------------
# Fused predictor kernel (one grid step == one batch element, fully in VMEM)
# ----------------------------------------------------------------------------

def _predictor_kernel(
    # per-batch data
    x_ref, maskf_ref, mfeat_ref, omask_ref,
    # front-end / embeddings
    qemb_ref, ln_in_g_ref, ln_in_b_ref, in_w_ref, in_b_ref,
    # stacked decoder-layer weights (leading dim = layer index)
    ln1_g_ref, ln1_b_ref, wq_ref, bq_ref, wk_ref, bk_ref, wv_ref, bv_ref,
    wo_ref, bo_ref, ln2_g_ref, ln2_b_ref, w1_ref, b1_ref, w2_ref, b2_ref,
    # heads
    cls_w_ref, cls_b_ref, me_w_ref, me_b_ref,
    # outputs
    logits_ref, masks_ref,
    *, n_layers, n_head, head_dim, eps, non_attn_const, compute_dtype):
  f32 = jnp.float32

  def mm(a, b):
    # all matmuls are the standard (N,K)@(K,C) or a@b^T forms (MXU-friendly).
    return jnp.dot(a.astype(compute_dtype), b.astype(compute_dtype),
                   preferred_element_type=f32)

  def ln_rows(x, g_row, b_row):
    # x: (N, C); LayerNorm over channels (last axis), stats in f32.
    mu = jnp.mean(x, axis=-1, keepdims=True)
    xc = x - mu
    var = jnp.mean(xc * xc, axis=-1, keepdims=True)
    return xc * jax.lax.rsqrt(var + eps) * g_row + b_row

  def gelu_exact(x):
    # erf-based GELU (PyTorch nn.GELU default).  erf via Abramowitz & Stegun
    # 7.1.26 polynomial (|err| < 1.5e-7); only exp / div / mul -> EUP + VPU.
    z = x * f32(0.7071067811865476)
    az = jnp.abs(z)
    t = 1.0 / (1.0 + f32(0.3275911) * az)
    poly = ((((f32(1.061405429) * t + f32(-1.453152027)) * t
              + f32(1.421413741)) * t + f32(-0.284496736)) * t
            + f32(0.254829592)) * t
    erf_abs = 1.0 - poly * jnp.exp(-az * az)
    erf_z = jnp.where(z >= 0.0, erf_abs, -erf_abs)
    return 0.5 * x * (1.0 + erf_z)

  # ---- front end: LayerNorm(x) over channels, 1x1 input proj, mask ---------
  x_cf = x_ref[0].astype(f32)                       # (Cin, T) channels-first
  m_row = maskf_ref[0]                              # (1, T) float, 1 = valid
  mu = jnp.mean(x_cf, axis=0, keepdims=True)
  xc = x_cf - mu
  var = jnp.mean(xc * xc, axis=0, keepdims=True)
  xn = xc * jax.lax.rsqrt(var + eps) * ln_in_g_ref[...] + ln_in_b_ref[...]
  src_cf = (mm(in_w_ref[...], xn) + in_b_ref[...]) * m_row     # (C, T)
  src = src_cf.T                                    # (T, C) position-major

  scale = f32(1.0 / math.sqrt(head_dim))
  neg = f32(-1e30)

  # ---- pre-LN masked cross-attention decoder stack --------------------------
  h = qemb_ref[...].astype(f32)                     # (Q, C) learned queries
  for l in range(n_layers):
    hn = ln_rows(h, ln1_g_ref[l], ln1_b_ref[l])
    qp = mm(hn, wq_ref[l]) + bq_ref[l]              # (Q, C)
    kp = mm(src, wk_ref[l]) + bk_ref[l]             # (T, C)
    vp = mm(src, wv_ref[l]) + bv_ref[l]             # (T, C)
    wo_l = wo_ref[l]                                # (C, C)  (pre-transposed)
    attn = jnp.zeros_like(h)                        # (Q, C)
    for hh in range(n_head):
      sl = slice(hh * head_dim, (hh + 1) * head_dim)
      qh, kh, vh = qp[:, sl], kp[:, sl], vp[:, sl]  # (Q,d), (T,d), (T,d)
      s = jax.lax.dot_general(
          qh.astype(compute_dtype), kh.astype(compute_dtype),
          (((1,), (1,)), ((), ())),
          preferred_element_type=f32) * scale       # (Q, T) = q @ k^T
      s = jnp.where(m_row > 0.5, s, neg)
      # TODO(synk): a fully-masked key row degenerates to a uniform softmax;
      # the reference's handling of fully-padded sequences is unspecified.
      s = s - jnp.max(s, axis=-1, keepdims=True)
      p = jnp.exp(s)
      p = p * pl.reciprocal(jnp.sum(p, axis=-1, keepdims=True), approx=True)
      oh = mm(p, vh)                                # (Q, d)
      # fold the output projection into the head loop: no concat, no scratch.
      attn = attn + mm(oh, wo_l[sl, :])             # (Q, C)
    h = h + attn + bo_ref[l]
    hn = ln_rows(h, ln2_g_ref[l], ln2_b_ref[l])
    ff = gelu_exact(mm(hn, w1_ref[l]) + b1_ref[l])  # (Q, Hid)
    h = h + mm(ff, w2_ref[l]) + b2_ref[l]

  # ---- class head: emitted directly as (Q, num_classes+1) -------------------
  logits = mm(h, cls_w_ref[...]) + cls_b_ref[...]
  logits_ref[0] = logits.astype(logits_ref.dtype)

  # ---- mask head: 3-layer 1x1-conv MLP, (Q,C)@(C,M), masked_fill ------------
  me = h
  for i in range(3):
    me = mm(me, me_w_ref[i]) + me_b_ref[i]
    if i < 2:
      me = jnp.maximum(me, 0.0)
  pm = mm(me, mfeat_ref[0].astype(f32))             # (Q, M)
  pm = jnp.where(omask_ref[0] > 0.5, pm, f32(non_attn_const))
  masks_ref[0] = pm.astype(masks_ref.dtype)


# ----------------------------------------------------------------------------
# Wrapper: pack / pre-transpose weights, single pallas_call gridded over batch
# ----------------------------------------------------------------------------

def masked_transformer_predictor(params, x, mask_features, mask, output_mask,
                                 n_head, non_attn_const=-10.0, eps=1e-5,
                                 compute_dtype=jnp.float32):
  B, Cin, T = x.shape
  layers = params["layers"]
  L = len(layers)
  Q, C = params["query_embed"].shape
  Hid = layers[0]["w1"].shape[0]
  M = mask_features.shape[2]
  Ncls1 = params["cls_w"].shape[0]
  head_dim = C // n_head

  maskf = mask.astype(jnp.float32)                  # (B, 1, T)
  omaskf = output_mask.astype(jnp.float32)          # (B, 1, M)

  # Stack per-layer weights (leading layer dim) and pre-transpose so every
  # in-kernel matmul is a lane-contracting (N,K)@(K,C) form.
  def stack(k):
    return jnp.stack([ly[k] for ly in layers])

  def stack_t(k):
    return jnp.transpose(stack(k), (0, 2, 1))

  def stack_row(k):
    v = stack(k)
    return v.reshape(L, 1, v.shape[-1])

  ln1_g, ln1_b = stack_row("ln1_g"), stack_row("ln1_b")
  ln2_g, ln2_b = stack_row("ln2_g"), stack_row("ln2_b")
  wq_t, bq = stack_t("wq"), stack_row("bq")
  wk_t, bk = stack_t("wk"), stack_row("bk")
  wv_t, bv = stack_t("wv"), stack_row("bv")
  wo_t, bo = stack_t("wo"), stack_row("bo")
  w1_t, b1 = stack_t("w1"), stack_row("b1")
  w2_t, b2 = stack_t("w2"), stack_row("b2")

  ln_in_g = params["ln_in_g"].reshape(Cin, 1)
  ln_in_b = params["ln_in_b"].reshape(Cin, 1)
  in_w = params["in_proj_w"]                        # (C, Cin)
  in_b = params["in_proj_b"].reshape(C, 1)
  qemb = params["query_embed"]                      # (Q, C)
  cls_w_t = params["cls_w"].T                       # (C, Ncls1)
  cls_b = params["cls_b"].reshape(1, Ncls1)
  me_w_t = jnp.stack([params["me_w0"].T, params["me_w1"].T, params["me_w2"].T])
  me_b = jnp.stack([params["me_b0"], params["me_b1"],
                    params["me_b2"]]).reshape(3, 1, C)

  kernel = functools.partial(
      _predictor_kernel, n_layers=L, n_head=n_head, head_dim=head_dim,
      eps=eps, non_attn_const=float(non_attn_const),
      compute_dtype=compute_dtype)

  def full(*shape):
    # weights: same block every grid step -> DMA'd once, stays VMEM-resident.
    return pl.BlockSpec(shape, lambda b: (0,) * len(shape))

  def per_batch(*shape):
    return pl.BlockSpec((1,) + shape, lambda b: (b,) + (0,) * len(shape))

  # NOTE: at these sizes everything fits the default scoped VMEM; if T/M grow,
  # tile the T axis and set pltpu.CompilerParams(vmem_limit_bytes=...) for the
  # 64-MiB VMEM of v7x.
  pred_logits, pred_masks = pl.pallas_call(
      kernel,
      out_shape=(jax.ShapeDtypeStruct((B, Q, Ncls1), jnp.float32),
                 jax.ShapeDtypeStruct((B, Q, M), jnp.float32)),
      grid=(B,),
      in_specs=[
          per_batch(Cin, T),                        # x
          per_batch(1, T),                          # mask (float)
          per_batch(C, M),                          # mask_features
          per_batch(1, M),                          # output_mask (float)
          full(Q, C),                               # query embedding
          full(Cin, 1), full(Cin, 1),               # input LN gamma/beta
          full(C, Cin), full(C, 1),                 # input_proj W/b
          full(L, 1, C), full(L, 1, C),             # ln1 gamma/beta
          full(L, C, C), full(L, 1, C),             # Wq^T / bq
          full(L, C, C), full(L, 1, C),             # Wk^T / bk
          full(L, C, C), full(L, 1, C),             # Wv^T / bv
          full(L, C, C), full(L, 1, C),             # Wo^T / bo
          full(L, 1, C), full(L, 1, C),             # ln2 gamma/beta
          full(L, C, Hid), full(L, 1, Hid),         # W1^T / b1
          full(L, Hid, C), full(L, 1, C),           # W2^T / b2
          full(C, Ncls1), full(1, Ncls1),           # class head W^T / b
          full(3, C, C), full(3, 1, C),             # mask-embed MLP W^T / b
      ],
      out_specs=(pl.BlockSpec((1, Q, Ncls1), lambda b: (b, 0, 0)),
                 pl.BlockSpec((1, Q, M), lambda b: (b, 0, 0))),
      compiler_params=pltpu.CompilerParams(
          dimension_semantics=("parallel",)),       # v7x: shard B over 2 TCs
  )(x, maskf, mask_features, omaskf, qemb, ln_in_g, ln_in_b, in_w, in_b,
    ln1_g, ln1_b, wq_t, bq, wk_t, bk, wv_t, bv, wo_t, bo,
    ln2_g, ln2_b, w1_t, b1, w2_t, b2,
    cls_w_t, cls_b, me_w_t, me_b)

  return {"pred_logits": pred_logits,
          "pred_masks": pred_masks,
          "output_mask": output_mask}


# ----------------------------------------------------------------------------
# Parameter construction (deterministic, mirrors module __init__ shapes)
# ----------------------------------------------------------------------------

def init_params(key, n_input, n_embd, n_head, n_hidden, num_queries, num_classes,
                num_layers=4, cls_prior_prob=0.01):
  scale = 0.02
  keys = iter(jax.random.split(key, 64))

  def nrm(shape):
    return scale * jax.random.normal(next(keys), shape, dtype=jnp.float32)

  params = {
      "ln_in_g": jnp.ones((n_input,), jnp.float32),
      "ln_in_b": jnp.zeros((n_input,), jnp.float32),
      "in_proj_w": nrm((n_embd, n_input)),
      "in_proj_b": jnp.zeros((n_embd,), jnp.float32),
      "query_embed": nrm((num_queries, n_embd)),
      "cls_w": nrm((num_classes + 1, n_embd)),
      "cls_b": jnp.full((num_classes + 1,),
                        -math.log((1.0 - cls_prior_prob) / cls_prior_prob),
                        jnp.float32),
      "me_w0": nrm((n_embd, n_embd)), "me_b0": jnp.zeros((n_embd,), jnp.float32),
      "me_w1": nrm((n_embd, n_embd)), "me_b1": jnp.zeros((n_embd,), jnp.float32),
      "me_w2": nrm((n_embd, n_embd)), "me_b2": jnp.zeros((n_embd,), jnp.float32),
      "layers": [],
  }
  for _ in range(num_layers):
    params["layers"].append({
        "ln1_g": jnp.ones((n_embd,), jnp.float32),
        "ln1_b": jnp.zeros((n_embd,), jnp.float32),
        "wq": nrm((n_embd, n_embd)), "bq": jnp.zeros((n_embd,), jnp.float32),
        "wk": nrm((n_embd, n_embd)), "bk": jnp.zeros((n_embd,), jnp.float32),
        "wv": nrm((n_embd, n_embd)), "bv": jnp.zeros((n_embd,), jnp.float32),
        "wo": nrm((n_embd, n_embd)), "bo": jnp.zeros((n_embd,), jnp.float32),
        "ln2_g": jnp.ones((n_embd,), jnp.float32),
        "ln2_b": jnp.zeros((n_embd,), jnp.float32),
        "w1": nrm((n_hidden, n_embd)), "b1": jnp.zeros((n_hidden,), jnp.float32),
        "w2": nrm((n_embd, n_hidden)), "b2": jnp.zeros((n_embd,), jnp.float32),
    })
  return params


# ----------------------------------------------------------------------------
# Example run
# ----------------------------------------------------------------------------

if __name__ == "__main__":
  B, T, M = 2, 16, 16
  n_input, n_embd, n_head, n_hidden = 16, 32, 4, 64
  num_queries, num_classes, num_layers = 8, 5, 4

  key = jax.random.PRNGKey(0)
  kx, kf, kp = jax.random.split(key, 3)

  x = jax.random.normal(kx, (B, n_input, T), dtype=jnp.float32)
  mask_features = jax.random.normal(kf, (B, n_embd, M), dtype=jnp.float32)
  mask = jnp.broadcast_to(jnp.arange(T)[None, None, :] < 12, (B, 1, T))
  output_mask = jnp.broadcast_to(jnp.arange(M)[None, None, :] < 12, (B, 1, M))

  params = init_params(kp, n_input, n_embd, n_head, n_hidden,
                       num_queries, num_classes, num_layers=num_layers)

  # compute_dtype=jnp.bfloat16 is a drop-in MXU speedup on v6e/v7x; kept f32
  # here for exact-numerics demo.
  fwd = jax.jit(functools.partial(masked_transformer_predictor,
                                  n_head=n_head, non_attn_const=-10.0))
  out = fwd(params, x, mask_features, mask, output_mask)
  jax.block_until_ready(out)

  assert out["pred_logits"].shape == (B, num_queries, num_classes + 1)
  assert out["pred_masks"].shape == (B, num_queries, M)
  assert bool(jnp.all(jnp.isfinite(out["pred_logits"])))
  assert bool(jnp.all(jnp.isfinite(out["pred_masks"])))
  print("KERNEL_OK")
</pallas_src>

<mosaic_0001>
module attributes {stable_mosaic.version = 11 : i64} {
  func.func @_predictor_kernel(%arg0: i32, %arg1: memref<1x16x16xf32, #tpu.memory_space<vmem>>, %arg2: memref<1x1x16xf32, #tpu.memory_space<vmem>>, %arg3: memref<1x32x16xf32, #tpu.memory_space<vmem>>, %arg4: memref<1x1x16xf32, #tpu.memory_space<vmem>>, %arg5: memref<8x32xf32, #tpu.memory_space<vmem>>, %arg6: memref<16x1xf32, #tpu.memory_space<vmem>>, %arg7: memref<16x1xf32, #tpu.memory_space<vmem>>, %arg8: memref<32x16xf32, #tpu.memory_space<vmem>>, %arg9: memref<32x1xf32, #tpu.memory_space<vmem>>, %arg10: memref<4x1x32xf32, #tpu.memory_space<vmem>>, %arg11: memref<4x1x32xf32, #tpu.memory_space<vmem>>, %arg12: memref<4x32x32xf32, #tpu.memory_space<vmem>>, %arg13: memref<4x1x32xf32, #tpu.memory_space<vmem>>, %arg14: memref<4x32x32xf32, #tpu.memory_space<vmem>>, %arg15: memref<4x1x32xf32, #tpu.memory_space<vmem>>, %arg16: memref<4x32x32xf32, #tpu.memory_space<vmem>>, %arg17: memref<4x1x32xf32, #tpu.memory_space<vmem>>, %arg18: memref<4x32x32xf32, #tpu.memory_space<vmem>>, %arg19: memref<4x1x32xf32, #tpu.memory_space<vmem>>, %arg20: memref<4x1x32xf32, #tpu.memory_space<vmem>>, %arg21: memref<4x1x32xf32, #tpu.memory_space<vmem>>, %arg22: memref<4x32x64xf32, #tpu.memory_space<vmem>>, %arg23: memref<4x1x64xf32, #tpu.memory_space<vmem>>, %arg24: memref<4x64x32xf32, #tpu.memory_space<vmem>>, %arg25: memref<4x1x32xf32, #tpu.memory_space<vmem>>, %arg26: memref<32x6xf32, #tpu.memory_space<vmem>>, %arg27: memref<1x6xf32, #tpu.memory_space<vmem>>, %arg28: memref<3x32x32xf32, #tpu.memory_space<vmem>>, %arg29: memref<3x1x32xf32, #tpu.memory_space<vmem>>, %arg30: memref<1x8x6xf32, #tpu.memory_space<vmem>>, %arg31: memref<1x8x16xf32, #tpu.memory_space<vmem>>) attributes {dimension_semantics = [#tpu.dimension_semantics<parallel>], iteration_bounds = array<i64: 2>, scalar_prefetch = 0 : i64, scratch_operands = 0 : i64, tpu.core_type = #tpu.core_type<tc>, window_params = [{transform_indices = @transform_0, window_bounds = array<i64: 1, 16, 16>}, {transform_indices = @transform_1, window_bounds = array<i64: 1, 1, 16>}, {transform_indices = @transform_2, window_bounds = array<i64: 1, 32, 16>}, {transform_indices = @transform_3, window_bounds = array<i64: 1, 1, 16>}, {pipeline_mode = #tpu.pipeline_mode<synchronous>, transform_indices = @transform_4, window_bounds = array<i64: 8, 32>}, {pipeline_mode = #tpu.pipeline_mode<synchronous>, transform_indices = @transform_5, window_bounds = array<i64: 16, 1>}, {pipeline_mode = #tpu.pipeline_mode<synchronous>, transform_indices = @transform_6, window_bounds = array<i64: 16, 1>}, {pipeline_mode = #tpu.pipeline_mode<synchronous>, transform_indices = @transform_7, window_bounds = array<i64: 32, 16>}, {pipeline_mode = #tpu.pipeline_mode<synchronous>, transform_indices = @transform_8, window_bounds = array<i64: 32, 1>}, {pipeline_mode = #tpu.pipeline_mode<synchronous>, transform_indices = @transform_9, window_bounds = array<i64: 4, 1, 32>}, {pipeline_mode = #tpu.pipeline_mode<synchronous>, transform_indices = @transform_10, window_bounds = array<i64: 4, 1, 32>}, {pipeline_mode = #tpu.pipeline_mode<synchronous>, transform_indices = @transform_11, window_bounds = array<i64: 4, 32, 32>}, {pipeline_mode = #tpu.pipeline_mode<synchronous>, transform_indices = @transform_12, window_bounds = array<i64: 4, 1, 32>}, {pipeline_mode = #tpu.pipeline_mode<synchronous>, transform_indices = @transform_13, window_bounds = array<i64: 4, 32, 32>}, {pipeline_mode = #tpu.pipeline_mode<synchronous>, transform_indices = @transform_14, window_bounds = array<i64: 4, 1, 32>}, {pipeline_mode = #tpu.pipeline_mode<synchronous>, transform_indices = @transform_15, window_bounds = array<i64: 4, 32, 32>}, {pipeline_mode = #tpu.pipeline_mode<synchronous>, transform_indices = @transform_16, window_bounds = array<i64: 4, 1, 32>}, {pipeline_mode = #tpu.pipeline_mode<synchronous>, transform_indices = @transform_17, window_bounds = array<i64: 4, 32, 32>}, {pipeline_mode = #tpu.pipeline_mode<synchronous>, transform_indices = @transform_18, window_bounds = array<i64: 4, 1, 32>}, {pipeline_mode = #tpu.pipeline_mode<synchronous>, transform_indices = @transform_19, window_bounds = array<i64: 4, 1, 32>}, {pipeline_mode = #tpu.pipeline_mode<synchronous>, transform_indices = @transform_20, window_bounds = array<i64: 4, 1, 32>}, {pipeline_mode = #tpu.pipeline_mode<synchronous>, transform_indices = @transform_21, window_bounds = array<i64: 4, 32, 64>}, {pipeline_mode = #tpu.pipeline_mode<synchronous>, transform_indices = @transform_22, window_bounds = array<i64: 4, 1, 64>}, {pipeline_mode = #tpu.pipeline_mode<synchronous>, transform_indices = @transform_23, window_bounds = array<i64: 4, 64, 32>}, {pipeline_mode = #tpu.pipeline_mode<synchronous>, transform_indices = @transform_24, window_bounds = array<i64: 4, 1, 32>}, {pipeline_mode = #tpu.pipeline_mode<synchronous>, transform_indices = @transform_25, window_bounds = array<i64: 32, 6>}, {pipeline_mode = #tpu.pipeline_mode<synchronous>, transform_indices = @transform_26, window_bounds = array<i64: 1, 6>}, {pipeline_mode = #tpu.pipeline_mode<synchronous>, transform_indices = @transform_27, window_bounds = array<i64: 3, 32, 32>}, {pipeline_mode = #tpu.pipeline_mode<synchronous>, transform_indices = @transform_28, window_bounds = array<i64: 3, 1, 32>}, {transform_indices = @transform_29, window_bounds = array<i64: 1, 8, 6>}, {transform_indices = @transform_30, window_bounds = array<i64: 1, 8, 16>}]} {
    %c0 = arith.constant 0 : index
    %c0_0 = arith.constant 0 : index
    %c0_1 = arith.constant 0 : index
    %0 = vector.load %arg1[%c0, %c0_0, %c0_1] : memref<1x16x16xf32, #tpu.memory_space<vmem>>, vector<1x16x16xf32>
    %1 = vector.shape_cast %0 : vector<1x16x16xf32> to vector<16x16xf32>
    %c0_2 = arith.constant 0 : index
    %c0_3 = arith.constant 0 : index
    %c0_4 = arith.constant 0 : index
    %2 = vector.load %arg2[%c0_2, %c0_3, %c0_4] : memref<1x1x16xf32, #tpu.memory_space<vmem>>, vector<1x1x16xf32>
    %3 = vector.shape_cast %2 : vector<1x1x16xf32> to vector<1x16xf32>
    %cst = arith.constant dense<0.000000e+00> : vector<16xf32>
    %4 = vector.multi_reduction <add>, %1, %cst [0] : vector<16x16xf32> to vector<16xf32>
    %5 = vector.shape_cast %4 : vector<16xf32> to vector<1x16xf32>
    %cst_5 = arith.constant 1.600000e+01 : f32
    %6 = vector.broadcast %cst_5 : f32 to vector<1x16xf32>
    %7 = arith.divf %5, %6 : vector<1x16xf32>
    %8 = vector.broadcast %7 : vector<1x16xf32> to vector<16x16xf32>
    %9 = arith.subf %1, %8 : vector<16x16xf32>
    %10 = arith.mulf %9, %9 : vector<16x16xf32>
    %cst_6 = arith.constant dense<0.000000e+00> : vector<16xf32>
    %11 = vector.multi_reduction <add>, %10, %cst_6 [0] : vector<16x16xf32> to vector<16xf32>
    %12 = vector.shape_cast %11 : vector<16xf32> to vector<1x16xf32>
    %cst_7 = arith.constant 1.600000e+01 : f32
    %13 = vector.broadcast %cst_7 : f32 to vector<1x16xf32>
    %14 = arith.divf %12, %13 : vector<1x16xf32>
    %cst_8 = arith.constant 9.99999974E-6 : f32
    %15 = vector.broadcast %cst_8 : f32 to vector<1x16xf32>
    %16 = arith.addf %14, %15 : vector<1x16xf32>
    %17 = math.rsqrt %16 : vector<1x16xf32>
    %18 = vector.broadcast %17 : vector<1x16xf32> to vector<16x16xf32>
    %19 = arith.mulf %9, %18 : vector<16x16xf32>
    %c0_9 = arith.constant 0 : index
    %c0_10 = arith.constant 0 : index
    %20 = vector.load %arg6[%c0_9, %c0_10] : memref<16x1xf32, #tpu.memory_space<vmem>>, vector<16x1xf32>
    %21 = vector.broadcast %20 : vector<16x1xf32> to vector<16x16xf32>
    %22 = arith.mulf %19, %21 : vector<16x16xf32>
    %c0_11 = arith.constant 0 : index
    %c0_12 = arith.constant 0 : index
    %23 = vector.load %arg7[%c0_11, %c0_12] : memref<16x1xf32, #tpu.memory_space<vmem>>, vector<16x1xf32>
    %24 = vector.broadcast %23 : vector<16x1xf32> to vector<16x16xf32>
    %25 = arith.addf %22, %24 : vector<16x16xf32>
    %c0_13 = arith.constant 0 : index
    %c0_14 = arith.constant 0 : index
    %26 = vector.load %arg8[%c0_13, %c0_14] : memref<32x16xf32, #tpu.memory_space<vmem>>, vector<32x16xf32>
    %cst_15 = arith.constant dense<0.000000e+00> : vector<32x16xf32>
    %27 = tpu.matmul %26, %25, %cst_15 {dimension_numbers = #tpu.dot_dimension_numbers<[1], [0], [0], [1], [0, 0, 1, 1], [], []>} : vector<32x16xf32>, vector<16x16xf32>, vector<32x16xf32> -> vector<32x16xf32>
    %c0_16 = arith.constant 0 : index
    %c0_17 = arith.constant 0 : index
    %28 = vector.load %arg9[%c0_16, %c0_17] : memref<32x1xf32, #tpu.memory_space<vmem>>, vector<32x1xf32>
    %29 = vector.broadcast %28 : vector<32x1xf32> to vector<32x16xf32>
    %30 = arith.addf %27, %29 : vector<32x16xf32>
    %31 = vector.broadcast %3 : vector<1x16xf32> to vector<32x16xf32>
    %32 = arith.mulf %30, %31 : vector<32x16xf32>
    %33 = tpu.transpose %32, [1, 0] : vector<32x16xf32> -> vector<16x32xf32>
    %c0_18 = arith.constant 0 : index
    %c0_19 = arith.constant 0 : index
    %34 = vector.load %arg5[%c0_18, %c0_19] : memref<8x32xf32, #tpu.memory_space<vmem>>, vector<8x32xf32>
    %c0_20 = arith.constant 0 : index
    %c0_21 = arith.constant 0 : index
    %c0_22 = arith.constant 0 : index
    %35 = vector.load %arg10[%c0_20, %c0_21, %c0_22] : memref<4x1x32xf32, #tpu.memory_space<vmem>>, vector<1x1x32xf32>
    %36 = vector.shape_cast %35 : vector<1x1x32xf32> to vector<1x32xf32>
    %c0_23 = arith.constant 0 : index
    %c0_24 = arith.constant 0 : index
    %c0_25 = arith.constant 0 : index
    %37 = vector.load %arg11[%c0_23, %c0_24, %c0_25] : memref<4x1x32xf32, #tpu.memory_space<vmem>>, vector<1x1x32xf32>
    %38 = vector.shape_cast %37 : vector<1x1x32xf32> to vector<1x32xf32>
    %cst_26 = arith.constant dense<0.000000e+00> : vector<8xf32>
    %39 = vector.multi_reduction <add>, %34, %cst_26 [1] : vector<8x32xf32> to vector<8xf32>
    %40 = vector.shape_cast %39 : vector<8xf32> to vector<8x1xf32>
    %cst_27 = arith.constant 3.200000e+01 : f32
    %41 = vector.broadcast %cst_27 : f32 to vector<8x1xf32>
    %42 = arith.divf %40, %41 : vector<8x1xf32>
    %43 = vector.broadcast %42 : vector<8x1xf32> to vector<8x32xf32>
    %44 = arith.subf %34, %43 : vector<8x32xf32>
    %45 = arith.mulf %44, %44 : vector<8x32xf32>
    %cst_28 = arith.constant dense<0.000000e+00> : vector<8xf32>
    %46 = vector.multi_reduction <add>, %45, %cst_28 [1] : vector<8x32xf32> to vector<8xf32>
    %47 = vector.shape_cast %46 : vector<8xf32> to vector<8x1xf32>
    %cst_29 = arith.constant 3.200000e+01 : f32
    %48 = vector.broadcast %cst_29 : f32 to vector<8x1xf32>
    %49 = arith.divf %47, %48 : vector<8x1xf32>
    %cst_30 = arith.constant 9.99999974E-6 : f32
    %50 = vector.broadcast %cst_30 : f32 to vector<8x1xf32>
    %51 = arith.addf %49, %50 : vector<8x1xf32>
    %52 = math.rsqrt %51 : vector<8x1xf32>
    %53 = vector.broadcast %52 : vector<8x1xf32> to vector<8x32xf32>
    %54 = arith.mulf %44, %53 : vector<8x32xf32>
    %55 = vector.broadcast %36 : vector<1x32xf32> to vector<8x32xf32>
    %56 = arith.mulf %54, %55 : vector<8x32xf32>
    %57 = vector.broadcast %38 : vector<1x32xf32> to vector<8x32xf32>
    %58 = arith.addf %56, %57 : vector<8x32xf32>
    %c0_31 = arith.constant 0 : index
    %c0_32 = arith.constant 0 : index
    %c0_33 = arith.constant 0 : index
    %59 = vector.load %arg12[%c0_31, %c0_32, %c0_33] : memref<4x32x32xf32, #tpu.memory_space<vmem>>, vector<1x32x32xf32>
    %60 = vector.shape_cast %59 : vector<1x32x32xf32> to vector<32x32xf32>
    %cst_34 = arith.constant dense<0.000000e+00> : vector<8x32xf32>
    %61 = tpu.matmul %58, %60, %cst_34 {dimension_numbers = #tpu.dot_dimension_numbers<[1], [0], [0], [1], [0, 0, 1, 1], [], []>} : vector<8x32xf32>, vector<32x32xf32>, vector<8x32xf32> -> vector<8x32xf32>
    %c0_35 = arith.constant 0 : index
    %c0_36 = arith.constant 0 : index
    %c0_37 = arith.constant 0 : index
    %62 = vector.load %arg13[%c0_35, %c0_36, %c0_37] : memref<4x1x32xf32, #tpu.memory_space<vmem>>, vector<1x1x32xf32>
    %63 = vector.shape_cast %62 : vector<1x1x32xf32> to vector<1x32xf32>
    %64 = vector.broadcast %63 : vector<1x32xf32> to vector<8x32xf32>
    %65 = arith.addf %61, %64 : vector<8x32xf32>
    %c0_38 = arith.constant 0 : index
    %c0_39 = arith.constant 0 : index
    %c0_40 = arith.constant 0 : index
    %66 = vector.load %arg14[%c0_38, %c0_39, %c0_40] : memref<4x32x32xf32, #tpu.memory_space<vmem>>, vector<1x32x32xf32>
    %67 = vector.shape_cast %66 : vector<1x32x32xf32> to vector<32x32xf32>
    %cst_41 = arith.constant dense<0.000000e+00> : vector<16x32xf32>
    %68 = tpu.matmul %33, %67, %cst_41 {dimension_numbers = #tpu.dot_dimension_numbers<[1], [0], [0], [1], [0, 0, 1, 1], [], []>} : vector<16x32xf32>, vector<32x32xf32>, vector<16x32xf32> -> vector<16x32xf32>
    %c0_42 = arith.constant 0 : index
    %c0_43 = arith.constant 0 : index
    %c0_44 = arith.constant 0 : index
    %69 = vector.load %arg15[%c0_42, %c0_43, %c0_44] : memref<4x1x32xf32, #tpu.memory_space<vmem>>, vector<1x1x32xf32>
    %70 = vector.shape_cast %69 : vector<1x1x32xf32> to vector<1x32xf32>
    %71 = vector.broadcast %70 : vector<1x32xf32> to vector<16x32xf32>
    %72 = arith.addf %68, %71 : vector<16x32xf32>
    %c0_45 = arith.constant 0 : index
    %c0_46 = arith.constant 0 : index
    %c0_47 = arith.constant 0 : index
    %73 = vector.load %arg16[%c0_45, %c0_46, %c0_47] : memref<4x32x32xf32, #tpu.memory_space<vmem>>, vector<1x32x32xf32>
    %74 = vector.shape_cast %73 : vector<1x32x32xf32> to vector<32x32xf32>
    %cst_48 = arith.constant dense<0.000000e+00> : vector<16x32xf32>
    %75 = tpu.matmul %33, %74, %cst_48 {dimension_numbers = #tpu.dot_dimension_numbers<[1], [0], [0], [1], [0, 0, 1, 1], [], []>} : vector<16x32xf32>, vector<32x32xf32>, vector<16x32xf32> -> vector<16x32xf32>
    %c0_49 = arith.constant 0 : index
    %c0_50 = arith.constant 0 : index
    %c0_51 = arith.constant 0 : index
    %76 = vector.load %arg17[%c0_49, %c0_50, %c0_51] : memref<4x1x32xf32, #tpu.memory_space<vmem>>, vector<1x1x32xf32>
    %77 = vector.shape_cast %76 : vector<1x1x32xf32> to vector<1x32xf32>
    %78 = vector.broadcast %77 : vector<1x32xf32> to vector<16x32xf32>
    %79 = arith.addf %75, %78 : vector<16x32xf32>
    %c0_52 = arith.constant 0 : index
    %c0_53 = arith.constant 0 : index
    %c0_54 = arith.constant 0 : index
    %80 = vector.load %arg18[%c0_52, %c0_53, %c0_54] : memref<4x32x32xf32, #tpu.memory_space<vmem>>, vector<1x32x32xf32>
    %81 = vector.shape_cast %80 : vector<1x32x32xf32> to vector<32x32xf32>
    %cst_55 = arith.constant 0.000000e+00 : f32
    %82 = vector.broadcast %cst_55 : f32 to vector<8x32xf32>
    %83 = vector.extract_strided_slice %65 {offsets = [0, 0], sizes = [8, 8], strides = [1, 1]} : vector<8x32xf32> to vector<8x8xf32>
    %84 = vector.extract_strided_slice %72 {offsets = [0, 0], sizes = [16, 8], strides = [1, 1]} : vector<16x32xf32> to vector<16x8xf32>
    %85 = vector.extract_strided_slice %79 {offsets = [0, 0], sizes = [16, 8], strides = [1, 1]} : vector<16x32xf32> to vector<16x8xf32>
    %cst_56 = arith.constant dense<0.000000e+00> : vector<8x16xf32>
    %86 = tpu.matmul %83, %84, %cst_56 {dimension_numbers = #tpu.dot_dimension_numbers<[1], [1], [0], [0], [0, 0, 1, 0], [], []>} : vector<8x8xf32>, vector<16x8xf32>, vector<8x16xf32> -> vector<8x16xf32>
    %cst_57 = arith.constant 0.353553385 : f32
    %87 = vector.broadcast %cst_57 : f32 to vector<8x16xf32>
    %88 = arith.mulf %86, %87 : vector<8x16xf32>
    %cst_58 = arith.constant 5.000000e-01 : f32
    %89 = vector.broadcast %cst_58 : f32 to vector<1x16xf32>
    %90 = arith.cmpf ogt, %3, %89 : vector<1x16xf32>
    %cst_59 = arith.constant -1.000000e+30 : f32
    %91 = vector.shape_cast %90 : vector<1x16xi1> to vector<1x16xi1>
    %92 = vector.broadcast %91 : vector<1x16xi1> to vector<8x16xi1>
    %93 = vector.broadcast %cst_59 : f32 to vector<8x16xf32>
    %94 = arith.select %92, %88, %93 : vector<8x16xi1>, vector<8x16xf32>
    %cst_60 = arith.constant dense<0xFF800000> : vector<8xf32>
    %95 = vector.multi_reduction <maximumf>, %94, %cst_60 [1] : vector<8x16xf32> to vector<8xf32>
    %96 = vector.shape_cast %95 : vector<8xf32> to vector<8x1xf32>
    %97 = vector.broadcast %96 : vector<8x1xf32> to vector<8x16xf32>
    %98 = arith.subf %94, %97 : vector<8x16xf32>
    %99 = math.exp %98 : vector<8x16xf32>
    %cst_61 = arith.constant dense<0.000000e+00> : vector<8xf32>
    %100 = vector.multi_reduction <add>, %99, %cst_61 [1] : vector<8x16xf32> to vector<8xf32>
    %101 = vector.shape_cast %100 : vector<8xf32> to vector<8x1xf32>
    %102 = tpu.reciprocal %101 {approx = true} : vector<8x1xf32> -> vector<8x1xf32>
    %103 = vector.broadcast %102 : vector<8x1xf32> to vector<8x16xf32>
    %104 = arith.mulf %99, %103 : vector<8x16xf32>
    %cst_62 = arith.constant dense<0.000000e+00> : vector<8x8xf32>
    %105 = tpu.matmul %104, %85, %cst_62 {dimension_numbers = #tpu.dot_dimension_numbers<[1], [0], [0], [1], [0, 0, 1, 1], [], []>} : vector<8x16xf32>, vector<16x8xf32>, vector<8x8xf32> -> vector<8x8xf32>
    %106 = vector.extract_strided_slice %81 {offsets = [0, 0], sizes = [8, 32], strides = [1, 1]} : vector<32x32xf32> to vector<8x32xf32>
    %cst_63 = arith.constant dense<0.000000e+00> : vector<8x32xf32>
    %107 = tpu.matmul %105, %106, %cst_63 {dimension_numbers = #tpu.dot_dimension_numbers<[1], [0], [0], [1], [0, 0, 1, 1], [], []>} : vector<8x8xf32>, vector<8x32xf32>, vector<8x32xf32> -> vector<8x32xf32>
    %108 = arith.addf %82, %107 : vector<8x32xf32>
    %109 = vector.extract_strided_slice %65 {offsets = [0, 8], sizes = [8, 8], strides = [1, 1]} : vector<8x32xf32> to vector<8x8xf32>
    %110 = vector.extract_strided_slice %72 {offsets = [0, 8], sizes = [16, 8], strides = [1, 1]} : vector<16x32xf32> to vector<16x8xf32>
    %111 = vector.extract_strided_slice %79 {offsets = [0, 8], sizes = [16, 8], strides = [1, 1]} : vector<16x32xf32> to vector<16x8xf32>
    %cst_64 = arith.constant dense<0.000000e+00> : vector<8x16xf32>
    %112 = tpu.matmul %109, %110, %cst_64 {dimension_numbers = #tpu.dot_dimension_numbers<[1], [1], [0], [0], [0, 0, 1, 0], [], []>} : vector<8x8xf32>, vector<16x8xf32>, vector<8x16xf32> -> vector<8x16xf32>
    %cst_65 = arith.constant 0.353553385 : f32
    %113 = vector.broadcast %cst_65 : f32 to vector<8x16xf32>
    %114 = arith.mulf %112, %113 : vector<8x16xf32>
    %cst_66 = arith.constant 5.000000e-01 : f32
    %115 = vector.broadcast %cst_66 : f32 to vector<1x16xf32>
    %116 = arith.cmpf ogt, %3, %115 : vector<1x16xf32>
    %cst_67 = arith.constant -1.000000e+30 : f32
    %117 = vector.shape_cast %116 : vector<1x16xi1> to vector<1x16xi1>
    %118 = vector.broadcast %117 : vector<1x16xi1> to vector<8x16xi1>
    %119 = vector.broadcast %cst_67 : f32 to vector<8x16xf32>
    %120 = arith.select %118, %114, %119 : vector<8x16xi1>, vector<8x16xf32>
    %cst_68 = arith.constant dense<0xFF800000> : vector<8xf32>
    %121 = vector.multi_reduction <maximumf>, %120, %cst_68 [1] : vector<8x16xf32> to vector<8xf32>
    %122 = vector.shape_cast %121 : vector<8xf32> to vector<8x1xf32>
    %123 = vector.broadcast %122 : vector<8x1xf32> to vector<8x16xf32>
    %124 = arith.subf %120, %123 : vector<8x16xf32>
    %125 = math.exp %124 : vector<8x16xf32>
    %cst_69 = arith.constant dense<0.000000e+00> : vector<8xf32>
    %126 = vector.multi_reduction <add>, %125, %cst_69 [1] : vector<8x16xf32> to vector<8xf32>
    %127 = vector.shape_cast %126 : vector<8xf32> to vector<8x1xf32>
    %128 = tpu.reciprocal %127 {approx = true} : vector<8x1xf32> -> vector<8x1xf32>
    %129 = vector.broadcast %128 : vector<8x1xf32> to vector<8x16xf32>
    %130 = arith.mulf %125, %129 : vector<8x16xf32>
    %cst_70 = arith.constant dense<0.000000e+00> : vector<8x8xf32>
    %131 = tpu.matmul %130, %111, %cst_70 {dimension_numbers = #tpu.dot_dimension_numbers<[1], [0], [0], [1], [0, 0, 1, 1], [], []>} : vector<8x16xf32>, vector<16x8xf32>, vector<8x8xf32> -> vector<8x8xf32>
    %132 = vector.extract_strided_slice %81 {offsets = [8, 0], sizes = [8, 32], strides = [1, 1]} : vector<32x32xf32> to vector<8x32xf32>
    %cst_71 = arith.constant dense<0.000000e+00> : vector<8x32xf32>
    %133 = tpu.matmul %131, %132, %cst_71 {dimension_numbers = #tpu.dot_dimension_numbers<[1], [0], [0], [1], [0, 0, 1, 1], [], []>} : vector<8x8xf32>, vector<8x32xf32>, vector<8x32xf32> -> vector<8x32xf32>
    %134 = arith.addf %108, %133 : vector<8x32xf32>
    %135 = vector.extract_strided_slice %65 {offsets = [0, 16], sizes = [8, 8], strides = [1, 1]} : vector<8x32xf32> to vector<8x8xf32>
    %136 = vector.extract_strided_slice %72 {offsets = [0, 16], sizes = [16, 8], strides = [1, 1]} : vector<16x32xf32> to vector<16x8xf32>
    %137 = vector.extract_strided_slice %79 {offsets = [0, 16], sizes = [16, 8], strides = [1, 1]} : vector<16x32xf32> to vector<16x8xf32>
    %cst_72 = arith.constant dense<0.000000e+00> : vector<8x16xf32>
    %138 = tpu.matmul %135, %136, %cst_72 {dimension_numbers = #tpu.dot_dimension_numbers<[1], [1], [0], [0], [0, 0, 1, 0], [], []>} : vector<8x8xf32>, vector<16x8xf32>, vector<8x16xf32> -> vector<8x16xf32>
    %cst_73 = arith.constant 0.353553385 : f32
    %139 = vector.broadcast %cst_73 : f32 to vector<8x16xf32>
    %140 = arith.mulf %138, %139 : vector<8x16xf32>
    %cst_74 = arith.constant 5.000000e-01 : f32
    %141 = vector.broadcast %cst_74 : f32 to vector<1x16xf32>
    %142 = arith.cmpf ogt, %3, %141 : vector<1x16xf32>
    %cst_75 = arith.constant -1.000000e+30 : f32
    %143 = vector.shape_cast %142 : vector<1x16xi1> to vector<1x16xi1>
    %144 = vector.broadcast %143 : vector<1x16xi1> to vector<8x16xi1>
    %145 = vector.broadcast %cst_75 : f32 to vector<8x16xf32>
    %146 = arith.select %144, %140, %145 : vector<8x16xi1>, vector<8x16xf32>
    %cst_76 = arith.constant dense<0xFF800000> : vector<8xf32>
    %147 = vector.multi_reduction <maximumf>, %146, %cst_76 [1] : vector<8x16xf32> to vector<8xf32>
    %148 = vector.shape_cast %147 : vector<8xf32> to vector<8x1xf32>
    %149 = vector.broadcast %148 : vector<8x1xf32> to vector<8x16xf32>
    %150 = arith.subf %146, %149 : vector<8x16xf32>
    %151 = math.exp %150 : vector<8x16xf32>
    %cst_77 = arith.constant dense<0.000000e+00> : vector<8xf32>
    %152 = vector.multi_reduction <add>, %151, %cst_77 [1] : vector<8x16xf32> to vector<8xf32>
    %153 = vector.shape_cast %152 : vector<8xf32> to vector<8x1xf32>
    %154 = tpu.reciprocal %153 {approx = true} : vector<8x1xf32> -> vector<8x1xf32>
    %155 = vector.broadcast %154 : vector<8x1xf32> to vector<8x16xf32>
    %156 = arith.mulf %151, %155 : vector<8x16xf32>
    %cst_78 = arith.constant dense<0.000000e+00> : vector<8x8xf32>
    %157 = tpu.matmul %156, %137, %cst_78 {dimension_numbers = #tpu.dot_dimension_numbers<[1], [0], [0], [1], [0, 0, 1, 1], [], []>} : vector<8x16xf32>, vector<16x8xf32>, vector<8x8xf32> -> vector<8x8xf32>
    %158 = vector.extract_strided_slice %81 {offsets = [16, 0], sizes = [8, 32], strides = [1, 1]} : vector<32x32xf32> to vector<8x32xf32>
    %cst_79 = arith.constant dense<0.000000e+00> : vector<8x32xf32>
    %159 = tpu.matmul %157, %158, %cst_79 {dimension_numbers = #tpu.dot_dimension_numbers<[1], [0], [0], [1], [0, 0, 1, 1], [], []>} : vector<8x8xf32>, vector<8x32xf32>, vector<8x32xf32> -> vector<8x32xf32>
    %160 = arith.addf %134, %159 : vector<8x32xf32>
    %161 = vector.extract_strided_slice %65 {offsets = [0, 24], sizes = [8, 8], strides = [1, 1]} : vector<8x32xf32> to vector<8x8xf32>
    %162 = vector.extract_strided_slice %72 {offsets = [0, 24], sizes = [16, 8], strides = [1, 1]} : vector<16x32xf32> to vector<16x8xf32>
    %163 = vector.extract_strided_slice %79 {offsets = [0, 24], sizes = [16, 8], strides = [1, 1]} : vector<16x32xf32> to vector<16x8xf32>
    %cst_80 = arith.constant dense<0.000000e+00> : vector<8x16xf32>
    %164 = tpu.matmul %161, %162, %cst_80 {dimension_numbers = #tpu.dot_dimension_numbers<[1], [1], [0], [0], [0, 0, 1, 0], [], []>} : vector<8x8xf32>, vector<16x8xf32>, vector<8x16xf32> -> vector<8x16xf32>
    %cst_81 = arith.constant 0.353553385 : f32
    %165 = vector.broadcast %cst_81 : f32 to vector<8x16xf32>
    %166 = arith.mulf %164, %165 : vector<8x16xf32>
    %cst_82 = arith.constant 5.000000e-01 : f32
    %167 = vector.broadcast %cst_82 : f32 to vector<1x16xf32>
    %168 = arith.cmpf ogt, %3, %167 : vector<1x16xf32>
    %cst_83 = arith.constant -1.000000e+30 : f32
    %169 = vector.shape_cast %168 : vector<1x16xi1> to vector<1x16xi1>
    %170 = vector.broadcast %169 : vector<1x16xi1> to vector<8x16xi1>
    %171 = vector.broadcast %cst_83 : f32 to vector<8x16xf32>
    %172 = arith.select %170, %166, %171 : vector<8x16xi1>, vector<8x16xf32>
    %cst_84 = arith.constant dense<0xFF800000> : vector<8xf32>
    %173 = vector.multi_reduction <maximumf>, %172, %cst_84 [1] : vector<8x16xf32> to vector<8xf32>
    %174 = vector.shape_cast %173 : vector<8xf32> to vector<8x1xf32>
    %175 = vector.broadcast %174 : vector<8x1xf32> to vector<8x16xf32>
    %176 = arith.subf %172, %175 : vector<8x16xf32>
    %177 = math.exp %176 : vector<8x16xf32>
    %cst_85 = arith.constant dense<0.000000e+00> : vector<8xf32>
    %178 = vector.multi_reduction <add>, %177, %cst_85 [1] : vector<8x16xf32> to vector<8xf32>
    %179 = vector.shape_cast %178 : vector<8xf32> to vector<8x1xf32>
    %180 = tpu.reciprocal %179 {approx = true} : vector<8x1xf32> -> vector<8x1xf32>
    %181 = vector.broadcast %180 : vector<8x1xf32> to vector<8x16xf32>
    %182 = arith.mulf %177, %181 : vector<8x16xf32>
    %cst_86 = arith.constant dense<0.000000e+00> : vector<8x8xf32>
    %183 = tpu.matmul %182, %163, %cst_86 {dimension_numbers = #tpu.dot_dimension_numbers<[1], [0], [0], [1], [0, 0, 1, 1], [], []>} : vector<8x16xf32>, vector<16x8xf32>, vector<8x8xf32> -> vector<8x8xf32>
    %184 = vector.extract_strided_slice %81 {offsets = [24, 0], sizes = [8, 32], strides = [1, 1]} : vector<32x32xf32> to vector<8x32xf32>
    %cst_87 = arith.constant dense<0.000000e+00> : vector<8x32xf32>
    %185 = tpu.matmul %183, %184, %cst_87 {dimension_numbers = #tpu.dot_dimension_numbers<[1], [0], [0], [1], [0, 0, 1, 1], [], []>} : vector<8x8xf32>, vector<8x32xf32>, vector<8x32xf32> -> vector<8x32xf32>
    %186 = arith.addf %160, %185 : vector<8x32xf32>
    %187 = arith.addf %34, %186 : vector<8x32xf32>
    %c0_88 = arith.constant 0 : index
    %c0_89 = arith.constant 0 : index
    %c0_90 = arith.constant 0 : index
    %188 = vector.load %arg19[%c0_88, %c0_89, %c0_90] : memref<4x1x32xf32, #tpu.memory_space<vmem>>, vector<1x1x32xf32>
    %189 = vector.shape_cast %188 : vector<1x1x32xf32> to vector<1x32xf32>
    %190 = vector.broadcast %189 : vector<1x32xf32> to vector<8x32xf32>
    %191 = arith.addf %187, %190 : vector<8x32xf32>
    %c0_91 = arith.constant 0 : index
    %c0_92 = arith.constant 0 : index
    %c0_93 = arith.constant 0 : index
    %192 = vector.load %arg20[%c0_91, %c0_92, %c0_93] : memref<4x1x32xf32, #tpu.memory_space<vmem>>, vector<1x1x32xf32>
    %193 = vector.shape_cast %192 : vector<1x1x32xf32> to vector<1x32xf32>
    %c0_94 = arith.constant 0 : index
    %c0_95 = arith.constant 0 : index
    %c0_96 = arith.constant 0 : index
    %194 = vector.load %arg21[%c0_94, %c0_95, %c0_96] : memref<4x1x32xf32, #tpu.memory_space<vmem>>, vector<1x1x32xf32>
    %195 = vector.shape_cast %194 : vector<1x1x32xf32> to vector<1x32xf32>
    %cst_97 = arith.constant dense<0.000000e+00> : vector<8xf32>
    %196 = vector.multi_reduction <add>, %191, %cst_97 [1] : vector<8x32xf32> to vector<8xf32>
    %197 = vector.shape_cast %196 : vector<8xf32> to vector<8x1xf32>
    %cst_98 = arith.constant 3.200000e+01 : f32
    %198 = vector.broadcast %cst_98 : f32 to vector<8x1xf32>
    %199 = arith.divf %197, %198 : vector<8x1xf32>
    %200 = vector.broadcast %199 : vector<8x1xf32> to vector<8x32xf32>
    %201 = arith.subf %191, %200 : vector<8x32xf32>
    %202 = arith.mulf %201, %201 : vector<8x32xf32>
    %cst_99 = arith.constant dense<0.000000e+00> : vector<8xf32>
    %203 = vector.multi_reduction <add>, %202, %cst_99 [1] : vector<8x32xf32> to vector<8xf32>
    %204 = vector.shape_cast %203 : vector<8xf32> to vector<8x1xf32>
    %cst_100 = arith.constant 3.200000e+01 : f32
    %205 = vector.broadcast %cst_100 : f32 to vector<8x1xf32>
    %206 = arith.divf %204, %205 : vector<8x1xf32>
    %cst_101 = arith.constant 9.99999974E-6 : f32
    %207 = vector.broadcast %cst_101 : f32 to vector<8x1xf32>
    %208 = arith.addf %206, %207 : vector<8x1xf32>
    %209 = math.rsqrt %208 : vector<8x1xf32>
    %210 = vector.broadcast %209 : vector<8x1xf32> to vector<8x32xf32>
    %211 = arith.mulf %201, %210 : vector<8x32xf32>
    %212 = vector.broadcast %193 : vector<1x32xf32> to vector<8x32xf32>
    %213 = arith.mulf %211, %212 : vector<8x32xf32>
    %214 = vector.broadcast %195 : vector<1x32xf32> to vector<8x32xf32>
    %215 = arith.addf %213, %214 : vector<8x32xf32>
    %c0_102 = arith.constant 0 : index
    %c0_103 = arith.constant 0 : index
    %c0_104 = arith.constant 0 : index
    %216 = vector.load %arg22[%c0_102, %c0_103, %c0_104] : memref<4x32x64xf32, #tpu.memory_space<vmem>>, vector<1x32x64xf32>
    %217 = vector.shape_cast %216 : vector<1x32x64xf32> to vector<32x64xf32>
    %cst_105 = arith.constant dense<0.000000e+00> : vector<8x64xf32>
    %218 = tpu.matmul %215, %217, %cst_105 {dimension_numbers = #tpu.dot_dimension_numbers<[1], [0], [0], [1], [0, 0, 1, 1], [], []>} : vector<8x32xf32>, vector<32x64xf32>, vector<8x64xf32> -> vector<8x64xf32>
    %c0_106 = arith.constant 0 : index
    %c0_107 = arith.constant 0 : index
    %c0_108 = arith.constant 0 : index
    %219 = vector.load %arg23[%c0_106, %c0_107, %c0_108] : memref<4x1x64xf32, #tpu.memory_space<vmem>>, vector<1x1x64xf32>
    %220 = vector.shape_cast %219 : vector<1x1x64xf32> to vector<1x64xf32>
    %221 = vector.broadcast %220 : vector<1x64xf32> to vector<8x64xf32>
    %222 = arith.addf %218, %221 : vector<8x64xf32>
    %cst_109 = arith.constant 0.707106769 : f32
    %223 = vector.broadcast %cst_109 : f32 to vector<8x64xf32>
    %224 = arith.mulf %222, %223 : vector<8x64xf32>
    %225 = math.absf %224 : vector<8x64xf32>
    %cst_110 = arith.constant 0.327591091 : f32
    %226 = vector.broadcast %cst_110 : f32 to vector<8x64xf32>
    %227 = arith.mulf %226, %225 : vector<8x64xf32>
    %cst_111 = arith.constant 1.000000e+00 : f32
    %228 = vector.broadcast %cst_111 : f32 to vector<8x64xf32>
    %229 = arith.addf %228, %227 : vector<8x64xf32>
    %cst_112 = arith.constant 1.000000e+00 : f32
    %230 = vector.broadcast %cst_112 : f32 to vector<8x64xf32>
    %231 = arith.divf %230, %229 : vector<8x64xf32>
    %cst_113 = arith.constant 1.06140542 : f32
    %232 = vector.broadcast %cst_113 : f32 to vector<8x64xf32>
    %233 = arith.mulf %232, %231 : vector<8x64xf32>
    %cst_114 = arith.constant -1.45315206 : f32
    %234 = vector.broadcast %cst_114 : f32 to vector<8x64xf32>
    %235 = arith.addf %233, %234 : vector<8x64xf32>
    %236 = arith.mulf %235, %231 : vector<8x64xf32>
    %cst_115 = arith.constant 1.42141378 : f32
    %237 = vector.broadcast %cst_115 : f32 to vector<8x64xf32>
    %238 = arith.addf %236, %237 : vector<8x64xf32>
    %239 = arith.mulf %238, %231 : vector<8x64xf32>
    %cst_116 = arith.constant -0.284496725 : f32
    %240 = vector.broadcast %cst_116 : f32 to vector<8x64xf32>
    %241 = arith.addf %239, %240 : vector<8x64xf32>
    %242 = arith.mulf %241, %231 : vector<8x64xf32>
    %cst_117 = arith.constant 0.254829586 : f32
    %243 = vector.broadcast %cst_117 : f32 to vector<8x64xf32>
    %244 = arith.addf %242, %243 : vector<8x64xf32>
    %245 = arith.mulf %244, %231 : vector<8x64xf32>
    %cst_118 = arith.constant 0.000000e+00 : f32
    %246 = vector.broadcast %cst_118 : f32 to vector<8x64xf32>
    %247 = arith.subf %246, %225 : vector<8x64xf32>
    %248 = arith.mulf %247, %225 : vector<8x64xf32>
    %249 = math.exp %248 : vector<8x64xf32>
    %250 = arith.mulf %245, %249 : vector<8x64xf32>
    %cst_119 = arith.constant 1.000000e+00 : f32
    %251 = vector.broadcast %cst_119 : f32 to vector<8x64xf32>
    %252 = arith.subf %251, %250 : vector<8x64xf32>
    %cst_120 = arith.constant 0.000000e+00 : f32
    %253 = vector.broadcast %cst_120 : f32 to vector<8x64xf32>
    %254 = arith.cmpf oge, %224, %253 : vector<8x64xf32>
    %cst_121 = arith.constant 0.000000e+00 : f32
    %255 = vector.broadcast %cst_121 : f32 to vector<8x64xf32>
    %256 = arith.subf %255, %252 : vector<8x64xf32>
    %257 = arith.select %254, %252, %256 : vector<8x64xi1>, vector<8x64xf32>
    %cst_122 = arith.constant 5.000000e-01 : f32
    %258 = vector.broadcast %cst_122 : f32 to vector<8x64xf32>
    %259 = arith.mulf %258, %222 : vector<8x64xf32>
    %cst_123 = arith.constant 1.000000e+00 : f32
    %260 = vector.broadcast %cst_123 : f32 to vector<8x64xf32>
    %261 = arith.addf %260, %257 : vector<8x64xf32>
    %262 = arith.mulf %259, %261 : vector<8x64xf32>
    %c0_124 = arith.constant 0 : index
    %c0_125 = arith.constant 0 : index
    %c0_126 = arith.constant 0 : index
    %263 = vector.load %arg24[%c0_124, %c0_125, %c0_126] : memref<4x64x32xf32, #tpu.memory_space<vmem>>, vector<1x64x32xf32>
    %264 = vector.shape_cast %263 : vector<1x64x32xf32> to vector<64x32xf32>
    %cst_127 = arith.constant dense<0.000000e+00> : vector<8x32xf32>
    %265 = tpu.matmul %262, %264, %cst_127 {dimension_numbers = #tpu.dot_dimension_numbers<[1], [0], [0], [1], [0, 0, 1, 1], [], []>} : vector<8x64xf32>, vector<64x32xf32>, vector<8x32xf32> -> vector<8x32xf32>
    %266 = arith.addf %191, %265 : vector<8x32xf32>
    %c0_128 = arith.constant 0 : index
    %c0_129 = arith.constant 0 : index
    %c0_130 = arith.constant 0 : index
    %267 = vector.load %arg25[%c0_128, %c0_129, %c0_130] : memref<4x1x32xf32, #tpu.memory_space<vmem>>, vector<1x1x32xf32>
    %268 = vector.shape_cast %267 : vector<1x1x32xf32> to vector<1x32xf32>
    %269 = vector.broadcast %268 : vector<1x32xf32> to vector<8x32xf32>
    %270 = arith.addf %266, %269 : vector<8x32xf32>
    %c1 = arith.constant 1 : index
    %c0_131 = arith.constant 0 : index
    %c0_132 = arith.constant 0 : index
    %271 = vector.load %arg10[%c1, %c0_131, %c0_132] : memref<4x1x32xf32, #tpu.memory_space<vmem>>, vector<1x1x32xf32>
    %272 = vector.shape_cast %271 : vector<1x1x32xf32> to vector<1x32xf32>
    %c1_133 = arith.constant 1 : index
    %c0_134 = arith.constant 0 : index
    %c0_135 = arith.constant 0 : index
    %273 = vector.load %arg11[%c1_133, %c0_134, %c0_135] : memref<4x1x32xf32, #tpu.memory_space<vmem>>, vector<1x1x32xf32>
    %274 = vector.shape_cast %273 : vector<1x1x32xf32> to vector<1x32xf32>
    %cst_136 = arith.constant dense<0.000000e+00> : vector<8xf32>
    %275 = vector.multi_reduction <add>, %270, %cst_136 [1] : vector<8x32xf32> to vector<8xf32>
    %276 = vector.shape_cast %275 : vector<8xf32> to vector<8x1xf32>
    %cst_137 = arith.constant 3.200000e+01 : f32
    %277 = vector.broadcast %cst_137 : f32 to vector<8x1xf32>
    %278 = arith.divf %276, %277 : vector<8x1xf32>
    %279 = vector.broadcast %278 : vector<8x1xf32> to vector<8x32xf32>
    %280 = arith.subf %270, %279 : vector<8x32xf32>
    %281 = arith.mulf %280, %280 : vector<8x32xf32>
    %cst_138 = arith.constant dense<0.000000e+00> : vector<8xf32>
    %282 = vector.multi_reduction <add>, %281, %cst_138 [1] : vector<8x32xf32> to vector<8xf32>
    %283 = vector.shape_cast %282 : vector<8xf32> to vector<8x1xf32>
    %cst_139 = arith.constant 3.200000e+01 : f32
    %284 = vector.broadcast %cst_139 : f32 to vector<8x1xf32>
    %285 = arith.divf %283, %284 : vector<8x1xf32>
    %cst_140 = arith.constant 9.99999974E-6 : f32
    %286 = vector.broadcast %cst_140 : f32 to vector<8x1xf32>
    %287 = arith.addf %285, %286 : vector<8x1xf32>
    %288 = math.rsqrt %287 : vector<8x1xf32>
    %289 = vector.broadcast %288 : vector<8x1xf32> to vector<8x32xf32>
    %290 = arith.mulf %280, %289 : vector<8x32xf32>
    %291 = vector.broadcast %272 : vector<1x32xf32> to vector<8x32xf32>
    %292 = arith.mulf %290, %291 : vector<8x32xf32>
    %293 = vector.broadcast %274 : vector<1x32xf32> to vector<8x32xf32>
    %294 = arith.addf %292, %293 : vector<8x32xf32>
    %c1_141 = arith.constant 1 : index
    %c0_142 = arith.constant 0 : index
    %c0_143 = arith.constant 0 : index
    %295 = vector.load %arg12[%c1_141, %c0_142, %c0_143] : memref<4x32x32xf32, #tpu.memory_space<vmem>>, vector<1x32x32xf32>
    %296 = vector.shape_cast %295 : vector<1x32x32xf32> to vector<32x32xf32>
    %cst_144 = arith.constant dense<0.000000e+00> : vector<8x32xf32>
    %297 = tpu.matmul %294, %296, %cst_144 {dimension_numbers = #tpu.dot_dimension_numbers<[1], [0], [0], [1], [0, 0, 1, 1], [], []>} : vector<8x32xf32>, vector<32x32xf32>, vector<8x32xf32> -> vector<8x32xf32>
    %c1_145 = arith.constant 1 : index
    %c0_146 = arith.constant 0 : index
    %c0_147 = arith.constant 0 : index
    %298 = vector.load %arg13[%c1_145, %c0_146, %c0_147] : memref<4x1x32xf32, #tpu.memory_space<vmem>>, vector<1x1x32xf32>
    %299 = vector.shape_cast %298 : vector<1x1x32xf32> to vector<1x32xf32>
    %300 = vector.broadcast %299 : vector<1x32xf32> to vector<8x32xf32>
    %301 = arith.addf %297, %300 : vector<8x32xf32>
    %c1_148 = arith.constant 1 : index
    %c0_149 = arith.constant 0 : index
    %c0_150 = arith.constant 0 : index
    %302 = vector.load %arg14[%c1_148, %c0_149, %c0_150] : memref<4x32x32xf32, #tpu.memory_space<vmem>>, vector<1x32x32xf32>
    %303 = vector.shape_cast %302 : vector<1x32x32xf32> to vector<32x32xf32>
    %cst_151 = arith.constant dense<0.000000e+00> : vector<16x32xf32>
    %304 = tpu.matmul %33, %303, %cst_151 {dimension_numbers = #tpu.dot_dimension_numbers<[1], [0], [0], [1], [0, 0, 1, 1], [], []>} : vector<16x32xf32>, vector<32x32xf32>, vector<16x32xf32> -> vector<16x32xf32>
    %c1_152 = arith.constant 1 : index
    %c0_153 = arith.constant 0 : index
    %c0_154 = arith.constant 0 : index
    %305 = vector.load %arg15[%c1_152, %c0_153, %c0_154] : memref<4x1x32xf32, #tpu.memory_space<vmem>>, vector<1x1x32xf32>
    %306 = vector.shape_cast %305 : vector<1x1x32xf32> to vector<1x32xf32>
    %307 = vector.broadcast %306 : vector<1x32xf32> to vector<16x32xf32>
    %308 = arith.addf %304, %307 : vector<16x32xf32>
    %c1_155 = arith.constant 1 : index
    %c0_156 = arith.constant 0 : index
    %c0_157 = arith.constant 0 : index
    %309 = vector.load %arg16[%c1_155, %c0_156, %c0_157] : memref<4x32x32xf32, #tpu.memory_space<vmem>>, vector<1x32x32xf32>
    %310 = vector.shape_cast %309 : vector<1x32x32xf32> to vector<32x32xf32>
    %cst_158 = arith.constant dense<0.000000e+00> : vector<16x32xf32>
    %311 = tpu.matmul %33, %310, %cst_158 {dimension_numbers = #tpu.dot_dimension_numbers<[1], [0], [0], [1], [0, 0, 1, 1], [], []>} : vector<16x32xf32>, vector<32x32xf32>, vector<16x32xf32> -> vector<16x32xf32>
    %c1_159 = arith.constant 1 : index
    %c0_160 = arith.constant 0 : index
    %c0_161 = arith.constant 0 : index
    %312 = vector.load %arg17[%c1_159, %c0_160, %c0_161] : memref<4x1x32xf32, #tpu.memory_space<vmem>>, vector<1x1x32xf32>
    %313 = vector.shape_cast %312 : vector<1x1x32xf32> to vector<1x32xf32>
    %314 = vector.broadcast %313 : vector<1x32xf32> to vector<16x32xf32>
    %315 = arith.addf %311, %314 : vector<16x32xf32>
    %c1_162 = arith.constant 1 : index
    %c0_163 = arith.constant 0 : index
    %c0_164 = arith.constant 0 : index
    %316 = vector.load %arg18[%c1_162, %c0_163, %c0_164] : memref<4x32x32xf32, #tpu.memory_space<vmem>>, vector<1x32x32xf32>
    %317 = vector.shape_cast %316 : vector<1x32x32xf32> to vector<32x32xf32>
    %cst_165 = arith.constant 0.000000e+00 : f32
    %318 = vector.broadcast %cst_165 : f32 to vector<8x32xf32>
    %319 = vector.extract_strided_slice %301 {offsets = [0, 0], sizes = [8, 8], strides = [1, 1]} : vector<8x32xf32> to vector<8x8xf32>
    %320 = vector.extract_strided_slice %308 {offsets = [0, 0], sizes = [16, 8], strides = [1, 1]} : vector<16x32xf32> to vector<16x8xf32>
    %321 = vector.extract_strided_slice %315 {offsets = [0, 0], sizes = [16, 8], strides = [1, 1]} : vector<16x32xf32> to vector<16x8xf32>
    %cst_166 = arith.constant dense<0.000000e+00> : vector<8x16xf32>
    %322 = tpu.matmul %319, %320, %cst_166 {dimension_numbers = #tpu.dot_dimension_numbers<[1], [1], [0], [0], [0, 0, 1, 0], [], []>} : vector<8x8xf32>, vector<16x8xf32>, vector<8x16xf32> -> vector<8x16xf32>
    %cst_167 = arith.constant 0.353553385 : f32
    %323 = vector.broadcast %cst_167 : f32 to vector<8x16xf32>
    %324 = arith.mulf %322, %323 : vector<8x16xf32>
    %cst_168 = arith.constant 5.000000e-01 : f32
    %325 = vector.broadcast %cst_168 : f32 to vector<1x16xf32>
    %326 = arith.cmpf ogt, %3, %325 : vector<1x16xf32>
    %cst_169 = arith.constant -1.000000e+30 : f32
    %327 = vector.shape_cast %326 : vector<1x16xi1> to vector<1x16xi1>
    %328 = vector.broadcast %327 : vector<1x16xi1> to vector<8x16xi1>
    %329 = vector.broadcast %cst_169 : f32 to vector<8x16xf32>
    %330 = arith.select %328, %324, %329 : vector<8x16xi1>, vector<8x16xf32>
    %cst_170 = arith.constant dense<0xFF800000> : vector<8xf32>
    %331 = vector.multi_reduction <maximumf>, %330, %cst_170 [1] : vector<8x16xf32> to vector<8xf32>
    %332 = vector.shape_cast %331 : vector<8xf32> to vector<8x1xf32>
    %333 = vector.broadcast %332 : vector<8x1xf32> to vector<8x16xf32>
    %334 = arith.subf %330, %333 : vector<8x16xf32>
    %335 = math.exp %334 : vector<8x16xf32>
    %cst_171 = arith.constant dense<0.000000e+00> : vector<8xf32>
    %336 = vector.multi_reduction <add>, %335, %cst_171 [1] : vector<8x16xf32> to vector<8xf32>
    %337 = vector.shape_cast %336 : vector<8xf32> to vector<8x1xf32>
    %338 = tpu.reciprocal %337 {approx = true} : vector<8x1xf32> -> vector<8x1xf32>
    %339 = vector.broadcast %338 : vector<8x1xf32> to vector<8x16xf32>
    %340 = arith.mulf %335, %339 : vector<8x16xf32>
    %cst_172 = arith.constant dense<0.000000e+00> : vector<8x8xf32>
    %341 = tpu.matmul %340, %321, %cst_172 {dimension_numbers = #tpu.dot_dimension_numbers<[1], [0], [0], [1], [0, 0, 1, 1], [], []>} : vector<8x16xf32>, vector<16x8xf32>, vector<8x8xf32> -> vector<8x8xf32>
    %342 = vector.extract_strided_slice %317 {offsets = [0, 0], sizes = [8, 32], strides = [1, 1]} : vector<32x32xf32> to vector<8x32xf32>
    %cst_173 = arith.constant dense<0.000000e+00> : vector<8x32xf32>
    %343 = tpu.matmul %341, %342, %cst_173 {dimension_numbers = #tpu.dot_dimension_numbers<[1], [0], [0], [1], [0, 0, 1, 1], [], []>} : vector<8x8xf32>, vector<8x32xf32>, vector<8x32xf32> -> vector<8x32xf32>
    %344 = arith.addf %318, %343 : vector<8x32xf32>
    %345 = vector.extract_strided_slice %301 {offsets = [0, 8], sizes = [8, 8], strides = [1, 1]} : vector<8x32xf32> to vector<8x8xf32>
    %346 = vector.extract_strided_slice %308 {offsets = [0, 8], sizes = [16, 8], strides = [1, 1]} : vector<16x32xf32> to vector<16x8xf32>
    %347 = vector.extract_strided_slice %315 {offsets = [0, 8], sizes = [16, 8], strides = [1, 1]} : vector<16x32xf32> to vector<16x8xf32>
    %cst_174 = arith.constant dense<0.000000e+00> : vector<8x16xf32>
    %348 = tpu.matmul %345, %346, %cst_174 {dimension_numbers = #tpu.dot_dimension_numbers<[1], [1], [0], [0], [0, 0, 1, 0], [], []>} : vector<8x8xf32>, vector<16x8xf32>, vector<8x16xf32> -> vector<8x16xf32>
    %cst_175 = arith.constant 0.353553385 : f32
    %349 = vector.broadcast %cst_175 : f32 to vector<8x16xf32>
    %350 = arith.mulf %348, %349 : vector<8x16xf32>
    %cst_176 = arith.constant 5.000000e-01 : f32
    %351 = vector.broadcast %cst_176 : f32 to vector<1x16xf32>
    %352 = arith.cmpf ogt, %3, %351 : vector<1x16xf32>
    %cst_177 = arith.constant -1.000000e+30 : f32
    %353 = vector.shape_cast %352 : vector<1x16xi1> to vector<1x16xi1>
    %354 = vector.broadcast %353 : vector<1x16xi1> to vector<8x16xi1>
    %355 = vector.broadcast %cst_177 : f32 to vector<8x16xf32>
    %356 = arith.select %354, %350, %355 : vector<8x16xi1>, vector<8x16xf32>
    %cst_178 = arith.constant dense<0xFF800000> : vector<8xf32>
    %357 = vector.multi_reduction <maximumf>, %356, %cst_178 [1] : vector<8x16xf32> to vector<8xf32>
    %358 = vector.shape_cast %357 : vector<8xf32> to vector<8x1xf32>
    %359 = vector.broadcast %358 : vector<8x1xf32> to vector<8x16xf32>
    %360 = arith.subf %356, %359 : vector<8x16xf32>
    %361 = math.exp %360 : vector<8x16xf32>
    %cst_179 = arith.constant dense<0.000000e+00> : vector<8xf32>
    %362 = vector.multi_reduction <add>, %361, %cst_179 [1] : vector<8x16xf32> to vector<8xf32>
    %363 = vector.shape_cast %362 : vector<8xf32> to vector<8x1xf32>
    %364 = tpu.reciprocal %363 {approx = true} : vector<8x1xf32> -> vector<8x1xf32>
    %365 = vector.broadcast %364 : vector<8x1xf32> to vector<8x16xf32>
    %366 = arith.mulf %361, %365 : vector<8x16xf32>
    %cst_180 = arith.constant dense<0.000000e+00> : vector<8x8xf32>
    %367 = tpu.matmul %366, %347, %cst_180 {dimension_numbers = #tpu.dot_dimension_numbers<[1], [0], [0], [1], [0, 0, 1, 1], [], []>} : vector<8x16xf32>, vector<16x8xf32>, vector<8x8xf32> -> vector<8x8xf32>
    %368 = vector.extract_strided_slice %317 {offsets = [8, 0], sizes = [8, 32], strides = [1, 1]} : vector<32x32xf32> to vector<8x32xf32>
    %cst_181 = arith.constant dense<0.000000e+00> : vector<8x32xf32>
    %369 = tpu.matmul %367, %368, %cst_181 {dimension_numbers = #tpu.dot_dimension_numbers<[1], [0], [0], [1], [0, 0, 1, 1], [], []>} : vector<8x8xf32>, vector<8x32xf32>, vector<8x32xf32> -> vector<8x32xf32>
    %370 = arith.addf %344, %369 : vector<8x32xf32>
    %371 = vector.extract_strided_slice %301 {offsets = [0, 16], sizes = [8, 8], strides = [1, 1]} : vector<8x32xf32> to vector<8x8xf32>
    %372 = vector.extract_strided_slice %308 {offsets = [0, 16], sizes = [16, 8], strides = [1, 1]} : vector<16x32xf32> to vector<16x8xf32>
    %373 = vector.extract_strided_slice %315 {offsets = [0, 16], sizes = [16, 8], strides = [1, 1]} : vector<16x32xf32> to vector<16x8xf32>
    %cst_182 = arith.constant dense<0.000000e+00> : vector<8x16xf32>
    %374 = tpu.matmul %371, %372, %cst_182 {dimension_numbers = #tpu.dot_dimension_numbers<[1], [1], [0], [0], [0, 0, 1, 0], [], []>} : vector<8x8xf32>, vector<16x8xf32>, vector<8x16xf32> -> vector<8x16xf32>
    %cst_183 = arith.constant 0.353553385 : f32
    %375 = vector.broadcast %cst_183 : f32 to vector<8x16xf32>
    %376 = arith.mulf %374, %375 : vector<8x16xf32>
    %cst_184 = arith.constant 5.000000e-01 : f32
    %377 = vector.broadcast %cst_184 : f32 to vector<1x16xf32>
    %378 = arith.cmpf ogt, %3, %377 : vector<1x16xf32>
    %cst_185 = arith.constant -1.000000e+30 : f32
    %379 = vector.shape_cast %378 : vector<1x16xi1> to vector<1x16xi1>
    %380 = vector.broadcast %379 : vector<1x16xi1> to vector<8x16xi1>
    %381 = vector.broadcast %cst_185 : f32 to vector<8x16xf32>
    %382 = arith.select %380, %376, %381 : vector<8x16xi1>, vector<8x16xf32>
    %cst_186 = arith.constant dense<0xFF800000> : vector<8xf32>
    %383 = vector.multi_reduction <maximumf>, %382, %cst_186 [1] : vector<8x16xf32> to vector<8xf32>
    %384 = vector.shape_cast %383 : vector<8xf32> to vector<8x1xf32>
    %385 = vector.broadcast %384 : vector<8x1xf32> to vector<8x16xf32>
    %386 = arith.subf %382, %385 : vector<8x16xf32>
    %387 = math.exp %386 : vector<8x16xf32>
    %cst_187 = arith.constant dense<0.000000e+00> : vector<8xf32>
    %388 = vector.multi_reduction <add>, %387, %cst_187 [1] : vector<8x16xf32> to vector<8xf32>
    %389 = vector.shape_cast %388 : vector<8xf32> to vector<8x1xf32>
    %390 = tpu.reciprocal %389 {approx = true} : vector<8x1xf32> -> vector<8x1xf32>
    %391 = vector.broadcast %390 : vector<8x1xf32> to vector<8x16xf32>
    %392 = arith.mulf %387, %391 : vector<8x16xf32>
    %cst_188 = arith.constant dense<0.000000e+00> : vector<8x8xf32>
    %393 = tpu.matmul %392, %373, %cst_188 {dimension_numbers = #tpu.dot_dimension_numbers<[1], [0], [0], [1], [0, 0, 1, 1], [], []>} : vector<8x16xf32>, vector<16x8xf32>, vector<8x8xf32> -> vector<8x8xf32>
    %394 = vector.extract_strided_slice %317 {offsets = [16, 0], sizes = [8, 32], strides = [1, 1]} : vector<32x32xf32> to vector<8x32xf32>
    %cst_189 = arith.constant dense<0.000000e+00> : vector<8x32xf32>
    %395 = tpu.matmul %393, %394, %cst_189 {dimension_numbers = #tpu.dot_dimension_numbers<[1], [0], [0], [1], [0, 0, 1, 1], [], []>} : vector<8x8xf32>, vector<8x32xf32>, vector<8x32xf32> -> vector<8x32xf32>
    %396 = arith.addf %370, %395 : vector<8x32xf32>
    %397 = vector.extract_strided_slice %301 {offsets = [0, 24], sizes = [8, 8], strides = [1, 1]} : vector<8x32xf32> to vector<8x8xf32>
    %398 = vector.extract_strided_slice %308 {offsets = [0, 24], sizes = [16, 8], strides = [1, 1]} : vector<16x32xf32> to vector<16x8xf32>
    %399 = vector.extract_strided_slice %315 {offsets = [0, 24], sizes = [16, 8], strides = [1, 1]} : vector<16x32xf32> to vector<16x8xf32>
    %cst_190 = arith.constant dense<0.000000e+00> : vector<8x16xf32>
    %400 = tpu.matmul %397, %398, %cst_190 {dimension_numbers = #tpu.dot_dimension_numbers<[1], [1], [0], [0], [0, 0, 1, 0], [], []>} : vector<8x8xf32>, vector<16x8xf32>, vector<8x16xf32> -> vector<8x16xf32>
    %cst_191 = arith.constant 0.353553385 : f32
    %401 = vector.broadcast %cst_191 : f32 to vector<8x16xf32>
    %402 = arith.mulf %400, %401 : vector<8x16xf32>
    %cst_192 = arith.constant 5.000000e-01 : f32
    %403 = vector.broadcast %cst_192 : f32 to vector<1x16xf32>
    %404 = arith.cmpf ogt, %3, %403 : vector<1x16xf32>
    %cst_193 = arith.constant -1.000000e+30 : f32
    %405 = vector.shape_cast %404 : vector<1x16xi1> to vector<1x16xi1>
    %406 = vector.broadcast %405 : vector<1x16xi1> to vector<8x16xi1>
    %407 = vector.broadcast %cst_193 : f32 to vector<8x16xf32>
    %408 = arith.select %406, %402, %407 : vector<8x16xi1>, vector<8x16xf32>
    %cst_194 = arith.constant dense<0xFF800000> : vector<8xf32>
    %409 = vector.multi_reduction <maximumf>, %408, %cst_194 [1] : vector<8x16xf32> to vector<8xf32>
    %410 = vector.shape_cast %409 : vector<8xf32> to vector<8x1xf32>
    %411 = vector.broadcast %410 : vector<8x1xf32> to vector<8x16xf32>
    %412 = arith.subf %408, %411 : vector<8x16xf32>
    %413 = math.exp %412 : vector<8x16xf32>
    %cst_195 = arith.constant dense<0.000000e+00> : vector<8xf32>
    %414 = vector.multi_reduction <add>, %413, %cst_195 [1] : vector<8x16xf32> to vector<8xf32>
    %415 = vector.shape_cast %414 : vector<8xf32> to vector<8x1xf32>
    %416 = tpu.reciprocal %415 {approx = true} : vector<8x1xf32> -> vector<8x1xf32>
    %417 = vector.broadcast %416 : vector<8x1xf32> to vector<8x16xf32>
    %418 = arith.mulf %413, %417 : vector<8x16xf32>
    %cst_196 = arith.constant dense<0.000000e+00> : vector<8x8xf32>
    %419 = tpu.matmul %418, %399, %cst_196 {dimension_numbers = #tpu.dot_dimension_numbers<[1], [0], [0], [1], [0, 0, 1, 1], [], []>} : vector<8x16xf32>, vector<16x8xf32>, vector<8x8xf32> -> vector<8x8xf32>
    %420 = vector.extract_strided_slice %317 {offsets = [24, 0], sizes = [8, 32], strides = [1, 1]} : vector<32x32xf32> to vector<8x32xf32>
    %cst_197 = arith.constant dense<0.000000e+00> : vector<8x32xf32>
    %421 = tpu.matmul %419, %420, %cst_197 {dimension_numbers = #tpu.dot_dimension_numbers<[1], [0], [0], [1], [0, 0, 1, 1], [], []>} : vector<8x8xf32>, vector<8x32xf32>, vector<8x32xf32> -> vector<8x32xf32>
    %422 = arith.addf %396, %421 : vector<8x32xf32>
    %423 = arith.addf %270, %422 : vector<8x32xf32>
    %c1_198 = arith.constant 1 : index
    %c0_199 = arith.constant 0 : index
    %c0_200 = arith.constant 0 : index
    %424 = vector.load %arg19[%c1_198, %c0_199, %c0_200] : memref<4x1x32xf32, #tpu.memory_space<vmem>>, vector<1x1x32xf32>
    %425 = vector.shape_cast %424 : vector<1x1x32xf32> to vector<1x32xf32>
    %426 = vector.broadcast %425 : vector<1x32xf32> to vector<8x32xf32>
    %427 = arith.addf %423, %426 : vector<8x32xf32>
    %c1_201 = arith.constant 1 : index
    %c0_202 = arith.constant 0 : index
    %c0_203 = arith.constant 0 : index
    %428 = vector.load %arg20[%c1_201, %c0_202, %c0_203] : memref<4x1x32xf32, #tpu.memory_space<vmem>>, vector<1x1x32xf32>
    %429 = vector.shape_cast %428 : vector<1x1x32xf32> to vector<1x32xf32>
    %c1_204 = arith.constant 1 : index
    %c0_205 = arith.constant 0 : index
    %c0_206 = arith.constant 0 : index
    %430 = vector.load %arg21[%c1_204, %c0_205, %c0_206] : memref<4x1x32xf32, #tpu.memory_space<vmem>>, vector<1x1x32xf32>
    %431 = vector.shape_cast %430 : vector<1x1x32xf32> to vector<1x32xf32>
    %cst_207 = arith.constant dense<0.000000e+00> : vector<8xf32>
    %432 = vector.multi_reduction <add>, %427, %cst_207 [1] : vector<8x32xf32> to vector<8xf32>
    %433 = vector.shape_cast %432 : vector<8xf32> to vector<8x1xf32>
    %cst_208 = arith.constant 3.200000e+01 : f32
    %434 = vector.broadcast %cst_208 : f32 to vector<8x1xf32>
    %435 = arith.divf %433, %434 : vector<8x1xf32>
    %436 = vector.broadcast %435 : vector<8x1xf32> to vector<8x32xf32>
    %437 = arith.subf %427, %436 : vector<8x32xf32>
    %438 = arith.mulf %437, %437 : vector<8x32xf32>
    %cst_209 = arith.constant dense<0.000000e+00> : vector<8xf32>
    %439 = vector.multi_reduction <add>, %438, %cst_209 [1] : vector<8x32xf32> to vector<8xf32>
    %440 = vector.shape_cast %439 : vector<8xf32> to vector<8x1xf32>
    %cst_210 = arith.constant 3.200000e+01 : f32
    %441 = vector.broadcast %cst_210 : f32 to vector<8x1xf32>
    %442 = arith.divf %440, %441 : vector<8x1xf32>
    %cst_211 = arith.constant 9.99999974E-6 : f32
    %443 = vector.broadcast %cst_211 : f32 to vector<8x1xf32>
    %444 = arith.addf %442, %443 : vector<8x1xf32>
    %445 = math.rsqrt %444 : vector<8x1xf32>
    %446 = vector.broadcast %445 : vector<8x1xf32> to vector<8x32xf32>
    %447 = arith.mulf %437, %446 : vector<8x32xf32>
    %448 = vector.broadcast %429 : vector<1x32xf32> to vector<8x32xf32>
    %449 = arith.mulf %447, %448 : vector<8x32xf32>
    %450 = vector.broadcast %431 : vector<1x32xf32> to vector<8x32xf32>
    %451 = arith.addf %449, %450 : vector<8x32xf32>
    %c1_212 = arith.constant 1 : index
    %c0_213 = arith.constant 0 : index
    %c0_214 = arith.constant 0 : index
    %452 = vector.load %arg22[%c1_212, %c0_213, %c0_214] : memref<4x32x64xf32, #tpu.memory_space<vmem>>, vector<1x32x64xf32>
    %453 = vector.shape_cast %452 : vector<1x32x64xf32> to vector<32x64xf32>
    %cst_215 = arith.constant dense<0.000000e+00> : vector<8x64xf32>
    %454 = tpu.matmul %451, %453, %cst_215 {dimension_numbers = #tpu.dot_dimension_numbers<[1], [0], [0], [1], [0, 0, 1, 1], [], []>} : vector<8x32xf32>, vector<32x64xf32>, vector<8x64xf32> -> vector<8x64xf32>
    %c1_216 = arith.constant 1 : index
    %c0_217 = arith.constant 0 : index
    %c0_218 = arith.constant 0 : index
    %455 = vector.load %arg23[%c1_216, %c0_217, %c0_218] : memref<4x1x64xf32, #tpu.memory_space<vmem>>, vector<1x1x64xf32>
    %456 = vector.shape_cast %455 : vector<1x1x64xf32> to vector<1x64xf32>
    %457 = vector.broadcast %456 : vector<1x64xf32> to vector<8x64xf32>
    %458 = arith.addf %454, %457 : vector<8x64xf32>
    %cst_219 = arith.constant 0.707106769 : f32
    %459 = vector.broadcast %cst_219 : f32 to vector<8x64xf32>
    %460 = arith.mulf %458, %459 : vector<8x64xf32>
    %461 = math.absf %460 : vector<8x64xf32>
    %cst_220 = arith.constant 0.327591091 : f32
    %462 = vector.broadcast %cst_220 : f32 to vector<8x64xf32>
    %463 = arith.mulf %462, %461 : vector<8x64xf32>
    %cst_221 = arith.constant 1.000000e+00 : f32
    %464 = vector.broadcast %cst_221 : f32 to vector<8x64xf32>
    %465 = arith.addf %464, %463 : vector<8x64xf32>
    %cst_222 = arith.constant 1.000000e+00 : f32
    %466 = vector.broadcast %cst_222 : f32 to vector<8x64xf32>
    %467 = arith.divf %466, %465 : vector<8x64xf32>
    %cst_223 = arith.constant 1.06140542 : f32
    %468 = vector.broadcast %cst_223 : f32 to vector<8x64xf32>
    %469 = arith.mulf %468, %467 : vector<8x64xf32>
    %cst_224 = arith.constant -1.45315206 : f32
    %470 = vector.broadcast %cst_224 : f32 to vector<8x64xf32>
    %471 = arith.addf %469, %470 : vector<8x64xf32>
    %472 = arith.mulf %471, %467 : vector<8x64xf32>
    %cst_225 = arith.constant 1.42141378 : f32
    %473 = vector.broadcast %cst_225 : f32 to vector<8x64xf32>
    %474 = arith.addf %472, %473 : vector<8x64xf32>
    %475 = arith.mulf %474, %467 : vector<8x64xf32>
    %cst_226 = arith.constant -0.284496725 : f32
    %476 = vector.broadcast %cst_226 : f32 to vector<8x64xf32>
    %477 = arith.addf %475, %476 : vector<8x64xf32>
    %478 = arith.mulf %477, %467 : vector<8x64xf32>
    %cst_227 = arith.constant 0.254829586 : f32
    %479 = vector.broadcast %cst_227 : f32 to vector<8x64xf32>
    %480 = arith.addf %478, %479 : vector<8x64xf32>
    %481 = arith.mulf %480, %467 : vector<8x64xf32>
    %cst_228 = arith.constant 0.000000e+00 : f32
    %482 = vector.broadcast %cst_228 : f32 to vector<8x64xf32>
    %483 = arith.subf %482, %461 : vector<8x64xf32>
    %484 = arith.mulf %483, %461 : vector<8x64xf32>
    %485 = math.exp %484 : vector<8x64xf32>
    %486 = arith.mulf %481, %485 : vector<8x64xf32>
    %cst_229 = arith.constant 1.000000e+00 : f32
    %487 = vector.broadcast %cst_229 : f32 to vector<8x64xf32>
    %488 = arith.subf %487, %486 : vector<8x64xf32>
    %cst_230 = arith.constant 0.000000e+00 : f32
    %489 = vector.broadcast %cst_230 : f32 to vector<8x64xf32>
    %490 = arith.cmpf oge, %460, %489 : vector<8x64xf32>
    %cst_231 = arith.constant 0.000000e+00 : f32
    %491 = vector.broadcast %cst_231 : f32 to vector<8x64xf32>
    %492 = arith.subf %491, %488 : vector<8x64xf32>
    %493 = arith.select %490, %488, %492 : vector<8x64xi1>, vector<8x64xf32>
    %cst_232 = arith.constant 5.000000e-01 : f32
    %494 = vector.broadcast %cst_232 : f32 to vector<8x64xf32>
    %495 = arith.mulf %494, %458 : vector<8x64xf32>
    %cst_233 = arith.constant 1.000000e+00 : f32
    %496 = vector.broadcast %cst_233 : f32 to vector<8x64xf32>
    %497 = arith.addf %496, %493 : vector<8x64xf32>
    %498 = arith.mulf %495, %497 : vector<8x64xf32>
    %c1_234 = arith.constant 1 : index
    %c0_235 = arith.constant 0 : index
    %c0_236 = arith.constant 0 : index
    %499 = vector.load %arg24[%c1_234, %c0_235, %c0_236] : memref<4x64x32xf32, #tpu.memory_space<vmem>>, vector<1x64x32xf32>
    %500 = vector.shape_cast %499 : vector<1x64x32xf32> to vector<64x32xf32>
    %cst_237 = arith.constant dense<0.000000e+00> : vector<8x32xf32>
    %501 = tpu.matmul %498, %500, %cst_237 {dimension_numbers = #tpu.dot_dimension_numbers<[1], [0], [0], [1], [0, 0, 1, 1], [], []>} : vector<8x64xf32>, vector<64x32xf32>, vector<8x32xf32> -> vector<8x32xf32>
    %502 = arith.addf %427, %501 : vector<8x32xf32>
    %c1_238 = arith.constant 1 : index
    %c0_239 = arith.constant 0 : index
    %c0_240 = arith.constant 0 : index
    %503 = vector.load %arg25[%c1_238, %c0_239, %c0_240] : memref<4x1x32xf32, #tpu.memory_space<vmem>>, vector<1x1x32xf32>
    %504 = vector.shape_cast %503 : vector<1x1x32xf32> to vector<1x32xf32>
    %505 = vector.broadcast %504 : vector<1x32xf32> to vector<8x32xf32>
    %506 = arith.addf %502, %505 : vector<8x32xf32>
    %c2 = arith.constant 2 : index
    %c0_241 = arith.constant 0 : index
    %c0_242 = arith.constant 0 : index
    %507 = vector.load %arg10[%c2, %c0_241, %c0_242] : memref<4x1x32xf32, #tpu.memory_space<vmem>>, vector<1x1x32xf32>
    %508 = vector.shape_cast %507 : vector<1x1x32xf32> to vector<1x32xf32>
    %c2_243 = arith.constant 2 : index
    %c0_244 = arith.constant 0 : index
    %c0_245 = arith.constant 0 : index
    %509 = vector.load %arg11[%c2_243, %c0_244, %c0_245] : memref<4x1x32xf32, #tpu.memory_space<vmem>>, vector<1x1x32xf32>
    %510 = vector.shape_cast %509 : vector<1x1x32xf32> to vector<1x32xf32>
    %cst_246 = arith.constant dense<0.000000e+00> : vector<8xf32>
    %511 = vector.multi_reduction <add>, %506, %cst_246 [1] : vector<8x32xf32> to vector<8xf32>
    %512 = vector.shape_cast %511 : vector<8xf32> to vector<8x1xf32>
    %cst_247 = arith.constant 3.200000e+01 : f32
    %513 = vector.broadcast %cst_247 : f32 to vector<8x1xf32>
    %514 = arith.divf %512, %513 : vector<8x1xf32>
    %515 = vector.broadcast %514 : vector<8x1xf32> to vector<8x32xf32>
    %516 = arith.subf %506, %515 : vector<8x32xf32>
    %517 = arith.mulf %516, %516 : vector<8x32xf32>
    %cst_248 = arith.constant dense<0.000000e+00> : vector<8xf32>
    %518 = vector.multi_reduction <add>, %517, %cst_248 [1] : vector<8x32xf32> to vector<8xf32>
    %519 = vector.shape_cast %518 : vector<8xf32> to vector<8x1xf32>
    %cst_249 = arith.constant 3.200000e+01 : f32
    %520 = vector.broadcast %cst_249 : f32 to vector<8x1xf32>
    %521 = arith.divf %519, %520 : vector<8x1xf32>
    %cst_250 = arith.constant 9.99999974E-6 : f32
    %522 = vector.broadcast %cst_250 : f32 to vector<8x1xf32>
    %523 = arith.addf %521, %522 : vector<8x1xf32>
    %524 = math.rsqrt %523 : vector<8x1xf32>
    %525 = vector.broadcast %524 : vector<8x1xf32> to vector<8x32xf32>
    %526 = arith.mulf %516, %525 : vector<8x32xf32>
    %527 = vector.broadcast %508 : vector<1x32xf32> to vector<8x32xf32>
    %528 = arith.mulf %526, %527 : vector<8x32xf32>
    %529 = vector.broadcast %510 : vector<1x32xf32> to vector<8x32xf32>
    %530 = arith.addf %528, %529 : vector<8x32xf32>
    %c2_251 = arith.constant 2 : index
    %c0_252 = arith.constant 0 : index
    %c0_253 = arith.constant 0 : index
    %531 = vector.load %arg12[%c2_251, %c0_252, %c0_253] : memref<4x32x32xf32, #tpu.memory_space<vmem>>, vector<1x32x32xf32>
    %532 = vector.shape_cast %531 : vector<1x32x32xf32> to vector<32x32xf32>
    %cst_254 = arith.constant dense<0.000000e+00> : vector<8x32xf32>
    %533 = tpu.matmul %530, %532, %cst_254 {dimension_numbers = #tpu.dot_dimension_numbers<[1], [0], [0], [1], [0, 0, 1, 1], [], []>} : vector<8x32xf32>, vector<32x32xf32>, vector<8x32xf32> -> vector<8x32xf32>
    %c2_255 = arith.constant 2 : index
    %c0_256 = arith.constant 0 : index
    %c0_257 = arith.constant 0 : index
    %534 = vector.load %arg13[%c2_255, %c0_256, %c0_257] : memref<4x1x32xf32, #tpu.memory_space<vmem>>, vector<1x1x32xf32>
    %535 = vector.shape_cast %534 : vector<1x1x32xf32> to vector<1x32xf32>
    %536 = vector.broadcast %535 : vector<1x32xf32> to vector<8x32xf32>
    %537 = arith.addf %533, %536 : vector<8x32xf32>
    %c2_258 = arith.constant 2 : index
    %c0_259 = arith.constant 0 : index
    %c0_260 = arith.constant 0 : index
    %538 = vector.load %arg14[%c2_258, %c0_259, %c0_260] : memref<4x32x32xf32, #tpu.memory_space<vmem>>, vector<1x32x32xf32>
    %539 = vector.shape_cast %538 : vector<1x32x32xf32> to vector<32x32xf32>
    %cst_261 = arith.constant dense<0.000000e+00> : vector<16x32xf32>
    %540 = tpu.matmul %33, %539, %cst_261 {dimension_numbers = #tpu.dot_dimension_numbers<[1], [0], [0], [1], [0, 0, 1, 1], [], []>} : vector<16x32xf32>, vector<32x32xf32>, vector<16x32xf32> -> vector<16x32xf32>
    %c2_262 = arith.constant 2 : index
    %c0_263 = arith.constant 0 : index
    %c0_264 = arith.constant 0 : index
    %541 = vector.load %arg15[%c2_262, %c0_263, %c0_264] : memref<4x1x32xf32, #tpu.memory_space<vmem>>, vector<1x1x32xf32>
    %542 = vector.shape_cast %541 : vector<1x1x32xf32> to vector<1x32xf32>
    %543 = vector.broadcast %542 : vector<1x32xf32> to vector<16x32xf32>
    %544 = arith.addf %540, %543 : vector<16x32xf32>
    %c2_265 = arith.constant 2 : index
    %c0_266 = arith.constant 0 : index
    %c0_267 = arith.constant 0 : index
    %545 = vector.load %arg16[%c2_265, %c0_266, %c0_267] : memref<4x32x32xf32, #tpu.memory_space<vmem>>, vector<1x32x32xf32>
    %546 = vector.shape_cast %545 : vector<1x32x32xf32> to vector<32x32xf32>
    %cst_268 = arith.constant dense<0.000000e+00> : vector<16x32xf32>
    %547 = tpu.matmul %33, %546, %cst_268 {dimension_numbers = #tpu.dot_dimension_numbers<[1], [0], [0], [1], [0, 0, 1, 1], [], []>} : vector<16x32xf32>, vector<32x32xf32>, vector<16x32xf32> -> vector<16x32xf32>
    %c2_269 = arith.constant 2 : index
    %c0_270 = arith.constant 0 : index
    %c0_271 = arith.constant 0 : index
    %548 = vector.load %arg17[%c2_269, %c0_270, %c0_271] : memref<4x1x32xf32, #tpu.memory_space<vmem>>, vector<1x1x32xf32>
    %549 = vector.shape_cast %548 : vector<1x1x32xf32> to vector<1x32xf32>
    %550 = vector.broadcast %549 : vector<1x32xf32> to vector<16x32xf32>
    %551 = arith.addf %547, %550 : vector<16x32xf32>
    %c2_272 = arith.constant 2 : index
    %c0_273 = arith.constant 0 : index
    %c0_274 = arith.constant 0 : index
    %552 = vector.load %arg18[%c2_272, %c0_273, %c0_274] : memref<4x32x32xf32, #tpu.memory_space<vmem>>, vector<1x32x32xf32>
    %553 = vector.shape_cast %552 : vector<1x32x32xf32> to vector<32x32xf32>
    %cst_275 = arith.constant 0.000000e+00 : f32
    %554 = vector.broadcast %cst_275 : f32 to vector<8x32xf32>
    %555 = vector.extract_strided_slice %537 {offsets = [0, 0], sizes = [8, 8], strides = [1, 1]} : vector<8x32xf32> to vector<8x8xf32>
    %556 = vector.extract_strided_slice %544 {offsets = [0, 0], sizes = [16, 8], strides = [1, 1]} : vector<16x32xf32> to vector<16x8xf32>
    %557 = vector.extract_strided_slice %551 {offsets = [0, 0], sizes = [16, 8], strides = [1, 1]} : vector<16x32xf32> to vector<16x8xf32>
    %cst_276 = arith.constant dense<0.000000e+00> : vector<8x16xf32>
    %558 = tpu.matmul %555, %556, %cst_276 {dimension_numbers = #tpu.dot_dimension_numbers<[1], [1], [0], [0], [0, 0, 1, 0], [], []>} : vector<8x8xf32>, vector<16x8xf32>, vector<8x16xf32> -> vector<8x16xf32>
    %cst_277 = arith.constant 0.353553385 : f32
    %559 = vector.broadcast %cst_277 : f32 to vector<8x16xf32>
    %560 = arith.mulf %558, %559 : vector<8x16xf32>
    %cst_278 = arith.constant 5.000000e-01 : f32
    %561 = vector.broadcast %cst_278 : f32 to vector<1x16xf32>
    %562 = arith.cmpf ogt, %3, %561 : vector<1x16xf32>
    %cst_279 = arith.constant -1.000000e+30 : f32
    %563 = vector.shape_cast %562 : vector<1x16xi1> to vector<1x16xi1>
    %564 = vector.broadcast %563 : vector<1x16xi1> to vector<8x16xi1>
    %565 = vector.broadcast %cst_279 : f32 to vector<8x16xf32>
    %566 = arith.select %564, %560, %565 : vector<8x16xi1>, vector<8x16xf32>
    %cst_280 = arith.constant dense<0xFF800000> : vector<8xf32>
    %567 = vector.multi_reduction <maximumf>, %566, %cst_280 [1] : vector<8x16xf32> to vector<8xf32>
    %568 = vector.shape_cast %567 : vector<8xf32> to vector<8x1xf32>
    %569 = vector.broadcast %568 : vector<8x1xf32> to vector<8x16xf32>
    %570 = arith.subf %566, %569 : vector<8x16xf32>
    %571 = math.exp %570 : vector<8x16xf32>
    %cst_281 = arith.constant dense<0.000000e+00> : vector<8xf32>
    %572 = vector.multi_reduction <add>, %571, %cst_281 [1] : vector<8x16xf32> to vector<8xf32>
    %573 = vector.shape_cast %572 : vector<8xf32> to vector<8x1xf32>
    %574 = tpu.reciprocal %573 {approx = true} : vector<8x1xf32> -> vector<8x1xf32>
    %575 = vector.broadcast %574 : vector<8x1xf32> to vector<8x16xf32>
    %576 = arith.mulf %571, %575 : vector<8x16xf32>
    %cst_282 = arith.constant dense<0.000000e+00> : vector<8x8xf32>
    %577 = tpu.matmul %576, %557, %cst_282 {dimension_numbers = #tpu.dot_dimension_numbers<[1], [0], [0], [1], [0, 0, 1, 1], [], []>} : vector<8x16xf32>, vector<16x8xf32>, vector<8x8xf32> -> vector<8x8xf32>
    %578 = vector.extract_strided_slice %553 {offsets = [0, 0], sizes = [8, 32], strides = [1, 1]} : vector<32x32xf32> to vector<8x32xf32>
    %cst_283 = arith.constant dense<0.000000e+00> : vector<8x32xf32>
    %579 = tpu.matmul %577, %578, %cst_283 {dimension_numbers = #tpu.dot_dimension_numbers<[1], [0], [0], [1], [0, 0, 1, 1], [], []>} : vector<8x8xf32>, vector<8x32xf32>, vector<8x32xf32> -> vector<8x32xf32>
    %580 = arith.addf %554, %579 : vector<8x32xf32>
    %581 = vector.extract_strided_slice %537 {offsets = [0, 8], sizes = [8, 8], strides = [1, 1]} : vector<8x32xf32> to vector<8x8xf32>
    %582 = vector.extract_strided_slice %544 {offsets = [0, 8], sizes = [16, 8], strides = [1, 1]} : vector<16x32xf32> to vector<16x8xf32>
    %583 = vector.extract_strided_slice %551 {offsets = [0, 8], sizes = [16, 8], strides = [1, 1]} : vector<16x32xf32> to vector<16x8xf32>
    %cst_284 = arith.constant dense<0.000000e+00> : vector<8x16xf32>
    %584 = tpu.matmul %581, %582, %cst_284 {dimension_numbers = #tpu.dot_dimension_numbers<[1], [1], [0], [0], [0, 0, 1, 0], [], []>} : vector<8x8xf32>, vector<16x8xf32>, vector<8x16xf32> -> vector<8x16xf32>
    %cst_285 = arith.constant 0.353553385 : f32
    %585 = vector.broadcast %cst_285 : f32 to vector<8x16xf32>
    %586 = arith.mulf %584, %585 : vector<8x16xf32>
    %cst_286 = arith.constant 5.000000e-01 : f32
    %587 = vector.broadcast %cst_286 : f32 to vector<1x16xf32>
    %588 = arith.cmpf ogt, %3, %587 : vector<1x16xf32>
    %cst_287 = arith.constant -1.000000e+30 : f32
    %589 = vector.shape_cast %588 : vector<1x16xi1> to vector<1x16xi1>
    %590 = vector.broadcast %589 : vector<1x16xi1> to vector<8x16xi1>
    %591 = vector.broadcast %cst_287 : f32 to vector<8x16xf32>
    %592 = arith.select %590, %586, %591 : vector<8x16xi1>, vector<8x16xf32>
    %cst_288 = arith.constant dense<0xFF800000> : vector<8xf32>
    %593 = vector.multi_reduction <maximumf>, %592, %cst_288 [1] : vector<8x16xf32> to vector<8xf32>
    %594 = vector.shape_cast %593 : vector<8xf32> to vector<8x1xf32>
    %595 = vector.broadcast %594 : vector<8x1xf32> to vector<8x16xf32>
    %596 = arith.subf %592, %595 : vector<8x16xf32>
    %597 = math.exp %596 : vector<8x16xf32>
    %cst_289 = arith.constant dense<0.000000e+00> : vector<8xf32>
    %598 = vector.multi_reduction <add>, %597, %cst_289 [1] : vector<8x16xf32> to vector<8xf32>
    %599 = vector.shape_cast %598 : vector<8xf32> to vector<8x1xf32>
    %600 = tpu.reciprocal %599 {approx = true} : vector<8x1xf32> -> vector<8x1xf32>
    %601 = vector.broadcast %600 : vector<8x1xf32> to vector<8x16xf32>
    %602 = arith.mulf %597, %601 : vector<8x16xf32>
    %cst_290 = arith.constant dense<0.000000e+00> : vector<8x8xf32>
    %603 = tpu.matmul %602, %583, %cst_290 {dimension_numbers = #tpu.dot_dimension_numbers<[1], [0], [0], [1], [0, 0, 1, 1], [], []>} : vector<8x16xf32>, vector<16x8xf32>, vector<8x8xf32> -> vector<8x8xf32>
    %604 = vector.extract_strided_slice %553 {offsets = [8, 0], sizes = [8, 32], strides = [1, 1]} : vector<32x32xf32> to vector<8x32xf32>
    %cst_291 = arith.constant dense<0.000000e+00> : vector<8x32xf32>
    %605 = tpu.matmul %603, %604, %cst_291 {dimension_numbers = #tpu.dot_dimension_numbers<[1], [0], [0], [1], [0, 0, 1, 1], [], []>} : vector<8x8xf32>, vector<8x32xf32>, vector<8x32xf32> -> vector<8x32xf32>
    %606 = arith.addf %580, %605 : vector<8x32xf32>
    %607 = vector.extract_strided_slice %537 {offsets = [0, 16], sizes = [8, 8], strides = [1, 1]} : vector<8x32xf32> to vector<8x8xf32>
    %608 = vector.extract_strided_slice %544 {offsets = [0, 16], sizes = [16, 8], strides = [1, 1]} : vector<16x32xf32> to vector<16x8xf32>
    %609 = vector.extract_strided_slice %551 {offsets = [0, 16], sizes = [16, 8], strides = [1, 1]} : vector<16x32xf32> to vector<16x8xf32>
    %cst_292 = arith.constant dense<0.000000e+00> : vector<8x16xf32>
    %610 = tpu.matmul %607, %608, %cst_292 {dimension_numbers = #tpu.dot_dimension_numbers<[1], [1], [0], [0], [0, 0, 1, 0], [], []>} : vector<8x8xf32>, vector<16x8xf32>, vector<8x16xf32> -> vector<8x16xf32>
    %cst_293 = arith.constant 0.353553385 : f32
    %611 = vector.broadcast %cst_293 : f32 to vector<8x16xf32>
    %612 = arith.mulf %610, %611 : vector<8x16xf32>
    %cst_294 = arith.constant 5.000000e-01 : f32
    %613 = vector.broadcast %cst_294 : f32 to vector<1x16xf32>
    %614 = arith.cmpf ogt, %3, %613 : vector<1x16xf32>
    %cst_295 = arith.constant -1.000000e+30 : f32
    %615 = vector.shape_cast %614 : vector<1x16xi1> to vector<1x16xi1>
    %616 = vector.broadcast %615 : vector<1x16xi1> to vector<8x16xi1>
    %617 = vector.broadcast %cst_295 : f32 to vector<8x16xf32>
    %618 = arith.select %616, %612, %617 : vector<8x16xi1>, vector<8x16xf32>
    %cst_296 = arith.constant dense<0xFF800000> : vector<8xf32>
    %619 = vector.multi_reduction <maximumf>, %618, %cst_296 [1] : vector<8x16xf32> to vector<8xf32>
    %620 = vector.shape_cast %619 : vector<8xf32> to vector<8x1xf32>
    %621 = vector.broadcast %620 : vector<8x1xf32> to vector<8x16xf32>
    %622 = arith.subf %618, %621 : vector<8x16xf32>
    %623 = math.exp %622 : vector<8x16xf32>
    %cst_297 = arith.constant dense<0.000000e+00> : vector<8xf32>
    %624 = vector.multi_reduction <add>, %623, %cst_297 [1] : vector<8x16xf32> to vector<8xf32>
    %625 = vector.shape_cast %624 : vector<8xf32> to vector<8x1xf32>
    %626 = tpu.reciprocal %625 {approx = true} : vector<8x1xf32> -> vector<8x1xf32>
    %627 = vector.broadcast %626 : vector<8x1xf32> to vector<8x16xf32>
    %628 = arith.mulf %623, %627 : vector<8x16xf32>
    %cst_298 = arith.constant dense<0.000000e+00> : vector<8x8xf32>
    %629 = tpu.matmul %628, %609, %cst_298 {dimension_numbers = #tpu.dot_dimension_numbers<[1], [0], [0], [1], [0, 0, 1, 1], [], []>} : vector<8x16xf32>, vector<16x8xf32>, vector<8x8xf32> -> vector<8x8xf32>
    %630 = vector.extract_strided_slice %553 {offsets = [16, 0], sizes = [8, 32], strides = [1, 1]} : vector<32x32xf32> to vector<8x32xf32>
    %cst_299 = arith.constant dense<0.000000e+00> : vector<8x32xf32>
    %631 = tpu.matmul %629, %630, %cst_299 {dimension_numbers = #tpu.dot_dimension_numbers<[1], [0], [0], [1], [0, 0, 1, 1], [], []>} : vector<8x8xf32>, vector<8x32xf32>, vector<8x32xf32> -> vector<8x32xf32>
    %632 = arith.addf %606, %631 : vector<8x32xf32>
    %633 = vector.extract_strided_slice %537 {offsets = [0, 24], sizes = [8, 8], strides = [1, 1]} : vector<8x32xf32> to vector<8x8xf32>
    %634 = vector.extract_strided_slice %544 {offsets = [0, 24], sizes = [16, 8], strides = [1, 1]} : vector<16x32xf32> to vector<16x8xf32>
    %635 = vector.extract_strided_slice %551 {offsets = [0, 24], sizes = [16, 8], strides = [1, 1]} : vector<16x32xf32> to vector<16x8xf32>
    %cst_300 = arith.constant dense<0.000000e+00> : vector<8x16xf32>
    %636 = tpu.matmul %633, %634, %cst_300 {dimension_numbers = #tpu.dot_dimension_numbers<[1], [1], [0], [0], [0, 0, 1, 0], [], []>} : vector<8x8xf32>, vector<16x8xf32>, vector<8x16xf32> -> vector<8x16xf32>
    %cst_301 = arith.constant 0.353553385 : f32
    %637 = vector.broadcast %cst_301 : f32 to vector<8x16xf32>
    %638 = arith.mulf %636, %637 : vector<8x16xf32>
    %cst_302 = arith.constant 5.000000e-01 : f32
    %639 = vector.broadcast %cst_302 : f32 to vector<1x16xf32>
    %640 = arith.cmpf ogt, %3, %639 : vector<1x16xf32>
    %cst_303 = arith.constant -1.000000e+30 : f32
    %641 = vector.shape_cast %640 : vector<1x16xi1> to vector<1x16xi1>
    %642 = vector.broadcast %641 : vector<1x16xi1> to vector<8x16xi1>
    %643 = vector.broadcast %cst_303 : f32 to vector<8x16xf32>
    %644 = arith.select %642, %638, %643 : vector<8x16xi1>, vector<8x16xf32>
    %cst_304 = arith.constant dense<0xFF800000> : vector<8xf32>
    %645 = vector.multi_reduction <maximumf>, %644, %cst_304 [1] : vector<8x16xf32> to vector<8xf32>
    %646 = vector.shape_cast %645 : vector<8xf32> to vector<8x1xf32>
    %647 = vector.broadcast %646 : vector<8x1xf32> to vector<8x16xf32>
    %648 = arith.subf %644, %647 : vector<8x16xf32>
    %649 = math.exp %648 : vector<8x16xf32>
    %cst_305 = arith.constant dense<0.000000e+00> : vector<8xf32>
    %650 = vector.multi_reduction <add>, %649, %cst_305 [1] : vector<8x16xf32> to vector<8xf32>
    %651 = vector.shape_cast %650 : vector<8xf32> to vector<8x1xf32>
    %652 = tpu.reciprocal %651 {approx = true} : vector<8x1xf32> -> vector<8x1xf32>
    %653 = vector.broadcast %652 : vector<8x1xf32> to vector<8x16xf32>
    %654 = arith.mulf %649, %653 : vector<8x16xf32>
    %cst_306 = arith.constant dense<0.000000e+00> : vector<8x8xf32>
    %655 = tpu.matmul %654, %635, %cst_306 {dimension_numbers = #tpu.dot_dimension_numbers<[1], [0], [0], [1], [0, 0, 1, 1], [], []>} : vector<8x16xf32>, vector<16x8xf32>, vector<8x8xf32> -> vector<8x8xf32>
    %656 = vector.extract_strided_slice %553 {offsets = [24, 0], sizes = [8, 32], strides = [1, 1]} : vector<32x32xf32> to vector<8x32xf32>
    %cst_307 = arith.constant dense<0.000000e+00> : vector<8x32xf32>
    %657 = tpu.matmul %655, %656, %cst_307 {dimension_numbers = #tpu.dot_dimension_numbers<[1], [0], [0], [1], [0, 0, 1, 1], [], []>} : vector<8x8xf32>, vector<8x32xf32>, vector<8x32xf32> -> vector<8x32xf32>
    %658 = arith.addf %632, %657 : vector<8x32xf32>
    %659 = arith.addf %506, %658 : vector<8x32xf32>
    %c2_308 = arith.constant 2 : index
    %c0_309 = arith.constant 0 : index
    %c0_310 = arith.constant 0 : index
    %660 = vector.load %arg19[%c2_308, %c0_309, %c0_310] : memref<4x1x32xf32, #tpu.memory_space<vmem>>, vector<1x1x32xf32>
    %661 = vector.shape_cast %660 : vector<1x1x32xf32> to vector<1x32xf32>
    %662 = vector.broadcast %661 : vector<1x32xf32> to vector<8x32xf32>
    %663 = arith.addf %659, %662 : vector<8x32xf32>
    %c2_311 = arith.constant 2 : index
    %c0_312 = arith.constant 0 : index
    %c0_313 = arith.constant 0 : index
    %664 = vector.load %arg20[%c2_311, %c0_312, %c0_313] : memref<4x1x32xf32, #tpu.memory_space<vmem>>, vector<1x1x32xf32>
    %665 = vector.shape_cast %664 : vector<1x1x32xf32> to vector<1x32xf32>
    %c2_314 = arith.constant 2 : index
    %c0_315 = arith.constant 0 : index
    %c0_316 = arith.constant 0 : index
    %666 = vector.load %arg21[%c2_314, %c0_315, %c0_316] : memref<4x1x32xf32, #tpu.memory_space<vmem>>, vector<1x1x32xf32>
    %667 = vector.shape_cast %666 : vector<1x1x32xf32> to vector<1x32xf32>
    %cst_317 = arith.constant dense<0.000000e+00> : vector<8xf32>
    %668 = vector.multi_reduction <add>, %663, %cst_317 [1] : vector<8x32xf32> to vector<8xf32>
    %669 = vector.shape_cast %668 : vector<8xf32> to vector<8x1xf32>
    %cst_318 = arith.constant 3.200000e+01 : f32
    %670 = vector.broadcast %cst_318 : f32 to vector<8x1xf32>
    %671 = arith.divf %669, %670 : vector<8x1xf32>
    %672 = vector.broadcast %671 : vector<8x1xf32> to vector<8x32xf32>
    %673 = arith.subf %663, %672 : vector<8x32xf32>
    %674 = arith.mulf %673, %673 : vector<8x32xf32>
    %cst_319 = arith.constant dense<0.000000e+00> : vector<8xf32>
    %675 = vector.multi_reduction <add>, %674, %cst_319 [1] : vector<8x32xf32> to vector<8xf32>
    %676 = vector.shape_cast %675 : vector<8xf32> to vector<8x1xf32>
    %cst_320 = arith.constant 3.200000e+01 : f32
    %677 = vector.broadcast %cst_320 : f32 to vector<8x1xf32>
    %678 = arith.divf %676, %677 : vector<8x1xf32>
    %cst_321 = arith.constant 9.99999974E-6 : f32
    %679 = vector.broadcast %cst_321 : f32 to vector<8x1xf32>
    %680 = arith.addf %678, %679 : vector<8x1xf32>
    %681 = math.rsqrt %680 : vector<8x1xf32>
    %682 = vector.broadcast %681 : vector<8x1xf32> to vector<8x32xf32>
    %683 = arith.mulf %673, %682 : vector<8x32xf32>
    %684 = vector.broadcast %665 : vector<1x32xf32> to vector<8x32xf32>
    %685 = arith.mulf %683, %684 : vector<8x32xf32>
    %686 = vector.broadcast %667 : vector<1x32xf32> to vector<8x32xf32>
    %687 = arith.addf %685, %686 : vector<8x32xf32>
    %c2_322 = arith.constant 2 : index
    %c0_323 = arith.constant 0 : index
    %c0_324 = arith.constant 0 : index
    %688 = vector.load %arg22[%c2_322, %c0_323, %c0_324] : memref<4x32x64xf32, #tpu.memory_space<vmem>>, vector<1x32x64xf32>
    %689 = vector.shape_cast %688 : vector<1x32x64xf32> to vector<32x64xf32>
    %cst_325 = arith.constant dense<0.000000e+00> : vector<8x64xf32>
    %690 = tpu.matmul %687, %689, %cst_325 {dimension_numbers = #tpu.dot_dimension_numbers<[1], [0], [0], [1], [0, 0, 1, 1], [], []>} : vector<8x32xf32>, vector<32x64xf32>, vector<8x64xf32> -> vector<8x64xf32>
    %c2_326 = arith.constant 2 : index
    %c0_327 = arith.constant 0 : index
    %c0_328 = arith.constant 0 : index
    %691 = vector.load %arg23[%c2_326, %c0_327, %c0_328] : memref<4x1x64xf32, #tpu.memory_space<vmem>>, vector<1x1x64xf32>
    %692 = vector.shape_cast %691 : vector<1x1x64xf32> to vector<1x64xf32>
    %693 = vector.broadcast %692 : vector<1x64xf32> to vector<8x64xf32>
    %694 = arith.addf %690, %693 : vector<8x64xf32>
    %cst_329 = arith.constant 0.707106769 : f32
    %695 = vector.broadcast %cst_329 : f32 to vector<8x64xf32>
    %696 = arith.mulf %694, %695 : vector<8x64xf32>
    %697 = math.absf %696 : vector<8x64xf32>
    %cst_330 = arith.constant 0.327591091 : f32
    %698 = vector.broadcast %cst_330 : f32 to vector<8x64xf32>
    %699 = arith.mulf %698, %697 : vector<8x64xf32>
    %cst_331 = arith.constant 1.000000e+00 : f32
    %700 = vector.broadcast %cst_331 : f32 to vector<8x64xf32>
    %701 = arith.addf %700, %699 : vector<8x64xf32>
    %cst_332 = arith.constant 1.000000e+00 : f32
    %702 = vector.broadcast %cst_332 : f32 to vector<8x64xf32>
    %703 = arith.divf %702, %701 : vector<8x64xf32>
    %cst_333 = arith.constant 1.06140542 : f32
    %704 = vector.broadcast %cst_333 : f32 to vector<8x64xf32>
    %705 = arith.mulf %704, %703 : vector<8x64xf32>
    %cst_334 = arith.constant -1.45315206 : f32
    %706 = vector.broadcast %cst_334 : f32 to vector<8x64xf32>
    %707 = arith.addf %705, %706 : vector<8x64xf32>
    %708 = arith.mulf %707, %703 : vector<8x64xf32>
    %cst_335 = arith.constant 1.42141378 : f32
    %709 = vector.broadcast %cst_335 : f32 to vector<8x64xf32>
    %710 = arith.addf %708, %709 : vector<8x64xf32>
    %711 = arith.mulf %710, %703 : vector<8x64xf32>
    %cst_336 = arith.constant -0.284496725 : f32
    %712 = vector.broadcast %cst_336 : f32 to vector<8x64xf32>
    %713 = arith.addf %711, %712 : vector<8x64xf32>
    %714 = arith.mulf %713, %703 : vector<8x64xf32>
    %cst_337 = arith.constant 0.254829586 : f32
    %715 = vector.broadcast %cst_337 : f32 to vector<8x64xf32>
    %716 = arith.addf %714, %715 : vector<8x64xf32>
    %717 = arith.mulf %716, %703 : vector<8x64xf32>
    %cst_338 = arith.constant 0.000000e+00 : f32
    %718 = vector.broadcast %cst_338 : f32 to vector<8x64xf32>
    %719 = arith.subf %718, %697 : vector<8x64xf32>
    %720 = arith.mulf %719, %697 : vector<8x64xf32>
    %721 = math.exp %720 : vector<8x64xf32>
    %722 = arith.mulf %717, %721 : vector<8x64xf32>
    %cst_339 = arith.constant 1.000000e+00 : f32
    %723 = vector.broadcast %cst_339 : f32 to vector<8x64xf32>
    %724 = arith.subf %723, %722 : vector<8x64xf32>
    %cst_340 = arith.constant 0.000000e+00 : f32
    %725 = vector.broadcast %cst_340 : f32 to vector<8x64xf32>
    %726 = arith.cmpf oge, %696, %725 : vector<8x64xf32>
    %cst_341 = arith.constant 0.000000e+00 : f32
    %727 = vector.broadcast %cst_341 : f32 to vector<8x64xf32>
    %728 = arith.subf %727, %724 : vector<8x64xf32>
    %729 = arith.select %726, %724, %728 : vector<8x64xi1>, vector<8x64xf32>
    %cst_342 = arith.constant 5.000000e-01 : f32
    %730 = vector.broadcast %cst_342 : f32 to vector<8x64xf32>
    %731 = arith.mulf %730, %694 : vector<8x64xf32>
    %cst_343 = arith.constant 1.000000e+00 : f32
    %732 = vector.broadcast %cst_343 : f32 to vector<8x64xf32>
    %733 = arith.addf %732, %729 : vector<8x64xf32>
    %734 = arith.mulf %731, %733 : vector<8x64xf32>
    %c2_344 = arith.constant 2 : index
    %c0_345 = arith.constant 0 : index
    %c0_346 = arith.constant 0 : index
    %735 = vector.load %arg24[%c2_344, %c0_345, %c0_346] : memref<4x64x32xf32, #tpu.memory_space<vmem>>, vector<1x64x32xf32>
    %736 = vector.shape_cast %735 : vector<1x64x32xf32> to vector<64x32xf32>
    %cst_347 = arith.constant dense<0.000000e+00> : vector<8x32xf32>
    %737 = tpu.matmul %734, %736, %cst_347 {dimension_numbers = #tpu.dot_dimension_numbers<[1], [0], [0], [1], [0, 0, 1, 1], [], []>} : vector<8x64xf32>, vector<64x32xf32>, vector<8x32xf32> -> vector<8x32xf32>
    %738 = arith.addf %663, %737 : vector<8x32xf32>
    %c2_348 = arith.constant 2 : index
    %c0_349 = arith.constant 0 : index
    %c0_350 = arith.constant 0 : index
    %739 = vector.load %arg25[%c2_348, %c0_349, %c0_350] : memref<4x1x32xf32, #tpu.memory_space<vmem>>, vector<1x1x32xf32>
    %740 = vector.shape_cast %739 : vector<1x1x32xf32> to vector<1x32xf32>
    %741 = vector.broadcast %740 : vector<1x32xf32> to vector<8x32xf32>
    %742 = arith.addf %738, %741 : vector<8x32xf32>
    %c3 = arith.constant 3 : index
    %c0_351 = arith.constant 0 : index
    %c0_352 = arith.constant 0 : index
    %743 = vector.load %arg10[%c3, %c0_351, %c0_352] : memref<4x1x32xf32, #tpu.memory_space<vmem>>, vector<1x1x32xf32>
    %744 = vector.shape_cast %743 : vector<1x1x32xf32> to vector<1x32xf32>
    %c3_353 = arith.constant 3 : index
    %c0_354 = arith.constant 0 : index
    %c0_355 = arith.constant 0 : index
    %745 = vector.load %arg11[%c3_353, %c0_354, %c0_355] : memref<4x1x32xf32, #tpu.memory_space<vmem>>, vector<1x1x32xf32>
    %746 = vector.shape_cast %745 : vector<1x1x32xf32> to vector<1x32xf32>
    %cst_356 = arith.constant dense<0.000000e+00> : vector<8xf32>
    %747 = vector.multi_reduction <add>, %742, %cst_356 [1] : vector<8x32xf32> to vector<8xf32>
    %748 = vector.shape_cast %747 : vector<8xf32> to vector<8x1xf32>
    %cst_357 = arith.constant 3.200000e+01 : f32
    %749 = vector.broadcast %cst_357 : f32 to vector<8x1xf32>
    %750 = arith.divf %748, %749 : vector<8x1xf32>
    %751 = vector.broadcast %750 : vector<8x1xf32> to vector<8x32xf32>
    %752 = arith.subf %742, %751 : vector<8x32xf32>
    %753 = arith.mulf %752, %752 : vector<8x32xf32>
    %cst_358 = arith.constant dense<0.000000e+00> : vector<8xf32>
    %754 = vector.multi_reduction <add>, %753, %cst_358 [1] : vector<8x32xf32> to vector<8xf32>
    %755 = vector.shape_cast %754 : vector<8xf32> to vector<8x1xf32>
    %cst_359 = arith.constant 3.200000e+01 : f32
    %756 = vector.broadcast %cst_359 : f32 to vector<8x1xf32>
    %757 = arith.divf %755, %756 : vector<8x1xf32>
    %cst_360 = arith.constant 9.99999974E-6 : f32
    %758 = vector.broadcast %cst_360 : f32 to vector<8x1xf32>
    %759 = arith.addf %757, %758 : vector<8x1xf32>
    %760 = math.rsqrt %759 : vector<8x1xf32>
    %761 = vector.broadcast %760 : vector<8x1xf32> to vector<8x32xf32>
    %762 = arith.mulf %752, %761 : vector<8x32xf32>
    %763 = vector.broadcast %744 : vector<1x32xf32> to vector<8x32xf32>
    %764 = arith.mulf %762, %763 : vector<8x32xf32>
    %765 = vector.broadcast %746 : vector<1x32xf32> to vector<8x32xf32>
    %766 = arith.addf %764, %765 : vector<8x32xf32>
    %c3_361 = arith.constant 3 : index
    %c0_362 = arith.constant 0 : index
    %c0_363 = arith.constant 0 : index
    %767 = vector.load %arg12[%c3_361, %c0_362, %c0_363] : memref<4x32x32xf32, #tpu.memory_space<vmem>>, vector<1x32x32xf32>
    %768 = vector.shape_cast %767 : vector<1x32x32xf32> to vector<32x32xf32>
    %cst_364 = arith.constant dense<0.000000e+00> : vector<8x32xf32>
    %769 = tpu.matmul %766, %768, %cst_364 {dimension_numbers = #tpu.dot_dimension_numbers<[1], [0], [0], [1], [0, 0, 1, 1], [], []>} : vector<8x32xf32>, vector<32x32xf32>, vector<8x32xf32> -> vector<8x32xf32>
    %c3_365 = arith.constant 3 : index
    %c0_366 = arith.constant 0 : index
    %c0_367 = arith.constant 0 : index
    %770 = vector.load %arg13[%c3_365, %c0_366, %c0_367] : memref<4x1x32xf32, #tpu.memory_space<vmem>>, vector<1x1x32xf32>
    %771 = vector.shape_cast %770 : vector<1x1x32xf32> to vector<1x32xf32>
    %772 = vector.broadcast %771 : vector<1x32xf32> to vector<8x32xf32>
    %773 = arith.addf %769, %772 : vector<8x32xf32>
    %c3_368 = arith.constant 3 : index
    %c0_369 = arith.constant 0 : index
    %c0_370 = arith.constant 0 : index
    %774 = vector.load %arg14[%c3_368, %c0_369, %c0_370] : memref<4x32x32xf32, #tpu.memory_space<vmem>>, vector<1x32x32xf32>
    %775 = vector.shape_cast %774 : vector<1x32x32xf32> to vector<32x32xf32>
    %cst_371 = arith.constant dense<0.000000e+00> : vector<16x32xf32>
    %776 = tpu.matmul %33, %775, %cst_371 {dimension_numbers = #tpu.dot_dimension_numbers<[1], [0], [0], [1], [0, 0, 1, 1], [], []>} : vector<16x32xf32>, vector<32x32xf32>, vector<16x32xf32> -> vector<16x32xf32>
    %c3_372 = arith.constant 3 : index
    %c0_373 = arith.constant 0 : index
    %c0_374 = arith.constant 0 : index
    %777 = vector.load %arg15[%c3_372, %c0_373, %c0_374] : memref<4x1x32xf32, #tpu.memory_space<vmem>>, vector<1x1x32xf32>
    %778 = vector.shape_cast %777 : vector<1x1x32xf32> to vector<1x32xf32>
    %779 = vector.broadcast %778 : vector<1x32xf32> to vector<16x32xf32>
    %780 = arith.addf %776, %779 : vector<16x32xf32>
    %c3_375 = arith.constant 3 : index
    %c0_376 = arith.constant 0 : index
    %c0_377 = arith.constant 0 : index
    %781 = vector.load %arg16[%c3_375, %c0_376, %c0_377] : memref<4x32x32xf32, #tpu.memory_space<vmem>>, vector<1x32x32xf32>
    %782 = vector.shape_cast %781 : vector<1x32x32xf32> to vector<32x32xf32>
    %cst_378 = arith.constant dense<0.000000e+00> : vector<16x32xf32>
    %783 = tpu.matmul %33, %782, %cst_378 {dimension_numbers = #tpu.dot_dimension_numbers<[1], [0], [0], [1], [0, 0, 1, 1], [], []>} : vector<16x32xf32>, vector<32x32xf32>, vector<16x32xf32> -> vector<16x32xf32>
    %c3_379 = arith.constant 3 : index
    %c0_380 = arith.constant 0 : index
    %c0_381 = arith.constant 0 : index
    %784 = vector.load %arg17[%c3_379, %c0_380, %c0_381] : memref<4x1x32xf32, #tpu.memory_space<vmem>>, vector<1x1x32xf32>
    %785 = vector.shape_cast %784 : vector<1x1x32xf32> to vector<1x32xf32>
    %786 = vector.broadcast %785 : vector<1x32xf32> to vector<16x32xf32>
    %787 = arith.addf %783, %786 : vector<16x32xf32>
    %c3_382 = arith.constant 3 : index
    %c0_383 = arith.constant 0 : index
    %c0_384 = arith.constant 0 : index
    %788 = vector.load %arg18[%c3_382, %c0_383, %c0_384] : memref<4x32x32xf32, #tpu.memory_space<vmem>>, vector<1x32x32xf32>
    %789 = vector.shape_cast %788 : vector<1x32x32xf32> to vector<32x32xf32>
    %cst_385 = arith.constant 0.000000e+00 : f32
    %790 = vector.broadcast %cst_385 : f32 to vector<8x32xf32>
    %791 = vector.extract_strided_slice %773 {offsets = [0, 0], sizes = [8, 8], strides = [1, 1]} : vector<8x32xf32> to vector<8x8xf32>
    %792 = vector.extract_strided_slice %780 {offsets = [0, 0], sizes = [16, 8], strides = [1, 1]} : vector<16x32xf32> to vector<16x8xf32>
    %793 = vector.extract_strided_slice %787 {offsets = [0, 0], sizes = [16, 8], strides = [1, 1]} : vector<16x32xf32> to vector<16x8xf32>
    %cst_386 = arith.constant dense<0.000000e+00> : vector<8x16xf32>
    %794 = tpu.matmul %791, %792, %cst_386 {dimension_numbers = #tpu.dot_dimension_numbers<[1], [1], [0], [0], [0, 0, 1, 0], [], []>} : vector<8x8xf32>, vector<16x8xf32>, vector<8x16xf32> -> vector<8x16xf32>
    %cst_387 = arith.constant 0.353553385 : f32
    %795 = vector.broadcast %cst_387 : f32 to vector<8x16xf32>
    %796 = arith.mulf %794, %795 : vector<8x16xf32>
    %cst_388 = arith.constant 5.000000e-01 : f32
    %797 = vector.broadcast %cst_388 : f32 to vector<1x16xf32>
    %798 = arith.cmpf ogt, %3, %797 : vector<1x16xf32>
    %cst_389 = arith.constant -1.000000e+30 : f32
    %799 = vector.shape_cast %798 : vector<1x16xi1> to vector<1x16xi1>
    %800 = vector.broadcast %799 : vector<1x16xi1> to vector<8x16xi1>
    %801 = vector.broadcast %cst_389 : f32 to vector<8x16xf32>
    %802 = arith.select %800, %796, %801 : vector<8x16xi1>, vector<8x16xf32>
    %cst_390 = arith.constant dense<0xFF800000> : vector<8xf32>
    %803 = vector.multi_reduction <maximumf>, %802, %cst_390 [1] : vector<8x16xf32> to vector<8xf32>
    %804 = vector.shape_cast %803 : vector<8xf32> to vector<8x1xf32>
    %805 = vector.broadcast %804 : vector<8x1xf32> to vector<8x16xf32>
    %806 = arith.subf %802, %805 : vector<8x16xf32>
    %807 = math.exp %806 : vector<8x16xf32>
    %cst_391 = arith.constant dense<0.000000e+00> : vector<8xf32>
    %808 = vector.multi_reduction <add>, %807, %cst_391 [1] : vector<8x16xf32> to vector<8xf32>
    %809 = vector.shape_cast %808 : vector<8xf32> to vector<8x1xf32>
    %810 = tpu.reciprocal %809 {approx = true} : vector<8x1xf32> -> vector<8x1xf32>
    %811 = vector.broadcast %810 : vector<8x1xf32> to vector<8x16xf32>
    %812 = arith.mulf %807, %811 : vector<8x16xf32>
    %cst_392 = arith.constant dense<0.000000e+00> : vector<8x8xf32>
    %813 = tpu.matmul %812, %793, %cst_392 {dimension_numbers = #tpu.dot_dimension_numbers<[1], [0], [0], [1], [0, 0, 1, 1], [], []>} : vector<8x16xf32>, vector<16x8xf32>, vector<8x8xf32> -> vector<8x8xf32>
    %814 = vector.extract_strided_slice %789 {offsets = [0, 0], sizes = [8, 32], strides = [1, 1]} : vector<32x32xf32> to vector<8x32xf32>
    %cst_393 = arith.constant dense<0.000000e+00> : vector<8x32xf32>
    %815 = tpu.matmul %813, %814, %cst_393 {dimension_numbers = #tpu.dot_dimension_numbers<[1], [0], [0], [1], [0, 0, 1, 1], [], []>} : vector<8x8xf32>, vector<8x32xf32>, vector<8x32xf32> -> vector<8x32xf32>
    %816 = arith.addf %790, %815 : vector<8x32xf32>
    %817 = vector.extract_strided_slice %773 {offsets = [0, 8], sizes = [8, 8], strides = [1, 1]} : vector<8x32xf32> to vector<8x8xf32>
    %818 = vector.extract_strided_slice %780 {offsets = [0, 8], sizes = [16, 8], strides = [1, 1]} : vector<16x32xf32> to vector<16x8xf32>
    %819 = vector.extract_strided_slice %787 {offsets = [0, 8], sizes = [16, 8], strides = [1, 1]} : vector<16x32xf32> to vector<16x8xf32>
    %cst_394 = arith.constant dense<0.000000e+00> : vector<8x16xf32>
    %820 = tpu.matmul %817, %818, %cst_394 {dimension_numbers = #tpu.dot_dimension_numbers<[1], [1], [0], [0], [0, 0, 1, 0], [], []>} : vector<8x8xf32>, vector<16x8xf32>, vector<8x16xf32> -> vector<8x16xf32>
    %cst_395 = arith.constant 0.353553385 : f32
    %821 = vector.broadcast %cst_395 : f32 to vector<8x16xf32>
    %822 = arith.mulf %820, %821 : vector<8x16xf32>
    %cst_396 = arith.constant 5.000000e-01 : f32
    %823 = vector.broadcast %cst_396 : f32 to vector<1x16xf32>
    %824 = arith.cmpf ogt, %3, %823 : vector<1x16xf32>
    %cst_397 = arith.constant -1.000000e+30 : f32
    %825 = vector.shape_cast %824 : vector<1x16xi1> to vector<1x16xi1>
    %826 = vector.broadcast %825 : vector<1x16xi1> to vector<8x16xi1>
    %827 = vector.broadcast %cst_397 : f32 to vector<8x16xf32>
    %828 = arith.select %826, %822, %827 : vector<8x16xi1>, vector<8x16xf32>
    %cst_398 = arith.constant dense<0xFF800000> : vector<8xf32>
    %829 = vector.multi_reduction <maximumf>, %828, %cst_398 [1] : vector<8x16xf32> to vector<8xf32>
    %830 = vector.shape_cast %829 : vector<8xf32> to vector<8x1xf32>
    %831 = vector.broadcast %830 : vector<8x1xf32> to vector<8x16xf32>
    %832 = arith.subf %828, %831 : vector<8x16xf32>
    %833 = math.exp %832 : vector<8x16xf32>
    %cst_399 = arith.constant dense<0.000000e+00> : vector<8xf32>
    %834 = vector.multi_reduction <add>, %833, %cst_399 [1] : vector<8x16xf32> to vector<8xf32>
    %835 = vector.shape_cast %834 : vector<8xf32> to vector<8x1xf32>
    %836 = tpu.reciprocal %835 {approx = true} : vector<8x1xf32> -> vector<8x1xf32>
    %837 = vector.broadcast %836 : vector<8x1xf32> to vector<8x16xf32>
    %838 = arith.mulf %833, %837 : vector<8x16xf32>
    %cst_400 = arith.constant dense<0.000000e+00> : vector<8x8xf32>
    %839 = tpu.matmul %838, %819, %cst_400 {dimension_numbers = #tpu.dot_dimension_numbers<[1], [0], [0], [1], [0, 0, 1, 1], [], []>} : vector<8x16xf32>, vector<16x8xf32>, vector<8x8xf32> -> vector<8x8xf32>
    %840 = vector.extract_strided_slice %789 {offsets = [8, 0], sizes = [8, 32], strides = [1, 1]} : vector<32x32xf32> to vector<8x32xf32>
    %cst_401 = arith.constant dense<0.000000e+00> : vector<8x32xf32>
    %841 = tpu.matmul %839, %840, %cst_401 {dimension_numbers = #tpu.dot_dimension_numbers<[1], [0], [0], [1], [0, 0, 1, 1], [], []>} : vector<8x8xf32>, vector<8x32xf32>, vector<8x32xf32> -> vector<8x32xf32>
    %842 = arith.addf %816, %841 : vector<8x32xf32>
    %843 = vector.extract_strided_slice %773 {offsets = [0, 16], sizes = [8, 8], strides = [1, 1]} : vector<8x32xf32> to vector<8x8xf32>
    %844 = vector.extract_strided_slice %780 {offsets = [0, 16], sizes = [16, 8], strides = [1, 1]} : vector<16x32xf32> to vector<16x8xf32>
    %845 = vector.extract_strided_slice %787 {offsets = [0, 16], sizes = [16, 8], strides = [1, 1]} : vector<16x32xf32> to vector<16x8xf32>
    %cst_402 = arith.constant dense<0.000000e+00> : vector<8x16xf32>
    %846 = tpu.matmul %843, %844, %cst_402 {dimension_numbers = #tpu.dot_dimension_numbers<[1], [1], [0], [0], [0, 0, 1, 0], [], []>} : vector<8x8xf32>, vector<16x8xf32>, vector<8x16xf32> -> vector<8x16xf32>
    %cst_403 = arith.constant 0.353553385 : f32
    %847 = vector.broadcast %cst_403 : f32 to vector<8x16xf32>
    %848 = arith.mulf %846, %847 : vector<8x16xf32>
    %cst_404 = arith.constant 5.000000e-01 : f32
    %849 = vector.broadcast %cst_404 : f32 to vector<1x16xf32>
    %850 = arith.cmpf ogt, %3, %849 : vector<1x16xf32>
    %cst_405 = arith.constant -1.000000e+30 : f32
    %851 = vector.shape_cast %850 : vector<1x16xi1> to vector<1x16xi1>
    %852 = vector.broadcast %851 : vector<1x16xi1> to vector<8x16xi1>
    %853 = vector.broadcast %cst_405 : f32 to vector<8x16xf32>
    %854 = arith.select %852, %848, %853 : vector<8x16xi1>, vector<8x16xf32>
    %cst_406 = arith.constant dense<0xFF800000> : vector<8xf32>
    %855 = vector.multi_reduction <maximumf>, %854, %cst_406 [1] : vector<8x16xf32> to vector<8xf32>
    %856 = vector.shape_cast %855 : vector<8xf32> to vector<8x1xf32>
    %857 = vector.broadcast %856 : vector<8x1xf32> to vector<8x16xf32>
    %858 = arith.subf %854, %857 : vector<8x16xf32>
    %859 = math.exp %858 : vector<8x16xf32>
    %cst_407 = arith.constant dense<0.000000e+00> : vector<8xf32>
    %860 = vector.multi_reduction <add>, %859, %cst_407 [1] : vector<8x16xf32> to vector<8xf32>
    %861 = vector.shape_cast %860 : vector<8xf32> to vector<8x1xf32>
    %862 = tpu.reciprocal %861 {approx = true} : vector<8x1xf32> -> vector<8x1xf32>
    %863 = vector.broadcast %862 : vector<8x1xf32> to vector<8x16xf32>
    %864 = arith.mulf %859, %863 : vector<8x16xf32>
    %cst_408 = arith.constant dense<0.000000e+00> : vector<8x8xf32>
    %865 = tpu.matmul %864, %845, %cst_408 {dimension_numbers = #tpu.dot_dimension_numbers<[1], [0], [0], [1], [0, 0, 1, 1], [], []>} : vector<8x16xf32>, vector<16x8xf32>, vector<8x8xf32> -> vector<8x8xf32>
    %866 = vector.extract_strided_slice %789 {offsets = [16, 0], sizes = [8, 32], strides = [1, 1]} : vector<32x32xf32> to vector<8x32xf32>
    %cst_409 = arith.constant dense<0.000000e+00> : vector<8x32xf32>
    %867 = tpu.matmul %865, %866, %cst_409 {dimension_numbers = #tpu.dot_dimension_numbers<[1], [0], [0], [1], [0, 0, 1, 1], [], []>} : vector<8x8xf32>, vector<8x32xf32>, vector<8x32xf32> -> vector<8x32xf32>
    %868 = arith.addf %842, %867 : vector<8x32xf32>
    %869 = vector.extract_strided_slice %773 {offsets = [0, 24], sizes = [8, 8], strides = [1, 1]} : vector<8x32xf32> to vector<8x8xf32>
    %870 = vector.extract_strided_slice %780 {offsets = [0, 24], sizes = [16, 8], strides = [1, 1]} : vector<16x32xf32> to vector<16x8xf32>
    %871 = vector.extract_strided_slice %787 {offsets = [0, 24], sizes = [16, 8], strides = [1, 1]} : vector<16x32xf32> to vector<16x8xf32>
    %cst_410 = arith.constant dense<0.000000e+00> : vector<8x16xf32>
    %872 = tpu.matmul %869, %870, %cst_410 {dimension_numbers = #tpu.dot_dimension_numbers<[1], [1], [0], [0], [0, 0, 1, 0], [], []>} : vector<8x8xf32>, vector<16x8xf32>, vector<8x16xf32> -> vector<8x16xf32>
    %cst_411 = arith.constant 0.353553385 : f32
    %873 = vector.broadcast %cst_411 : f32 to vector<8x16xf32>
    %874 = arith.mulf %872, %873 : vector<8x16xf32>
    %cst_412 = arith.constant 5.000000e-01 : f32
    %875 = vector.broadcast %cst_412 : f32 to vector<1x16xf32>
    %876 = arith.cmpf ogt, %3, %875 : vector<1x16xf32>
    %cst_413 = arith.constant -1.000000e+30 : f32
    %877 = vector.shape_cast %876 : vector<1x16xi1> to vector<1x16xi1>
    %878 = vector.broadcast %877 : vector<1x16xi1> to vector<8x16xi1>
    %879 = vector.broadcast %cst_413 : f32 to vector<8x16xf32>
    %880 = arith.select %878, %874, %879 : vector<8x16xi1>, vector<8x16xf32>
    %cst_414 = arith.constant dense<0xFF800000> : vector<8xf32>
    %881 = vector.multi_reduction <maximumf>, %880, %cst_414 [1] : vector<8x16xf32> to vector<8xf32>
    %882 = vector.shape_cast %881 : vector<8xf32> to vector<8x1xf32>
    %883 = vector.broadcast %882 : vector<8x1xf32> to vector<8x16xf32>
    %884 = arith.subf %880, %883 : vector<8x16xf32>
    %885 = math.exp %884 : vector<8x16xf32>
    %cst_415 = arith.constant dense<0.000000e+00> : vector<8xf32>
    %886 = vector.multi_reduction <add>, %885, %cst_415 [1] : vector<8x16xf32> to vector<8xf32>
    %887 = vector.shape_cast %886 : vector<8xf32> to vector<8x1xf32>
    %888 = tpu.reciprocal %887 {approx = true} : vector<8x1xf32> -> vector<8x1xf32>
    %889 = vector.broadcast %888 : vector<8x1xf32> to vector<8x16xf32>
    %890 = arith.mulf %885, %889 : vector<8x16xf32>
    %cst_416 = arith.constant dense<0.000000e+00> : vector<8x8xf32>
    %891 = tpu.matmul %890, %871, %cst_416 {dimension_numbers = #tpu.dot_dimension_numbers<[1], [0], [0], [1], [0, 0, 1, 1], [], []>} : vector<8x16xf32>, vector<16x8xf32>, vector<8x8xf32> -> vector<8x8xf32>
    %892 = vector.extract_strided_slice %789 {offsets = [24, 0], sizes = [8, 32], strides = [1, 1]} : vector<32x32xf32> to vector<8x32xf32>
    %cst_417 = arith.constant dense<0.000000e+00> : vector<8x32xf32>
    %893 = tpu.matmul %891, %892, %cst_417 {dimension_numbers = #tpu.dot_dimension_numbers<[1], [0], [0], [1], [0, 0, 1, 1], [], []>} : vector<8x8xf32>, vector<8x32xf32>, vector<8x32xf32> -> vector<8x32xf32>
    %894 = arith.addf %868, %893 : vector<8x32xf32>
    %895 = arith.addf %742, %894 : vector<8x32xf32>
    %c3_418 = arith.constant 3 : index
    %c0_419 = arith.constant 0 : index
    %c0_420 = arith.constant 0 : index
    %896 = vector.load %arg19[%c3_418, %c0_419, %c0_420] : memref<4x1x32xf32, #tpu.memory_space<vmem>>, vector<1x1x32xf32>
    %897 = vector.shape_cast %896 : vector<1x1x32xf32> to vector<1x32xf32>
    %898 = vector.broadcast %897 : vector<1x32xf32> to vector<8x32xf32>
    %899 = arith.addf %895, %898 : vector<8x32xf32>
    %c3_421 = arith.constant 3 : index
    %c0_422 = arith.constant 0 : index
    %c0_423 = arith.constant 0 : index
    %900 = vector.load %arg20[%c3_421, %c0_422, %c0_423] : memref<4x1x32xf32, #tpu.memory_space<vmem>>, vector<1x1x32xf32>
    %901 = vector.shape_cast %900 : vector<1x1x32xf32> to vector<1x32xf32>
    %c3_424 = arith.constant 3 : index
    %c0_425 = arith.constant 0 : index
    %c0_426 = arith.constant 0 : index
    %902 = vector.load %arg21[%c3_424, %c0_425, %c0_426] : memref<4x1x32xf32, #tpu.memory_space<vmem>>, vector<1x1x32xf32>
    %903 = vector.shape_cast %902 : vector<1x1x32xf32> to vector<1x32xf32>
    %cst_427 = arith.constant dense<0.000000e+00> : vector<8xf32>
    %904 = vector.multi_reduction <add>, %899, %cst_427 [1] : vector<8x32xf32> to vector<8xf32>
    %905 = vector.shape_cast %904 : vector<8xf32> to vector<8x1xf32>
    %cst_428 = arith.constant 3.200000e+01 : f32
    %906 = vector.broadcast %cst_428 : f32 to vector<8x1xf32>
    %907 = arith.divf %905, %906 : vector<8x1xf32>
    %908 = vector.broadcast %907 : vector<8x1xf32> to vector<8x32xf32>
    %909 = arith.subf %899, %908 : vector<8x32xf32>
    %910 = arith.mulf %909, %909 : vector<8x32xf32>
    %cst_429 = arith.constant dense<0.000000e+00> : vector<8xf32>
    %911 = vector.multi_reduction <add>, %910, %cst_429 [1] : vector<8x32xf32> to vector<8xf32>
    %912 = vector.shape_cast %911 : vector<8xf32> to vector<8x1xf32>
    %cst_430 = arith.constant 3.200000e+01 : f32
    %913 = vector.broadcast %cst_430 : f32 to vector<8x1xf32>
    %914 = arith.divf %912, %913 : vector<8x1xf32>
    %cst_431 = arith.constant 9.99999974E-6 : f32
    %915 = vector.broadcast %cst_431 : f32 to vector<8x1xf32>
    %916 = arith.addf %914, %915 : vector<8x1xf32>
    %917 = math.rsqrt %916 : vector<8x1xf32>
    %918 = vector.broadcast %917 : vector<8x1xf32> to vector<8x32xf32>
    %919 = arith.mulf %909, %918 : vector<8x32xf32>
    %920 = vector.broadcast %901 : vector<1x32xf32> to vector<8x32xf32>
    %921 = arith.mulf %919, %920 : vector<8x32xf32>
    %922 = vector.broadcast %903 : vector<1x32xf32> to vector<8x32xf32>
    %923 = arith.addf %921, %922 : vector<8x32xf32>
    %c3_432 = arith.constant 3 : index
    %c0_433 = arith.constant 0 : index
    %c0_434 = arith.constant 0 : index
    %924 = vector.load %arg22[%c3_432, %c0_433, %c0_434] : memref<4x32x64xf32, #tpu.memory_space<vmem>>, vector<1x32x64xf32>
    %925 = vector.shape_cast %924 : vector<1x32x64xf32> to vector<32x64xf32>
    %cst_435 = arith.constant dense<0.000000e+00> : vector<8x64xf32>
    %926 = tpu.matmul %923, %925, %cst_435 {dimension_numbers = #tpu.dot_dimension_numbers<[1], [0], [0], [1], [0, 0, 1, 1], [], []>} : vector<8x32xf32>, vector<32x64xf32>, vector<8x64xf32> -> vector<8x64xf32>
    %c3_436 = arith.constant 3 : index
    %c0_437 = arith.constant 0 : index
    %c0_438 = arith.constant 0 : index
    %927 = vector.load %arg23[%c3_436, %c0_437, %c0_438] : memref<4x1x64xf32, #tpu.memory_space<vmem>>, vector<1x1x64xf32>
    %928 = vector.shape_cast %927 : vector<1x1x64xf32> to vector<1x64xf32>
    %929 = vector.broadcast %928 : vector<1x64xf32> to vector<8x64xf32>
    %930 = arith.addf %926, %929 : vector<8x64xf32>
    %cst_439 = arith.constant 0.707106769 : f32
    %931 = vector.broadcast %cst_439 : f32 to vector<8x64xf32>
    %932 = arith.mulf %930, %931 : vector<8x64xf32>
    %933 = math.absf %932 : vector<8x64xf32>
    %cst_440 = arith.constant 0.327591091 : f32
    %934 = vector.broadcast %cst_440 : f32 to vector<8x64xf32>
    %935 = arith.mulf %934, %933 : vector<8x64xf32>
    %cst_441 = arith.constant 1.000000e+00 : f32
    %936 = vector.broadcast %cst_441 : f32 to vector<8x64xf32>
    %937 = arith.addf %936, %935 : vector<8x64xf32>
    %cst_442 = arith.constant 1.000000e+00 : f32
    %938 = vector.broadcast %cst_442 : f32 to vector<8x64xf32>
    %939 = arith.divf %938, %937 : vector<8x64xf32>
    %cst_443 = arith.constant 1.06140542 : f32
    %940 = vector.broadcast %cst_443 : f32 to vector<8x64xf32>
    %941 = arith.mulf %940, %939 : vector<8x64xf32>
    %cst_444 = arith.constant -1.45315206 : f32
    %942 = vector.broadcast %cst_444 : f32 to vector<8x64xf32>
    %943 = arith.addf %941, %942 : vector<8x64xf32>
    %944 = arith.mulf %943, %939 : vector<8x64xf32>
    %cst_445 = arith.constant 1.42141378 : f32
    %945 = vector.broadcast %cst_445 : f32 to vector<8x64xf32>
    %946 = arith.addf %944, %945 : vector<8x64xf32>
    %947 = arith.mulf %946, %939 : vector<8x64xf32>
    %cst_446 = arith.constant -0.284496725 : f32
    %948 = vector.broadcast %cst_446 : f32 to vector<8x64xf32>
    %949 = arith.addf %947, %948 : vector<8x64xf32>
    %950 = arith.mulf %949, %939 : vector<8x64xf32>
    %cst_447 = arith.constant 0.254829586 : f32
    %951 = vector.broadcast %cst_447 : f32 to vector<8x64xf32>
    %952 = arith.addf %950, %951 : vector<8x64xf32>
    %953 = arith.mulf %952, %939 : vector<8x64xf32>
    %cst_448 = arith.constant 0.000000e+00 : f32
    %954 = vector.broadcast %cst_448 : f32 to vector<8x64xf32>
    %955 = arith.subf %954, %933 : vector<8x64xf32>
    %956 = arith.mulf %955, %933 : vector<8x64xf32>
    %957 = math.exp %956 : vector<8x64xf32>
    %958 = arith.mulf %953, %957 : vector<8x64xf32>
    %cst_449 = arith.constant 1.000000e+00 : f32
    %959 = vector.broadcast %cst_449 : f32 to vector<8x64xf32>
    %960 = arith.subf %959, %958 : vector<8x64xf32>
    %cst_450 = arith.constant 0.000000e+00 : f32
    %961 = vector.broadcast %cst_450 : f32 to vector<8x64xf32>
    %962 = arith.cmpf oge, %932, %961 : vector<8x64xf32>
    %cst_451 = arith.constant 0.000000e+00 : f32
    %963 = vector.broadcast %cst_451 : f32 to vector<8x64xf32>
    %964 = arith.subf %963, %960 : vector<8x64xf32>
    %965 = arith.select %962, %960, %964 : vector<8x64xi1>, vector<8x64xf32>
    %cst_452 = arith.constant 5.000000e-01 : f32
    %966 = vector.broadcast %cst_452 : f32 to vector<8x64xf32>
    %967 = arith.mulf %966, %930 : vector<8x64xf32>
    %cst_453 = arith.constant 1.000000e+00 : f32
    %968 = vector.broadcast %cst_453 : f32 to vector<8x64xf32>
    %969 = arith.addf %968, %965 : vector<8x64xf32>
    %970 = arith.mulf %967, %969 : vector<8x64xf32>
    %c3_454 = arith.constant 3 : index
    %c0_455 = arith.constant 0 : index
    %c0_456 = arith.constant 0 : index
    %971 = vector.load %arg24[%c3_454, %c0_455, %c0_456] : memref<4x64x32xf32, #tpu.memory_space<vmem>>, vector<1x64x32xf32>
    %972 = vector.shape_cast %971 : vector<1x64x32xf32> to vector<64x32xf32>
    %cst_457 = arith.constant dense<0.000000e+00> : vector<8x32xf32>
    %973 = tpu.matmul %970, %972, %cst_457 {dimension_numbers = #tpu.dot_dimension_numbers<[1], [0], [0], [1], [0, 0, 1, 1], [], []>} : vector<8x64xf32>, vector<64x32xf32>, vector<8x32xf32> -> vector<8x32xf32>
    %974 = arith.addf %899, %973 : vector<8x32xf32>
    %c3_458 = arith.constant 3 : index
    %c0_459 = arith.constant 0 : index
    %c0_460 = arith.constant 0 : index
    %975 = vector.load %arg25[%c3_458, %c0_459, %c0_460] : memref<4x1x32xf32, #tpu.memory_space<vmem>>, vector<1x1x32xf32>
    %976 = vector.shape_cast %975 : vector<1x1x32xf32> to vector<1x32xf32>
    %977 = vector.broadcast %976 : vector<1x32xf32> to vector<8x32xf32>
    %978 = arith.addf %974, %977 : vector<8x32xf32>
    %c0_461 = arith.constant 0 : index
    %c0_462 = arith.constant 0 : index
    %979 = vector.load %arg26[%c0_461, %c0_462] : memref<32x6xf32, #tpu.memory_space<vmem>>, vector<32x6xf32>
    %cst_463 = arith.constant dense<0.000000e+00> : vector<8x6xf32>
    %980 = tpu.matmul %978, %979, %cst_463 {dimension_numbers = #tpu.dot_dimension_numbers<[1], [0], [0], [1], [0, 0, 1, 1], [], []>} : vector<8x32xf32>, vector<32x6xf32>, vector<8x6xf32> -> vector<8x6xf32>
    %c0_464 = arith.constant 0 : index
    %c0_465 = arith.constant 0 : index
    %981 = vector.load %arg27[%c0_464, %c0_465] : memref<1x6xf32, #tpu.memory_space<vmem>>, vector<1x6xf32>
    %982 = vector.broadcast %981 : vector<1x6xf32> to vector<8x6xf32>
    %983 = arith.addf %980, %982 : vector<8x6xf32>
    %c0_466 = arith.constant 0 : index
    %c0_467 = arith.constant 0 : index
    %c0_468 = arith.constant 0 : index
    %984 = vector.load %arg30[%c0_466, %c0_467, %c0_468] : memref<1x8x6xf32, #tpu.memory_space<vmem>>, vector<1x8x6xf32>
    %985 = vector.shape_cast %984 : vector<1x8x6xf32> to vector<8x6xf32>
    %986 = vector.shape_cast %983 : vector<8x6xf32> to vector<1x8x6xf32>
    tpu.vector_store %arg30[%c0_466, %c0_467, %c0_468], %986 {strides = array<i32>} : memref<1x8x6xf32, #tpu.memory_space<vmem>>, vector<1x8x6xf32>,
    %c0_469 = arith.constant 0 : index
    %c0_470 = arith.constant 0 : index
    %c0_471 = arith.constant 0 : index
    %987 = vector.load %arg28[%c0_469, %c0_470, %c0_471] : memref<3x32x32xf32, #tpu.memory_space<vmem>>, vector<1x32x32xf32>
    %988 = vector.shape_cast %987 : vector<1x32x32xf32> to vector<32x32xf32>
    %cst_472 = arith.constant dense<0.000000e+00> : vector<8x32xf32>
    %989 = tpu.matmul %978, %988, %cst_472 {dimension_numbers = #tpu.dot_dimension_numbers<[1], [0], [0], [1], [0, 0, 1, 1], [], []>} : vector<8x32xf32>, vector<32x32xf32>, vector<8x32xf32> -> vector<8x32xf32>
    %c0_473 = arith.constant 0 : index
    %c0_474 = arith.constant 0 : index
    %c0_475 = arith.constant 0 : index
    %990 = vector.load %arg29[%c0_473, %c0_474, %c0_475] : memref<3x1x32xf32, #tpu.memory_space<vmem>>, vector<1x1x32xf32>
    %991 = vector.shape_cast %990 : vector<1x1x32xf32> to vector<1x32xf32>
    %992 = vector.broadcast %991 : vector<1x32xf32> to vector<8x32xf32>
    %993 = arith.addf %989, %992 : vector<8x32xf32>
    %cst_476 = arith.constant 0.000000e+00 : f32
    %994 = vector.broadcast %cst_476 : f32 to vector<8x32xf32>
    %995 = arith.maximumf %993, %994 : vector<8x32xf32>
    %c1_477 = arith.constant 1 : index
    %c0_478 = arith.constant 0 : index
    %c0_479 = arith.constant 0 : index
    %996 = vector.load %arg28[%c1_477, %c0_478, %c0_479] : memref<3x32x32xf32, #tpu.memory_space<vmem>>, vector<1x32x32xf32>
    %997 = vector.shape_cast %996 : vector<1x32x32xf32> to vector<32x32xf32>
    %cst_480 = arith.constant dense<0.000000e+00> : vector<8x32xf32>
    %998 = tpu.matmul %995, %997, %cst_480 {dimension_numbers = #tpu.dot_dimension_numbers<[1], [0], [0], [1], [0, 0, 1, 1], [], []>} : vector<8x32xf32>, vector<32x32xf32>, vector<8x32xf32> -> vector<8x32xf32>
    %c1_481 = arith.constant 1 : index
    %c0_482 = arith.constant 0 : index
    %c0_483 = arith.constant 0 : index
    %999 = vector.load %arg29[%c1_481, %c0_482, %c0_483] : memref<3x1x32xf32, #tpu.memory_space<vmem>>, vector<1x1x32xf32>
    %1000 = vector.shape_cast %999 : vector<1x1x32xf32> to vector<1x32xf32>
    %1001 = vector.broadcast %1000 : vector<1x32xf32> to vector<8x32xf32>
    %1002 = arith.addf %998, %1001 : vector<8x32xf32>
    %cst_484 = arith.constant 0.000000e+00 : f32
    %1003 = vector.broadcast %cst_484 : f32 to vector<8x32xf32>
    %1004 = arith.maximumf %1002, %1003 : vector<8x32xf32>
    %c2_485 = arith.constant 2 : index
    %c0_486 = arith.constant 0 : index
    %c0_487 = arith.constant 0 : index
    %1005 = vector.load %arg28[%c2_485, %c0_486, %c0_487] : memref<3x32x32xf32, #tpu.memory_space<vmem>>, vector<1x32x32xf32>
    %1006 = vector.shape_cast %1005 : vector<1x32x32xf32> to vector<32x32xf32>
    %cst_488 = arith.constant dense<0.000000e+00> : vector<8x32xf32>
    %1007 = tpu.matmul %1004, %1006, %cst_488 {dimension_numbers = #tpu.dot_dimension_numbers<[1], [0], [0], [1], [0, 0, 1, 1], [], []>} : vector<8x32xf32>, vector<32x32xf32>, vector<8x32xf32> -> vector<8x32xf32>
    %c2_489 = arith.constant 2 : index
    %c0_490 = arith.constant 0 : index
    %c0_491 = arith.constant 0 : index
    %1008 = vector.load %arg29[%c2_489, %c0_490, %c0_491] : memref<3x1x32xf32, #tpu.memory_space<vmem>>, vector<1x1x32xf32>
    %1009 = vector.shape_cast %1008 : vector<1x1x32xf32> to vector<1x32xf32>
    %1010 = vector.broadcast %1009 : vector<1x32xf32> to vector<8x32xf32>
    %1011 = arith.addf %1007, %1010 : vector<8x32xf32>
    %c0_492 = arith.constant 0 : index
    %c0_493 = arith.constant 0 : index
    %c0_494 = arith.constant 0 : index
    %1012 = vector.load %arg3[%c0_492, %c0_493, %c0_494] : memref<1x32x16xf32, #tpu.memory_space<vmem>>, vector<1x32x16xf32>
    %1013 = vector.shape_cast %1012 : vector<1x32x16xf32> to vector<32x16xf32>
    %cst_495 = arith.constant dense<0.000000e+00> : vector<8x16xf32>
    %1014 = tpu.matmul %1011, %1013, %cst_495 {dimension_numbers = #tpu.dot_dimension_numbers<[1], [0], [0], [1], [0, 0, 1, 1], [], []>} : vector<8x32xf32>, vector<32x16xf32>, vector<8x16xf32> -> vector<8x16xf32>
    %c0_496 = arith.constant 0 : index
    %c0_497 = arith.constant 0 : index
    %c0_498 = arith.constant 0 : index
    %1015 = vector.load %arg4[%c0_496, %c0_497, %c0_498] : memref<1x1x16xf32, #tpu.memory_space<vmem>>, vector<1x1x16xf32>
    %1016 = vector.shape_cast %1015 : vector<1x1x16xf32> to vector<1x16xf32>
    %cst_499 = arith.constant 5.000000e-01 : f32
    %1017 = vector.broadcast %cst_499 : f32 to vector<1x16xf32>
    %1018 = arith.cmpf ogt, %1016, %1017 : vector<1x16xf32>
    %cst_500 = arith.constant -1.000000e+01 : f32
    %1019 = vector.shape_cast %1018 : vector<1x16xi1> to vector<1x16xi1>
    %1020 = vector.broadcast %1019 : vector<1x16xi1> to vector<8x16xi1>
    %1021 = vector.broadcast %cst_500 : f32 to vector<8x16xf32>
    %1022 = arith.select %1020, %1014, %1021 : vector<8x16xi1>, vector<8x16xf32>
    %c0_501 = arith.constant 0 : index
    %c0_502 = arith.constant 0 : index
    %c0_503 = arith.constant 0 : index
    %1023 = vector.load %arg31[%c0_501, %c0_502, %c0_503] : memref<1x8x16xf32, #tpu.memory_space<vmem>>, vector<1x8x16xf32>
    %1024 = vector.shape_cast %1023 : vector<1x8x16xf32> to vector<8x16xf32>
    %1025 = vector.shape_cast %1022 : vector<8x16xf32> to vector<1x8x16xf32>
    tpu.vector_store %arg31[%c0_501, %c0_502, %c0_503], %1025 {strides = array<i32>} : memref<1x8x16xf32, #tpu.memory_space<vmem>>, vector<1x8x16xf32>,
    return
  }
  func.func @transform_0(%arg0: i32) -> (i32, i32, i32) {
    %c0_i32 = arith.constant 0 : i32
    %c0_i32_0 = arith.constant 0 : i32
    %c0_i32_1 = arith.constant 0 : i32
    return %arg0, %c0_i32, %c0_i32_0 : i32, i32, i32
  }
  func.func @transform_1(%arg0: i32) -> (i32, i32, i32) {
    %c0_i32 = arith.constant 0 : i32
    %c0_i32_0 = arith.constant 0 : i32
    %c0_i32_1 = arith.constant 0 : i32
    return %arg0, %c0_i32, %c0_i32_0 : i32, i32, i32
  }
  func.func @transform_2(%arg0: i32) -> (i32, i32, i32) {
    %c0_i32 = arith.constant 0 : i32
    %c0_i32_0 = arith.constant 0 : i32
    %c0_i32_1 = arith.constant 0 : i32
    return %arg0, %c0_i32, %c0_i32_0 : i32, i32, i32
  }
  func.func @transform_3(%arg0: i32) -> (i32, i32, i32) {
    %c0_i32 = arith.constant 0 : i32
    %c0_i32_0 = arith.constant 0 : i32
    %c0_i32_1 = arith.constant 0 : i32
    return %arg0, %c0_i32, %c0_i32_0 : i32, i32, i32
  }
  func.func @transform_4(%arg0: i32) -> (i32, i32) {
    %c0_i32 = arith.constant 0 : i32
    %c0_i32_0 = arith.constant 0 : i32
    %c0_i32_1 = arith.constant 0 : i32
    return %c0_i32, %c0_i32_0 : i32, i32
  }
  func.func @transform_5(%arg0: i32) -> (i32, i32) {
    %c0_i32 = arith.constant 0 : i32
    %c0_i32_0 = arith.constant 0 : i32
    %c0_i32_1 = arith.constant 0 : i32
    return %c0_i32, %c0_i32_0 : i32, i32
  }
  func.func @transform_6(%arg0: i32) -> (i32, i32) {
    %c0_i32 = arith.constant 0 : i32
    %c0_i32_0 = arith.constant 0 : i32
    %c0_i32_1 = arith.constant 0 : i32
    return %c0_i32, %c0_i32_0 : i32, i32
  }
  func.func @transform_7(%arg0: i32) -> (i32, i32) {
    %c0_i32 = arith.constant 0 : i32
    %c0_i32_0 = arith.constant 0 : i32
    %c0_i32_1 = arith.constant 0 : i32
    return %c0_i32, %c0_i32_0 : i32, i32
  }
  func.func @transform_8(%arg0: i32) -> (i32, i32) {
    %c0_i32 = arith.constant 0 : i32
    %c0_i32_0 = arith.constant 0 : i32
    %c0_i32_1 = arith.constant 0 : i32
    return %c0_i32, %c0_i32_0 : i32, i32
  }
  func.func @transform_9(%arg0: i32) -> (i32, i32, i32) {
    %c0_i32 = arith.constant 0 : i32
    %c0_i32_0 = arith.constant 0 : i32
    %c0_i32_1 = arith.constant 0 : i32
    %c0_i32_2 = arith.constant 0 : i32
    return %c0_i32, %c0_i32_0, %c0_i32_1 : i32, i32, i32
  }
  func.func @transform_10(%arg0: i32) -> (i32, i32, i32) {
    %c0_i32 = arith.constant 0 : i32
    %c0_i32_0 = arith.constant 0 : i32
    %c0_i32_1 = arith.constant 0 : i32
    %c0_i32_2 = arith.constant 0 : i32
    return %c0_i32, %c0_i32_0, %c0_i32_1 : i32, i32, i32
  }
  func.func @transform_11(%arg0: i32) -> (i32, i32, i32) {
    %c0_i32 = arith.constant 0 : i32
    %c0_i32_0 = arith.constant 0 : i32
    %c0_i32_1 = arith.constant 0 : i32
    %c0_i32_2 = arith.constant 0 : i32
    return %c0_i32, %c0_i32_0, %c0_i32_1 : i32, i32, i32
  }
  func.func @transform_12(%arg0: i32) -> (i32, i32, i32) {
    %c0_i32 = arith.constant 0 : i32
    %c0_i32_0 = arith.constant 0 : i32
    %c0_i32_1 = arith.constant 0 : i32
    %c0_i32_2 = arith.constant 0 : i32
    return %c0_i32, %c0_i32_0, %c0_i32_1 : i32, i32, i32
  }
  func.func @transform_13(%arg0: i32) -> (i32, i32, i32) {
    %c0_i32 = arith.constant 0 : i32
    %c0_i32_0 = arith.constant 0 : i32
    %c0_i32_1 = arith.constant 0 : i32
    %c0_i32_2 = arith.constant 0 : i32
    return %c0_i32, %c0_i32_0, %c0_i32_1 : i32, i32, i32
  }
  func.func @transform_14(%arg0: i32) -> (i32, i32, i32) {
    %c0_i32 = arith.constant 0 : i32
    %c0_i32_0 = arith.constant 0 : i32
    %c0_i32_1 = arith.constant 0 : i32
    %c0_i32_2 = arith.constant 0 : i32
    return %c0_i32, %c0_i32_0, %c0_i32_1 : i32, i32, i32
  }
  func.func @transform_15(%arg0: i32) -> (i32, i32, i32) {
    %c0_i32 = arith.constant 0 : i32
    %c0_i32_0 = arith.constant 0 : i32
    %c0_i32_1 = arith.constant 0 : i32
    %c0_i32_2 = arith.constant 0 : i32
    return %c0_i32, %c0_i32_0, %c0_i32_1 : i32, i32, i32
  }
  func.func @transform_16(%arg0: i32) -> (i32, i32, i32) {
    %c0_i32 = arith.constant 0 : i32
    %c0_i32_0 = arith.constant 0 : i32
    %c0_i32_1 = arith.constant 0 : i32
    %c0_i32_2 = arith.constant 0 : i32
    return %c0_i32, %c0_i32_0, %c0_i32_1 : i32, i32, i32
  }
  func.func @transform_17(%arg0: i32) -> (i32, i32, i32) {
    %c0_i32 = arith.constant 0 : i32
    %c0_i32_0 = arith.constant 0 : i32
    %c0_i32_1 = arith.constant 0 : i32
    %c0_i32_2 = arith.constant 0 : i32
    return %c0_i32, %c0_i32_0, %c0_i32_1 : i32, i32, i32
  }
  func.func @transform_18(%arg0: i32) -> (i32, i32, i32) {
    %c0_i32 = arith.constant 0 : i32
    %c0_i32_0 = arith.constant 0 : i32
    %c0_i32_1 = arith.constant 0 : i32
    %c0_i32_2 = arith.constant 0 : i32
    return %c0_i32, %c0_i32_0, %c0_i32_1 : i32, i32, i32
  }
  func.func @transform_19(%arg0: i32) -> (i32, i32, i32) {
    %c0_i32 = arith.constant 0 : i32
    %c0_i32_0 = arith.constant 0 : i32
    %c0_i32_1 = arith.constant 0 : i32
    %c0_i32_2 = arith.constant 0 : i32
    return %c0_i32, %c0_i32_0, %c0_i32_1 : i32, i32, i32
  }
  func.func @transform_20(%arg0: i32) -> (i32, i32, i32) {
    %c0_i32 = arith.constant 0 : i32
    %c0_i32_0 = arith.constant 0 : i32
    %c0_i32_1 = arith.constant 0 : i32
    %c0_i32_2 = arith.constant 0 : i32
    return %c0_i32, %c0_i32_0, %c0_i32_1 : i32, i32, i32
  }
  func.func @transform_21(%arg0: i32) -> (i32, i32, i32) {
    %c0_i32 = arith.constant 0 : i32
    %c0_i32_0 = arith.constant 0 : i32
    %c0_i32_1 = arith.constant 0 : i32
    %c0_i32_2 = arith.constant 0 : i32
    return %c0_i32, %c0_i32_0, %c0_i32_1 : i32, i32, i32
  }
  func.func @transform_22(%arg0: i32) -> (i32, i32, i32) {
    %c0_i32 = arith.constant 0 : i32
    %c0_i32_0 = arith.constant 0 : i32
    %c0_i32_1 = arith.constant 0 : i32
    %c0_i32_2 = arith.constant 0 : i32
    return %c0_i32, %c0_i32_0, %c0_i32_1 : i32, i32, i32
  }
  func.func @transform_23(%arg0: i32) -> (i32, i32, i32) {
    %c0_i32 = arith.constant 0 : i32
    %c0_i32_0 = arith.constant 0 : i32
    %c0_i32_1 = arith.constant 0 : i32
    %c0_i32_2 = arith.constant 0 : i32
    return %c0_i32, %c0_i32_0, %c0_i32_1 : i32, i32, i32
  }
  func.func @transform_24(%arg0: i32) -> (i32, i32, i32) {
    %c0_i32 = arith.constant 0 : i32
    %c0_i32_0 = arith.constant 0 : i32
    %c0_i32_1 = arith.constant 0 : i32
    %c0_i32_2 = arith.constant 0 : i32
    return %c0_i32, %c0_i32_0, %c0_i32_1 : i32, i32, i32
  }
  func.func @transform_25(%arg0: i32) -> (i32, i32) {
    %c0_i32 = arith.constant 0 : i32
    %c0_i32_0 = arith.constant 0 : i32
    %c0_i32_1 = arith.constant 0 : i32
    return %c0_i32, %c0_i32_0 : i32, i32
  }
  func.func @transform_26(%arg0: i32) -> (i32, i32) {
    %c0_i32 = arith.constant 0 : i32
    %c0_i32_0 = arith.constant 0 : i32
    %c0_i32_1 = arith.constant 0 : i32
    return %c0_i32, %c0_i32_0 : i32, i32
  }
  func.func @transform_27(%arg0: i32) -> (i32, i32, i32) {
    %c0_i32 = arith.constant 0 : i32
    %c0_i32_0 = arith.constant 0 : i32
    %c0_i32_1 = arith.constant 0 : i32
    %c0_i32_2 = arith.constant 0 : i32
    return %c0_i32, %c0_i32_0, %c0_i32_1 : i32, i32, i32
  }
  func.func @transform_28(%arg0: i32) -> (i32, i32, i32) {
    %c0_i32 = arith.constant 0 : i32
    %c0_i32_0 = arith.constant 0 : i32
    %c0_i32_1 = arith.constant 0 : i32
    %c0_i32_2 = arith.constant 0 : i32
    return %c0_i32, %c0_i32_0, %c0_i32_1 : i32, i32, i32
  }
  func.func @transform_29(%arg0: i32) -> (i32, i32, i32) {
    %c0_i32 = arith.constant 0 : i32
    %c0_i32_0 = arith.constant 0 : i32
    %c0_i32_1 = arith.constant 0 : i32
    return %arg0, %c0_i32, %c0_i32_0 : i32, i32, i32
  }
  func.func @transform_30(%arg0: i32) -> (i32, i32, i32) {
    %c0_i32 = arith.constant 0 : i32
    %c0_i32_0 = arith.constant 0 : i32
    %c0_i32_1 = arith.constant 0 : i32
    return %arg0, %c0_i32, %c0_i32_0 : i32, i32, i32
  }
}

</mosaic_0001>

<llo_original>
// kernel: masked_transformer_predictor.1
$region0: #{masked_transformer_predictor.1}
  #allocation0 [shape = 'u32[]', space=smem, size = 0x4, offset = 0x4, fixed_abs, tag = 'smem constant byte address 0x4 - core index']
  #allocation1 [shape = 'u32[144,128]{1,0:T(1,128)}', space=vmem, size = 0x12000, scoped, tag = 'internal scratch']
  %s0 = inlined_call_operand.smem [shape: u32[31], index: -1, kind: input, shape index: {}]
  %s1 = sld [smem:[%s0]]
  %s2 = scalar_lea.smem %s0, 1
  %s3 = sld [smem:[%s2]]
  %s4 = scalar_lea.smem %s0, 2
  %s5 = sld [smem:[%s4]]
  %s6 = scalar_lea.smem %s0, 3
  %s7 = sld [smem:[%s6]]
  %s8 = scalar_lea.smem %s0, 4
  %s9 = sld [smem:[%s8]]
  %s10 = scalar_lea.smem %s0, 5
  %s11 = sld [smem:[%s10]]
  %s12 = scalar_lea.smem %s0, 6
  %s13 = sld [smem:[%s12]]
  %s14 = scalar_lea.smem %s0, 7
  %s15 = sld [smem:[%s14]]
  %s16 = scalar_lea.smem %s0, 8
  %s17 = sld [smem:[%s16]]
  %s18 = scalar_lea.smem %s0, 9
  %s19 = sld [smem:[%s18]]
  %s20 = scalar_lea.smem %s0, 10
  %s21 = sld [smem:[%s20]]
  %s22 = scalar_lea.smem %s0, 11
  %s23 = sld [smem:[%s22]]
  %s24 = scalar_lea.smem %s0, 12
  %s25 = sld [smem:[%s24]]
  %s26 = scalar_lea.smem %s0, 13
  %s27 = sld [smem:[%s26]]
  %s28 = scalar_lea.smem %s0, 14
  %s29 = sld [smem:[%s28]]
  %s30 = scalar_lea.smem %s0, 15
  %s31 = sld [smem:[%s30]]
  %s32 = scalar_lea.smem %s0, 16
  %s33 = sld [smem:[%s32]]
  %s34 = scalar_lea.smem %s0, 17
  %s35 = sld [smem:[%s34]]
  %s36 = scalar_lea.smem %s0, 18
  %s37 = sld [smem:[%s36]]
  %s38 = scalar_lea.smem %s0, 19
  %s39 = sld [smem:[%s38]]
  %s40 = scalar_lea.smem %s0, 20
  %s41 = sld [smem:[%s40]]
  %s42 = scalar_lea.smem %s0, 21
  %s43 = sld [smem:[%s42]]
  %s44 = scalar_lea.smem %s0, 22
  %s45 = sld [smem:[%s44]]
  %s46 = scalar_lea.smem %s0, 23
  %s47 = sld [smem:[%s46]]
  %s48 = scalar_lea.smem %s0, 24
  %s49 = sld [smem:[%s48]]
  %s50 = scalar_lea.smem %s0, 25
  %s51 = sld [smem:[%s50]]
  %s52 = scalar_lea.smem %s0, 26
  %s53 = sld [smem:[%s52]]
  %s54 = scalar_lea.smem %s0, 27
  %s55 = sld [smem:[%s54]]
  %s56 = scalar_lea.smem %s0, 28
  %s57 = sld [smem:[%s56]]
  %s58 = scalar_lea.smem %s0, 29
  %s59 = sld [smem:[%s58]]
  %s60 = scalar_lea.smem %s0, 30
  %s61 = sld [smem:[%s60]]
  %62 = xla_tuple %s59, %s61
  %s63 = sld [smem:[#allocation0]]
  $region157: #{masked_transformer_predictor.1} parent=0
    _
  %s65 = ssub.s32 1, %s63
  %s66 = scalar_select 0, %s65, %s63
  $region1: #{masked_transformer_predictor.1} parent=0
    #allocation2 [shape = 'u8[8192]{0}', space=vmem, size = 0x2000, scoped, tag = 'output window, operand 1']
    #allocation3 [shape = 's32[2]{0}', space=sflag, size = 0x8, scoped, tag = 'scoped memory for masked_transformer_predictor.1']
    %67 = vsyncpa [#allocation3], 0
    %s68 = scalar_lea.sflag [#allocation3], 1
    %69 = vsyncpa %s68, 0
    loop: start=0, step=1, limit=4
    $region2: #{masked_transformer_predictor.1} parent=1 // loop_pre_header
      _
    $region3: #{masked_transformer_predictor.1} parent=1 // loop_header
      %s71 = sphi 0, %s75
      %p72 = scmp.ge.s32.totalorder %s71, 4
      %s81 = sphi 0, %s83
      %s84 = sphi 0, %s81
      %s85 = sphi 0, %s84
      %s101 = sphi 0, %s85
      %s107 = sphi 0, %s109
      %s110 = sphi 0, %s107
      %s111 = sphi 0, %s110
      %s127 = sphi 0, %s111
      %s133 = sphi 0, %s135
      %s136 = sphi 0, %s133
      %s137 = sphi 0, %s136
      %s153 = sphi 0, %s137
      %s159 = sphi 0, %s161
      %s162 = sphi 0, %s159
      %s163 = sphi 0, %s162
      %s179 = sphi 0, %s163
      %s183 = sphi 0, %s183
      %s185 = sphi 0, %s183
      %s186 = sphi 0, %s185
      %s200 = sphi 0, %s186
      %s204 = sphi 0, %s204
      %s206 = sphi 0, %s204
      %s207 = sphi 0, %s206
      %s221 = sphi 0, %s207
      %s225 = sphi 0, %s225
      %s227 = sphi 0, %s225
      %s228 = sphi 0, %s227
      %s242 = sphi 0, %s228
      %s246 = sphi 0, %s246
      %s248 = sphi 0, %s246
      %s249 = sphi 0, %s248
      %s263 = sphi 0, %s249
      %s267 = sphi 0, %s267
      %s269 = sphi 0, %s267
      %s270 = sphi 0, %s269
      %s284 = sphi 0, %s270
      %s288 = sphi 0, %s288
      %s290 = sphi 0, %s288
      %s291 = sphi 0, %s290
      %s305 = sphi 0, %s291
      %s309 = sphi 0, %s309
      %s311 = sphi 0, %s309
      %s312 = sphi 0, %s311
      %s326 = sphi 0, %s312
      %s330 = sphi 0, %s330
      %s332 = sphi 0, %s330
      %s333 = sphi 0, %s332
      %s347 = sphi 0, %s333
      %s351 = sphi 0, %s351
      %s353 = sphi 0, %s351
      %s354 = sphi 0, %s353
      %s368 = sphi 0, %s354
      %s372 = sphi 0, %s372
      %s374 = sphi 0, %s372
      %s375 = sphi 0, %s374
      %s389 = sphi 0, %s375
      %s393 = sphi 0, %s393
      %s395 = sphi 0, %s393
      %s396 = sphi 0, %s395
      %s410 = sphi 0, %s396
      %s414 = sphi 0, %s414
      %s416 = sphi 0, %s414
      %s417 = sphi 0, %s416
      %s431 = sphi 0, %s417
      %s435 = sphi 0, %s435
      %s437 = sphi 0, %s435
      %s438 = sphi 0, %s437
      %s452 = sphi 0, %s438
      %s456 = sphi 0, %s456
      %s458 = sphi 0, %s456
      %s459 = sphi 0, %s458
      %s473 = sphi 0, %s459
      %s477 = sphi 0, %s477
      %s479 = sphi 0, %s477
      %s480 = sphi 0, %s479
      %s494 = sphi 0, %s480
      %s498 = sphi 0, %s498
      %s500 = sphi 0, %s498
      %s501 = sphi 0, %s500
      %s515 = sphi 0, %s501
      %s519 = sphi 0, %s519
      %s521 = sphi 0, %s519
      %s522 = sphi 0, %s521
      %s536 = sphi 0, %s522
      %s540 = sphi 0, %s540
      %s542 = sphi 0, %s540
      %s543 = sphi 0, %s542
      %s557 = sphi 0, %s543
      %s561 = sphi 0, %s561
      %s563 = sphi 0, %s561
      %s564 = sphi 0, %s563
      %s578 = sphi 0, %s564
      %s582 = sphi 0, %s582
      %s584 = sphi 0, %s582
      %s585 = sphi 0, %s584
      %s599 = sphi 0, %s585
      %s603 = sphi 0, %s603
      %s605 = sphi 0, %s603
      %s606 = sphi 0, %s605
      %s620 = sphi 0, %s606
      %s624 = sphi 0, %s624
      %s626 = sphi 0, %s624
      %s627 = sphi 0, %s626
      %s641 = sphi 0, %s627
      %s645 = sphi 0, %s645
      %s647 = sphi 0, %s645
      %s648 = sphi 0, %s647
      %s662 = sphi 0, %s648
      %s666 = sphi 0, %s666
      %s668 = sphi 0, %s666
      %s669 = sphi 0, %s668
      %s683 = sphi 0, %s669
      %s687 = sphi 0, %s687
      %s689 = sphi 0, %s687
      %s690 = sphi 0, %s689
      %s704 = sphi 0, %s690
      %s710 = sphi 0, %s712
      %s713 = sphi 0, %s710
      %s714 = sphi 0, %s713
      %s730 = sphi 0, %s714
      %s736 = sphi 0, %s738
      %s739 = sphi 0, %s736
      %s740 = sphi 0, %s739
      %s756 = sphi 0, %s740
    $region4: #{masked_transformer_predictor.1} parent=1 // loop_header_branch
      %74 = sbr.rel (%p72) target = $region8
    $region5: #{masked_transformer_predictor.1} parent=1 // loop_body
      %s76 = ssub.s32 %s71, 1
      %s77 = ssub.s32 %s71, 2
      %s78 = sadd.s32 %s71, 1
      %s79 = ssub.s32 %s71, %s78
      %p80 = scmp.eq.s32.totalorder %s79, 0
      %s82 = sadd.s32 %s81, 1
      %s83 = scalar_select %p80, %s81, %s82
      %p86 = pneg %p80
      %p87 = scmp.eq.s32.totalorder %s71, 1
      %p88 = por %p86, %p87
      %p89 = scmp.ne.s32.totalorder %s81, %s84
      %p90 = scmp.eq.s32.totalorder %s71, 0
      %p91 = por %p89, %p90
      %p92 = scmp.ne.s32.totalorder %s81, %s84
      %p93 = scmp.eq.s32.totalorder %s76, 1
      %p94 = por %p92, %p93
      %p95 = scmp.ne.s32.totalorder %s84, %s85
      %p96 = scmp.eq.s32.totalorder %s76, 0
      %p97 = por %p95, %p96
      %p98 = scmp.ne.s32.totalorder %s84, %s85
      %p99 = scmp.eq.s32.totalorder %s77, 1
      %p100 = por %p98, %p99
      %p102 = scmp.ne.s32.totalorder %s85, %s101
      %p103 = scmp.eq.s32.totalorder %s77, 0
      %p104 = por %p102, %p103
      %s105 = ssub.s32 %s71, %s78
      %p106 = scmp.eq.s32.totalorder %s105, 0
      %s108 = sadd.s32 %s107, 1
      %s109 = scalar_select %p106, %s107, %s108
      %p112 = pneg %p106
      %p113 = scmp.eq.s32.totalorder %s71, 1
      %p114 = por %p112, %p113
      %p115 = scmp.ne.s32.totalorder %s107, %s110
      %p116 = scmp.eq.s32.totalorder %s71, 0
      %p117 = por %p115, %p116
      %p118 = scmp.ne.s32.totalorder %s107, %s110
      %p119 = scmp.eq.s32.totalorder %s76, 1
      %p120 = por %p118, %p119
      %p121 = scmp.ne.s32.totalorder %s110, %s111
      %p122 = scmp.eq.s32.totalorder %s76, 0
      %p123 = por %p121, %p122
      %p124 = scmp.ne.s32.totalorder %s110, %s111
      %p125 = scmp.eq.s32.totalorder %s77, 1
      %p126 = por %p124, %p125
      %p128 = scmp.ne.s32.totalorder %s111, %s127
      %p129 = scmp.eq.s32.totalorder %s77, 0
      %p130 = por %p128, %p129
      %s131 = ssub.s32 %s71, %s78
      %p132 = scmp.eq.s32.totalorder %s131, 0
      %s134 = sadd.s32 %s133, 1
      %s135 = scalar_select %p132, %s133, %s134
      %p138 = pneg %p132
      %p139 = scmp.eq.s32.totalorder %s71, 1
      %p140 = por %p138, %p139
      %p141 = scmp.ne.s32.totalorder %s133, %s136
      %p142 = scmp.eq.s32.totalorder %s71, 0
      %p143 = por %p141, %p142
      %p144 = scmp.ne.s32.totalorder %s133, %s136
      %p145 = scmp.eq.s32.totalorder %s76, 1
      %p146 = por %p144, %p145
      %p147 = scmp.ne.s32.totalorder %s136, %s137
      %p148 = scmp.eq.s32.totalorder %s76, 0
      %p149 = por %p147, %p148
      %p150 = scmp.ne.s32.totalorder %s136, %s137
      %p151 = scmp.eq.s32.totalorder %s77, 1
      %p152 = por %p150, %p151
      %p154 = scmp.ne.s32.totalorder %s137, %s153
      %p155 = scmp.eq.s32.totalorder %s77, 0
      %p156 = por %p154, %p155
      %s157 = ssub.s32 %s71, %s78
      %p158 = scmp.eq.s32.totalorder %s157, 0
      %s160 = sadd.s32 %s159, 1
      %s161 = scalar_select %p158, %s159, %s160
      %p164 = pneg %p158
      %p165 = scmp.eq.s32.totalorder %s71, 1
      %p166 = por %p164, %p165
      %p167 = scmp.ne.s32.totalorder %s159, %s162
      %p168 = scmp.eq.s32.totalorder %s71, 0
      %p169 = por %p167, %p168
      %p170 = scmp.ne.s32.totalorder %s159, %s162
      %p171 = scmp.eq.s32.totalorder %s76, 1
      %p172 = por %p170, %p171
      %p173 = scmp.ne.s32.totalorder %s162, %s163
      %p174 = scmp.eq.s32.totalorder %s76, 0
      %p175 = por %p173, %p174
      %p176 = scmp.ne.s32.totalorder %s162, %s163
      %p177 = scmp.eq.s32.totalorder %s77, 1
      %p178 = por %p176, %p177
      %p180 = scmp.ne.s32.totalorder %s163, %s179
      %p181 = scmp.eq.s32.totalorder %s77, 0
      %p182 = por %p180, %p181
      %s184 = sadd.s32 %s183, 1
      %p187 = scmp.eq.s32.totalorder %s71, 1
      %p188 = scmp.ne.s32.totalorder %s183, %s185
      %p189 = scmp.eq.s32.totalorder %s71, 0
      %p190 = por %p188, %p189
      %p191 = scmp.ne.s32.totalorder %s183, %s185
      %p192 = scmp.eq.s32.totalorder %s76, 1
      %p193 = por %p191, %p192
      %p194 = scmp.ne.s32.totalorder %s185, %s186
      %p195 = scmp.eq.s32.totalorder %s76, 0
      %p196 = por %p194, %p195
      %p197 = scmp.ne.s32.totalorder %s185, %s186
      %p198 = scmp.eq.s32.totalorder %s77, 1
      %p199 = por %p197, %p198
      %p201 = scmp.ne.s32.totalorder %s186, %s200
      %p202 = scmp.eq.s32.totalorder %s77, 0
      %p203 = por %p201, %p202
      %s205 = sadd.s32 %s204, 1
      %p208 = scmp.eq.s32.totalorder %s71, 1
      %p209 = scmp.ne.s32.totalorder %s204, %s206
      %p210 = scmp.eq.s32.totalorder %s71, 0
      %p211 = por %p209, %p210
      %p212 = scmp.ne.s32.totalorder %s204, %s206
      %p213 = scmp.eq.s32.totalorder %s76, 1
      %p214 = por %p212, %p213
      %p215 = scmp.ne.s32.totalorder %s206, %s207
      %p216 = scmp.eq.s32.totalorder %s76, 0
      %p217 = por %p215, %p216
      %p218 = scmp.ne.s32.totalorder %s206, %s207
      %p219 = scmp.eq.s32.totalorder %s77, 1
      %p220 = por %p218, %p219
      %p222 = scmp.ne.s32.totalorder %s207, %s221
      %p223 = scmp.eq.s32.totalorder %s77, 0
      %p224 = por %p222, %p223
      %s226 = sadd.s32 %s225, 1
      %p229 = scmp.eq.s32.totalorder %s71, 1
      %p230 = scmp.ne.s32.totalorder %s225, %s227
      %p231 = scmp.eq.s32.totalorder %s71, 0
      %p232 = por %p230, %p231
      %p233 = scmp.ne.s32.totalorder %s225, %s227
      %p234 = scmp.eq.s32.totalorder %s76, 1
      %p235 = por %p233, %p234
      %p236 = scmp.ne.s32.totalorder %s227, %s228
      %p237 = scmp.eq.s32.totalorder %s76, 0
      %p238 = por %p236, %p237
      %p239 = scmp.ne.s32.totalorder %s227, %s228
      %p240 = scmp.eq.s32.totalorder %s77, 1
      %p241 = por %p239, %p240
      %p243 = scmp.ne.s32.totalorder %s228, %s242
      %p244 = scmp.eq.s32.totalorder %s77, 0
      %p245 = por %p243, %p244
      %s247 = sadd.s32 %s246, 1
      %p250 = scmp.eq.s32.totalorder %s71, 1
      %p251 = scmp.ne.s32.totalorder %s246, %s248
      %p252 = scmp.eq.s32.totalorder %s71, 0
      %p253 = por %p251, %p252
      %p254 = scmp.ne.s32.totalorder %s246, %s248
      %p255 = scmp.eq.s32.totalorder %s76, 1
      %p256 = por %p254, %p255
      %p257 = scmp.ne.s32.totalorder %s248, %s249
      %p258 = scmp.eq.s32.totalorder %s76, 0
      %p259 = por %p257, %p258
      %p260 = scmp.ne.s32.totalorder %s248, %s249
      %p261 = scmp.eq.s32.totalorder %s77, 1
      %p262 = por %p260, %p261
      %p264 = scmp.ne.s32.totalorder %s249, %s263
      %p265 = scmp.eq.s32.totalorder %s77, 0
      %p266 = por %p264, %p265
      %s268 = sadd.s32 %s267, 1
      %p271 = scmp.eq.s32.totalorder %s71, 1
      %p272 = scmp.ne.s32.totalorder %s267, %s269
      %p273 = scmp.eq.s32.totalorder %s71, 0
      %p274 = por %p272, %p273
      %p275 = scmp.ne.s32.totalorder %s267, %s269
      %p276 = scmp.eq.s32.totalorder %s76, 1
      %p277 = por %p275, %p276
      %p278 = scmp.ne.s32.totalorder %s269, %s270
      %p279 = scmp.eq.s32.totalorder %s76, 0
      %p280 = por %p278, %p279
      %p281 = scmp.ne.s32.totalorder %s269, %s270
      %p282 = scmp.eq.s32.totalorder %s77, 1
      %p283 = por %p281, %p282
      %p285 = scmp.ne.s32.totalorder %s270, %s284
      %p286 = scmp.eq.s32.totalorder %s77, 0
      %p287 = por %p285, %p286
      %s289 = sadd.s32 %s288, 1
      %p292 = scmp.eq.s32.totalorder %s71, 1
      %p293 = scmp.ne.s32.totalorder %s288, %s290
      %p294 = scmp.eq.s32.totalorder %s71, 0
      %p295 = por %p293, %p294
      %p296 = scmp.ne.s32.totalorder %s288, %s290
      %p297 = scmp.eq.s32.totalorder %s76, 1
      %p298 = por %p296, %p297
      %p299 = scmp.ne.s32.totalorder %s290, %s291
      %p300 = scmp.eq.s32.totalorder %s76, 0
      %p301 = por %p299, %p300
      %p302 = scmp.ne.s32.totalorder %s290, %s291
      %p303 = scmp.eq.s32.totalorder %s77, 1
      %p304 = por %p302, %p303
      %p306 = scmp.ne.s32.totalorder %s291, %s305
      %p307 = scmp.eq.s32.totalorder %s77, 0
      %p308 = por %p306, %p307
      %s310 = sadd.s32 %s309, 1
      %p313 = scmp.eq.s32.totalorder %s71, 1
      %p314 = scmp.ne.s32.totalorder %s309, %s311
      %p315 = scmp.eq.s32.totalorder %s71, 0
      %p316 = por %p314, %p315
      %p317 = scmp.ne.s32.totalorder %s309, %s311
      %p318 = scmp.eq.s32.totalorder %s76, 1
      %p319 = por %p317, %p318
      %p320 = scmp.ne.s32.totalorder %s311, %s312
      %p321 = scmp.eq.s32.totalorder %s76, 0
      %p322 = por %p320, %p321
      %p323 = scmp.ne.s32.totalorder %s311, %s312
      %p324 = scmp.eq.s32.totalorder %s77, 1
      %p325 = por %p323, %p324
      %p327 = scmp.ne.s32.totalorder %s312, %s326
      %p328 = scmp.eq.s32.totalorder %s77, 0
      %p329 = por %p327, %p328
      %s331 = sadd.s32 %s330, 1
      %p334 = scmp.eq.s32.totalorder %s71, 1
      %p335 = scmp.ne.s32.totalorder %s330, %s332
      %p336 = scmp.eq.s32.totalorder %s71, 0
      %p337 = por %p335, %p336
      %p338 = scmp.ne.s32.totalorder %s330, %s332
      %p339 = scmp.eq.s32.totalorder %s76, 1
      %p340 = por %p338, %p339
      %p341 = scmp.ne.s32.totalorder %s332, %s333
      %p342 = scmp.eq.s32.totalorder %s76, 0
      %p343 = por %p341, %p342
      %p344 = scmp.ne.s32.totalorder %s332, %s333
      %p345 = scmp.eq.s32.totalorder %s77, 1
      %p346 = por %p344, %p345
      %p348 = scmp.ne.s32.totalorder %s333, %s347
      %p349 = scmp.eq.s32.totalorder %s77, 0
      %p350 = por %p348, %p349
      %s352 = sadd.s32 %s351, 1
      %p355 = scmp.eq.s32.totalorder %s71, 1
      %p356 = scmp.ne.s32.totalorder %s351, %s353
      %p357 = scmp.eq.s32.totalorder %s71, 0
      %p358 = por %p356, %p357
      %p359 = scmp.ne.s32.totalorder %s351, %s353
      %p360 = scmp.eq.s32.totalorder %s76, 1
      %p361 = por %p359, %p360
      %p362 = scmp.ne.s32.totalorder %s353, %s354
      %p363 = scmp.eq.s32.totalorder %s76, 0
      %p364 = por %p362, %p363
      %p365 = scmp.ne.s32.totalorder %s353, %s354
      %p366 = scmp.eq.s32.totalorder %s77, 1
      %p367 = por %p365, %p366
      %p369 = scmp.ne.s32.totalorder %s354, %s368
      %p370 = scmp.eq.s32.totalorder %s77, 0
      %p371 = por %p369, %p370
      %s373 = sadd.s32 %s372, 1
      %p376 = scmp.eq.s32.totalorder %s71, 1
      %p377 = scmp.ne.s32.totalorder %s372, %s374
      %p378 = scmp.eq.s32.totalorder %s71, 0
      %p379 = por %p377, %p378
      %p380 = scmp.ne.s32.totalorder %s372, %s374
      %p381 = scmp.eq.s32.totalorder %s76, 1
      %p382 = por %p380, %p381
      %p383 = scmp.ne.s32.totalorder %s374, %s375
      %p384 = scmp.eq.s32.totalorder %s76, 0
      %p385 = por %p383, %p384
      %p386 = scmp.ne.s32.totalorder %s374, %s375
      %p387 = scmp.eq.s32.totalorder %s77, 1
      %p388 = por %p386, %p387
      %p390 = scmp.ne.s32.totalorder %s375, %s389
      %p391 = scmp.eq.s32.totalorder %s77, 0
      %p392 = por %p390, %p391
      %s394 = sadd.s32 %s393, 1
      %p397 = scmp.eq.s32.totalorder %s71, 1
      %p398 = scmp.ne.s32.totalorder %s393, %s395
      %p399 = scmp.eq.s32.totalorder %s71, 0
      %p400 = por %p398, %p399
      %p401 = scmp.ne.s32.totalorder %s393, %s395
      %p402 = scmp.eq.s32.totalorder %s76, 1
      %p403 = por %p401, %p402
      %p404 = scmp.ne.s32.totalorder %s395, %s396
      %p405 = scmp.eq.s32.totalorder %s76, 0
      %p406 = por %p404, %p405
      %p407 = scmp.ne.s32.totalorder %s395, %s396
      %p408 = scmp.eq.s32.totalorder %s77, 1
      %p409 = por %p407, %p408
      %p411 = scmp.ne.s32.totalorder %s396, %s410
      %p412 = scmp.eq.s32.totalorder %s77, 0
      %p413 = por %p411, %p412
      %s415 = sadd.s32 %s414, 1
      %p418 = scmp.eq.s32.totalorder %s71, 1
      %p419 = scmp.ne.s32.totalorder %s414, %s416
      %p420 = scmp.eq.s32.totalorder %s71, 0
      %p421 = por %p419, %p420
      %p422 = scmp.ne.s32.totalorder %s414, %s416
      %p423 = scmp.eq.s32.totalorder %s76, 1
      %p424 = por %p422, %p423
      %p425 = scmp.ne.s32.totalorder %s416, %s417
      %p426 = scmp.eq.s32.totalorder %s76, 0
      %p427 = por %p425, %p426
      %p428 = scmp.ne.s32.totalorder %s416, %s417
      %p429 = scmp.eq.s32.totalorder %s77, 1
      %p430 = por %p428, %p429
      %p432 = scmp.ne.s32.totalorder %s417, %s431
      %p433 = scmp.eq.s32.totalorder %s77, 0
      %p434 = por %p432, %p433
      %s436 = sadd.s32 %s435, 1
      %p439 = scmp.eq.s32.totalorder %s71, 1
      %p440 = scmp.ne.s32.totalorder %s435, %s437
      %p441 = scmp.eq.s32.totalorder %s71, 0
      %p442 = por %p440, %p441
      %p443 = scmp.ne.s32.totalorder %s435, %s437
      %p444 = scmp.eq.s32.totalorder %s76, 1
      %p445 = por %p443, %p444
      %p446 = scmp.ne.s32.totalorder %s437, %s438
      %p447 = scmp.eq.s32.totalorder %s76, 0
      %p448 = por %p446, %p447
      %p449 = scmp.ne.s32.totalorder %s437, %s438
      %p450 = scmp.eq.s32.totalorder %s77, 1
      %p451 = por %p449, %p450
      %p453 = scmp.ne.s32.totalorder %s438, %s452
      %p454 = scmp.eq.s32.totalorder %s77, 0
      %p455 = por %p453, %p454
      %s457 = sadd.s32 %s456, 1
      %p460 = scmp.eq.s32.totalorder %s71, 1
      %p461 = scmp.ne.s32.totalorder %s456, %s458
      %p462 = scmp.eq.s32.totalorder %s71, 0
      %p463 = por %p461, %p462
      %p464 = scmp.ne.s32.totalorder %s456, %s458
      %p465 = scmp.eq.s32.totalorder %s76, 1
      %p466 = por %p464, %p465
      %p467 = scmp.ne.s32.totalorder %s458, %s459
      %p468 = scmp.eq.s32.totalorder %s76, 0
      %p469 = por %p467, %p468
      %p470 = scmp.ne.s32.totalorder %s458, %s459
      %p471 = scmp.eq.s32.totalorder %s77, 1
      %p472 = por %p470, %p471
      %p474 = scmp.ne.s32.totalorder %s459, %s473
      %p475 = scmp.eq.s32.totalorder %s77, 0
      %p476 = por %p474, %p475
      %s478 = sadd.s32 %s477, 1
      %p481 = scmp.eq.s32.totalorder %s71, 1
      %p482 = scmp.ne.s32.totalorder %s477, %s479
      %p483 = scmp.eq.s32.totalorder %s71, 0
      %p484 = por %p482, %p483
      %p485 = scmp.ne.s32.totalorder %s477, %s479
      %p486 = scmp.eq.s32.totalorder %s76, 1
      %p487 = por %p485, %p486
      %p488 = scmp.ne.s32.totalorder %s479, %s480
      %p489 = scmp.eq.s32.totalorder %s76, 0
      %p490 = por %p488, %p489
      %p491 = scmp.ne.s32.totalorder %s479, %s480
      %p492 = scmp.eq.s32.totalorder %s77, 1
      %p493 = por %p491, %p492
      %p495 = scmp.ne.s32.totalorder %s480, %s494
      %p496 = scmp.eq.s32.totalorder %s77, 0
      %p497 = por %p495, %p496
      %s499 = sadd.s32 %s498, 1
      %p502 = scmp.eq.s32.totalorder %s71, 1
      %p503 = scmp.ne.s32.totalorder %s498, %s500
      %p504 = scmp.eq.s32.totalorder %s71, 0
      %p505 = por %p503, %p504
      %p506 = scmp.ne.s32.totalorder %s498, %s500
      %p507 = scmp.eq.s32.totalorder %s76, 1
      %p508 = por %p506, %p507
      %p509 = scmp.ne.s32.totalorder %s500, %s501
      %p510 = scmp.eq.s32.totalorder %s76, 0
      %p511 = por %p509, %p510
      %p512 = scmp.ne.s32.totalorder %s500, %s501
      %p513 = scmp.eq.s32.totalorder %s77, 1
      %p514 = por %p512, %p513
      %p516 = scmp.ne.s32.totalorder %s501, %s515
      %p517 = scmp.eq.s32.totalorder %s77, 0
      %p518 = por %p516, %p517
      %s520 = sadd.s32 %s519, 1
      %p523 = scmp.eq.s32.totalorder %s71, 1
      %p524 = scmp.ne.s32.totalorder %s519, %s521
      %p525 = scmp.eq.s32.totalorder %s71, 0
      %p526 = por %p524, %p525
      %p527 = scmp.ne.s32.totalorder %s519, %s521
      %p528 = scmp.eq.s32.totalorder %s76, 1
      %p529 = por %p527, %p528
      %p530 = scmp.ne.s32.totalorder %s521, %s522
      %p531 = scmp.eq.s32.totalorder %s76, 0
      %p532 = por %p530, %p531
      %p533 = scmp.ne.s32.totalorder %s521, %s522
      %p534 = scmp.eq.s32.totalorder %s77, 1
      %p535 = por %p533, %p534
      %p537 = scmp.ne.s32.totalorder %s522, %s536
      %p538 = scmp.eq.s32.totalorder %s77, 0
      %p539 = por %p537, %p538
      %s541 = sadd.s32 %s540, 1
      %p544 = scmp.eq.s32.totalorder %s71, 1
      %p545 = scmp.ne.s32.totalorder %s540, %s542
      %p546 = scmp.eq.s32.totalorder %s71, 0
      %p547 = por %p545, %p546
      %p548 = scmp.ne.s32.totalorder %s540, %s542
      %p549 = scmp.eq.s32.totalorder %s76, 1
      %p550 = por %p548, %p549
      %p551 = scmp.ne.s32.totalorder %s542, %s543
      %p552 = scmp.eq.s32.totalorder %s76, 0
      %p553 = por %p551, %p552
      %p554 = scmp.ne.s32.totalorder %s542, %s543
      %p555 = scmp.eq.s32.totalorder %s77, 1
      %p556 = por %p554, %p555
      %p558 = scmp.ne.s32.totalorder %s543, %s557
      %p559 = scmp.eq.s32.totalorder %s77, 0
      %p560 = por %p558, %p559
      %s562 = sadd.s32 %s561, 1
      %p565 = scmp.eq.s32.totalorder %s71, 1
      %p566 = scmp.ne.s32.totalorder %s561, %s563
      %p567 = scmp.eq.s32.totalorder %s71, 0
      %p568 = por %p566, %p567
      %p569 = scmp.ne.s32.totalorder %s561, %s563
      %p570 = scmp.eq.s32.totalorder %s76, 1
      %p571 = por %p569, %p570
      %p572 = scmp.ne.s32.totalorder %s563, %s564
      %p573 = scmp.eq.s32.totalorder %s76, 0
      %p574 = por %p572, %p573
      %p575 = scmp.ne.s32.totalorder %s563, %s564
      %p576 = scmp.eq.s32.totalorder %s77, 1
      %p577 = por %p575, %p576
      %p579 = scmp.ne.s32.totalorder %s564, %s578
      %p580 = scmp.eq.s32.totalorder %s77, 0
      %p581 = por %p579, %p580
      %s583 = sadd.s32 %s582, 1
      %p586 = scmp.eq.s32.totalorder %s71, 1
      %p587 = scmp.ne.s32.totalorder %s582, %s584
      %p588 = scmp.eq.s32.totalorder %s71, 0
      %p589 = por %p587, %p588
      %p590 = scmp.ne.s32.totalorder %s582, %s584
      %p591 = scmp.eq.s32.totalorder %s76, 1
      %p592 = por %p590, %p591
      %p593 = scmp.ne.s32.totalorder %s584, %s585
      %p594 = scmp.eq.s32.totalorder %s76, 0
      %p595 = por %p593, %p594
      %p596 = scmp.ne.s32.totalorder %s584, %s585
      %p597 = scmp.eq.s32.totalorder %s77, 1
      %p598 = por %p596, %p597
      %p600 = scmp.ne.s32.totalorder %s585, %s599
      %p601 = scmp.eq.s32.totalorder %s77, 0
      %p602 = por %p600, %p601
      %s604 = sadd.s32 %s603, 1
      %p607 = scmp.eq.s32.totalorder %s71, 1
      %p608 = scmp.ne.s32.totalorder %s603, %s605
      %p609 = scmp.eq.s32.totalorder %s71, 0
      %p610 = por %p608, %p609
      %p611 = scmp.ne.s32.totalorder %s603, %s605
      %p612 = scmp.eq.s32.totalorder %s76, 1
      %p613 = por %p611, %p612
      %p614 = scmp.ne.s32.totalorder %s605, %s606
      %p615 = scmp.eq.s32.totalorder %s76, 0
      %p616 = por %p614, %p615
      %p617 = scmp.ne.s32.totalorder %s605, %s606
      %p618 = scmp.eq.s32.totalorder %s77, 1
      %p619 = por %p617, %p618
      %p621 = scmp.ne.s32.totalorder %s606, %s620
      %p622 = scmp.eq.s32.totalorder %s77, 0
      %p623 = por %p621, %p622
      %s625 = sadd.s32 %s624, 1
      %p628 = scmp.eq.s32.totalorder %s71, 1
      %p629 = scmp.ne.s32.totalorder %s624, %s626
      %p630 = scmp.eq.s32.totalorder %s71, 0
      %p631 = por %p629, %p630
      %p632 = scmp.ne.s32.totalorder %s624, %s626
      %p633 = scmp.eq.s32.totalorder %s76, 1
      %p634 = por %p632, %p633
      %p635 = scmp.ne.s32.totalorder %s626, %s627
      %p636 = scmp.eq.s32.totalorder %s76, 0
      %p637 = por %p635, %p636
      %p638 = scmp.ne.s32.totalorder %s626, %s627
      %p639 = scmp.eq.s32.totalorder %s77, 1
      %p640 = por %p638, %p639
      %p642 = scmp.ne.s32.totalorder %s627, %s641
      %p643 = scmp.eq.s32.totalorder %s77, 0
      %p644 = por %p642, %p643
      %s646 = sadd.s32 %s645, 1
      %p649 = scmp.eq.s32.totalorder %s71, 1
      %p650 = scmp.ne.s32.totalorder %s645, %s647
      %p651 = scmp.eq.s32.totalorder %s71, 0
      %p652 = por %p650, %p651
      %p653 = scmp.ne.s32.totalorder %s645, %s647
      %p654 = scmp.eq.s32.totalorder %s76, 1
      %p655 = por %p653, %p654
      %p656 = scmp.ne.s32.totalorder %s647, %s648
      %p657 = scmp.eq.s32.totalorder %s76, 0
      %p658 = por %p656, %p657
      %p659 = scmp.ne.s32.totalorder %s647, %s648
      %p660 = scmp.eq.s32.totalorder %s77, 1
      %p661 = por %p659, %p660
      %p663 = scmp.ne.s32.totalorder %s648, %s662
      %p664 = scmp.eq.s32.totalorder %s77, 0
      %p665 = por %p663, %p664
      %s667 = sadd.s32 %s666, 1
      %p670 = scmp.eq.s32.totalorder %s71, 1
      %p671 = scmp.ne.s32.totalorder %s666, %s668
      %p672 = scmp.eq.s32.totalorder %s71, 0
      %p673 = por %p671, %p672
      %p674 = scmp.ne.s32.totalorder %s666, %s668
      %p675 = scmp.eq.s32.totalorder %s76, 1
      %p676 = por %p674, %p675
      %p677 = scmp.ne.s32.totalorder %s668, %s669
      %p678 = scmp.eq.s32.totalorder %s76, 0
      %p679 = por %p677, %p678
      %p680 = scmp.ne.s32.totalorder %s668, %s669
      %p681 = scmp.eq.s32.totalorder %s77, 1
      %p682 = por %p680, %p681
      %p684 = scmp.ne.s32.totalorder %s669, %s683
      %p685 = scmp.eq.s32.totalorder %s77, 0
      %p686 = por %p684, %p685
      %s688 = sadd.s32 %s687, 1
      %p691 = scmp.eq.s32.totalorder %s71, 1
      %p692 = scmp.ne.s32.totalorder %s687, %s689
      %p693 = scmp.eq.s32.totalorder %s71, 0
      %p694 = por %p692, %p693
      %p695 = scmp.ne.s32.totalorder %s687, %s689
      %p696 = scmp.eq.s32.totalorder %s76, 1
      %p697 = por %p695, %p696
      %p698 = scmp.ne.s32.totalorder %s689, %s690
      %p699 = scmp.eq.s32.totalorder %s76, 0
      %p700 = por %p698, %p699
      %p701 = scmp.ne.s32.totalorder %s689, %s690
      %p702 = scmp.eq.s32.totalorder %s77, 1
      %p703 = por %p701, %p702
      %p705 = scmp.ne.s32.totalorder %s690, %s704
      %p706 = scmp.eq.s32.totalorder %s77, 0
      %p707 = por %p705, %p706
      %s708 = ssub.s32 %s71, %s78
      %p709 = scmp.eq.s32.totalorder %s708, 0
      %s711 = sadd.s32 %s710, 1
      %s712 = scalar_select %p709, %s710, %s711
      %p715 = pneg %p709
      %p716 = scmp.eq.s32.totalorder %s71, 1
      %p717 = por %p715, %p716
      %p718 = scmp.ne.s32.totalorder %s710, %s713
      %p719 = scmp.eq.s32.totalorder %s71, 0
      %p720 = por %p718, %p719
      %p721 = scmp.ne.s32.totalorder %s710, %s713
      %p722 = scmp.eq.s32.totalorder %s76, 1
      %p723 = por %p721, %p722
      %p724 = scmp.ne.s32.totalorder %s713, %s714
      %p725 = scmp.eq.s32.totalorder %s76, 0
      %p726 = por %p724, %p725
      %p727 = scmp.ne.s32.totalorder %s713, %s714
      %p728 = scmp.eq.s32.totalorder %s77, 1
      %p729 = por %p727, %p728
      %p731 = scmp.ne.s32.totalorder %s714, %s730
      %p732 = scmp.eq.s32.totalorder %s77, 0
      %p733 = por %p731, %p732
      %s734 = ssub.s32 %s71, %s78
      %p735 = scmp.eq.s32.totalorder %s734, 0
      %s737 = sadd.s32 %s736, 1
      %s738 = scalar_select %p735, %s736, %s737
      %p741 = pneg %p735
      %p742 = scmp.eq.s32.totalorder %s71, 1
      %p743 = por %p741, %p742
      %p744 = scmp.ne.s32.totalorder %s736, %s739
      %p745 = scmp.eq.s32.totalorder %s71, 0
      %p746 = por %p744, %p745
      %p747 = scmp.ne.s32.totalorder %s736, %s739
      %p748 = scmp.eq.s32.totalorder %s76, 1
      %p749 = por %p747, %p748
      %p750 = scmp.ne.s32.totalorder %s739, %s740
      %p751 = scmp.eq.s32.totalorder %s76, 0
      %p752 = por %p750, %p751
      %p753 = scmp.ne.s32.totalorder %s739, %s740
      %p754 = scmp.eq.s32.totalorder %s77, 1
      %p755 = por %p753, %p754
      %p757 = scmp.ne.s32.totalorder %s740, %s756
      %p758 = scmp.eq.s32.totalorder %s77, 0
      %p759 = por %p757, %p758
      %p760 = scmp.le.s32.totalorder 1, %s71
      %p761 = scmp.lt.s32.totalorder %s71, 3
      %p762 = pnand %p760, %p761
      %p763 = pneg %p762
      // Predicated region
      $region9: #{masked_transformer_predictor.1} parent=5 // pred_check
        _
      $region10: #{masked_transformer_predictor.1} parent=5 // pred_check_branch
        %765 = sbr.rel (%p762) target = $region12
      $region11: #{masked_transformer_predictor.1} parent=5 // pred_region
        %s766 = ssub.s32 %s71, 1
        // Predicated region
        $region13: #{masked_transformer_predictor.1} parent=11 // pred_check
          %p767 = pneg %p196
        $region14: #{masked_transformer_predictor.1} parent=11 // pred_check_branch
          %769 = sbr.rel (%p767) target = $region16
        $region15: #{masked_transformer_predictor.1} parent=11 // pred_region
          _
        $region16: #{masked_transformer_predictor.1} parent=11 // pred_fallthru
          _
        // Predicated region
        $region17: #{masked_transformer_predictor.1} parent=11 // pred_check
          %p770 = pneg %p217
        $region18: #{masked_transformer_predictor.1} parent=11 // pred_check_branch
          %772 = sbr.rel (%p770) target = $region20
        $region19: #{masked_transformer_predictor.1} parent=11 // pred_region
          _
        $region20: #{masked_transformer_predictor.1} parent=11 // pred_fallthru
          _
        // Predicated region
        $region21: #{masked_transformer_predictor.1} parent=11 // pred_check
          %p773 = pneg %p238
        $region22: #{masked_transformer_predictor.1} parent=11 // pred_check_branch
          %775 = sbr.rel (%p773) target = $region24
        $region23: #{masked_transformer_predictor.1} parent=11 // pred_region
          _
        $region24: #{masked_transformer_predictor.1} parent=11 // pred_fallthru
          _
        // Predicated region
        $region25: #{masked_transformer_predictor.1} parent=11 // pred_check
          %p776 = pneg %p259
        $region26: #{masked_transformer_predictor.1} parent=11 // pred_check_branch
          %778 = sbr.rel (%p776) target = $region28
        $region27: #{masked_transformer_predictor.1} parent=11 // pred_region
          _
        $region28: #{masked_transformer_predictor.1} parent=11 // pred_fallthru
          _
        // Predicated region
        $region29: #{masked_transformer_predictor.1} parent=11 // pred_check
          %p779 = pneg %p280
        $region30: #{masked_transformer_predictor.1} parent=11 // pred_check_branch
          %781 = sbr.rel (%p779) target = $region32
        $region31: #{masked_transformer_predictor.1} parent=11 // pred_region
          _
        $region32: #{masked_transformer_predictor.1} parent=11 // pred_fallthru
          _
        // Predicated region
        $region33: #{masked_transformer_predictor.1} parent=11 // pred_check
          %p782 = pneg %p301
        $region34: #{masked_transformer_predictor.1} parent=11 // pred_check_branch
          %784 = sbr.rel (%p782) target = $region36
        $region35: #{masked_transformer_predictor.1} parent=11 // pred_region
          _
        $region36: #{masked_transformer_predictor.1} parent=11 // pred_fallthru
          _
        // Predicated region
        $region37: #{masked_transformer_predictor.1} parent=11 // pred_check
          %p785 = pneg %p322
        $region38: #{masked_transformer_predictor.1} parent=11 // pred_check_branch
          %787 = sbr.rel (%p785) target = $region40
        $region39: #{masked_transformer_predictor.1} parent=11 // pred_region
          _
        $region40: #{masked_transformer_predictor.1} parent=11 // pred_fallthru
          _
        // Predicated region
        $region41: #{masked_transformer_predictor.1} parent=11 // pred_check
          %p788 = pneg %p343
        $region42: #{masked_transformer_predictor.1} parent=11 // pred_check_branch
          %790 = sbr.rel (%p788) target = $region44
        $region43: #{masked_transformer_predictor.1} parent=11 // pred_region
          _
        $region44: #{masked_transformer_predictor.1} parent=11 // pred_fallthru
          _
        // Predicated region
        $region45: #{masked_transformer_predictor.1} parent=11 // pred_check
          %p791 = pneg %p364
        $region46: #{masked_transformer_predictor.1} parent=11 // pred_check_branch
          %793 = sbr.rel (%p791) target = $region48
        $region47: #{masked_transformer_predictor.1} parent=11 // pred_region
          _
        $region48: #{masked_transformer_predictor.1} parent=11 // pred_fallthru
          _
        // Predicated region
        $region49: #{masked_transformer_predictor.1} parent=11 // pred_check
          %p794 = pneg %p385
        $region50: #{masked_transformer_predictor.1} parent=11 // pred_check_branch
          %796 = sbr.rel (%p794) target = $region52
        $region51: #{masked_transformer_predictor.1} parent=11 // pred_region
          _
        $region52: #{masked_transformer_predictor.1} parent=11 // pred_fallthru
          _
        // Predicated region
        $region53: #{masked_transformer_predictor.1} parent=11 // pred_check
          %p797 = pneg %p406
        $region54: #{masked_transformer_predictor.1} parent=11 // pred_check_branch
          %799 = sbr.rel (%p797) target = $region56
        $region55: #{masked_transformer_predictor.1} parent=11 // pred_region
          _
        $region56: #{masked_transformer_predictor.1} parent=11 // pred_fallthru
          _
        // Predicated region
        $region57: #{masked_transformer_predictor.1} parent=11 // pred_check
          %p800 = pneg %p427
        $region58: #{masked_transformer_predictor.1} parent=11 // pred_check_branch
          %802 = sbr.rel (%p800) target = $region60
        $region59: #{masked_transformer_predictor.1} parent=11 // pred_region
          _
        $region60: #{masked_transformer_predictor.1} parent=11 // pred_fallthru
          _
        // Predicated region
        $region61: #{masked_transformer_predictor.1} parent=11 // pred_check
          %p803 = pneg %p448
        $region62: #{masked_transformer_predictor.1} parent=11 // pred_check_branch
          %805 = sbr.rel (%p803) target = $region64
        $region63: #{masked_transformer_predictor.1} parent=11 // pred_region
          _
        $region64: #{masked_transformer_predictor.1} parent=11 // pred_fallthru
          _
        // Predicated region
        $region65: #{masked_transformer_predictor.1} parent=11 // pred_check
          %p806 = pneg %p469
        $region66: #{masked_transformer_predictor.1} parent=11 // pred_check_branch
          %808 = sbr.rel (%p806) target = $region68
        $region67: #{masked_transformer_predictor.1} parent=11 // pred_region
          _
        $region68: #{masked_transformer_predictor.1} parent=11 // pred_fallthru
          _
        // Predicated region
        $region69: #{masked_transformer_predictor.1} parent=11 // pred_check
          %p809 = pneg %p490
        $region70: #{masked_transformer_predictor.1} parent=11 // pred_check_branch
          %811 = sbr.rel (%p809) target = $region72
        $region71: #{masked_transformer_predictor.1} parent=11 // pred_region
          _
        $region72: #{masked_transformer_predictor.1} parent=11 // pred_fallthru
          _
        // Predicated region
        $region73: #{masked_transformer_predictor.1} parent=11 // pred_check
          %p812 = pneg %p511
        $region74: #{masked_transformer_predictor.1} parent=11 // pred_check_branch
          %814 = sbr.rel (%p812) target = $region76
        $region75: #{masked_transformer_predictor.1} parent=11 // pred_region
          _
        $region76: #{masked_transformer_predictor.1} parent=11 // pred_fallthru
          _
        // Predicated region
        $region77: #{masked_transformer_predictor.1} parent=11 // pred_check
          %p815 = pneg %p532
        $region78: #{masked_transformer_predictor.1} parent=11 // pred_check_branch
          %817 = sbr.rel (%p815) target = $region80
        $region79: #{masked_transformer_predictor.1} parent=11 // pred_region
          _
        $region80: #{masked_transformer_predictor.1} parent=11 // pred_fallthru
          _
        // Predicated region
        $region81: #{masked_transformer_predictor.1} parent=11 // pred_check
          %p818 = pneg %p553
        $region82: #{masked_transformer_predictor.1} parent=11 // pred_check_branch
          %820 = sbr.rel (%p818) target = $region84
        $region83: #{masked_transformer_predictor.1} parent=11 // pred_region
          _
        $region84: #{masked_transformer_predictor.1} parent=11 // pred_fallthru
          _
        // Predicated region
        $region85: #{masked_transformer_predictor.1} parent=11 // pred_check
          %p821 = pneg %p574
        $region86: #{masked_transformer_predictor.1} parent=11 // pred_check_branch
          %823 = sbr.rel (%p821) target = $region88
        $region87: #{masked_transformer_predictor.1} parent=11 // pred_region
          _
        $region88: #{masked_transformer_predictor.1} parent=11 // pred_fallthru
          _
        // Predicated region
        $region89: #{masked_transformer_predictor.1} parent=11 // pred_check
          %p824 = pneg %p595
        $region90: #{masked_transformer_predictor.1} parent=11 // pred_check_branch
          %826 = sbr.rel (%p824) target = $region92
        $region91: #{masked_transformer_predictor.1} parent=11 // pred_region
          _
        $region92: #{masked_transformer_predictor.1} parent=11 // pred_fallthru
          _
        // Predicated region
        $region93: #{masked_transformer_predictor.1} parent=11 // pred_check
          %p827 = pneg %p616
        $region94: #{masked_transformer_predictor.1} parent=11 // pred_check_branch
          %829 = sbr.rel (%p827) target = $region96
        $region95: #{masked_transformer_predictor.1} parent=11 // pred_region
          _
        $region96: #{masked_transformer_predictor.1} parent=11 // pred_fallthru
          _
        // Predicated region
        $region97: #{masked_transformer_predictor.1} parent=11 // pred_check
          %p830 = pneg %p637
        $region98: #{masked_transformer_predictor.1} parent=11 // pred_check_branch
          %832 = sbr.rel (%p830) target = $region100
        $region99: #{masked_transformer_predictor.1} parent=11 // pred_region
          _
        $region100: #{masked_transformer_predictor.1} parent=11 // pred_fallthru
          _
        // Predicated region
        $region101: #{masked_transformer_predictor.1} parent=11 // pred_check
          %p833 = pneg %p658
        $region102: #{masked_transformer_predictor.1} parent=11 // pred_check_branch
          %835 = sbr.rel (%p833) target = $region104
        $region103: #{masked_transformer_predictor.1} parent=11 // pred_region
          _
        $region104: #{masked_transformer_predictor.1} parent=11 // pred_fallthru
          _
        // Predicated region
        $region105: #{masked_transformer_predictor.1} parent=11 // pred_check
          %p836 = pneg %p679
        $region106: #{masked_transformer_predictor.1} parent=11 // pred_check_branch
          %838 = sbr.rel (%p836) target = $region108
        $region107: #{masked_transformer_predictor.1} parent=11 // pred_region
          _
        $region108: #{masked_transformer_predictor.1} parent=11 // pred_fallthru
          _
        // Predicated region
        $region109: #{masked_transformer_predictor.1} parent=11 // pred_check
          %p839 = pneg %p700
        $region110: #{masked_transformer_predictor.1} parent=11 // pred_check_branch
          %841 = sbr.rel (%p839) target = $region112
        $region111: #{masked_transformer_predictor.1} parent=11 // pred_region
          _
        $region112: #{masked_transformer_predictor.1} parent=11 // pred_fallthru
          _
      $region12: #{masked_transformer_predictor.1} parent=5 // pred_fallthru
        _
      %p842 = scmp.lt.s32.totalorder %s71, 2
      // Predicated region
      $region113: #{masked_transformer_predictor.1} parent=5 // pred_check
        %p843 = pneg %p842
      $region114: #{masked_transformer_predictor.1} parent=5 // pred_check_branch
        %845 = sbr.rel (%p843) target = $region116
      $region115: #{masked_transformer_predictor.1} parent=5 // pred_region
        // Predicated region
        $region117: #{masked_transformer_predictor.1} parent=115 // pred_check
          %p846 = pneg %p91
        $region118: #{masked_transformer_predictor.1} parent=115 // pred_check_branch
          %848 = sbr.rel (%p846) target = $region120
        $region119: #{masked_transformer_predictor.1} parent=115 // pred_region
          %p849 = scmp.lt.s32.totalorder %s71, 1
          %s850 = scalar_select %p849, %s71, 1
          %s851 = smul.addr %s850, 2
          %s852 = smul.addr %s851, 8
          %s853 = scalar_lea.vmem %s1, %s852
        $region120: #{masked_transformer_predictor.1} parent=115 // pred_fallthru
          _
        // Predicated region
        $region121: #{masked_transformer_predictor.1} parent=115 // pred_check
          %p854 = pneg %p117
        $region122: #{masked_transformer_predictor.1} parent=115 // pred_check_branch
          %856 = sbr.rel (%p854) target = $region124
        $region123: #{masked_transformer_predictor.1} parent=115 // pred_region
          %p857 = scmp.lt.s32.totalorder %s71, 1
          %s858 = scalar_select %p857, %s71, 1
          %s859 = scalar_lea.vmem %s3, %s858
        $region124: #{masked_transformer_predictor.1} parent=115 // pred_fallthru
          _
        // Predicated region
        $region125: #{masked_transformer_predictor.1} parent=115 // pred_check
          %p860 = pneg %p143
        $region126: #{masked_transformer_predictor.1} parent=115 // pred_check_branch
          %862 = sbr.rel (%p860) target = $region128
        $region127: #{masked_transformer_predictor.1} parent=115 // pred_region
          %p863 = scmp.lt.s32.totalorder %s71, 1
          %s864 = scalar_select %p863, %s71, 1
          %s865 = smul.addr %s864, 4
          %s866 = smul.addr %s865, 8
          %s867 = scalar_lea.vmem %s5, %s866
        $region128: #{masked_transformer_predictor.1} parent=115 // pred_fallthru
          _
        // Predicated region
        $region129: #{masked_transformer_predictor.1} parent=115 // pred_check
          %p868 = pneg %p169
        $region130: #{masked_transformer_predictor.1} parent=115 // pred_check_branch
          %870 = sbr.rel (%p868) target = $region132
        $region131: #{masked_transformer_predictor.1} parent=115 // pred_region
          %p871 = scmp.lt.s32.totalorder %s71, 1
          %s872 = scalar_select %p871, %s71, 1
          %s873 = scalar_lea.vmem %s7, %s872
        $region132: #{masked_transformer_predictor.1} parent=115 // pred_fallthru
          _
      $region116: #{masked_transformer_predictor.1} parent=5 // pred_fallthru
        _
      %p874 = scmp.le.s32.totalorder 1, %s71
      %p875 = scmp.lt.s32.totalorder %s71, 3
      %p876 = pnand %p874, %p875
      %p877 = pneg %p876
      // Predicated region
      $region133: #{masked_transformer_predictor.1} parent=5 // pred_check
        _
      $region134: #{masked_transformer_predictor.1} parent=5 // pred_check_branch
        %879 = sbr.rel (%p876) target = $region136
      $region135: #{masked_transformer_predictor.1} parent=5 // pred_region
        %s880 = ssub.s32 %s71, 1
        %p881 = scmp.lt.s32.totalorder %s76, 1
        %s882 = scalar_select %p881, %s76, 1
        %s883 = smul.addr %s882, 2
        %s884 = smul.addr %s883, 8
        %s885 = scalar_lea.vmem %s1, %s884
        %p886 = pneg %p97
        %p887 = pneg %p94
        %p888 = scmp.lt.s32.totalorder %s76, 1
        %s889 = scalar_select %p888, %s76, 1
        %s890 = scalar_lea.vmem %s3, %s889
        %p891 = pneg %p123
        %p892 = pneg %p120
        %p893 = scmp.lt.s32.totalorder %s76, 1
        %s894 = scalar_select %p893, %s76, 1
        %s895 = smul.addr %s894, 4
        %s896 = smul.addr %s895, 8
        %s897 = scalar_lea.vmem %s5, %s896
        %p898 = pneg %p149
        %p899 = pneg %p146
        %p900 = scmp.lt.s32.totalorder %s76, 1
        %s901 = scalar_select %p900, %s76, 1
        %s902 = scalar_lea.vmem %s7, %s901
        %p903 = pneg %p175
        %p904 = pneg %p172
        %p905 = pneg %p196
        %p906 = pneg %p193
        %p907 = pneg %p217
        %p908 = pneg %p214
        %p909 = pneg %p238
        %p910 = pneg %p235
        %p911 = pneg %p259
        %p912 = pneg %p256
        %p913 = pneg %p280
        %p914 = pneg %p277
        %p915 = pneg %p301
        %p916 = pneg %p298
        %p917 = pneg %p322
        %p918 = pneg %p319
        %p919 = pneg %p343
        %p920 = pneg %p340
        %p921 = pneg %p364
        %p922 = pneg %p361
        %p923 = pneg %p385
        %p924 = pneg %p382
        %p925 = pneg %p406
        %p926 = pneg %p403
        %p927 = pneg %p427
        %p928 = pneg %p424
        %p929 = pneg %p448
        %p930 = pneg %p445
        %p931 = pneg %p469
        %p932 = pneg %p466
        %p933 = pneg %p490
        %p934 = pneg %p487
        %p935 = pneg %p511
        %p936 = pneg %p508
        %p937 = pneg %p532
        %p938 = pneg %p529
        %p939 = pneg %p553
        %p940 = pneg %p550
        %p941 = pneg %p574
        %p942 = pneg %p571
        %p943 = pneg %p595
        %p944 = pneg %p592
        %p945 = pneg %p616
        %p946 = pneg %p613
        %p947 = pneg %p637
        %p948 = pneg %p634
        %p949 = pneg %p658
        %p950 = pneg %p655
        %p951 = pneg %p679
        %p952 = pneg %p676
        %p953 = pneg %p700
        %p954 = pneg %p697
        %p955 = pneg %p726
        %p956 = pneg %p723
        %p957 = scmp.lt.s32.totalorder %s76, 1
        %s958 = scalar_select %p957, %s76, 1
        %s959 = smul.addr %s958, 8
        %s960 = scalar_lea.vmem %s59, %s959
        %p961 = pneg %p752
        %p962 = pneg %p749
        %s963 = sand.u32 %s739, 1
        %s964 = scalar_lea.sflag [#allocation3], %s963
        %s965 = sand.u32 %s739, 1
        %s966 = smul.addr %s965, 8
        %s967 = scalar_lea.vmem [#allocation2], %s966
        %p968 = scmp.lt.s32.totalorder %s76, 1
        %s969 = scalar_select %p968, %s76, 1
        %s970 = smul.addr %s969, 2
        %s971 = smul.addr %s970, 8
        %s972 = scalar_lea.vmem %s1, %s971
        %p973 = scmp.lt.s32.totalorder %s76, 1
        %s974 = scalar_select %p973, %s76, 1
        %s975 = scalar_lea.vmem %s3, %s974
        %p976 = scmp.lt.s32.totalorder %s76, 1
        %s977 = scalar_select %p976, %s76, 1
        %s978 = smul.addr %s977, 4
        %s979 = smul.addr %s978, 8
        %s980 = scalar_lea.vmem %s5, %s979
        %p981 = scmp.lt.s32.totalorder %s76, 1
        %s982 = scalar_select %p981, %s76, 1
        %s983 = scalar_lea.vmem %s7, %s982
        %p984 = scmp.lt.s32.totalorder %s76, 1
        %s985 = scalar_select %p984, %s76, 1
        %s986 = smul.addr %s985, 8
        %s987 = scalar_lea.vmem %s59, %s986
        %v988 = vld [vmem:[%s972] sm:$0xff]
        %v989 = vld [vmem:[%s972 + $0x8] sm:$0xff]
        %v990 = vld [vmem:[%s975] sm:$0x1]
        %vm991 = vcmask 130048
        %v992 = vsel %vm991, %v988, 0.0
        %v993 = vsel %vm991, %v989, 0.0
        %v994 = vadd.f32 %v992, %v993
        %v995 = vrot.slane %v994, 4
        %v996 = vadd.f32 %v994, %v995
        %v997 = vrot.slane %v996, 2
        %v998 = vadd.f32 %v996, %v997
        %v999 = vrot.slane %v998, 1
        %v1000 = vadd.f32 %v998, %v999
        %v1001 = vrcp.pop 16.0
        %v1002 = vmul.f32 %v1000, %v1001
        %v1003 = vsub.f32 %v988, %v1002
        %v1004 = vsub.f32 %v989, %v1002
        %v1005 = vmul.f32 %v1003, %v1003
        %v1006 = vmul.f32 %v1004, %v1004
        %v1007 = vsel %vm991, %v1005, 0.0
        %v1008 = vsel %vm991, %v1006, 0.0
        %v1009 = vadd.f32 %v1007, %v1008
        %v1010 = vrot.slane %v1009, 4
        %v1011 = vadd.f32 %v1009, %v1010
        %v1012 = vrot.slane %v1011, 2
        %v1013 = vadd.f32 %v1011, %v1012
        %v1014 = vrot.slane %v1013, 1
        %v1015 = vadd.f32 %v1013, %v1014
        %v1016 = vmul.f32 %v1015, %v1001
        %v1017 = vadd.f32 %v1016, 1e-05
        %v1018 = vrsqrt.pop %v1017
        %v1019 = vmul.f32 %v1003, %v1018
        %v1020 = vmul.f32 %v1004, %v1018
        %v1021 = vld [vmem:[%s11] sm:$0xff]
        %v1022 = vld [vmem:[%s11 + $0x8] sm:$0xff]
        %1024 = vset.pattern.permute.xlu0 0
        %1025 = vperm.xlu0 %1024, %v1021
        %v1026 = vpop.permute.xlu0 %1025
        %1029 = vset.pattern.permute.xlu0 0
        %1030 = vperm.xlu0 %1029, %v1022
        %v1031 = vpop.permute.xlu0 %1030
        %v1033 = vmul.f32 %v1019, %v1026
        %v1034 = vmul.f32 %v1020, %v1031
        %v1035 = vld [vmem:[%s13] sm:$0xff]
        %v1036 = vld [vmem:[%s13 + $0x8] sm:$0xff]
        %1038 = vset.pattern.permute.xlu0 0
        %1039 = vperm.xlu0 %1038, %v1035
        %v1040 = vpop.permute.xlu0 %1039
        %1043 = vset.pattern.permute.xlu0 0
        %1044 = vperm.xlu0 %1043, %v1036
        %v1045 = vpop.permute.xlu0 %1044
        %v1047 = vadd.f32 %v1033, %v1040
        %v1048 = vadd.f32 %v1034, %v1045
        %v1049 = vld [vmem:[%s15] sm:$0xff]
        %v1050 = vld [vmem:[%s15 + $0x8] sm:$0xff]
        %v1051 = vld [vmem:[%s15 + $0x10] sm:$0xff]
        %v1052 = vld [vmem:[%s15 + $0x18] sm:$0xff]
        %v1053 = vld [vmem:[%s17] sm:$0xff]
        %v1054 = vld [vmem:[%s17 + $0x8] sm:$0xff]
        %v1055 = vld [vmem:[%s17 + $0x10] sm:$0xff]
        %v1056 = vld [vmem:[%s17 + $0x18] sm:$0xff]
        %1058 = vset.pattern.permute.xlu0 0
        %1059 = vperm.xlu0 %1058, %v1053
        %v1060 = vpop.permute.xlu0 %1059
        %1063 = vset.pattern.permute.xlu0 0
        %1064 = vperm.xlu0 %1063, %v1054
        %v1065 = vpop.permute.xlu0 %1064
        %1068 = vset.pattern.permute.xlu0 0
        %1069 = vperm.xlu0 %1068, %v1055
        %v1070 = vpop.permute.xlu0 %1069
        %1073 = vset.pattern.permute.xlu0 0
        %1074 = vperm.xlu0 %1073, %v1056
        %v1075 = vpop.permute.xlu0 %1074
        %v1078 = vsel %vm991, %v1049, 0
        %v1081 = vsel %vm991, %v1050, 0
        %v1084 = vsel %vm991, %v1051, 0
        %v1087 = vsel %vm991, %v1052, 0
        %1089 = vmatprep.subr.mxu0 0.0
        %1090 = vmatpush1.msra.mxu0 %v1047
        %1091 = vmatprep.subr.mxu0 0.0
        %1092 = vmatpush1.msra.mxu0 %v1048
        %1093 = vmatprep.subr.mxu0 0.0
        %1094 = vmatpush1.msra.mxu0 0.0
        %1095 = vmatprep.subr.mxu0 0.0
        %1096 = vmatpush1.msra.mxu0 0.0
        %1097 = vmatprep.subr.mxu0 0.0
        %1098 = vmatpush1.msra.mxu0 0.0
        %1099 = vmatprep.subr.mxu0 0.0
        %1100 = vmatpush1.msra.mxu0 0.0
        %1101 = vmatprep.subr.mxu0 0.0
        %1102 = vmatpush1.msra.mxu0 0.0
        %1103 = vmatprep.subr.mxu0 0.0
        %1104 = vmatpush1.msra.mxu0 0.0
        %1105 = vmatprep.subr.mxu0 0.0
        %1106 = vmatpush1.msra.mxu0 0.0
        %1107 = vmatprep.subr.mxu0 0.0
        %1108 = vmatpush1.msra.mxu0 0.0
        %1109 = vmatprep.subr.mxu0 0.0
        %1110 = vmatpush1.msra.mxu0 0.0
        %1111 = vmatprep.subr.mxu0 0.0
        %1112 = vmatpush1.msra.mxu0 0.0
        %1113 = vmatprep.subr.mxu0 0.0
        %1114 = vmatpush1.msra.mxu0 0.0
        %1115 = vmatprep.subr.mxu0 0.0
        %1116 = vmatpush1.msra.mxu0 0.0
        %1117 = vmatprep.subr.mxu0 0.0
        %1118 = vmatpush1.msra.mxu0 0.0
        %1119 = vmatprep.subr.mxu0 0.0
        %1120 = vmatpush1.msra.mxu0 0.0
        %1121 = vmatprep.subr.mxu0 0.0
        %1122 = vmatpush1.msra.mxu0 0.0
        %1123 = vmatprep.subr.mxu0 0.0
        %1124 = vmatpush1.msra.mxu0 0.0
        %1125 = vmatprep.subr.mxu0 0.0
        %1126 = vmatpush1.msra.mxu0 0.0
        %1127 = vmatprep.subr.mxu0 0.0
        %1128 = vmatpush1.msra.mxu0 0.0
        %1129 = vmatprep.subr.mxu0 0.0
        %1130 = vmatpush1.msra.mxu0 0.0
        %1131 = vmatprep.subr.mxu0 0.0
        %1132 = vmatpush1.msra.mxu0 0.0
        %1133 = vmatprep.subr.mxu0 0.0
        %1134 = vmatpush1.msra.mxu0 0.0
        %1135 = vmatprep.subr.mxu0 0.0
        %1136 = vmatpush1.msra.mxu0 0.0
        %1137 = vmatprep.subr.mxu0 0.0
        %1138 = vmatpush1.msra.mxu0 0.0
        %1139 = vmatprep.subr.mxu0 0.0
        %1140 = vmatpush1.msra.mxu0 0.0
        %1141 = vmatprep.subr.mxu0 0.0
        %1142 = vmatpush1.msra.mxu0 0.0
        %1143 = vmatprep.subr.mxu0 0.0
        %1144 = vmatpush1.msra.mxu0 0.0
        %1145 = vmatprep.subr.mxu0 0.0
        %1146 = vmatpush1.msra.mxu0 0.0
        %1147 = vmatprep.subr.mxu0 0.0
        %1148 = vmatpush1.msra.mxu0 0.0
        %1149 = vmatprep.subr.mxu0 0.0
        %1150 = vmatpush1.msra.mxu0 0.0
        %1151 = vmatprep.subr.mxu0 0.0
        %1152 = vmatpush1.msra.mxu0 0.0
        %1153 = vmatprep.mubr.f32.mxu0 0.0
        %1154 = vmatmul.mubr.f32.gmra.mrb[0].mxu0 %v1078
        %v1155 = vpop.f32.mrb[0].mxu0
        %v1156 = vadd.f32 %v1060, %v1155
        %v1157 = vpop.f32.mrb[0].mxu0
        %1158 = vmatprep.mubr.f32.mxu0 0.0
        %1159 = vmatmul.mubr.f32.gmra.mrb[0].mxu0 %v1081
        %v1160 = vpop.f32.mrb[0].mxu0
        %v1161 = vadd.f32 %v1065, %v1160
        %v1162 = vpop.f32.mrb[0].mxu0
        %1163 = vmatprep.mubr.f32.mxu0 0.0
        %1164 = vmatmul.mubr.f32.gmra.mrb[0].mxu0 %v1084
        %v1165 = vpop.f32.mrb[0].mxu0
        %v1166 = vadd.f32 %v1070, %v1165
        %v1167 = vpop.f32.mrb[0].mxu0
        %1168 = vmatprep.mubr.f32.mxu0 0.0
        %1169 = vmatmul.mubr.f32.gmra.mrb[0].mxu0 %v1087
        %v1170 = vpop.f32.mrb[0].mxu0
        %v1171 = vadd.f32 %v1075, %v1170
        %v1172 = vpop.f32.mrb[0].mxu0
        %1173 = vdwg.mxu0
        %v1175 = vlaneseq
        %v1176 = vshrl.u32 %v1175, 7
        %v1177 = vsub.s32 0, %v1176
        %v1178 = vrot.slane %v990, %v1177
        %v1180 = vmul.f32 %v1156, %v1178
        %v1181 = vmul.f32 %v1161, %v1178
        %v1182 = vmul.f32 %v1166, %v1178
        %v1183 = vmul.f32 %v1171, %v1178
        %1184 = vxpose.xlu0.b32.start [1/16] %v1180, 128
        %1185 = vxpose.xlu0.b32.cont [2/16] %v1181, 128
        %1186 = vxpose.xlu0.b32.cont [3/16] %v1182, 128
        %1187 = vxpose.xlu0.b32.cont [4/16] %v1183, 128
        %1188 = vxpose.xlu0.b32.cont [5/16] 0.0, 128
        %1189 = vxpose.xlu0.b32.cont [6/16] 0.0, 128
        %1190 = vxpose.xlu0.b32.cont [7/16] 0.0, 128
        %1191 = vxpose.xlu0.b32.cont [8/16] 0.0, 128
        %1192 = vxpose.xlu0.b32.cont [9/16] 0.0, 128
        %1193 = vxpose.xlu0.b32.cont [10/16] 0.0, 128
        %1194 = vxpose.xlu0.b32.cont [11/16] 0.0, 128
        %1195 = vxpose.xlu0.b32.cont [12/16] 0.0, 128
        %1196 = vxpose.xlu0.b32.cont [13/16] 0.0, 128
        %1197 = vxpose.xlu0.b32.cont [14/16] 0.0, 128
        %1198 = vxpose.xlu0.b32.cont [15/16] 0.0, 128
        %1199 = vxpose.xlu0.b32.end [16/16] 0.0, 128
        %v1200 = vpop.trf.xlu0
        %v1201 = vpop.trf.xlu0
        %v1202 = vpop.trf.xlu0
        %v1203 = vpop.trf.xlu0
        %v1204 = vpop.trf.xlu0
        %v1205 = vpop.trf.xlu0
        %v1206 = vpop.trf.xlu0
        %v1207 = vpop.trf.xlu0
        %v1208 = vpop.trf.xlu0
        %v1209 = vpop.trf.xlu0
        %v1210 = vpop.trf.xlu0
        %v1211 = vpop.trf.xlu0
        %v1212 = vpop.trf.xlu0
        %v1213 = vpop.trf.xlu0
        %v1214 = vpop.trf.xlu0
        %v1215 = vpop.trf.xlu0
        %v1216 = vld [vmem:[%s9] sm:$0xff]
        %v1217 = vld [vmem:[%s19] sm:$0x1]
        %v1218 = vld [vmem:[%s21] sm:$0x1]
        %vm1219 = vcmask 261120
        %v1220 = vsel %vm1219, %v1216, 0.0
        %1221 = vadd.xlane.f32.xlu0 %v1220
        %v1222 = vpop.xlane.xlu0 %1221
        %v1223 = vrcp.pop 32.0
        %v1224 = vmul.f32 %v1222, %v1223
        %v1225 = vsub.f32 %v1216, %v1224
        %v1226 = vmul.f32 %v1225, %v1225
        %v1227 = vsel %vm1219, %v1226, 0.0
        %1228 = vadd.xlane.f32.xlu0 %v1227
        %v1229 = vpop.xlane.xlu0 %1228
        %v1230 = vmul.f32 %v1229, %v1223
        %v1231 = vadd.f32 %v1230, 1e-05
        %v1232 = vrsqrt.pop %v1231
        %v1233 = vmul.f32 %v1225, %v1232
        %v1235 = vlaneseq
        %v1236 = vshrl.u32 %v1235, 7
        %v1237 = vsub.s32 0, %v1236
        %v1238 = vrot.slane %v1217, %v1237
        %v1240 = vmul.f32 %v1233, %v1238
        %v1242 = vlaneseq
        %v1243 = vshrl.u32 %v1242, 7
        %v1244 = vsub.s32 0, %v1243
        %v1245 = vrot.slane %v1218, %v1244
        %v1247 = vadd.f32 %v1240, %v1245
        %v1248 = vld [vmem:[%s23] sm:$0xff]
        %v1249 = vld [vmem:[%s23 + $0x8] sm:$0xff]
        %v1250 = vld [vmem:[%s23 + $0x10] sm:$0xff]
        %v1251 = vld [vmem:[%s23 + $0x18] sm:$0xff]
        %v1252 = vld [vmem:[%s25] sm:$0x1]
        %v1254 = vlaneseq
        %v1255 = vshrl.u32 %v1254, 7
        %v1256 = vsub.s32 0, %v1255
        %v1257 = vrot.slane %v1252, %v1256
        %v1260 = vsel %vm1219, %v1247, 0
        %1262 = vmatprep.subr.mxu0 0.0
        %1263 = vmatpush1.msra.mxu0 %v1248
        %1264 = vmatprep.subr.mxu0 0.0
        %1265 = vmatpush1.msra.mxu0 %v1249
        %1266 = vmatprep.subr.mxu0 0.0
        %1267 = vmatpush1.msra.mxu0 %v1250
        %1268 = vmatprep.subr.mxu0 0.0
        %1269 = vmatpush1.msra.mxu0 %v1251
        %1270 = vmatprep.subr.mxu0 0.0
        %1271 = vmatpush1.msra.mxu0 0.0
        %1272 = vmatprep.subr.mxu0 0.0
        %1273 = vmatpush1.msra.mxu0 0.0
        %1274 = vmatprep.subr.mxu0 0.0
        %1275 = vmatpush1.msra.mxu0 0.0
        %1276 = vmatprep.subr.mxu0 0.0
        %1277 = vmatpush1.msra.mxu0 0.0
        %1278 = vmatprep.subr.mxu0 0.0
        %1279 = vmatpush1.msra.mxu0 0.0
        %1280 = vmatprep.subr.mxu0 0.0
        %1281 = vmatpush1.msra.mxu0 0.0
        %1282 = vmatprep.subr.mxu0 0.0
        %1283 = vmatpush1.msra.mxu0 0.0
        %1284 = vmatprep.subr.mxu0 0.0
        %1285 = vmatpush1.msra.mxu0 0.0
        %1286 = vmatprep.subr.mxu0 0.0
        %1287 = vmatpush1.msra.mxu0 0.0
        %1288 = vmatprep.subr.mxu0 0.0
        %1289 = vmatpush1.msra.mxu0 0.0
        %1290 = vmatprep.subr.mxu0 0.0
        %1291 = vmatpush1.msra.mxu0 0.0
        %1292 = vmatprep.subr.mxu0 0.0
        %1293 = vmatpush1.msra.mxu0 0.0
        %1294 = vmatprep.subr.mxu0 0.0
        %1295 = vmatpush1.msra.mxu0 0.0
        %1296 = vmatprep.subr.mxu0 0.0
        %1297 = vmatpush1.msra.mxu0 0.0
        %1298 = vmatprep.subr.mxu0 0.0
        %1299 = vmatpush1.msra.mxu0 0.0
        %1300 = vmatprep.subr.mxu0 0.0
        %1301 = vmatpush1.msra.mxu0 0.0
        %1302 = vmatprep.subr.mxu0 0.0
        %1303 = vmatpush1.msra.mxu0 0.0
        %1304 = vmatprep.subr.mxu0 0.0
        %1305 = vmatpush1.msra.mxu0 0.0
        %1306 = vmatprep.subr.mxu0 0.0
        %1307 = vmatpush1.msra.mxu0 0.0
        %1308 = vmatprep.subr.mxu0 0.0
        %1309 = vmatpush1.msra.mxu0 0.0
        %1310 = vmatprep.subr.mxu0 0.0
        %1311 = vmatpush1.msra.mxu0 0.0
        %1312 = vmatprep.subr.mxu0 0.0
        %1313 = vmatpush1.msra.mxu0 0.0
        %1314 = vmatprep.subr.mxu0 0.0
        %1315 = vmatpush1.msra.mxu0 0.0
        %1316 = vmatprep.subr.mxu0 0.0
        %1317 = vmatpush1.msra.mxu0 0.0
        %1318 = vmatprep.subr.mxu0 0.0
        %1319 = vmatpush1.msra.mxu0 0.0
        %1320 = vmatprep.subr.mxu0 0.0
        %1321 = vmatpush1.msra.mxu0 0.0
        %1322 = vmatprep.subr.mxu0 0.0
        %1323 = vmatpush1.msra.mxu0 0.0
        %1324 = vmatprep.subr.mxu0 0.0
        %1325 = vmatpush1.msra.mxu0 0.0
        %1326 = vmatprep.mubr.f32.mxu0 0.0
        %1327 = vmatmul.mubr.f32.gmra.mrb[0].mxu0 %v1260
        %v1328 = vpop.f32.mrb[0].mxu0
        %v1329 = vadd.f32 %v1257, %v1328
        %v1330 = vpop.f32.mrb[0].mxu0
        %1331 = vdwg.mxu0
        %v1332 = vld [vmem:[%s27] sm:$0xff]
        %v1333 = vld [vmem:[%s27 + $0x8] sm:$0xff]
        %v1334 = vld [vmem:[%s27 + $0x10] sm:$0xff]
        %v1335 = vld [vmem:[%s27 + $0x18] sm:$0xff]
        %v1336 = vld [vmem:[%s29] sm:$0x1]
        %v1338 = vlaneseq
        %v1339 = vshrl.u32 %v1338, 7
        %v1340 = vsub.s32 0, %v1339
        %v1341 = vrot.slane %v1336, %v1340
        %v1344 = vsel %vm1219, %v1200, 0
        %v1347 = vsel %vm1219, %v1201, 0
        %1349 = vmatprep.subr.mxu0 0.0
        %1350 = vmatpush1.msra.mxu0 %v1332
        %1351 = vmatprep.subr.mxu0 0.0
        %1352 = vmatpush1.msra.mxu0 %v1333
        %1353 = vmatprep.subr.mxu0 0.0
        %1354 = vmatpush1.msra.mxu0 %v1334
        %1355 = vmatprep.subr.mxu0 0.0
        %1356 = vmatpush1.msra.mxu0 %v1335
        %1357 = vmatprep.subr.mxu0 0.0
        %1358 = vmatpush1.msra.mxu0 0.0
        %1359 = vmatprep.subr.mxu0 0.0
        %1360 = vmatpush1.msra.mxu0 0.0
        %1361 = vmatprep.subr.mxu0 0.0
        %1362 = vmatpush1.msra.mxu0 0.0
        %1363 = vmatprep.subr.mxu0 0.0
        %1364 = vmatpush1.msra.mxu0 0.0
        %1365 = vmatprep.subr.mxu0 0.0
        %1366 = vmatpush1.msra.mxu0 0.0
        %1367 = vmatprep.subr.mxu0 0.0
        %1368 = vmatpush1.msra.mxu0 0.0
        %1369 = vmatprep.subr.mxu0 0.0
        %1370 = vmatpush1.msra.mxu0 0.0
        %1371 = vmatprep.subr.mxu0 0.0
        %1372 = vmatpush1.msra.mxu0 0.0
        %1373 = vmatprep.subr.mxu0 0.0
        %1374 = vmatpush1.msra.mxu0 0.0
        %1375 = vmatprep.subr.mxu0 0.0
        %1376 = vmatpush1.msra.mxu0 0.0
        %1377 = vmatprep.subr.mxu0 0.0
        %1378 = vmatpush1.msra.mxu0 0.0
        %1379 = vmatprep.subr.mxu0 0.0
        %1380 = vmatpush1.msra.mxu0 0.0
        %1381 = vmatprep.subr.mxu0 0.0
        %1382 = vmatpush1.msra.mxu0 0.0
        %1383 = vmatprep.subr.mxu0 0.0
        %1384 = vmatpush1.msra.mxu0 0.0
        %1385 = vmatprep.subr.mxu0 0.0
        %1386 = vmatpush1.msra.mxu0 0.0
        %1387 = vmatprep.subr.mxu0 0.0
        %1388 = vmatpush1.msra.mxu0 0.0
        %1389 = vmatprep.subr.mxu0 0.0
        %1390 = vmatpush1.msra.mxu0 0.0
        %1391 = vmatprep.subr.mxu0 0.0
        %1392 = vmatpush1.msra.mxu0 0.0
        %1393 = vmatprep.subr.mxu0 0.0
        %1394 = vmatpush1.msra.mxu0 0.0
        %1395 = vmatprep.subr.mxu0 0.0
        %1396 = vmatpush1.msra.mxu0 0.0
        %1397 = vmatprep.subr.mxu0 0.0
        %1398 = vmatpush1.msra.mxu0 0.0
        %1399 = vmatprep.subr.mxu0 0.0
        %1400 = vmatpush1.msra.mxu0 0.0
        %1401 = vmatprep.subr.mxu0 0.0
        %1402 = vmatpush1.msra.mxu0 0.0
        %1403 = vmatprep.subr.mxu0 0.0
        %1404 = vmatpush1.msra.mxu0 0.0
        %1405 = vmatprep.subr.mxu0 0.0
        %1406 = vmatpush1.msra.mxu0 0.0
        %1407 = vmatprep.subr.mxu0 0.0
        %1408 = vmatpush1.msra.mxu0 0.0
        %1409 = vmatprep.subr.mxu0 0.0
        %1410 = vmatpush1.msra.mxu0 0.0
        %1411 = vmatprep.subr.mxu0 0.0
        %1412 = vmatpush1.msra.mxu0 0.0
        %1413 = vmatprep.mubr.f32.mxu0 0.0
        %1414 = vmatmul.mubr.f32.gmra.mrb[0].mxu0 %v1344
        %v1415 = vpop.f32.mrb[0].mxu0
        %v1416 = vadd.f32 %v1341, %v1415
        %v1417 = vpop.f32.mrb[0].mxu0
        %1418 = vmatprep.mubr.f32.mxu0 0.0
        %1419 = vmatmul.mubr.f32.gmra.mrb[0].mxu0 %v1347
        %v1420 = vpop.f32.mrb[0].mxu0
        %v1421 = vadd.f32 %v1341, %v1420
        %v1422 = vpop.f32.mrb[0].mxu0
        %1423 = vdwg.mxu0
        %v1424 = vld [vmem:[%s31] sm:$0xff]
        %v1425 = vld [vmem:[%s31 + $0x8] sm:$0xff]
        %v1426 = vld [vmem:[%s31 + $0x10] sm:$0xff]
        %v1427 = vld [vmem:[%s31 + $0x18] sm:$0xff]
        %v1428 = vld [vmem:[%s33] sm:$0x1]
        %v1430 = vlaneseq
        %v1431 = vshrl.u32 %v1430, 7
        %v1432 = vsub.s32 0, %v1431
        %v1433 = vrot.slane %v1428, %v1432
        %1435 = vmatprep.subr.mxu0 0.0
        %1436 = vmatpush1.msra.mxu0 %v1424
        %1437 = vmatprep.subr.mxu0 0.0
        %1438 = vmatpush1.msra.mxu0 %v1425
        %1439 = vmatprep.subr.mxu0 0.0
        %1440 = vmatpush1.msra.mxu0 %v1426
        %1441 = vmatprep.subr.mxu0 0.0
        %1442 = vmatpush1.msra.mxu0 %v1427
        %1443 = vmatprep.subr.mxu0 0.0
        %1444 = vmatpush1.msra.mxu0 0.0
        %1445 = vmatprep.subr.mxu0 0.0
        %1446 = vmatpush1.msra.mxu0 0.0
        %1447 = vmatprep.subr.mxu0 0.0
        %1448 = vmatpush1.msra.mxu0 0.0
        %1449 = vmatprep.subr.mxu0 0.0
        %1450 = vmatpush1.msra.mxu0 0.0
        %1451 = vmatprep.subr.mxu0 0.0
        %1452 = vmatpush1.msra.mxu0 0.0
        %1453 = vmatprep.subr.mxu0 0.0
        %1454 = vmatpush1.msra.mxu0 0.0
        %1455 = vmatprep.subr.mxu0 0.0
        %1456 = vmatpush1.msra.mxu0 0.0
        %1457 = vmatprep.subr.mxu0 0.0
        %1458 = vmatpush1.msra.mxu0 0.0
        %1459 = vmatprep.subr.mxu0 0.0
        %1460 = vmatpush1.msra.mxu0 0.0
        %1461 = vmatprep.subr.mxu0 0.0
        %1462 = vmatpush1.msra.mxu0 0.0
        %1463 = vmatprep.subr.mxu0 0.0
        %1464 = vmatpush1.msra.mxu0 0.0
        %1465 = vmatprep.subr.mxu0 0.0
        %1466 = vmatpush1.msra.mxu0 0.0
        %1467 = vmatprep.subr.mxu0 0.0
        %1468 = vmatpush1.msra.mxu0 0.0
        %1469 = vmatprep.subr.mxu0 0.0
        %1470 = vmatpush1.msra.mxu0 0.0
        %1471 = vmatprep.subr.mxu0 0.0
        %1472 = vmatpush1.msra.mxu0 0.0
        %1473 = vmatprep.subr.mxu0 0.0
        %1474 = vmatpush1.msra.mxu0 0.0
        %1475 = vmatprep.subr.mxu0 0.0
        %1476 = vmatpush1.msra.mxu0 0.0
        %1477 = vmatprep.subr.mxu0 0.0
        %1478 = vmatpush1.msra.mxu0 0.0
        %1479 = vmatprep.subr.mxu0 0.0
        %1480 = vmatpush1.msra.mxu0 0.0
        %1481 = vmatprep.subr.mxu0 0.0
        %1482 = vmatpush1.msra.mxu0 0.0
        %1483 = vmatprep.subr.mxu0 0.0
        %1484 = vmatpush1.msra.mxu0 0.0
        %1485 = vmatprep.subr.mxu0 0.0
        %1486 = vmatpush1.msra.mxu0 0.0
        %1487 = vmatprep.subr.mxu0 0.0
        %1488 = vmatpush1.msra.mxu0 0.0
        %1489 = vmatprep.subr.mxu0 0.0
        %1490 = vmatpush1.msra.mxu0 0.0
        %1491 = vmatprep.subr.mxu0 0.0
        %1492 = vmatpush1.msra.mxu0 0.0
        %1493 = vmatprep.subr.mxu0 0.0
        %1494 = vmatpush1.msra.mxu0 0.0
        %1495 = vmatprep.subr.mxu0 0.0
        %1496 = vmatpush1.msra.mxu0 0.0
        %1497 = vmatprep.subr.mxu0 0.0
        %1498 = vmatpush1.msra.mxu0 0.0
        %1499 = vmatprep.mubr.f32.mxu0 0.0
        %1500 = vmatmul.mubr.f32.gmra.mrb[0].mxu0 %v1344
        %v1501 = vpop.f32.mrb[0].mxu0
        %v1502 = vadd.f32 %v1433, %v1501
        %v1503 = vpop.f32.mrb[0].mxu0
        %1504 = vmatprep.mubr.f32.mxu0 0.0
        %1505 = vmatmul.mubr.f32.gmra.mrb[0].mxu0 %v1347
        %v1506 = vpop.f32.mrb[0].mxu0
        %v1507 = vadd.f32 %v1433, %v1506
        %v1508 = vpop.f32.mrb[0].mxu0
        %1509 = vdwg.mxu0
        %v1510 = vld [vmem:[%s35] sm:$0xff]
        %v1511 = vld [vmem:[%s35 + $0x8] sm:$0xff]
        %v1512 = vld [vmem:[%s35 + $0x10] sm:$0xff]
        %v1513 = vld [vmem:[%s35 + $0x18] sm:$0xff]
        %vm1514 = vcmask 64512
        %v1516 = vsel %vm1514, %v1329, 0
        %v1519 = vsel %vm1514, %v1416, 0
        %v1522 = vsel %vm1514, %v1421, 0
        %1524 = vmatprep.subr.mxu0 0.0
        %1525 = vmatpush1.xpose.msra.mxu0 %v1519
        %1526 = vmatprep.subr.mxu0 0.0
        %1527 = vmatpush1.xpose.msra.mxu0 %v1522
        %1528 = vmatprep.subr.mxu0 0.0
        %1529 = vmatpush1.xpose.msra.mxu0 0.0
        %1530 = vmatprep.subr.mxu0 0.0
        %1531 = vmatpush1.xpose.msra.mxu0 0.0
        %1532 = vmatprep.subr.mxu0 0.0
        %1533 = vmatpush1.xpose.msra.mxu0 0.0
        %1534 = vmatprep.subr.mxu0 0.0
        %1535 = vmatpush1.xpose.msra.mxu0 0.0
        %1536 = vmatprep.subr.mxu0 0.0
        %1537 = vmatpush1.xpose.msra.mxu0 0.0
        %1538 = vmatprep.subr.mxu0 0.0
        %1539 = vmatpush1.xpose.msra.mxu0 0.0
        %1540 = vmatprep.subr.mxu0 0.0
        %1541 = vmatpush1.xpose.msra.mxu0 0.0
        %1542 = vmatprep.subr.mxu0 0.0
        %1543 = vmatpush1.xpose.msra.mxu0 0.0
        %1544 = vmatprep.subr.mxu0 0.0
        %1545 = vmatpush1.xpose.msra.mxu0 0.0
        %1546 = vmatprep.subr.mxu0 0.0
        %1547 = vmatpush1.xpose.msra.mxu0 0.0
        %1548 = vmatprep.subr.mxu0 0.0
        %1549 = vmatpush1.xpose.msra.mxu0 0.0
        %1550 = vmatprep.subr.mxu0 0.0
        %1551 = vmatpush1.xpose.msra.mxu0 0.0
        %1552 = vmatprep.subr.mxu0 0.0
        %1553 = vmatpush1.xpose.msra.mxu0 0.0
        %1554 = vmatprep.subr.mxu0 0.0
        %1555 = vmatpush1.xpose.msra.mxu0 0.0
        %1556 = vmatprep.subr.mxu0 0.0
        %1557 = vmatpush1.xpose.msra.mxu0 0.0
        %1558 = vmatprep.subr.mxu0 0.0
        %1559 = vmatpush1.xpose.msra.mxu0 0.0
        %1560 = vmatprep.subr.mxu0 0.0
        %1561 = vmatpush1.xpose.msra.mxu0 0.0
        %1562 = vmatprep.subr.mxu0 0.0
        %1563 = vmatpush1.xpose.msra.mxu0 0.0
        %1564 = vmatprep.subr.mxu0 0.0
        %1565 = vmatpush1.xpose.msra.mxu0 0.0
        %1566 = vmatprep.subr.mxu0 0.0
        %1567 = vmatpush1.xpose.msra.mxu0 0.0
        %1568 = vmatprep.subr.mxu0 0.0
        %1569 = vmatpush1.xpose.msra.mxu0 0.0
        %1570 = vmatprep.subr.mxu0 0.0
        %1571 = vmatpush1.xpose.msra.mxu0 0.0
        %1572 = vmatprep.subr.mxu0 0.0
        %1573 = vmatpush1.xpose.msra.mxu0 0.0
        %1574 = vmatprep.subr.mxu0 0.0
        %1575 = vmatpush1.xpose.msra.mxu0 0.0
        %1576 = vmatprep.subr.mxu0 0.0
        %1577 = vmatpush1.xpose.msra.mxu0 0.0
        %1578 = vmatprep.subr.mxu0 0.0
        %1579 = vmatpush1.xpose.msra.mxu0 0.0
        %1580 = vmatprep.subr.mxu0 0.0
        %1581 = vmatpush1.xpose.msra.mxu0 0.0
        %1582 = vmatprep.subr.mxu0 0.0
        %1583 = vmatpush1.xpose.msra.mxu0 0.0
        %1584 = vmatprep.subr.mxu0 0.0
        %1585 = vmatpush1.xpose.msra.mxu0 0.0
        %1586 = vmatprep.subr.mxu0 0.0
        %1587 = vmatpush1.xpose.msra.mxu0 0.0
        %1588 = vmatprep.mubr.f32.mxu0 0.0
        %1589 = vmatmul.mubr.f32.gmra.mrb[0].mxu0 %v1516
        %v1590 = vpop.f32.mrb[0].mxu0
        %v1591 = vadd.f32 0.0, %v1590
        %v1592 = vpop.f32.mrb[0].mxu0
        %1593 = vdwg.mxu0
        %v1594 = vmul.f32 %v1591, 0.35355338
        %vm1595 = vcmp.gt.f32.partialorder %v990, 0.5
        %v1596 = vsel %vm1595, 1, 0
        %v1597 = vlaneseq
        %v1598 = vshrl.u32 %v1597, 7
        %v1599 = vsub.s32 0, %v1598
        %v1600 = vrot.slane %v1596, %v1599
        %vm1601 = vcmp.eq.s32.totalorder %v1600, 1
        %v1602 = vsel %vm1601, %v1594, -1e+30
        %v1603 = vsel %vm991, %v1602, -inf
        %1604 = vmax.xlane.f32.xlu0 %v1603
        %v1605 = vpop.xlane.xlu0 %1604
        %v1606 = vsub.f32 %v1602, %v1605
        %v1607 = vmul.f32 %v1606, 1.442695
        %v1608 = vpow.pop %v1607
        %v1609 = vsel %vm991, %v1608, 0.0
        %1610 = vadd.xlane.f32.xlu0 %v1609
        %v1611 = vpop.xlane.xlu0 %1610
        %v1612 = vrcp.pop %v1611
        %v1613 = vmul.f32 %v1608, %v1612
        %v1615 = vsel %vm991, %v1613, 0
        %1617 = vmatprep.subr.mxu0 0.0
        %1618 = vmatpush1.msra.mxu0 %v1502
        %1619 = vmatprep.subr.mxu0 0.0
        %1620 = vmatpush1.msra.mxu0 %v1507
        %1621 = vmatprep.subr.mxu0 0.0
        %1622 = vmatpush1.msra.mxu0 0.0
        %1623 = vmatprep.subr.mxu0 0.0
        %1624 = vmatpush1.msra.mxu0 0.0
        %1625 = vmatprep.subr.mxu0 0.0
        %1626 = vmatpush1.msra.mxu0 0.0
        %1627 = vmatprep.subr.mxu0 0.0
        %1628 = vmatpush1.msra.mxu0 0.0
        %1629 = vmatprep.subr.mxu0 0.0
        %1630 = vmatpush1.msra.mxu0 0.0
        %1631 = vmatprep.subr.mxu0 0.0
        %1632 = vmatpush1.msra.mxu0 0.0
        %1633 = vmatprep.subr.mxu0 0.0
        %1634 = vmatpush1.msra.mxu0 0.0
        %1635 = vmatprep.subr.mxu0 0.0
        %1636 = vmatpush1.msra.mxu0 0.0
        %1637 = vmatprep.subr.mxu0 0.0
        %1638 = vmatpush1.msra.mxu0 0.0
        %1639 = vmatprep.subr.mxu0 0.0
        %1640 = vmatpush1.msra.mxu0 0.0
        %1641 = vmatprep.subr.mxu0 0.0
        %1642 = vmatpush1.msra.mxu0 0.0
        %1643 = vmatprep.subr.mxu0 0.0
        %1644 = vmatpush1.msra.mxu0 0.0
        %1645 = vmatprep.subr.mxu0 0.0
        %1646 = vmatpush1.msra.mxu0 0.0
        %1647 = vmatprep.subr.mxu0 0.0
        %1648 = vmatpush1.msra.mxu0 0.0
        %1649 = vmatprep.subr.mxu0 0.0
        %1650 = vmatpush1.msra.mxu0 0.0
        %1651 = vmatprep.subr.mxu0 0.0
        %1652 = vmatpush1.msra.mxu0 0.0
        %1653 = vmatprep.subr.mxu0 0.0
        %1654 = vmatpush1.msra.mxu0 0.0
        %1655 = vmatprep.subr.mxu0 0.0
        %1656 = vmatpush1.msra.mxu0 0.0
        %1657 = vmatprep.subr.mxu0 0.0
        %1658 = vmatpush1.msra.mxu0 0.0
        %1659 = vmatprep.subr.mxu0 0.0
        %1660 = vmatpush1.msra.mxu0 0.0
        %1661 = vmatprep.subr.mxu0 0.0
        %1662 = vmatpush1.msra.mxu0 0.0
        %1663 = vmatprep.subr.mxu0 0.0
        %1664 = vmatpush1.msra.mxu0 0.0
        %1665 = vmatprep.subr.mxu0 0.0
        %1666 = vmatpush1.msra.mxu0 0.0
        %1667 = vmatprep.subr.mxu0 0.0
        %1668 = vmatpush1.msra.mxu0 0.0
        %1669 = vmatprep.subr.mxu0 0.0
        %1670 = vmatpush1.msra.mxu0 0.0
        %1671 = vmatprep.subr.mxu0 0.0
        %1672 = vmatpush1.msra.mxu0 0.0
        %1673 = vmatprep.subr.mxu0 0.0
        %1674 = vmatpush1.msra.mxu0 0.0
        %1675 = vmatprep.subr.mxu0 0.0
        %1676 = vmatpush1.msra.mxu0 0.0
        %1677 = vmatprep.subr.mxu0 0.0
        %1678 = vmatpush1.msra.mxu0 0.0
        %1679 = vmatprep.subr.mxu0 0.0
        %1680 = vmatpush1.msra.mxu0 0.0
        %1681 = vmatprep.mubr.f32.mxu0 0.0
        %1682 = vmatmul.mubr.f32.gmra.mrb[0].mxu0 %v1615
        %v1683 = vpop.f32.mrb[0].mxu0
        %v1684 = vadd.f32 0.0, %v1683
        %v1685 = vpop.f32.mrb[0].mxu0
        %1686 = vdwg.mxu0
        %1687 = vrot.lane.b32.xlu0 %v1329, 120
        %v1688 = vpop.permute.xlu0 %1687
        %1689 = vrot.lane.b32.xlu0 %v1416, 120
        %v1690 = vpop.permute.xlu0 %1689
        %1691 = vrot.lane.b32.xlu0 %v1421, 120
        %v1692 = vpop.permute.xlu0 %1691
        %v1693 = vsel %vm1514, %v1688, 0
        %v1695 = vsel %vm1514, %v1690, 0
        %v1697 = vsel %vm1514, %v1692, 0
        %1699 = vmatprep.subr.mxu0 0.0
        %1700 = vmatpush1.xpose.msra.mxu0 %v1695
        %1701 = vmatprep.subr.mxu0 0.0
        %1702 = vmatpush1.xpose.msra.mxu0 %v1697
        %1703 = vmatprep.subr.mxu0 0.0
        %1704 = vmatpush1.xpose.msra.mxu0 0.0
        %1705 = vmatprep.subr.mxu0 0.0
        %1706 = vmatpush1.xpose.msra.mxu0 0.0
        %1707 = vmatprep.subr.mxu0 0.0
        %1708 = vmatpush1.xpose.msra.mxu0 0.0
        %1709 = vmatprep.subr.mxu0 0.0
        %1710 = vmatpush1.xpose.msra.mxu0 0.0
        %1711 = vmatprep.subr.mxu0 0.0
        %1712 = vmatpush1.xpose.msra.mxu0 0.0
        %1713 = vmatprep.subr.mxu0 0.0
        %1714 = vmatpush1.xpose.msra.mxu0 0.0
        %1715 = vmatprep.subr.mxu0 0.0
        %1716 = vmatpush1.xpose.msra.mxu0 0.0
        %1717 = vmatprep.subr.mxu0 0.0
        %1718 = vmatpush1.xpose.msra.mxu0 0.0
        %1719 = vmatprep.subr.mxu0 0.0
        %1720 = vmatpush1.xpose.msra.mxu0 0.0
        %1721 = vmatprep.subr.mxu0 0.0
        %1722 = vmatpush1.xpose.msra.mxu0 0.0
        %1723 = vmatprep.subr.mxu0 0.0
        %1724 = vmatpush1.xpose.msra.mxu0 0.0
        %1725 = vmatprep.subr.mxu0 0.0
        %1726 = vmatpush1.xpose.msra.mxu0 0.0
        %1727 = vmatprep.subr.mxu0 0.0
        %1728 = vmatpush1.xpose.msra.mxu0 0.0
        %1729 = vmatprep.subr.mxu0 0.0
        %1730 = vmatpush1.xpose.msra.mxu0 0.0
        %1731 = vmatprep.subr.mxu0 0.0
        %1732 = vmatpush1.xpose.msra.mxu0 0.0
        %1733 = vmatprep.subr.mxu0 0.0
        %1734 = vmatpush1.xpose.msra.mxu0 0.0
        %1735 = vmatprep.subr.mxu0 0.0
        %1736 = vmatpush1.xpose.msra.mxu0 0.0
        %1737 = vmatprep.subr.mxu0 0.0
        %1738 = vmatpush1.xpose.msra.mxu0 0.0
        %1739 = vmatprep.subr.mxu0 0.0
        %1740 = vmatpush1.xpose.msra.mxu0 0.0
        %1741 = vmatprep.subr.mxu0 0.0
        %1742 = vmatpush1.xpose.msra.mxu0 0.0
        %1743 = vmatprep.subr.mxu0 0.0
        %1744 = vmatpush1.xpose.msra.mxu0 0.0
        %1745 = vmatprep.subr.mxu0 0.0
        %1746 = vmatpush1.xpose.msra.mxu0 0.0
        %1747 = vmatprep.subr.mxu0 0.0
        %1748 = vmatpush1.xpose.msra.mxu0 0.0
        %1749 = vmatprep.subr.mxu0 0.0
        %1750 = vmatpush1.xpose.msra.mxu0 0.0
        %1751 = vmatprep.subr.mxu0 0.0
        %1752 = vmatpush1.xpose.msra.mxu0 0.0
        %1753 = vmatprep.subr.mxu0 0.0
        %1754 = vmatpush1.xpose.msra.mxu0 0.0
        %1755 = vmatprep.subr.mxu0 0.0
        %1756 = vmatpush1.xpose.msra.mxu0 0.0
        %1757 = vmatprep.subr.mxu0 0.0
        %1758 = vmatpush1.xpose.msra.mxu0 0.0
        %1759 = vmatprep.subr.mxu0 0.0
        %1760 = vmatpush1.xpose.msra.mxu0 0.0
        %1761 = vmatprep.subr.mxu0 0.0
        %1762 = vmatpush1.xpose.msra.mxu0 0.0
        %1763 = vmatprep.mubr.f32.mxu0 0.0
        %1764 = vmatmul.mubr.f32.gmra.mrb[0].mxu0 %v1693
        %v1765 = vpop.f32.mrb[0].mxu0
        %v1766 = vadd.f32 0.0, %v1765
        %v1767 = vpop.f32.mrb[0].mxu0
        %1768 = vdwg.mxu0
        %v1769 = vmul.f32 %v1766, 0.35355338
        %v1770 = vsel %vm1601, %v1769, -1e+30
        %v1771 = vsel %vm991, %v1770, -inf
        %1772 = vmax.xlane.f32.xlu0 %v1771
        %v1773 = vpop.xlane.xlu0 %1772
        %v1774 = vsub.f32 %v1770, %v1773
        %v1775 = vmul.f32 %v1774, 1.442695
        %v1776 = vpow.pop %v1775
        %v1777 = vsel %vm991, %v1776, 0.0
        %1778 = vadd.xlane.f32.xlu0 %v1777
        %v1779 = vpop.xlane.xlu0 %1778
        %v1780 = vrcp.pop %v1779
        %v1781 = vmul.f32 %v1776, %v1780
        %1784 = vrot.lane.b32.xlu0 %v1502, 120
        %v1785 = vpop.permute.xlu0 %1784
        %1786 = vrot.lane.b32.xlu0 %v1507, 120
        %v1787 = vpop.permute.xlu0 %1786
        %v1791 = vsel %vm991, %v1781, 0
        %1793 = vmatprep.subr.mxu0 0.0
        %1794 = vmatpush1.msra.mxu0 %v1785
        %1795 = vmatprep.subr.mxu0 0.0
        %1796 = vmatpush1.msra.mxu0 %v1787
        %1797 = vmatprep.subr.mxu0 0.0
        %1798 = vmatpush1.msra.mxu0 0.0
        %1799 = vmatprep.subr.mxu0 0.0
        %1800 = vmatpush1.msra.mxu0 0.0
        %1801 = vmatprep.subr.mxu0 0.0
        %1802 = vmatpush1.msra.mxu0 0.0
        %1803 = vmatprep.subr.mxu0 0.0
        %1804 = vmatpush1.msra.mxu0 0.0
        %1805 = vmatprep.subr.mxu0 0.0
        %1806 = vmatpush1.msra.mxu0 0.0
        %1807 = vmatprep.subr.mxu0 0.0
        %1808 = vmatpush1.msra.mxu0 0.0
        %1809 = vmatprep.subr.mxu0 0.0
        %1810 = vmatpush1.msra.mxu0 0.0
        %1811 = vmatprep.subr.mxu0 0.0
        %1812 = vmatpush1.msra.mxu0 0.0
        %1813 = vmatprep.subr.mxu0 0.0
        %1814 = vmatpush1.msra.mxu0 0.0
        %1815 = vmatprep.subr.mxu0 0.0
        %1816 = vmatpush1.msra.mxu0 0.0
        %1817 = vmatprep.subr.mxu0 0.0
        %1818 = vmatpush1.msra.mxu0 0.0
        %1819 = vmatprep.subr.mxu0 0.0
        %1820 = vmatpush1.msra.mxu0 0.0
        %1821 = vmatprep.subr.mxu0 0.0
        %1822 = vmatpush1.msra.mxu0 0.0
        %1823 = vmatprep.subr.mxu0 0.0
        %1824 = vmatpush1.msra.mxu0 0.0
        %1825 = vmatprep.subr.mxu0 0.0
        %1826 = vmatpush1.msra.mxu0 0.0
        %1827 = vmatprep.subr.mxu0 0.0
        %1828 = vmatpush1.msra.mxu0 0.0
        %1829 = vmatprep.subr.mxu0 0.0
        %1830 = vmatpush1.msra.mxu0 0.0
        %1831 = vmatprep.subr.mxu0 0.0
        %1832 = vmatpush1.msra.mxu0 0.0
        %1833 = vmatprep.subr.mxu0 0.0
        %1834 = vmatpush1.msra.mxu0 0.0
        %1835 = vmatprep.subr.mxu0 0.0
        %1836 = vmatpush1.msra.mxu0 0.0
        %1837 = vmatprep.subr.mxu0 0.0
        %1838 = vmatpush1.msra.mxu0 0.0
        %1839 = vmatprep.subr.mxu0 0.0
        %1840 = vmatpush1.msra.mxu0 0.0
        %1841 = vmatprep.subr.mxu0 0.0
        %1842 = vmatpush1.msra.mxu0 0.0
        %1843 = vmatprep.subr.mxu0 0.0
        %1844 = vmatpush1.msra.mxu0 0.0
        %1845 = vmatprep.subr.mxu0 0.0
        %1846 = vmatpush1.msra.mxu0 0.0
        %1847 = vmatprep.subr.mxu0 0.0
        %1848 = vmatpush1.msra.mxu0 0.0
        %1849 = vmatprep.subr.mxu0 0.0
        %1850 = vmatpush1.msra.mxu0 0.0
        %1851 = vmatprep.subr.mxu0 0.0
        %1852 = vmatpush1.msra.mxu0 0.0
        %1853 = vmatprep.subr.mxu0 0.0
        %1854 = vmatpush1.msra.mxu0 0.0
        %1855 = vmatprep.subr.mxu0 0.0
        %1856 = vmatpush1.msra.mxu0 0.0
        %1857 = vmatprep.mubr.f32.mxu0 0.0
        %1858 = vmatmul.mubr.f32.gmra.mrb[0].mxu0 %v1791
        %v1859 = vpop.f32.mrb[0].mxu0
        %v1860 = vadd.f32 0.0, %v1859
        %v1861 = vpop.f32.mrb[0].mxu0
        %1862 = vdwg.mxu0
        %v1864 = vsel %vm1514, %v1860, 0
        %1866 = vmatprep.subr.mxu0 0.0
        %1867 = vmatpush1.msra.mxu0 %v1511
        %1868 = vmatprep.subr.mxu0 0.0
        %1869 = vmatpush1.msra.mxu0 0.0
        %1870 = vmatprep.subr.mxu0 0.0
        %1871 = vmatpush1.msra.mxu0 0.0
        %1872 = vmatprep.subr.mxu0 0.0
        %1873 = vmatpush1.msra.mxu0 0.0
        %1874 = vmatprep.subr.mxu0 0.0
        %1875 = vmatpush1.msra.mxu0 0.0
        %1876 = vmatprep.subr.mxu0 0.0
        %1877 = vmatpush1.msra.mxu0 0.0
        %1878 = vmatprep.subr.mxu0 0.0
        %1879 = vmatpush1.msra.mxu0 0.0
        %1880 = vmatprep.subr.mxu0 0.0
        %1881 = vmatpush1.msra.mxu0 0.0
        %1882 = vmatprep.subr.mxu0 0.0
        %1883 = vmatpush1.msra.mxu0 0.0
        %1884 = vmatprep.subr.mxu0 0.0
        %1885 = vmatpush1.msra.mxu0 0.0
        %1886 = vmatprep.subr.mxu0 0.0
        %1887 = vmatpush1.msra.mxu0 0.0
        %1888 = vmatprep.subr.mxu0 0.0
        %1889 = vmatpush1.msra.mxu0 0.0
        %1890 = vmatprep.subr.mxu0 0.0
        %1891 = vmatpush1.msra.mxu0 0.0
        %1892 = vmatprep.subr.mxu0 0.0
        %1893 = vmatpush1.msra.mxu0 0.0
        %1894 = vmatprep.subr.mxu0 0.0
        %1895 = vmatpush1.msra.mxu0 0.0
        %1896 = vmatprep.subr.mxu0 0.0
        %1897 = vmatpush1.msra.mxu0 0.0
        %1898 = vmatprep.subr.mxu0 0.0
        %1899 = vmatpush1.msra.mxu0 0.0
        %1900 = vmatprep.subr.mxu0 0.0
        %1901 = vmatpush1.msra.mxu0 0.0
        %1902 = vmatprep.subr.mxu0 0.0
        %1903 = vmatpush1.msra.mxu0 0.0
        %1904 = vmatprep.subr.mxu0 0.0
        %1905 = vmatpush1.msra.mxu0 0.0
        %1906 = vmatprep.subr.mxu0 0.0
        %1907 = vmatpush1.msra.mxu0 0.0
        %1908 = vmatprep.subr.mxu0 0.0
        %1909 = vmatpush1.msra.mxu0 0.0
        %1910 = vmatprep.subr.mxu0 0.0
        %1911 = vmatpush1.msra.mxu0 0.0
        %1912 = vmatprep.subr.mxu0 0.0
        %1913 = vmatpush1.msra.mxu0 0.0
        %1914 = vmatprep.subr.mxu0 0.0
        %1915 = vmatpush1.msra.mxu0 0.0
        %1916 = vmatprep.subr.mxu0 0.0
        %1917 = vmatpush1.msra.mxu0 0.0
        %1918 = vmatprep.subr.mxu0 0.0
        %1919 = vmatpush1.msra.mxu0 0.0
        %1920 = vmatprep.subr.mxu0 0.0
        %1921 = vmatpush1.msra.mxu0 0.0
        %1922 = vmatprep.subr.mxu0 0.0
        %1923 = vmatpush1.msra.mxu0 0.0
        %1924 = vmatprep.subr.mxu0 0.0
        %1925 = vmatpush1.msra.mxu0 0.0
        %1926 = vmatprep.subr.mxu0 0.0
        %1927 = vmatpush1.msra.mxu0 0.0
        %1928 = vmatprep.subr.mxu0 0.0
        %1929 = vmatpush1.msra.mxu0 0.0
        %1930 = vmatprep.mubr.f32.mxu0 0.0
        %1931 = vmatmul.mubr.f32.gmra.mrb[0].mxu0 %v1864
        %v1932 = vpop.f32.mrb[0].mxu0
        %v1933 = vadd.f32 0.0, %v1932
        %v1934 = vpop.f32.mrb[0].mxu0
        %1935 = vdwg.mxu0
        %v1937 = vsel %vm1514, %v1684, 0
        %1939 = vmatprep.subr.mxu0 0.0
        %1940 = vmatpush1.msra.mxu0 %v1510
        %1941 = vmatprep.subr.mxu0 0.0
        %1942 = vmatpush1.msra.mxu0 0.0
        %1943 = vmatprep.subr.mxu0 0.0
        %1944 = vmatpush1.msra.mxu0 0.0
        %1945 = vmatprep.subr.mxu0 0.0
        %1946 = vmatpush1.msra.mxu0 0.0
        %1947 = vmatprep.subr.mxu0 0.0
        %1948 = vmatpush1.msra.mxu0 0.0
        %1949 = vmatprep.subr.mxu0 0.0
        %1950 = vmatpush1.msra.mxu0 0.0
        %1951 = vmatprep.subr.mxu0 0.0
        %1952 = vmatpush1.msra.mxu0 0.0
        %1953 = vmatprep.subr.mxu0 0.0
        %1954 = vmatpush1.msra.mxu0 0.0
        %1955 = vmatprep.subr.mxu0 0.0
        %1956 = vmatpush1.msra.mxu0 0.0
        %1957 = vmatprep.subr.mxu0 0.0
        %1958 = vmatpush1.msra.mxu0 0.0
        %1959 = vmatprep.subr.mxu0 0.0
        %1960 = vmatpush1.msra.mxu0 0.0
        %1961 = vmatprep.subr.mxu0 0.0
        %1962 = vmatpush1.msra.mxu0 0.0
        %1963 = vmatprep.subr.mxu0 0.0
        %1964 = vmatpush1.msra.mxu0 0.0
        %1965 = vmatprep.subr.mxu0 0.0
        %1966 = vmatpush1.msra.mxu0 0.0
        %1967 = vmatprep.subr.mxu0 0.0
        %1968 = vmatpush1.msra.mxu0 0.0
        %1969 = vmatprep.subr.mxu0 0.0
        %1970 = vmatpush1.msra.mxu0 0.0
        %1971 = vmatprep.subr.mxu0 0.0
        %1972 = vmatpush1.msra.mxu0 0.0
        %1973 = vmatprep.subr.mxu0 0.0
        %1974 = vmatpush1.msra.mxu0 0.0
        %1975 = vmatprep.subr.mxu0 0.0
        %1976 = vmatpush1.msra.mxu0 0.0
        %1977 = vmatprep.subr.mxu0 0.0
        %1978 = vmatpush1.msra.mxu0 0.0
        %1979 = vmatprep.subr.mxu0 0.0
        %1980 = vmatpush1.msra.mxu0 0.0
        %1981 = vmatprep.subr.mxu0 0.0
        %1982 = vmatpush1.msra.mxu0 0.0
        %1983 = vmatprep.subr.mxu0 0.0
        %1984 = vmatpush1.msra.mxu0 0.0
        %1985 = vmatprep.subr.mxu0 0.0
        %1986 = vmatpush1.msra.mxu0 0.0
        %1987 = vmatprep.subr.mxu0 0.0
        %1988 = vmatpush1.msra.mxu0 0.0
        %1989 = vmatprep.subr.mxu0 0.0
        %1990 = vmatpush1.msra.mxu0 0.0
        %1991 = vmatprep.subr.mxu0 0.0
        %1992 = vmatpush1.msra.mxu0 0.0
        %1993 = vmatprep.subr.mxu0 0.0
        %1994 = vmatpush1.msra.mxu0 0.0
        %1995 = vmatprep.subr.mxu0 0.0
        %1996 = vmatpush1.msra.mxu0 0.0
        %1997 = vmatprep.subr.mxu0 0.0
        %1998 = vmatpush1.msra.mxu0 0.0
        %1999 = vmatprep.subr.mxu0 0.0
        %2000 = vmatpush1.msra.mxu0 0.0
        %2001 = vmatprep.subr.mxu0 0.0
        %2002 = vmatpush1.msra.mxu0 0.0
        %2003 = vmatprep.mubr.f32.mxu0 0.0
        %2004 = vmatmul.mubr.f32.gmra.mrb[0].mxu0 %v1937
        %v2005 = vpop.f32.mrb[0].mxu0
        %v2006 = vadd.f32 %v1933, %v2005
        %v2007 = vpop.f32.mrb[0].mxu0
        %2008 = vdwg.mxu0
        %2009 = vrot.lane.b32.xlu0 %v1329, 112
        %v2010 = vpop.permute.xlu0 %2009
        %2011 = vrot.lane.b32.xlu0 %v1416, 112
        %v2012 = vpop.permute.xlu0 %2011
        %2013 = vrot.lane.b32.xlu0 %v1421, 112
        %v2014 = vpop.permute.xlu0 %2013
        %v2015 = vsel %vm1514, %v2010, 0
        %v2017 = vsel %vm1514, %v2012, 0
        %v2019 = vsel %vm1514, %v2014, 0
        %2021 = vmatprep.subr.mxu0 0.0
        %2022 = vmatpush1.xpose.msra.mxu0 %v2017
        %2023 = vmatprep.subr.mxu0 0.0
        %2024 = vmatpush1.xpose.msra.mxu0 %v2019
        %2025 = vmatprep.subr.mxu0 0.0
        %2026 = vmatpush1.xpose.msra.mxu0 0.0
        %2027 = vmatprep.subr.mxu0 0.0
        %2028 = vmatpush1.xpose.msra.mxu0 0.0
        %2029 = vmatprep.subr.mxu0 0.0
        %2030 = vmatpush1.xpose.msra.mxu0 0.0
        %2031 = vmatprep.subr.mxu0 0.0
        %2032 = vmatpush1.xpose.msra.mxu0 0.0
        %2033 = vmatprep.subr.mxu0 0.0
        %2034 = vmatpush1.xpose.msra.mxu0 0.0
        %2035 = vmatprep.subr.mxu0 0.0
        %2036 = vmatpush1.xpose.msra.mxu0 0.0
        %2037 = vmatprep.subr.mxu0 0.0
        %2038 = vmatpush1.xpose.msra.mxu0 0.0
        %2039 = vmatprep.subr.mxu0 0.0
        %2040 = vmatpush1.xpose.msra.mxu0 0.0
        %2041 = vmatprep.subr.mxu0 0.0
        %2042 = vmatpush1.xpose.msra.mxu0 0.0
        %2043 = vmatprep.subr.mxu0 0.0
        %2044 = vmatpush1.xpose.msra.mxu0 0.0
        %2045 = vmatprep.subr.mxu0 0.0
        %2046 = vmatpush1.xpose.msra.mxu0 0.0
        %2047 = vmatprep.subr.mxu0 0.0
        %2048 = vmatpush1.xpose.msra.mxu0 0.0
        %2049 = vmatprep.subr.mxu0 0.0
        %2050 = vmatpush1.xpose.msra.mxu0 0.0
        %2051 = vmatprep.subr.mxu0 0.0
        %2052 = vmatpush1.xpose.msra.mxu0 0.0
        %2053 = vmatprep.subr.mxu0 0.0
        %2054 = vmatpush1.xpose.msra.mxu0 0.0
        %2055 = vmatprep.subr.mxu0 0.0
        %2056 = vmatpush1.xpose.msra.mxu0 0.0
        %2057 = vmatprep.subr.mxu0 0.0
        %2058 = vmatpush1.xpose.msra.mxu0 0.0
        %2059 = vmatprep.subr.mxu0 0.0
        %2060 = vmatpush1.xpose.msra.mxu0 0.0
        %2061 = vmatprep.subr.mxu0 0.0
        %2062 = vmatpush1.xpose.msra.mxu0 0.0
        %2063 = vmatprep.subr.mxu0 0.0
        %2064 = vmatpush1.xpose.msra.mxu0 0.0
        %2065 = vmatprep.subr.mxu0 0.0
        %2066 = vmatpush1.xpose.msra.mxu0 0.0
        %2067 = vmatprep.subr.mxu0 0.0
        %2068 = vmatpush1.xpose.msra.mxu0 0.0
        %2069 = vmatprep.subr.mxu0 0.0
        %2070 = vmatpush1.xpose.msra.mxu0 0.0
        %2071 = vmatprep.subr.mxu0 0.0
        %2072 = vmatpush1.xpose.msra.mxu0 0.0
        %2073 = vmatprep.subr.mxu0 0.0
        %2074 = vmatpush1.xpose.msra.mxu0 0.0
        %2075 = vmatprep.subr.mxu0 0.0
        %2076 = vmatpush1.xpose.msra.mxu0 0.0
        %2077 = vmatprep.subr.mxu0 0.0
        %2078 = vmatpush1.xpose.msra.mxu0 0.0
        %2079 = vmatprep.subr.mxu0 0.0
        %2080 = vmatpush1.xpose.msra.mxu0 0.0
        %2081 = vmatprep.subr.mxu0 0.0
        %2082 = vmatpush1.xpose.msra.mxu0 0.0
        %2083 = vmatprep.subr.mxu0 0.0
        %2084 = vmatpush1.xpose.msra.mxu0 0.0
        %2085 = vmatprep.mubr.f32.mxu0 0.0
        %2086 = vmatmul.mubr.f32.gmra.mrb[0].mxu0 %v2015
        %v2087 = vpop.f32.mrb[0].mxu0
        %v2088 = vadd.f32 0.0, %v2087
        %v2089 = vpop.f32.mrb[0].mxu0
        %2090 = vdwg.mxu0
        %v2091 = vmul.f32 %v2088, 0.35355338
        %v2092 = vsel %vm1601, %v2091, -1e+30
        %v2093 = vsel %vm991, %v2092, -inf
        %2094 = vmax.xlane.f32.xlu0 %v2093
        %v2095 = vpop.xlane.xlu0 %2094
        %v2096 = vsub.f32 %v2092, %v2095
        %v2097 = vmul.f32 %v2096, 1.442695
        %v2098 = vpow.pop %v2097
        %v2099 = vsel %vm991, %v2098, 0.0
        %2100 = vadd.xlane.f32.xlu0 %v2099
        %v2101 = vpop.xlane.xlu0 %2100
        %v2102 = vrcp.pop %v2101
        %v2103 = vmul.f32 %v2098, %v2102
        %2104 = vrot.lane.b32.xlu0 %v1502, 112
        %v2105 = vpop.permute.xlu0 %2104
        %2106 = vrot.lane.b32.xlu0 %v1507, 112
        %v2107 = vpop.permute.xlu0 %2106
        %v2111 = vsel %vm991, %v2103, 0
        %2113 = vmatprep.subr.mxu0 0.0
        %2114 = vmatpush1.msra.mxu0 %v2105
        %2115 = vmatprep.subr.mxu0 0.0
        %2116 = vmatpush1.msra.mxu0 %v2107
        %2117 = vmatprep.subr.mxu0 0.0
        %2118 = vmatpush1.msra.mxu0 0.0
        %2119 = vmatprep.subr.mxu0 0.0
        %2120 = vmatpush1.msra.mxu0 0.0
        %2121 = vmatprep.subr.mxu0 0.0
        %2122 = vmatpush1.msra.mxu0 0.0
        %2123 = vmatprep.subr.mxu0 0.0
        %2124 = vmatpush1.msra.mxu0 0.0
        %2125 = vmatprep.subr.mxu0 0.0
        %2126 = vmatpush1.msra.mxu0 0.0
        %2127 = vmatprep.subr.mxu0 0.0
        %2128 = vmatpush1.msra.mxu0 0.0
        %2129 = vmatprep.subr.mxu0 0.0
        %2130 = vmatpush1.msra.mxu0 0.0
        %2131 = vmatprep.subr.mxu0 0.0
        %2132 = vmatpush1.msra.mxu0 0.0
        %2133 = vmatprep.subr.mxu0 0.0
        %2134 = vmatpush1.msra.mxu0 0.0
        %2135 = vmatprep.subr.mxu0 0.0
        %2136 = vmatpush1.msra.mxu0 0.0
        %2137 = vmatprep.subr.mxu0 0.0
        %2138 = vmatpush1.msra.mxu0 0.0
        %2139 = vmatprep.subr.mxu0 0.0
        %2140 = vmatpush1.msra.mxu0 0.0
        %2141 = vmatprep.subr.mxu0 0.0
        %2142 = vmatpush1.msra.mxu0 0.0
        %2143 = vmatprep.subr.mxu0 0.0
        %2144 = vmatpush1.msra.mxu0 0.0
        %2145 = vmatprep.subr.mxu0 0.0
        %2146 = vmatpush1.msra.mxu0 0.0
        %2147 = vmatprep.subr.mxu0 0.0
        %2148 = vmatpush1.msra.mxu0 0.0
        %2149 = vmatprep.subr.mxu0 0.0
        %2150 = vmatpush1.msra.mxu0 0.0
        %2151 = vmatprep.subr.mxu0 0.0
        %2152 = vmatpush1.msra.mxu0 0.0
        %2153 = vmatprep.subr.mxu0 0.0
        %2154 = vmatpush1.msra.mxu0 0.0
        %2155 = vmatprep.subr.mxu0 0.0
        %2156 = vmatpush1.msra.mxu0 0.0
        %2157 = vmatprep.subr.mxu0 0.0
        %2158 = vmatpush1.msra.mxu0 0.0
        %2159 = vmatprep.subr.mxu0 0.0
        %2160 = vmatpush1.msra.mxu0 0.0
        %2161 = vmatprep.subr.mxu0 0.0
        %2162 = vmatpush1.msra.mxu0 0.0
        %2163 = vmatprep.subr.mxu0 0.0
        %2164 = vmatpush1.msra.mxu0 0.0
        %2165 = vmatprep.subr.mxu0 0.0
        %2166 = vmatpush1.msra.mxu0 0.0
        %2167 = vmatprep.subr.mxu0 0.0
        %2168 = vmatpush1.msra.mxu0 0.0
        %2169 = vmatprep.subr.mxu0 0.0
        %2170 = vmatpush1.msra.mxu0 0.0
        %2171 = vmatprep.subr.mxu0 0.0
        %2172 = vmatpush1.msra.mxu0 0.0
        %2173 = vmatprep.subr.mxu0 0.0
        %2174 = vmatpush1.msra.mxu0 0.0
        %2175 = vmatprep.subr.mxu0 0.0
        %2176 = vmatpush1.msra.mxu0 0.0
        %2177 = vmatprep.mubr.f32.mxu0 0.0
        %2178 = vmatmul.mubr.f32.gmra.mrb[0].mxu0 %v2111
        %v2179 = vpop.f32.mrb[0].mxu0
        %v2180 = vadd.f32 0.0, %v2179
        %v2181 = vpop.f32.mrb[0].mxu0
        %2182 = vdwg.mxu0
        %v2184 = vsel %vm1514, %v2180, 0
        %2186 = vmatprep.subr.mxu0 0.0
        %2187 = vmatpush1.msra.mxu0 %v1512
        %2188 = vmatprep.subr.mxu0 0.0
        %2189 = vmatpush1.msra.mxu0 0.0
        %2190 = vmatprep.subr.mxu0 0.0
        %2191 = vmatpush1.msra.mxu0 0.0
        %2192 = vmatprep.subr.mxu0 0.0
        %2193 = vmatpush1.msra.mxu0 0.0
        %2194 = vmatprep.subr.mxu0 0.0
        %2195 = vmatpush1.msra.mxu0 0.0
        %2196 = vmatprep.subr.mxu0 0.0
        %2197 = vmatpush1.msra.mxu0 0.0
        %2198 = vmatprep.subr.mxu0 0.0
        %2199 = vmatpush1.msra.mxu0 0.0
        %2200 = vmatprep.subr.mxu0 0.0
        %2201 = vmatpush1.msra.mxu0 0.0
        %2202 = vmatprep.subr.mxu0 0.0
        %2203 = vmatpush1.msra.mxu0 0.0
        %2204 = vmatprep.subr.mxu0 0.0
        %2205 = vmatpush1.msra.mxu0 0.0
        %2206 = vmatprep.subr.mxu0 0.0
        %2207 = vmatpush1.msra.mxu0 0.0
        %2208 = vmatprep.subr.mxu0 0.0
        %2209 = vmatpush1.msra.mxu0 0.0
        %2210 = vmatprep.subr.mxu0 0.0
        %2211 = vmatpush1.msra.mxu0 0.0
        %2212 = vmatprep.subr.mxu0 0.0
        %2213 = vmatpush1.msra.mxu0 0.0
        %2214 = vmatprep.subr.mxu0 0.0
        %2215 = vmatpush1.msra.mxu0 0.0
        %2216 = vmatprep.subr.mxu0 0.0
        %2217 = vmatpush1.msra.mxu0 0.0
        %2218 = vmatprep.subr.mxu0 0.0
        %2219 = vmatpush1.msra.mxu0 0.0
        %2220 = vmatprep.subr.mxu0 0.0
        %2221 = vmatpush1.msra.mxu0 0.0
        %2222 = vmatprep.subr.mxu0 0.0
        %2223 = vmatpush1.msra.mxu0 0.0
        %2224 = vmatprep.subr.mxu0 0.0
        %2225 = vmatpush1.msra.mxu0 0.0
        %2226 = vmatprep.subr.mxu0 0.0
        %2227 = vmatpush1.msra.mxu0 0.0
        %2228 = vmatprep.subr.mxu0 0.0
        %2229 = vmatpush1.msra.mxu0 0.0
        %2230 = vmatprep.subr.mxu0 0.0
        %2231 = vmatpush1.msra.mxu0 0.0
        %2232 = vmatprep.subr.mxu0 0.0
        %2233 = vmatpush1.msra.mxu0 0.0
        %2234 = vmatprep.subr.mxu0 0.0
        %2235 = vmatpush1.msra.mxu0 0.0
        %2236 = vmatprep.subr.mxu0 0.0
        %2237 = vmatpush1.msra.mxu0 0.0
        %2238 = vmatprep.subr.mxu0 0.0
        %2239 = vmatpush1.msra.mxu0 0.0
        %2240 = vmatprep.subr.mxu0 0.0
        %2241 = vmatpush1.msra.mxu0 0.0
        %2242 = vmatprep.subr.mxu0 0.0
        %2243 = vmatpush1.msra.mxu0 0.0
        %2244 = vmatprep.subr.mxu0 0.0
        %2245 = vmatpush1.msra.mxu0 0.0
        %2246 = vmatprep.subr.mxu0 0.0
        %2247 = vmatpush1.msra.mxu0 0.0
        %2248 = vmatprep.subr.mxu0 0.0
        %2249 = vmatpush1.msra.mxu0 0.0
        %2250 = vmatprep.mubr.f32.mxu0 0.0
        %2251 = vmatmul.mubr.f32.gmra.mrb[0].mxu0 %v2184
        %v2252 = vpop.f32.mrb[0].mxu0
        %v2253 = vadd.f32 0.0, %v2252
        %v2254 = vpop.f32.mrb[0].mxu0
        %2255 = vdwg.mxu0
        %v2256 = vadd.f32 %v2006, %v2253
        %2257 = vrot.lane.b32.xlu0 %v1329, 104
        %v2258 = vpop.permute.xlu0 %2257
        %2259 = vrot.lane.b32.xlu0 %v1416, 104
        %v2260 = vpop.permute.xlu0 %2259
        %2261 = vrot.lane.b32.xlu0 %v1421, 104
        %v2262 = vpop.permute.xlu0 %2261
        %v2263 = vsel %vm1514, %v2258, 0
        %v2265 = vsel %vm1514, %v2260, 0
        %v2267 = vsel %vm1514, %v2262, 0
        %2269 = vmatprep.subr.mxu0 0.0
        %2270 = vmatpush1.xpose.msra.mxu0 %v2265
        %2271 = vmatprep.subr.mxu0 0.0
        %2272 = vmatpush1.xpose.msra.mxu0 %v2267
        %2273 = vmatprep.subr.mxu0 0.0
        %2274 = vmatpush1.xpose.msra.mxu0 0.0
        %2275 = vmatprep.subr.mxu0 0.0
        %2276 = vmatpush1.xpose.msra.mxu0 0.0
        %2277 = vmatprep.subr.mxu0 0.0
        %2278 = vmatpush1.xpose.msra.mxu0 0.0
        %2279 = vmatprep.subr.mxu0 0.0
        %2280 = vmatpush1.xpose.msra.mxu0 0.0
        %2281 = vmatprep.subr.mxu0 0.0
        %2282 = vmatpush1.xpose.msra.mxu0 0.0
        %2283 = vmatprep.subr.mxu0 0.0
        %2284 = vmatpush1.xpose.msra.mxu0 0.0
        %2285 = vmatprep.subr.mxu0 0.0
        %2286 = vmatpush1.xpose.msra.mxu0 0.0
        %2287 = vmatprep.subr.mxu0 0.0
        %2288 = vmatpush1.xpose.msra.mxu0 0.0
        %2289 = vmatprep.subr.mxu0 0.0
        %2290 = vmatpush1.xpose.msra.mxu0 0.0
        %2291 = vmatprep.subr.mxu0 0.0
        %2292 = vmatpush1.xpose.msra.mxu0 0.0
        %2293 = vmatprep.subr.mxu0 0.0
        %2294 = vmatpush1.xpose.msra.mxu0 0.0
        %2295 = vmatprep.subr.mxu0 0.0
        %2296 = vmatpush1.xpose.msra.mxu0 0.0
        %2297 = vmatprep.subr.mxu0 0.0
        %2298 = vmatpush1.xpose.msra.mxu0 0.0
        %2299 = vmatprep.subr.mxu0 0.0
        %2300 = vmatpush1.xpose.msra.mxu0 0.0
        %2301 = vmatprep.subr.mxu0 0.0
        %2302 = vmatpush1.xpose.msra.mxu0 0.0
        %2303 = vmatprep.subr.mxu0 0.0
        %2304 = vmatpush1.xpose.msra.mxu0 0.0
        %2305 = vmatprep.subr.mxu0 0.0
        %2306 = vmatpush1.xpose.msra.mxu0 0.0
        %2307 = vmatprep.subr.mxu0 0.0
        %2308 = vmatpush1.xpose.msra.mxu0 0.0
        %2309 = vmatprep.subr.mxu0 0.0
        %2310 = vmatpush1.xpose.msra.mxu0 0.0
        %2311 = vmatprep.subr.mxu0 0.0
        %2312 = vmatpush1.xpose.msra.mxu0 0.0
        %2313 = vmatprep.subr.mxu0 0.0
        %2314 = vmatpush1.xpose.msra.mxu0 0.0
        %2315 = vmatprep.subr.mxu0 0.0
        %2316 = vmatpush1.xpose.msra.mxu0 0.0
        %2317 = vmatprep.subr.mxu0 0.0
        %2318 = vmatpush1.xpose.msra.mxu0 0.0
        %2319 = vmatprep.subr.mxu0 0.0
        %2320 = vmatpush1.xpose.msra.mxu0 0.0
        %2321 = vmatprep.subr.mxu0 0.0
        %2322 = vmatpush1.xpose.msra.mxu0 0.0
        %2323 = vmatprep.subr.mxu0 0.0
        %2324 = vmatpush1.xpose.msra.mxu0 0.0
        %2325 = vmatprep.subr.mxu0 0.0
        %2326 = vmatpush1.xpose.msra.mxu0 0.0
        %2327 = vmatprep.subr.mxu0 0.0
        %2328 = vmatpush1.xpose.msra.mxu0 0.0
        %2329 = vmatprep.subr.mxu0 0.0
        %2330 = vmatpush1.xpose.msra.mxu0 0.0
        %2331 = vmatprep.subr.mxu0 0.0
        %2332 = vmatpush1.xpose.msra.mxu0 0.0
        %2333 = vmatprep.mubr.f32.mxu0 0.0
        %2334 = vmatmul.mubr.f32.gmra.mrb[0].mxu0 %v2263
        %v2335 = vpop.f32.mrb[0].mxu0
        %v2336 = vadd.f32 0.0, %v2335
        %v2337 = vpop.f32.mrb[0].mxu0
        %2338 = vdwg.mxu0
        %v2339 = vmul.f32 %v2336, 0.35355338
        %v2340 = vsel %vm1601, %v2339, -1e+30
        %v2341 = vsel %vm991, %v2340, -inf
        %2342 = vmax.xlane.f32.xlu0 %v2341
        %v2343 = vpop.xlane.xlu0 %2342
        %v2344 = vsub.f32 %v2340, %v2343
        %v2345 = vmul.f32 %v2344, 1.442695
        %v2346 = vpow.pop %v2345
        %v2347 = vsel %vm991, %v2346, 0.0
        %2348 = vadd.xlane.f32.xlu0 %v2347
        %v2349 = vpop.xlane.xlu0 %2348
        %v2350 = vrcp.pop %v2349
        %v2351 = vmul.f32 %v2346, %v2350
        %2352 = vrot.lane.b32.xlu0 %v1502, 104
        %v2353 = vpop.permute.xlu0 %2352
        %2354 = vrot.lane.b32.xlu0 %v1507, 104
        %v2355 = vpop.permute.xlu0 %2354
        %v2359 = vsel %vm991, %v2351, 0
        %2361 = vmatprep.subr.mxu0 0.0
        %2362 = vmatpush1.msra.mxu0 %v2353
        %2363 = vmatprep.subr.mxu0 0.0
        %2364 = vmatpush1.msra.mxu0 %v2355
        %2365 = vmatprep.subr.mxu0 0.0
        %2366 = vmatpush1.msra.mxu0 0.0
        %2367 = vmatprep.subr.mxu0 0.0
        %2368 = vmatpush1.msra.mxu0 0.0
        %2369 = vmatprep.subr.mxu0 0.0
        %2370 = vmatpush1.msra.mxu0 0.0
        %2371 = vmatprep.subr.mxu0 0.0
        %2372 = vmatpush1.msra.mxu0 0.0
        %2373 = vmatprep.subr.mxu0 0.0
        %2374 = vmatpush1.msra.mxu0 0.0
        %2375 = vmatprep.subr.mxu0 0.0
        %2376 = vmatpush1.msra.mxu0 0.0
        %2377 = vmatprep.subr.mxu0 0.0
        %2378 = vmatpush1.msra.mxu0 0.0
        %2379 = vmatprep.subr.mxu0 0.0
        %2380 = vmatpush1.msra.mxu0 0.0
        %2381 = vmatprep.subr.mxu0 0.0
        %2382 = vmatpush1.msra.mxu0 0.0
        %2383 = vmatprep.subr.mxu0 0.0
        %2384 = vmatpush1.msra.mxu0 0.0
        %2385 = vmatprep.subr.mxu0 0.0
        %2386 = vmatpush1.msra.mxu0 0.0
        %2387 = vmatprep.subr.mxu0 0.0
        %2388 = vmatpush1.msra.mxu0 0.0
        %2389 = vmatprep.subr.mxu0 0.0
        %2390 = vmatpush1.msra.mxu0 0.0
        %2391 = vmatprep.subr.mxu0 0.0
        %2392 = vmatpush1.msra.mxu0 0.0
        %2393 = vmatprep.subr.mxu0 0.0
        %2394 = vmatpush1.msra.mxu0 0.0
        %2395 = vmatprep.subr.mxu0 0.0
        %2396 = vmatpush1.msra.mxu0 0.0
        %2397 = vmatprep.subr.mxu0 0.0
        %2398 = vmatpush1.msra.mxu0 0.0
        %2399 = vmatprep.subr.mxu0 0.0
        %2400 = vmatpush1.msra.mxu0 0.0
        %2401 = vmatprep.subr.mxu0 0.0
        %2402 = vmatpush1.msra.mxu0 0.0
        %2403 = vmatprep.subr.mxu0 0.0
        %2404 = vmatpush1.msra.mxu0 0.0
        %2405 = vmatprep.subr.mxu0 0.0
        %2406 = vmatpush1.msra.mxu0 0.0
        %2407 = vmatprep.subr.mxu0 0.0
        %2408 = vmatpush1.msra.mxu0 0.0
        %2409 = vmatprep.subr.mxu0 0.0
        %2410 = vmatpush1.msra.mxu0 0.0
        %2411 = vmatprep.subr.mxu0 0.0
        %2412 = vmatpush1.msra.mxu0 0.0
        %2413 = vmatprep.subr.mxu0 0.0
        %2414 = vmatpush1.msra.mxu0 0.0
        %2415 = vmatprep.subr.mxu0 0.0
        %2416 = vmatpush1.msra.mxu0 0.0
        %2417 = vmatprep.subr.mxu0 0.0
        %2418 = vmatpush1.msra.mxu0 0.0
        %2419 = vmatprep.subr.mxu0 0.0
        %2420 = vmatpush1.msra.mxu0 0.0
        %2421 = vmatprep.subr.mxu0 0.0
        %2422 = vmatpush1.msra.mxu0 0.0
        %2423 = vmatprep.subr.mxu0 0.0
        %2424 = vmatpush1.msra.mxu0 0.0
        %2425 = vmatprep.mubr.f32.mxu0 0.0
        %2426 = vmatmul.mubr.f32.gmra.mrb[0].mxu0 %v2359
        %v2427 = vpop.f32.mrb[0].mxu0
        %v2428 = vadd.f32 0.0, %v2427
        %v2429 = vpop.f32.mrb[0].mxu0
        %2430 = vdwg.mxu0
        %v2432 = vsel %vm1514, %v2428, 0
        %2434 = vmatprep.subr.mxu0 0.0
        %2435 = vmatpush1.msra.mxu0 %v1513
        %2436 = vmatprep.subr.mxu0 0.0
        %2437 = vmatpush1.msra.mxu0 0.0
        %2438 = vmatprep.subr.mxu0 0.0
        %2439 = vmatpush1.msra.mxu0 0.0
        %2440 = vmatprep.subr.mxu0 0.0
        %2441 = vmatpush1.msra.mxu0 0.0
        %2442 = vmatprep.subr.mxu0 0.0
        %2443 = vmatpush1.msra.mxu0 0.0
        %2444 = vmatprep.subr.mxu0 0.0
        %2445 = vmatpush1.msra.mxu0 0.0
        %2446 = vmatprep.subr.mxu0 0.0
        %2447 = vmatpush1.msra.mxu0 0.0
        %2448 = vmatprep.subr.mxu0 0.0
        %2449 = vmatpush1.msra.mxu0 0.0
        %2450 = vmatprep.subr.mxu0 0.0
        %2451 = vmatpush1.msra.mxu0 0.0
        %2452 = vmatprep.subr.mxu0 0.0
        %2453 = vmatpush1.msra.mxu0 0.0
        %2454 = vmatprep.subr.mxu0 0.0
        %2455 = vmatpush1.msra.mxu0 0.0
        %2456 = vmatprep.subr.mxu0 0.0
        %2457 = vmatpush1.msra.mxu0 0.0
        %2458 = vmatprep.subr.mxu0 0.0
        %2459 = vmatpush1.msra.mxu0 0.0
        %2460 = vmatprep.subr.mxu0 0.0
        %2461 = vmatpush1.msra.mxu0 0.0
        %2462 = vmatprep.subr.mxu0 0.0
        %2463 = vmatpush1.msra.mxu0 0.0
        %2464 = vmatprep.subr.mxu0 0.0
        %2465 = vmatpush1.msra.mxu0 0.0
        %2466 = vmatprep.subr.mxu0 0.0
        %2467 = vmatpush1.msra.mxu0 0.0
        %2468 = vmatprep.subr.mxu0 0.0
        %2469 = vmatpush1.msra.mxu0 0.0
        %2470 = vmatprep.subr.mxu0 0.0
        %2471 = vmatpush1.msra.mxu0 0.0
        %2472 = vmatprep.subr.mxu0 0.0
        %2473 = vmatpush1.msra.mxu0 0.0
        %2474 = vmatprep.subr.mxu0 0.0
        %2475 = vmatpush1.msra.mxu0 0.0
        %2476 = vmatprep.subr.mxu0 0.0
        %2477 = vmatpush1.msra.mxu0 0.0
        %2478 = vmatprep.subr.mxu0 0.0
        %2479 = vmatpush1.msra.mxu0 0.0
        %2480 = vmatprep.subr.mxu0 0.0
        %2481 = vmatpush1.msra.mxu0 0.0
        %2482 = vmatprep.subr.mxu0 0.0
        %2483 = vmatpush1.msra.mxu0 0.0
        %2484 = vmatprep.subr.mxu0 0.0
        %2485 = vmatpush1.msra.mxu0 0.0
        %2486 = vmatprep.subr.mxu0 0.0
        %2487 = vmatpush1.msra.mxu0 0.0
        %2488 = vmatprep.subr.mxu0 0.0
        %2489 = vmatpush1.msra.mxu0 0.0
        %2490 = vmatprep.subr.mxu0 0.0
        %2491 = vmatpush1.msra.mxu0 0.0
        %2492 = vmatprep.subr.mxu0 0.0
        %2493 = vmatpush1.msra.mxu0 0.0
        %2494 = vmatprep.subr.mxu0 0.0
        %2495 = vmatpush1.msra.mxu0 0.0
        %2496 = vmatprep.subr.mxu0 0.0
        %2497 = vmatpush1.msra.mxu0 0.0
        %2498 = vmatprep.mubr.f32.mxu0 0.0
        %2499 = vmatmul.mubr.f32.gmra.mrb[0].mxu0 %v2432
        %v2500 = vpop.f32.mrb[0].mxu0
        %v2501 = vadd.f32 0.0, %v2500
        %v2502 = vpop.f32.mrb[0].mxu0
        %2503 = vdwg.mxu0
        %v2504 = vadd.f32 %v2256, %v2501
        %v2505 = vadd.f32 %v1216, %v2504
        %v2506 = vld [vmem:[%s37] sm:$0x1]
        %v2508 = vlaneseq
        %v2509 = vshrl.u32 %v2508, 7
        %v2510 = vsub.s32 0, %v2509
        %v2511 = vrot.slane %v2506, %v2510
        %v2513 = vadd.f32 %v2505, %v2511
        %v2514 = vld [vmem:[%s39] sm:$0x1]
        %v2515 = vld [vmem:[%s41] sm:$0x1]
        %v2516 = vsel %vm1219, %v2513, 0.0
        %2517 = vadd.xlane.f32.xlu0 %v2516
        %v2518 = vpop.xlane.xlu0 %2517
        %v2519 = vmul.f32 %v2518, %v1223
        %v2520 = vsub.f32 %v2513, %v2519
        %v2521 = vmul.f32 %v2520, %v2520
        %v2522 = vsel %vm1219, %v2521, 0.0
        %2523 = vadd.xlane.f32.xlu0 %v2522
        %v2524 = vpop.xlane.xlu0 %2523
        %v2525 = vmul.f32 %v2524, %v1223
        %v2526 = vadd.f32 %v2525, 1e-05
        %v2527 = vrsqrt.pop %v2526
        %v2528 = vmul.f32 %v2520, %v2527
        %v2530 = vlaneseq
        %v2531 = vshrl.u32 %v2530, 7
        %v2532 = vsub.s32 0, %v2531
        %v2533 = vrot.slane %v2514, %v2532
        %v2535 = vmul.f32 %v2528, %v2533
        %v2537 = vlaneseq
        %v2538 = vshrl.u32 %v2537, 7
        %v2539 = vsub.s32 0, %v2538
        %v2540 = vrot.slane %v2515, %v2539
        %v2542 = vadd.f32 %v2535, %v2540
        %v2543 = vld [vmem:[%s43] sm:$0xff]
        %v2544 = vld [vmem:[%s43 + $0x8] sm:$0xff]
        %v2545 = vld [vmem:[%s43 + $0x10] sm:$0xff]
        %v2546 = vld [vmem:[%s43 + $0x18] sm:$0xff]
        %v2547 = vld [vmem:[%s45] sm:$0x1]
        %v2549 = vlaneseq
        %v2550 = vshrl.u32 %v2549, 7
        %v2551 = vsub.s32 0, %v2550
        %v2552 = vrot.slane %v2547, %v2551
        %v2555 = vsel %vm1219, %v2542, 0
        %2557 = vmatprep.subr.mxu0 0.0
        %2558 = vmatpush1.msra.mxu0 %v2543
        %2559 = vmatprep.subr.mxu0 0.0
        %2560 = vmatpush1.msra.mxu0 %v2544
        %2561 = vmatprep.subr.mxu0 0.0
        %2562 = vmatpush1.msra.mxu0 %v2545
        %2563 = vmatprep.subr.mxu0 0.0
        %2564 = vmatpush1.msra.mxu0 %v2546
        %2565 = vmatprep.subr.mxu0 0.0
        %2566 = vmatpush1.msra.mxu0 0.0
        %2567 = vmatprep.subr.mxu0 0.0
        %2568 = vmatpush1.msra.mxu0 0.0
        %2569 = vmatprep.subr.mxu0 0.0
        %2570 = vmatpush1.msra.mxu0 0.0
        %2571 = vmatprep.subr.mxu0 0.0
        %2572 = vmatpush1.msra.mxu0 0.0
        %2573 = vmatprep.subr.mxu0 0.0
        %2574 = vmatpush1.msra.mxu0 0.0
        %2575 = vmatprep.subr.mxu0 0.0
        %2576 = vmatpush1.msra.mxu0 0.0
        %2577 = vmatprep.subr.mxu0 0.0
        %2578 = vmatpush1.msra.mxu0 0.0
        %2579 = vmatprep.subr.mxu0 0.0
        %2580 = vmatpush1.msra.mxu0 0.0
        %2581 = vmatprep.subr.mxu0 0.0
        %2582 = vmatpush1.msra.mxu0 0.0
        %2583 = vmatprep.subr.mxu0 0.0
        %2584 = vmatpush1.msra.mxu0 0.0
        %2585 = vmatprep.subr.mxu0 0.0
        %2586 = vmatpush1.msra.mxu0 0.0
        %2587 = vmatprep.subr.mxu0 0.0
        %2588 = vmatpush1.msra.mxu0 0.0
        %2589 = vmatprep.subr.mxu0 0.0
        %2590 = vmatpush1.msra.mxu0 0.0
        %2591 = vmatprep.subr.mxu0 0.0
        %2592 = vmatpush1.msra.mxu0 0.0
        %2593 = vmatprep.subr.mxu0 0.0
        %2594 = vmatpush1.msra.mxu0 0.0
        %2595 = vmatprep.subr.mxu0 0.0
        %2596 = vmatpush1.msra.mxu0 0.0
        %2597 = vmatprep.subr.mxu0 0.0
        %2598 = vmatpush1.msra.mxu0 0.0
        %2599 = vmatprep.subr.mxu0 0.0
        %2600 = vmatpush1.msra.mxu0 0.0
        %2601 = vmatprep.subr.mxu0 0.0
        %2602 = vmatpush1.msra.mxu0 0.0
        %2603 = vmatprep.subr.mxu0 0.0
        %2604 = vmatpush1.msra.mxu0 0.0
        %2605 = vmatprep.subr.mxu0 0.0
        %2606 = vmatpush1.msra.mxu0 0.0
        %2607 = vmatprep.subr.mxu0 0.0
        %2608 = vmatpush1.msra.mxu0 0.0
        %2609 = vmatprep.subr.mxu0 0.0
        %2610 = vmatpush1.msra.mxu0 0.0
        %2611 = vmatprep.subr.mxu0 0.0
        %2612 = vmatpush1.msra.mxu0 0.0
        %2613 = vmatprep.subr.mxu0 0.0
        %2614 = vmatpush1.msra.mxu0 0.0
        %2615 = vmatprep.subr.mxu0 0.0
        %2616 = vmatpush1.msra.mxu0 0.0
        %2617 = vmatprep.subr.mxu0 0.0
        %2618 = vmatpush1.msra.mxu0 0.0
        %2619 = vmatprep.subr.mxu0 0.0
        %2620 = vmatpush1.msra.mxu0 0.0
        %2621 = vmatprep.mubr.f32.mxu0 0.0
        %2622 = vmatmul.mubr.f32.gmra.mrb[0].mxu0 %v2555
        %v2623 = vpop.f32.mrb[0].mxu0
        %v2624 = vadd.f32 %v2552, %v2623
        %v2625 = vpop.f32.mrb[0].mxu0
        %2626 = vdwg.mxu0
        %v2627 = vmul.f32 %v2624, 0.70710677
        %v2628 = vand.u32 2147483647, %v2627
        %v2629 = vmul.f32 %v2628, 0.3275911
        %v2630 = vadd.f32 %v2629, 1.0
        %v2631 = vrcp.pop %v2630
        %v2632 = vmul.f32 1.0, %v2631
        %v2633 = vmul.f32 %v2632, 1.0614054
        %v2634 = vadd.f32 %v2633, -1.4531521
        %v2635 = vmul.f32 %v2634, %v2632
        %v2636 = vadd.f32 %v2635, 1.4214138
        %v2637 = vmul.f32 %v2636, %v2632
        %v2638 = vadd.f32 %v2637, -0.28449672
        %v2639 = vmul.f32 %v2638, %v2632
        %v2640 = vadd.f32 %v2639, 0.2548296
        %v2641 = vmul.f32 %v2640, %v2632
        %v2642 = vsub.f32 0.0, %v2628
        %v2643 = vmul.f32 %v2642, %v2628
        %v2644 = vmul.f32 %v2643, 1.442695
        %v2645 = vpow.pop %v2644
        %v2646 = vmul.f32 %v2641, %v2645
        %v2647 = vsub.f32 1.0, %v2646
        %vm2648 = vcmp.ge.f32.partialorder %v2627, 0.0
        %v2649 = vsub.f32 0.0, %v2647
        %v2650 = vsel %vm2648, %v2647, %v2649
        %v2651 = vmul.f32 %v2624, 0.5
        %v2652 = vadd.f32 %v2650, 1.0
        %v2653 = vmul.f32 %v2651, %v2652
        %v2654 = vld [vmem:[%s47] sm:$0xff]
        %v2655 = vld [vmem:[%s47 + $0x8] sm:$0xff]
        %v2656 = vld [vmem:[%s47 + $0x10] sm:$0xff]
        %v2657 = vld [vmem:[%s47 + $0x18] sm:$0xff]
        %v2658 = vld [vmem:[%s47 + $0x20] sm:$0xff]
        %v2659 = vld [vmem:[%s47 + $0x28] sm:$0xff]
        %v2660 = vld [vmem:[%s47 + $0x30] sm:$0xff]
        %v2661 = vld [vmem:[%s47 + $0x38] sm:$0xff]
        %vm2662 = vcmask 523264
        %v2664 = vsel %vm2662, %v2653, 0
        %2666 = vmatprep.subr.mxu0 0.0
        %2667 = vmatpush1.msra.mxu0 %v2654
        %2668 = vmatprep.subr.mxu0 0.0
        %2669 = vmatpush1.msra.mxu0 %v2655
        %2670 = vmatprep.subr.mxu0 0.0
        %2671 = vmatpush1.msra.mxu0 %v2656
        %2672 = vmatprep.subr.mxu0 0.0
        %2673 = vmatpush1.msra.mxu0 %v2657
        %2674 = vmatprep.subr.mxu0 0.0
        %2675 = vmatpush1.msra.mxu0 %v2658
        %2676 = vmatprep.subr.mxu0 0.0
        %2677 = vmatpush1.msra.mxu0 %v2659
        %2678 = vmatprep.subr.mxu0 0.0
        %2679 = vmatpush1.msra.mxu0 %v2660
        %2680 = vmatprep.subr.mxu0 0.0
        %2681 = vmatpush1.msra.mxu0 %v2661
        %2682 = vmatprep.subr.mxu0 0.0
        %2683 = vmatpush1.msra.mxu0 0.0
        %2684 = vmatprep.subr.mxu0 0.0
        %2685 = vmatpush1.msra.mxu0 0.0
        %2686 = vmatprep.subr.mxu0 0.0
        %2687 = vmatpush1.msra.mxu0 0.0
        %2688 = vmatprep.subr.mxu0 0.0
        %2689 = vmatpush1.msra.mxu0 0.0
        %2690 = vmatprep.subr.mxu0 0.0
        %2691 = vmatpush1.msra.mxu0 0.0
        %2692 = vmatprep.subr.mxu0 0.0
        %2693 = vmatpush1.msra.mxu0 0.0
        %2694 = vmatprep.subr.mxu0 0.0
        %2695 = vmatpush1.msra.mxu0 0.0
        %2696 = vmatprep.subr.mxu0 0.0
        %2697 = vmatpush1.msra.mxu0 0.0
        %2698 = vmatprep.subr.mxu0 0.0
        %2699 = vmatpush1.msra.mxu0 0.0
        %2700 = vmatprep.subr.mxu0 0.0
        %2701 = vmatpush1.msra.mxu0 0.0
        %2702 = vmatprep.subr.mxu0 0.0
        %2703 = vmatpush1.msra.mxu0 0.0
        %2704 = vmatprep.subr.mxu0 0.0
        %2705 = vmatpush1.msra.mxu0 0.0
        %2706 = vmatprep.subr.mxu0 0.0
        %2707 = vmatpush1.msra.mxu0 0.0
        %2708 = vmatprep.subr.mxu0 0.0
        %2709 = vmatpush1.msra.mxu0 0.0
        %2710 = vmatprep.subr.mxu0 0.0
        %2711 = vmatpush1.msra.mxu0 0.0
        %2712 = vmatprep.subr.mxu0 0.0
        %2713 = vmatpush1.msra.mxu0 0.0
        %2714 = vmatprep.subr.mxu0 0.0
        %2715 = vmatpush1.msra.mxu0 0.0
        %2716 = vmatprep.subr.mxu0 0.0
        %2717 = vmatpush1.msra.mxu0 0.0
        %2718 = vmatprep.subr.mxu0 0.0
        %2719 = vmatpush1.msra.mxu0 0.0
        %2720 = vmatprep.subr.mxu0 0.0
        %2721 = vmatpush1.msra.mxu0 0.0
        %2722 = vmatprep.subr.mxu0 0.0
        %2723 = vmatpush1.msra.mxu0 0.0
        %2724 = vmatprep.subr.mxu0 0.0
        %2725 = vmatpush1.msra.mxu0 0.0
        %2726 = vmatprep.subr.mxu0 0.0
        %2727 = vmatpush1.msra.mxu0 0.0
        %2728 = vmatprep.subr.mxu0 0.0
        %2729 = vmatpush1.msra.mxu0 0.0
        %2730 = vmatprep.mubr.f32.mxu0 0.0
        %2731 = vmatmul.mubr.f32.gmra.mrb[0].mxu0 %v2664
        %v2732 = vpop.f32.mrb[0].mxu0
        %v2733 = vadd.f32 0.0, %v2732
        %v2734 = vpop.f32.mrb[0].mxu0
        %2735 = vdwg.mxu0
        %v2736 = vadd.f32 %v2513, %v2733
        %v2737 = vld [vmem:[%s49] sm:$0x1]
        %v2739 = vlaneseq
        %v2740 = vshrl.u32 %v2739, 7
        %v2741 = vsub.s32 0, %v2740
        %v2742 = vrot.slane %v2737, %v2741
        %v2744 = vadd.f32 %v2736, %v2742
        %s2745 = scalar_lea.vmem %s19, 1
        %v2746 = vld [vmem:[%s2745] sm:$0x1]
        %s2747 = scalar_lea.vmem %s21, 1
        %v2748 = vld [vmem:[%s2747] sm:$0x1]
        %v2749 = vsel %vm1219, %v2744, 0.0
        %2750 = vadd.xlane.f32.xlu0 %v2749
        %v2751 = vpop.xlane.xlu0 %2750
        %v2752 = vmul.f32 %v2751, %v1223
        %v2753 = vsub.f32 %v2744, %v2752
        %v2754 = vmul.f32 %v2753, %v2753
        %v2755 = vsel %vm1219, %v2754, 0.0
        %2756 = vadd.xlane.f32.xlu0 %v2755
        %v2757 = vpop.xlane.xlu0 %2756
        %v2758 = vmul.f32 %v2757, %v1223
        %v2759 = vadd.f32 %v2758, 1e-05
        %v2760 = vrsqrt.pop %v2759
        %v2761 = vmul.f32 %v2753, %v2760
        %v2763 = vlaneseq
        %v2764 = vshrl.u32 %v2763, 7
        %v2765 = vsub.s32 0, %v2764
        %v2766 = vrot.slane %v2746, %v2765
        %v2768 = vmul.f32 %v2761, %v2766
        %v2770 = vlaneseq
        %v2771 = vshrl.u32 %v2770, 7
        %v2772 = vsub.s32 0, %v2771
        %v2773 = vrot.slane %v2748, %v2772
        %v2775 = vadd.f32 %v2768, %v2773
        %s2776 = scalar_lea.vmem %s23, 32
        %v2777 = vld [vmem:[%s2776] sm:$0xff]
        %v2778 = vld [vmem:[%s2776 + $0x8] sm:$0xff]
        %v2779 = vld [vmem:[%s2776 + $0x10] sm:$0xff]
        %v2780 = vld [vmem:[%s2776 + $0x18] sm:$0xff]
        %s2781 = scalar_lea.vmem %s25, 1
        %v2782 = vld [vmem:[%s2781] sm:$0x1]
        %v2784 = vlaneseq
        %v2785 = vshrl.u32 %v2784, 7
        %v2786 = vsub.s32 0, %v2785
        %v2787 = vrot.slane %v2782, %v2786
        %v2790 = vsel %vm1219, %v2775, 0
        %2792 = vmatprep.subr.mxu0 0.0
        %2793 = vmatpush1.msra.mxu0 %v2777
        %2794 = vmatprep.subr.mxu0 0.0
        %2795 = vmatpush1.msra.mxu0 %v2778
        %2796 = vmatprep.subr.mxu0 0.0
        %2797 = vmatpush1.msra.mxu0 %v2779
        %2798 = vmatprep.subr.mxu0 0.0
        %2799 = vmatpush1.msra.mxu0 %v2780
        %2800 = vmatprep.subr.mxu0 0.0
        %2801 = vmatpush1.msra.mxu0 0.0
        %2802 = vmatprep.subr.mxu0 0.0
        %2803 = vmatpush1.msra.mxu0 0.0
        %2804 = vmatprep.subr.mxu0 0.0
        %2805 = vmatpush1.msra.mxu0 0.0
        %2806 = vmatprep.subr.mxu0 0.0
        %2807 = vmatpush1.msra.mxu0 0.0
        %2808 = vmatprep.subr.mxu0 0.0
        %2809 = vmatpush1.msra.mxu0 0.0
        %2810 = vmatprep.subr.mxu0 0.0
        %2811 = vmatpush1.msra.mxu0 0.0
        %2812 = vmatprep.subr.mxu0 0.0
        %2813 = vmatpush1.msra.mxu0 0.0
        %2814 = vmatprep.subr.mxu0 0.0
        %2815 = vmatpush1.msra.mxu0 0.0
        %2816 = vmatprep.subr.mxu0 0.0
        %2817 = vmatpush1.msra.mxu0 0.0
        %2818 = vmatprep.subr.mxu0 0.0
        %2819 = vmatpush1.msra.mxu0 0.0
        %2820 = vmatprep.subr.mxu0 0.0
        %2821 = vmatpush1.msra.mxu0 0.0
        %2822 = vmatprep.subr.mxu0 0.0
        %2823 = vmatpush1.msra.mxu0 0.0
        %2824 = vmatprep.subr.mxu0 0.0
        %2825 = vmatpush1.msra.mxu0 0.0
        %2826 = vmatprep.subr.mxu0 0.0
        %2827 = vmatpush1.msra.mxu0 0.0
        %2828 = vmatprep.subr.mxu0 0.0
        %2829 = vmatpush1.msra.mxu0 0.0
        %2830 = vmatprep.subr.mxu0 0.0
        %2831 = vmatpush1.msra.mxu0 0.0
        %2832 = vmatprep.subr.mxu0 0.0
        %2833 = vmatpush1.msra.mxu0 0.0
        %2834 = vmatprep.subr.mxu0 0.0
        %2835 = vmatpush1.msra.mxu0 0.0
        %2836 = vmatprep.subr.mxu0 0.0
        %2837 = vmatpush1.msra.mxu0 0.0
        %2838 = vmatprep.subr.mxu0 0.0
        %2839 = vmatpush1.msra.mxu0 0.0
        %2840 = vmatprep.subr.mxu0 0.0
        %2841 = vmatpush1.msra.mxu0 0.0
        %2842 = vmatprep.subr.mxu0 0.0
        %2843 = vmatpush1.msra.mxu0 0.0
        %2844 = vmatprep.subr.mxu0 0.0
        %2845 = vmatpush1.msra.mxu0 0.0
        %2846 = vmatprep.subr.mxu0 0.0
        %2847 = vmatpush1.msra.mxu0 0.0
        %2848 = vmatprep.subr.mxu0 0.0
        %2849 = vmatpush1.msra.mxu0 0.0
        %2850 = vmatprep.subr.mxu0 0.0
        %2851 = vmatpush1.msra.mxu0 0.0
        %2852 = vmatprep.subr.mxu0 0.0
        %2853 = vmatpush1.msra.mxu0 0.0
        %2854 = vmatprep.subr.mxu0 0.0
        %2855 = vmatpush1.msra.mxu0 0.0
        %2856 = vmatprep.mubr.f32.mxu0 0.0
        %2857 = vmatmul.mubr.f32.gmra.mrb[0].mxu0 %v2790
        %v2858 = vpop.f32.mrb[0].mxu0
        %v2859 = vadd.f32 %v2787, %v2858
        %v2860 = vpop.f32.mrb[0].mxu0
        %2861 = vdwg.mxu0
        %s2862 = scalar_lea.vmem %s27, 32
        %v2863 = vld [vmem:[%s2862] sm:$0xff]
        %v2864 = vld [vmem:[%s2862 + $0x8] sm:$0xff]
        %v2865 = vld [vmem:[%s2862 + $0x10] sm:$0xff]
        %v2866 = vld [vmem:[%s2862 + $0x18] sm:$0xff]
        %s2867 = scalar_lea.vmem %s29, 1
        %v2868 = vld [vmem:[%s2867] sm:$0x1]
        %v2870 = vlaneseq
        %v2871 = vshrl.u32 %v2870, 7
        %v2872 = vsub.s32 0, %v2871
        %v2873 = vrot.slane %v2868, %v2872
        %2875 = vmatprep.subr.mxu0 0.0
        %2876 = vmatpush1.msra.mxu0 %v2863
        %2877 = vmatprep.subr.mxu0 0.0
        %2878 = vmatpush1.msra.mxu0 %v2864
        %2879 = vmatprep.subr.mxu0 0.0
        %2880 = vmatpush1.msra.mxu0 %v2865
        %2881 = vmatprep.subr.mxu0 0.0
        %2882 = vmatpush1.msra.mxu0 %v2866
        %2883 = vmatprep.subr.mxu0 0.0
        %2884 = vmatpush1.msra.mxu0 0.0
        %2885 = vmatprep.subr.mxu0 0.0
        %2886 = vmatpush1.msra.mxu0 0.0
        %2887 = vmatprep.subr.mxu0 0.0
        %2888 = vmatpush1.msra.mxu0 0.0
        %2889 = vmatprep.subr.mxu0 0.0
        %2890 = vmatpush1.msra.mxu0 0.0
        %2891 = vmatprep.subr.mxu0 0.0
        %2892 = vmatpush1.msra.mxu0 0.0
        %2893 = vmatprep.subr.mxu0 0.0
        %2894 = vmatpush1.msra.mxu0 0.0
        %2895 = vmatprep.subr.mxu0 0.0
        %2896 = vmatpush1.msra.mxu0 0.0
        %2897 = vmatprep.subr.mxu0 0.0
        %2898 = vmatpush1.msra.mxu0 0.0
        %2899 = vmatprep.subr.mxu0 0.0
        %2900 = vmatpush1.msra.mxu0 0.0
        %2901 = vmatprep.subr.mxu0 0.0
        %2902 = vmatpush1.msra.mxu0 0.0
        %2903 = vmatprep.subr.mxu0 0.0
        %2904 = vmatpush1.msra.mxu0 0.0
        %2905 = vmatprep.subr.mxu0 0.0
        %2906 = vmatpush1.msra.mxu0 0.0
        %2907 = vmatprep.subr.mxu0 0.0
        %2908 = vmatpush1.msra.mxu0 0.0
        %2909 = vmatprep.subr.mxu0 0.0
        %2910 = vmatpush1.msra.mxu0 0.0
        %2911 = vmatprep.subr.mxu0 0.0
        %2912 = vmatpush1.msra.mxu0 0.0
        %2913 = vmatprep.subr.mxu0 0.0
        %2914 = vmatpush1.msra.mxu0 0.0
        %2915 = vmatprep.subr.mxu0 0.0
        %2916 = vmatpush1.msra.mxu0 0.0
        %2917 = vmatprep.subr.mxu0 0.0
        %2918 = vmatpush1.msra.mxu0 0.0
        %2919 = vmatprep.subr.mxu0 0.0
        %2920 = vmatpush1.msra.mxu0 0.0
        %2921 = vmatprep.subr.mxu0 0.0
        %2922 = vmatpush1.msra.mxu0 0.0
        %2923 = vmatprep.subr.mxu0 0.0
        %2924 = vmatpush1.msra.mxu0 0.0
        %2925 = vmatprep.subr.mxu0 0.0
        %2926 = vmatpush1.msra.mxu0 0.0
        %2927 = vmatprep.subr.mxu0 0.0
        %2928 = vmatpush1.msra.mxu0 0.0
        %2929 = vmatprep.subr.mxu0 0.0
        %2930 = vmatpush1.msra.mxu0 0.0
        %2931 = vmatprep.subr.mxu0 0.0
        %2932 = vmatpush1.msra.mxu0 0.0
        %2933 = vmatprep.subr.mxu0 0.0
        %2934 = vmatpush1.msra.mxu0 0.0
        %2935 = vmatprep.subr.mxu0 0.0
        %2936 = vmatpush1.msra.mxu0 0.0
        %2937 = vmatprep.subr.mxu0 0.0
        %2938 = vmatpush1.msra.mxu0 0.0
        %2939 = vmatprep.mubr.f32.mxu0 0.0
        %2940 = vmatmul.mubr.f32.gmra.mrb[0].mxu0 %v1344
        %v2941 = vpop.f32.mrb[0].mxu0
        %v2942 = vadd.f32 %v2873, %v2941
        %v2943 = vpop.f32.mrb[0].mxu0
        %2944 = vmatprep.mubr.f32.mxu0 0.0
        %2945 = vmatmul.mubr.f32.gmra.mrb[0].mxu0 %v1347
        %v2946 = vpop.f32.mrb[0].mxu0
        %v2947 = vadd.f32 %v2873, %v2946
        %v2948 = vpop.f32.mrb[0].mxu0
        %2949 = vdwg.mxu0
        %s2950 = scalar_lea.vmem %s31, 32
        %v2951 = vld [vmem:[%s2950] sm:$0xff]
        %v2952 = vld [vmem:[%s2950 + $0x8] sm:$0xff]
        %v2953 = vld [vmem:[%s2950 + $0x10] sm:$0xff]
        %v2954 = vld [vmem:[%s2950 + $0x18] sm:$0xff]
        %s2955 = scalar_lea.vmem %s33, 1
        %v2956 = vld [vmem:[%s2955] sm:$0x1]
        %v2958 = vlaneseq
        %v2959 = vshrl.u32 %v2958, 7
        %v2960 = vsub.s32 0, %v2959
        %v2961 = vrot.slane %v2956, %v2960
        %2963 = vmatprep.subr.mxu0 0.0
        %2964 = vmatpush1.msra.mxu0 %v2951
        %2965 = vmatprep.subr.mxu0 0.0
        %2966 = vmatpush1.msra.mxu0 %v2952
        %2967 = vmatprep.subr.mxu0 0.0
        %2968 = vmatpush1.msra.mxu0 %v2953
        %2969 = vmatprep.subr.mxu0 0.0
        %2970 = vmatpush1.msra.mxu0 %v2954
        %2971 = vmatprep.subr.mxu0 0.0
        %2972 = vmatpush1.msra.mxu0 0.0
        %2973 = vmatprep.subr.mxu0 0.0
        %2974 = vmatpush1.msra.mxu0 0.0
        %2975 = vmatprep.subr.mxu0 0.0
        %2976 = vmatpush1.msra.mxu0 0.0
        %2977 = vmatprep.subr.mxu0 0.0
        %2978 = vmatpush1.msra.mxu0 0.0
        %2979 = vmatprep.subr.mxu0 0.0
        %2980 = vmatpush1.msra.mxu0 0.0
        %2981 = vmatprep.subr.mxu0 0.0
        %2982 = vmatpush1.msra.mxu0 0.0
        %2983 = vmatprep.subr.mxu0 0.0
        %2984 = vmatpush1.msra.mxu0 0.0
        %2985 = vmatprep.subr.mxu0 0.0
        %2986 = vmatpush1.msra.mxu0 0.0
        %2987 = vmatprep.subr.mxu0 0.0
        %2988 = vmatpush1.msra.mxu0 0.0
        %2989 = vmatprep.subr.mxu0 0.0
        %2990 = vmatpush1.msra.mxu0 0.0
        %2991 = vmatprep.subr.mxu0 0.0
        %2992 = vmatpush1.msra.mxu0 0.0
        %2993 = vmatprep.subr.mxu0 0.0
        %2994 = vmatpush1.msra.mxu0 0.0
        %2995 = vmatprep.subr.mxu0 0.0
        %2996 = vmatpush1.msra.mxu0 0.0
        %2997 = vmatprep.subr.mxu0 0.0
        %2998 = vmatpush1.msra.mxu0 0.0
        %2999 = vmatprep.subr.mxu0 0.0
        %3000 = vmatpush1.msra.mxu0 0.0
        %3001 = vmatprep.subr.mxu0 0.0
        %3002 = vmatpush1.msra.mxu0 0.0
        %3003 = vmatprep.subr.mxu0 0.0
        %3004 = vmatpush1.msra.mxu0 0.0
        %3005 = vmatprep.subr.mxu0 0.0
        %3006 = vmatpush1.msra.mxu0 0.0
        %3007 = vmatprep.subr.mxu0 0.0
        %3008 = vmatpush1.msra.mxu0 0.0
        %3009 = vmatprep.subr.mxu0 0.0
        %3010 = vmatpush1.msra.mxu0 0.0
        %3011 = vmatprep.subr.mxu0 0.0
        %3012 = vmatpush1.msra.mxu0 0.0
        %3013 = vmatprep.subr.mxu0 0.0
        %3014 = vmatpush1.msra.mxu0 0.0
        %3015 = vmatprep.subr.mxu0 0.0
        %3016 = vmatpush1.msra.mxu0 0.0
        %3017 = vmatprep.subr.mxu0 0.0
        %3018 = vmatpush1.msra.mxu0 0.0
        %3019 = vmatprep.subr.mxu0 0.0
        %3020 = vmatpush1.msra.mxu0 0.0
        %3021 = vmatprep.subr.mxu0 0.0
        %3022 = vmatpush1.msra.mxu0 0.0
        %3023 = vmatprep.subr.mxu0 0.0
        %3024 = vmatpush1.msra.mxu0 0.0
        %3025 = vmatprep.subr.mxu0 0.0
        %3026 = vmatpush1.msra.mxu0 0.0
        %3027 = vmatprep.mubr.f32.mxu0 0.0
        %3028 = vmatmul.mubr.f32.gmra.mrb[0].mxu0 %v1344
        %v3029 = vpop.f32.mrb[0].mxu0
        %v3030 = vadd.f32 %v2961, %v3029
        %v3031 = vpop.f32.mrb[0].mxu0
        %3032 = vmatprep.mubr.f32.mxu0 0.0
        %3033 = vmatmul.mubr.f32.gmra.mrb[0].mxu0 %v1347
        %v3034 = vpop.f32.mrb[0].mxu0
        %v3035 = vadd.f32 %v2961, %v3034
        %v3036 = vpop.f32.mrb[0].mxu0
        %3037 = vdwg.mxu0
        %s3038 = scalar_lea.vmem %s35, 32
        %v3039 = vld [vmem:[%s3038] sm:$0xff]
        %v3040 = vld [vmem:[%s3038 + $0x8] sm:$0xff]
        %v3041 = vld [vmem:[%s3038 + $0x10] sm:$0xff]
        %v3042 = vld [vmem:[%s3038 + $0x18] sm:$0xff]
        %v3044 = vsel %vm1514, %v2859, 0
        %v3047 = vsel %vm1514, %v2942, 0
        %v3050 = vsel %vm1514, %v2947, 0
        %3052 = vmatprep.subr.mxu0 0.0
        %3053 = vmatpush1.xpose.msra.mxu0 %v3047
        %3054 = vmatprep.subr.mxu0 0.0
        %3055 = vmatpush1.xpose.msra.mxu0 %v3050
        %3056 = vmatprep.subr.mxu0 0.0
        %3057 = vmatpush1.xpose.msra.mxu0 0.0
        %3058 = vmatprep.subr.mxu0 0.0
        %3059 = vmatpush1.xpose.msra.mxu0 0.0
        %3060 = vmatprep.subr.mxu0 0.0
        %3061 = vmatpush1.xpose.msra.mxu0 0.0
        %3062 = vmatprep.subr.mxu0 0.0
        %3063 = vmatpush1.xpose.msra.mxu0 0.0
        %3064 = vmatprep.subr.mxu0 0.0
        %3065 = vmatpush1.xpose.msra.mxu0 0.0
        %3066 = vmatprep.subr.mxu0 0.0
        %3067 = vmatpush1.xpose.msra.mxu0 0.0
        %3068 = vmatprep.subr.mxu0 0.0
        %3069 = vmatpush1.xpose.msra.mxu0 0.0
        %3070 = vmatprep.subr.mxu0 0.0
        %3071 = vmatpush1.xpose.msra.mxu0 0.0
        %3072 = vmatprep.subr.mxu0 0.0
        %3073 = vmatpush1.xpose.msra.mxu0 0.0
        %3074 = vmatprep.subr.mxu0 0.0
        %3075 = vmatpush1.xpose.msra.mxu0 0.0
        %3076 = vmatprep.subr.mxu0 0.0
        %3077 = vmatpush1.xpose.msra.mxu0 0.0
        %3078 = vmatprep.subr.mxu0 0.0
        %3079 = vmatpush1.xpose.msra.mxu0 0.0
        %3080 = vmatprep.subr.mxu0 0.0
        %3081 = vmatpush1.xpose.msra.mxu0 0.0
        %3082 = vmatprep.subr.mxu0 0.0
        %3083 = vmatpush1.xpose.msra.mxu0 0.0
        %3084 = vmatprep.subr.mxu0 0.0
        %3085 = vmatpush1.xpose.msra.mxu0 0.0
        %3086 = vmatprep.subr.mxu0 0.0
        %3087 = vmatpush1.xpose.msra.mxu0 0.0
        %3088 = vmatprep.subr.mxu0 0.0
        %3089 = vmatpush1.xpose.msra.mxu0 0.0
        %3090 = vmatprep.subr.mxu0 0.0
        %3091 = vmatpush1.xpose.msra.mxu0 0.0
        %3092 = vmatprep.subr.mxu0 0.0
        %3093 = vmatpush1.xpose.msra.mxu0 0.0
        %3094 = vmatprep.subr.mxu0 0.0
        %3095 = vmatpush1.xpose.msra.mxu0 0.0
        %3096 = vmatprep.subr.mxu0 0.0
        %3097 = vmatpush1.xpose.msra.mxu0 0.0
        %3098 = vmatprep.subr.mxu0 0.0
        %3099 = vmatpush1.xpose.msra.mxu0 0.0
        %3100 = vmatprep.subr.mxu0 0.0
        %3101 = vmatpush1.xpose.msra.mxu0 0.0
        %3102 = vmatprep.subr.mxu0 0.0
        %3103 = vmatpush1.xpose.msra.mxu0 0.0
        %3104 = vmatprep.subr.mxu0 0.0
        %3105 = vmatpush1.xpose.msra.mxu0 0.0
        %3106 = vmatprep.subr.mxu0 0.0
        %3107 = vmatpush1.xpose.msra.mxu0 0.0
        %3108 = vmatprep.subr.mxu0 0.0
        %3109 = vmatpush1.xpose.msra.mxu0 0.0
        %3110 = vmatprep.subr.mxu0 0.0
        %3111 = vmatpush1.xpose.msra.mxu0 0.0
        %3112 = vmatprep.subr.mxu0 0.0
        %3113 = vmatpush1.xpose.msra.mxu0 0.0
        %3114 = vmatprep.subr.mxu0 0.0
        %3115 = vmatpush1.xpose.msra.mxu0 0.0
        %3116 = vmatprep.mubr.f32.mxu0 0.0
        %3117 = vmatmul.mubr.f32.gmra.mrb[0].mxu0 %v3044
        %v3118 = vpop.f32.mrb[0].mxu0
        %v3119 = vadd.f32 0.0, %v3118
        %v3120 = vpop.f32.mrb[0].mxu0
        %3121 = vdwg.mxu0
        %v3122 = vmul.f32 %v3119, 0.35355338
        %v3123 = vsel %vm1601, %v3122, -1e+30
        %v3124 = vsel %vm991, %v3123, -inf
        %3125 = vmax.xlane.f32.xlu0 %v3124
        %v3126 = vpop.xlane.xlu0 %3125
        %v3127 = vsub.f32 %v3123, %v3126
        %v3128 = vmul.f32 %v3127, 1.442695
        %v3129 = vpow.pop %v3128
        %v3130 = vsel %vm991, %v3129, 0.0
        %3131 = vadd.xlane.f32.xlu0 %v3130
        %v3132 = vpop.xlane.xlu0 %3131
        %v3133 = vrcp.pop %v3132
        %v3134 = vmul.f32 %v3129, %v3133
        %v3136 = vsel %vm991, %v3134, 0
        %3138 = vmatprep.subr.mxu0 0.0
        %3139 = vmatpush1.msra.mxu0 %v3030
        %3140 = vmatprep.subr.mxu0 0.0
        %3141 = vmatpush1.msra.mxu0 %v3035
        %3142 = vmatprep.subr.mxu0 0.0
        %3143 = vmatpush1.msra.mxu0 0.0
        %3144 = vmatprep.subr.mxu0 0.0
        %3145 = vmatpush1.msra.mxu0 0.0
        %3146 = vmatprep.subr.mxu0 0.0
        %3147 = vmatpush1.msra.mxu0 0.0
        %3148 = vmatprep.subr.mxu0 0.0
        %3149 = vmatpush1.msra.mxu0 0.0
        %3150 = vmatprep.subr.mxu0 0.0
        %3151 = vmatpush1.msra.mxu0 0.0
        %3152 = vmatprep.subr.mxu0 0.0
        %3153 = vmatpush1.msra.mxu0 0.0
        %3154 = vmatprep.subr.mxu0 0.0
        %3155 = vmatpush1.msra.mxu0 0.0
        %3156 = vmatprep.subr.mxu0 0.0
        %3157 = vmatpush1.msra.mxu0 0.0
        %3158 = vmatprep.subr.mxu0 0.0
        %3159 = vmatpush1.msra.mxu0 0.0
        %3160 = vmatprep.subr.mxu0 0.0
        %3161 = vmatpush1.msra.mxu0 0.0
        %3162 = vmatprep.subr.mxu0 0.0
        %3163 = vmatpush1.msra.mxu0 0.0
        %3164 = vmatprep.subr.mxu0 0.0
        %3165 = vmatpush1.msra.mxu0 0.0
        %3166 = vmatprep.subr.mxu0 0.0
        %3167 = vmatpush1.msra.mxu0 0.0
        %3168 = vmatprep.subr.mxu0 0.0
        %3169 = vmatpush1.msra.mxu0 0.0
        %3170 = vmatprep.subr.mxu0 0.0
        %3171 = vmatpush1.msra.mxu0 0.0
        %3172 = vmatprep.subr.mxu0 0.0
        %3173 = vmatpush1.msra.mxu0 0.0
        %3174 = vmatprep.subr.mxu0 0.0
        %3175 = vmatpush1.msra.mxu0 0.0
        %3176 = vmatprep.subr.mxu0 0.0
        %3177 = vmatpush1.msra.mxu0 0.0
        %3178 = vmatprep.subr.mxu0 0.0
        %3179 = vmatpush1.msra.mxu0 0.0
        %3180 = vmatprep.subr.mxu0 0.0
        %3181 = vmatpush1.msra.mxu0 0.0
        %3182 = vmatprep.subr.mxu0 0.0
        %3183 = vmatpush1.msra.mxu0 0.0
        %3184 = vmatprep.subr.mxu0 0.0
        %3185 = vmatpush1.msra.mxu0 0.0
        %3186 = vmatprep.subr.mxu0 0.0
        %3187 = vmatpush1.msra.mxu0 0.0
        %3188 = vmatprep.subr.mxu0 0.0
        %3189 = vmatpush1.msra.mxu0 0.0
        %3190 = vmatprep.subr.mxu0 0.0
        %3191 = vmatpush1.msra.mxu0 0.0
        %3192 = vmatprep.subr.mxu0 0.0
        %3193 = vmatpush1.msra.mxu0 0.0
        %3194 = vmatprep.subr.mxu0 0.0
        %3195 = vmatpush1.msra.mxu0 0.0
        %3196 = vmatprep.subr.mxu0 0.0
        %3197 = vmatpush1.msra.mxu0 0.0
        %3198 = vmatprep.subr.mxu0 0.0
        %3199 = vmatpush1.msra.mxu0 0.0
        %3200 = vmatprep.subr.mxu0 0.0
        %3201 = vmatpush1.msra.mxu0 0.0
        %3202 = vmatprep.mubr.f32.mxu0 0.0
        %3203 = vmatmul.mubr.f32.gmra.mrb[0].mxu0 %v3136
        %v3204 = vpop.f32.mrb[0].mxu0
        %v3205 = vadd.f32 0.0, %v3204
        %v3206 = vpop.f32.mrb[0].mxu0
        %3207 = vdwg.mxu0
        %3208 = vrot.lane.b32.xlu0 %v2859, 120
        %v3209 = vpop.permute.xlu0 %3208
        %3210 = vrot.lane.b32.xlu0 %v2942, 120
        %v3211 = vpop.permute.xlu0 %3210
        %3212 = vrot.lane.b32.xlu0 %v2947, 120
        %v3213 = vpop.permute.xlu0 %3212
        %v3214 = vsel %vm1514, %v3209, 0
        %v3216 = vsel %vm1514, %v3211, 0
        %v3218 = vsel %vm1514, %v3213, 0
        %3220 = vmatprep.subr.mxu0 0.0
        %3221 = vmatpush1.xpose.msra.mxu0 %v3216
        %3222 = vmatprep.subr.mxu0 0.0
        %3223 = vmatpush1.xpose.msra.mxu0 %v3218
        %3224 = vmatprep.subr.mxu0 0.0
        %3225 = vmatpush1.xpose.msra.mxu0 0.0
        %3226 = vmatprep.subr.mxu0 0.0
        %3227 = vmatpush1.xpose.msra.mxu0 0.0
        %3228 = vmatprep.subr.mxu0 0.0
        %3229 = vmatpush1.xpose.msra.mxu0 0.0
        %3230 = vmatprep.subr.mxu0 0.0
        %3231 = vmatpush1.xpose.msra.mxu0 0.0
        %3232 = vmatprep.subr.mxu0 0.0
        %3233 = vmatpush1.xpose.msra.mxu0 0.0
        %3234 = vmatprep.subr.mxu0 0.0
        %3235 = vmatpush1.xpose.msra.mxu0 0.0
        %3236 = vmatprep.subr.mxu0 0.0
        %3237 = vmatpush1.xpose.msra.mxu0 0.0
        %3238 = vmatprep.subr.mxu0 0.0
        %3239 = vmatpush1.xpose.msra.mxu0 0.0
        %3240 = vmatprep.subr.mxu0 0.0
        %3241 = vmatpush1.xpose.msra.mxu0 0.0
        %3242 = vmatprep.subr.mxu0 0.0
        %3243 = vmatpush1.xpose.msra.mxu0 0.0
        %3244 = vmatprep.subr.mxu0 0.0
        %3245 = vmatpush1.xpose.msra.mxu0 0.0
        %3246 = vmatprep.subr.mxu0 0.0
        %3247 = vmatpush1.xpose.msra.mxu0 0.0
        %3248 = vmatprep.subr.mxu0 0.0
        %3249 = vmatpush1.xpose.msra.mxu0 0.0
        %3250 = vmatprep.subr.mxu0 0.0
        %3251 = vmatpush1.xpose.msra.mxu0 0.0
        %3252 = vmatprep.subr.mxu0 0.0
        %3253 = vmatpush1.xpose.msra.mxu0 0.0
        %3254 = vmatprep.subr.mxu0 0.0
        %3255 = vmatpush1.xpose.msra.mxu0 0.0
        %3256 = vmatprep.subr.mxu0 0.0
        %3257 = vmatpush1.xpose.msra.mxu0 0.0
        %3258 = vmatprep.subr.mxu0 0.0
        %3259 = vmatpush1.xpose.msra.mxu0 0.0
        %3260 = vmatprep.subr.mxu0 0.0
        %3261 = vmatpush1.xpose.msra.mxu0 0.0
        %3262 = vmatprep.subr.mxu0 0.0
        %3263 = vmatpush1.xpose.msra.mxu0 0.0
        %3264 = vmatprep.subr.mxu0 0.0
        %3265 = vmatpush1.xpose.msra.mxu0 0.0
        %3266 = vmatprep.subr.mxu0 0.0
        %3267 = vmatpush1.xpose.msra.mxu0 0.0
        %3268 = vmatprep.subr.mxu0 0.0
        %3269 = vmatpush1.xpose.msra.mxu0 0.0
        %3270 = vmatprep.subr.mxu0 0.0
        %3271 = vmatpush1.xpose.msra.mxu0 0.0
        %3272 = vmatprep.subr.mxu0 0.0
        %3273 = vmatpush1.xpose.msra.mxu0 0.0
        %3274 = vmatprep.subr.mxu0 0.0
        %3275 = vmatpush1.xpose.msra.mxu0 0.0
        %3276 = vmatprep.subr.mxu0 0.0
        %3277 = vmatpush1.xpose.msra.mxu0 0.0
        %3278 = vmatprep.subr.mxu0 0.0
        %3279 = vmatpush1.xpose.msra.mxu0 0.0
        %3280 = vmatprep.subr.mxu0 0.0
        %3281 = vmatpush1.xpose.msra.mxu0 0.0
        %3282 = vmatprep.subr.mxu0 0.0
        %3283 = vmatpush1.xpose.msra.mxu0 0.0
        %3284 = vmatprep.mubr.f32.mxu0 0.0
        %3285 = vmatmul.mubr.f32.gmra.mrb[0].mxu0 %v3214
        %v3286 = vpop.f32.mrb[0].mxu0
        %v3287 = vadd.f32 0.0, %v3286
        %v3288 = vpop.f32.mrb[0].mxu0
        %3289 = vdwg.mxu0
        %v3290 = vmul.f32 %v3287, 0.35355338
        %v3291 = vsel %vm1601, %v3290, -1e+30
        %v3292 = vsel %vm991, %v3291, -inf
        %3293 = vmax.xlane.f32.xlu0 %v3292
        %v3294 = vpop.xlane.xlu0 %3293
        %v3295 = vsub.f32 %v3291, %v3294
        %v3296 = vmul.f32 %v3295, 1.442695
        %v3297 = vpow.pop %v3296
        %v3298 = vsel %vm991, %v3297, 0.0
        %3299 = vadd.xlane.f32.xlu0 %v3298
        %v3300 = vpop.xlane.xlu0 %3299
        %v3301 = vrcp.pop %v3300
        %v3302 = vmul.f32 %v3297, %v3301
        %3305 = vrot.lane.b32.xlu0 %v3030, 120
        %v3306 = vpop.permute.xlu0 %3305
        %3307 = vrot.lane.b32.xlu0 %v3035, 120
        %v3308 = vpop.permute.xlu0 %3307
        %v3312 = vsel %vm991, %v3302, 0
        %3314 = vmatprep.subr.mxu0 0.0
        %3315 = vmatpush1.msra.mxu0 %v3306
        %3316 = vmatprep.subr.mxu0 0.0
        %3317 = vmatpush1.msra.mxu0 %v3308
        %3318 = vmatprep.subr.mxu0 0.0
        %3319 = vmatpush1.msra.mxu0 0.0
        %3320 = vmatprep.subr.mxu0 0.0
        %3321 = vmatpush1.msra.mxu0 0.0
        %3322 = vmatprep.subr.mxu0 0.0
        %3323 = vmatpush1.msra.mxu0 0.0
        %3324 = vmatprep.subr.mxu0 0.0
        %3325 = vmatpush1.msra.mxu0 0.0
        %3326 = vmatprep.subr.mxu0 0.0
        %3327 = vmatpush1.msra.mxu0 0.0
        %3328 = vmatprep.subr.mxu0 0.0
        %3329 = vmatpush1.msra.mxu0 0.0
        %3330 = vmatprep.subr.mxu0 0.0
        %3331 = vmatpush1.msra.mxu0 0.0
        %3332 = vmatprep.subr.mxu0 0.0
        %3333 = vmatpush1.msra.mxu0 0.0
        %3334 = vmatprep.subr.mxu0 0.0
        %3335 = vmatpush1.msra.mxu0 0.0
        %3336 = vmatprep.subr.mxu0 0.0
        %3337 = vmatpush1.msra.mxu0 0.0
        %3338 = vmatprep.subr.mxu0 0.0
        %3339 = vmatpush1.msra.mxu0 0.0
        %3340 = vmatprep.subr.mxu0 0.0
        %3341 = vmatpush1.msra.mxu0 0.0
        %3342 = vmatprep.subr.mxu0 0.0
        %3343 = vmatpush1.msra.mxu0 0.0
        %3344 = vmatprep.subr.mxu0 0.0
        %3345 = vmatpush1.msra.mxu0 0.0
        %3346 = vmatprep.subr.mxu0 0.0
        %3347 = vmatpush1.msra.mxu0 0.0
        %3348 = vmatprep.subr.mxu0 0.0
        %3349 = vmatpush1.msra.mxu0 0.0
        %3350 = vmatprep.subr.mxu0 0.0
        %3351 = vmatpush1.msra.mxu0 0.0
        %3352 = vmatprep.subr.mxu0 0.0
        %3353 = vmatpush1.msra.mxu0 0.0
        %3354 = vmatprep.subr.mxu0 0.0
        %3355 = vmatpush1.msra.mxu0 0.0
        %3356 = vmatprep.subr.mxu0 0.0
        %3357 = vmatpush1.msra.mxu0 0.0
        %3358 = vmatprep.subr.mxu0 0.0
        %3359 = vmatpush1.msra.mxu0 0.0
        %3360 = vmatprep.subr.mxu0 0.0
        %3361 = vmatpush1.msra.mxu0 0.0
        %3362 = vmatprep.subr.mxu0 0.0
        %3363 = vmatpush1.msra.mxu0 0.0
        %3364 = vmatprep.subr.mxu0 0.0
        %3365 = vmatpush1.msra.mxu0 0.0
        %3366 = vmatprep.subr.mxu0 0.0
        %3367 = vmatpush1.msra.mxu0 0.0
        %3368 = vmatprep.subr.mxu0 0.0
        %3369 = vmatpush1.msra.mxu0 0.0
        %3370 = vmatprep.subr.mxu0 0.0
        %3371 = vmatpush1.msra.mxu0 0.0
        %3372 = vmatprep.subr.mxu0 0.0
        %3373 = vmatpush1.msra.mxu0 0.0
        %3374 = vmatprep.subr.mxu0 0.0
        %3375 = vmatpush1.msra.mxu0 0.0
        %3376 = vmatprep.subr.mxu0 0.0
        %3377 = vmatpush1.msra.mxu0 0.0
        %3378 = vmatprep.mubr.f32.mxu0 0.0
        %3379 = vmatmul.mubr.f32.gmra.mrb[0].mxu0 %v3312
        %v3380 = vpop.f32.mrb[0].mxu0
        %v3381 = vadd.f32 0.0, %v3380
        %v3382 = vpop.f32.mrb[0].mxu0
        %3383 = vdwg.mxu0
        %v3385 = vsel %vm1514, %v3381, 0
        %3387 = vmatprep.subr.mxu0 0.0
        %3388 = vmatpush1.msra.mxu0 %v3040
        %3389 = vmatprep.subr.mxu0 0.0
        %3390 = vmatpush1.msra.mxu0 0.0
        %3391 = vmatprep.subr.mxu0 0.0
        %3392 = vmatpush1.msra.mxu0 0.0
        %3393 = vmatprep.subr.mxu0 0.0
        %3394 = vmatpush1.msra.mxu0 0.0
        %3395 = vmatprep.subr.mxu0 0.0
        %3396 = vmatpush1.msra.mxu0 0.0
        %3397 = vmatprep.subr.mxu0 0.0
        %3398 = vmatpush1.msra.mxu0 0.0
        %3399 = vmatprep.subr.mxu0 0.0
        %3400 = vmatpush1.msra.mxu0 0.0
        %3401 = vmatprep.subr.mxu0 0.0
        %3402 = vmatpush1.msra.mxu0 0.0
        %3403 = vmatprep.subr.mxu0 0.0
        %3404 = vmatpush1.msra.mxu0 0.0
        %3405 = vmatprep.subr.mxu0 0.0
        %3406 = vmatpush1.msra.mxu0 0.0
        %3407 = vmatprep.subr.mxu0 0.0
        %3408 = vmatpush1.msra.mxu0 0.0
        %3409 = vmatprep.subr.mxu0 0.0
        %3410 = vmatpush1.msra.mxu0 0.0
        %3411 = vmatprep.subr.mxu0 0.0
        %3412 = vmatpush1.msra.mxu0 0.0
        %3413 = vmatprep.subr.mxu0 0.0
        %3414 = vmatpush1.msra.mxu0 0.0
        %3415 = vmatprep.subr.mxu0 0.0
        %3416 = vmatpush1.msra.mxu0 0.0
        %3417 = vmatprep.subr.mxu0 0.0
        %3418 = vmatpush1.msra.mxu0 0.0
        %3419 = vmatprep.subr.mxu0 0.0
        %3420 = vmatpush1.msra.mxu0 0.0
        %3421 = vmatprep.subr.mxu0 0.0
        %3422 = vmatpush1.msra.mxu0 0.0
        %3423 = vmatprep.subr.mxu0 0.0
        %3424 = vmatpush1.msra.mxu0 0.0
        %3425 = vmatprep.subr.mxu0 0.0
        %3426 = vmatpush1.msra.mxu0 0.0
        %3427 = vmatprep.subr.mxu0 0.0
        %3428 = vmatpush1.msra.mxu0 0.0
        %3429 = vmatprep.subr.mxu0 0.0
        %3430 = vmatpush1.msra.mxu0 0.0
        %3431 = vmatprep.subr.mxu0 0.0
        %3432 = vmatpush1.msra.mxu0 0.0
        %3433 = vmatprep.subr.mxu0 0.0
        %3434 = vmatpush1.msra.mxu0 0.0
        %3435 = vmatprep.subr.mxu0 0.0
        %3436 = vmatpush1.msra.mxu0 0.0
        %3437 = vmatprep.subr.mxu0 0.0
        %3438 = vmatpush1.msra.mxu0 0.0
        %3439 = vmatprep.subr.mxu0 0.0
        %3440 = vmatpush1.msra.mxu0 0.0
        %3441 = vmatprep.subr.mxu0 0.0
        %3442 = vmatpush1.msra.mxu0 0.0
        %3443 = vmatprep.subr.mxu0 0.0
        %3444 = vmatpush1.msra.mxu0 0.0
        %3445 = vmatprep.subr.mxu0 0.0
        %3446 = vmatpush1.msra.mxu0 0.0
        %3447 = vmatprep.subr.mxu0 0.0
        %3448 = vmatpush1.msra.mxu0 0.0
        %3449 = vmatprep.subr.mxu0 0.0
        %3450 = vmatpush1.msra.mxu0 0.0
        %3451 = vmatprep.mubr.f32.mxu0 0.0
        %3452 = vmatmul.mubr.f32.gmra.mrb[0].mxu0 %v3385
        %v3453 = vpop.f32.mrb[0].mxu0
        %v3454 = vadd.f32 0.0, %v3453
        %v3455 = vpop.f32.mrb[0].mxu0
        %3456 = vdwg.mxu0
        %v3458 = vsel %vm1514, %v3205, 0
        %3460 = vmatprep.subr.mxu0 0.0
        %3461 = vmatpush1.msra.mxu0 %v3039
        %3462 = vmatprep.subr.mxu0 0.0
        %3463 = vmatpush1.msra.mxu0 0.0
        %3464 = vmatprep.subr.mxu0 0.0
        %3465 = vmatpush1.msra.mxu0 0.0
        %3466 = vmatprep.subr.mxu0 0.0
        %3467 = vmatpush1.msra.mxu0 0.0
        %3468 = vmatprep.subr.mxu0 0.0
        %3469 = vmatpush1.msra.mxu0 0.0
        %3470 = vmatprep.subr.mxu0 0.0
        %3471 = vmatpush1.msra.mxu0 0.0
        %3472 = vmatprep.subr.mxu0 0.0
        %3473 = vmatpush1.msra.mxu0 0.0
        %3474 = vmatprep.subr.mxu0 0.0
        %3475 = vmatpush1.msra.mxu0 0.0
        %3476 = vmatprep.subr.mxu0 0.0
        %3477 = vmatpush1.msra.mxu0 0.0
        %3478 = vmatprep.subr.mxu0 0.0
        %3479 = vmatpush1.msra.mxu0 0.0
        %3480 = vmatprep.subr.mxu0 0.0
        %3481 = vmatpush1.msra.mxu0 0.0
        %3482 = vmatprep.subr.mxu0 0.0
        %3483 = vmatpush1.msra.mxu0 0.0
        %3484 = vmatprep.subr.mxu0 0.0
        %3485 = vmatpush1.msra.mxu0 0.0
        %3486 = vmatprep.subr.mxu0 0.0
        %3487 = vmatpush1.msra.mxu0 0.0
        %3488 = vmatprep.subr.mxu0 0.0
        %3489 = vmatpush1.msra.mxu0 0.0
        %3490 = vmatprep.subr.mxu0 0.0
        %3491 = vmatpush1.msra.mxu0 0.0
        %3492 = vmatprep.subr.mxu0 0.0
        %3493 = vmatpush1.msra.mxu0 0.0
        %3494 = vmatprep.subr.mxu0 0.0
        %3495 = vmatpush1.msra.mxu0 0.0
        %3496 = vmatprep.subr.mxu0 0.0
        %3497 = vmatpush1.msra.mxu0 0.0
        %3498 = vmatprep.subr.mxu0 0.0
        %3499 = vmatpush1.msra.mxu0 0.0
        %3500 = vmatprep.subr.mxu0 0.0
        %3501 = vmatpush1.msra.mxu0 0.0
        %3502 = vmatprep.subr.mxu0 0.0
        %3503 = vmatpush1.msra.mxu0 0.0
        %3504 = vmatprep.subr.mxu0 0.0
        %3505 = vmatpush1.msra.mxu0 0.0
        %3506 = vmatprep.subr.mxu0 0.0
        %3507 = vmatpush1.msra.mxu0 0.0
        %3508 = vmatprep.subr.mxu0 0.0
        %3509 = vmatpush1.msra.mxu0 0.0
        %3510 = vmatprep.subr.mxu0 0.0
        %3511 = vmatpush1.msra.mxu0 0.0
        %3512 = vmatprep.subr.mxu0 0.0
        %3513 = vmatpush1.msra.mxu0 0.0
        %3514 = vmatprep.subr.mxu0 0.0
        %3515 = vmatpush1.msra.mxu0 0.0
        %3516 = vmatprep.subr.mxu0 0.0
        %3517 = vmatpush1.msra.mxu0 0.0
        %3518 = vmatprep.subr.mxu0 0.0
        %3519 = vmatpush1.msra.mxu0 0.0
        %3520 = vmatprep.subr.mxu0 0.0
        %3521 = vmatpush1.msra.mxu0 0.0
        %3522 = vmatprep.subr.mxu0 0.0
        %3523 = vmatpush1.msra.mxu0 0.0
        %3524 = vmatprep.mubr.f32.mxu0 0.0
        %3525 = vmatmul.mubr.f32.gmra.mrb[0].mxu0 %v3458
        %v3526 = vpop.f32.mrb[0].mxu0
        %v3527 = vadd.f32 %v3454, %v3526
        %v3528 = vpop.f32.mrb[0].mxu0
        %3529 = vdwg.mxu0
        %3530 = vrot.lane.b32.xlu0 %v2859, 112
        %v3531 = vpop.permute.xlu0 %3530
        %3532 = vrot.lane.b32.xlu0 %v2942, 112
        %v3533 = vpop.permute.xlu0 %3532
        %3534 = vrot.lane.b32.xlu0 %v2947, 112
        %v3535 = vpop.permute.xlu0 %3534
        %v3536 = vsel %vm1514, %v3531, 0
        %v3538 = vsel %vm1514, %v3533, 0
        %v3540 = vsel %vm1514, %v3535, 0
        %3542 = vmatprep.subr.mxu0 0.0
        %3543 = vmatpush1.xpose.msra.mxu0 %v3538
        %3544 = vmatprep.subr.mxu0 0.0
        %3545 = vmatpush1.xpose.msra.mxu0 %v3540
        %3546 = vmatprep.subr.mxu0 0.0
        %3547 = vmatpush1.xpose.msra.mxu0 0.0
        %3548 = vmatprep.subr.mxu0 0.0
        %3549 = vmatpush1.xpose.msra.mxu0 0.0
        %3550 = vmatprep.subr.mxu0 0.0
        %3551 = vmatpush1.xpose.msra.mxu0 0.0
        %3552 = vmatprep.subr.mxu0 0.0
        %3553 = vmatpush1.xpose.msra.mxu0 0.0
        %3554 = vmatprep.subr.mxu0 0.0
        %3555 = vmatpush1.xpose.msra.mxu0 0.0
        %3556 = vmatprep.subr.mxu0 0.0
        %3557 = vmatpush1.xpose.msra.mxu0 0.0
        %3558 = vmatprep.subr.mxu0 0.0
        %3559 = vmatpush1.xpose.msra.mxu0 0.0
        %3560 = vmatprep.subr.mxu0 0.0
        %3561 = vmatpush1.xpose.msra.mxu0 0.0
        %3562 = vmatprep.subr.mxu0 0.0
        %3563 = vmatpush1.xpose.msra.mxu0 0.0
        %3564 = vmatprep.subr.mxu0 0.0
        %3565 = vmatpush1.xpose.msra.mxu0 0.0
        %3566 = vmatprep.subr.mxu0 0.0
        %3567 = vmatpush1.xpose.msra.mxu0 0.0
        %3568 = vmatprep.subr.mxu0 0.0
        %3569 = vmatpush1.xpose.msra.mxu0 0.0
        %3570 = vmatprep.subr.mxu0 0.0
        %3571 = vmatpush1.xpose.msra.mxu0 0.0
        %3572 = vmatprep.subr.mxu0 0.0
        %3573 = vmatpush1.xpose.msra.mxu0 0.0
        %3574 = vmatprep.subr.mxu0 0.0
        %3575 = vmatpush1.xpose.msra.mxu0 0.0
        %3576 = vmatprep.subr.mxu0 0.0
        %3577 = vmatpush1.xpose.msra.mxu0 0.0
        %3578 = vmatprep.subr.mxu0 0.0
        %3579 = vmatpush1.xpose.msra.mxu0 0.0
        %3580 = vmatprep.subr.mxu0 0.0
        %3581 = vmatpush1.xpose.msra.mxu0 0.0
        %3582 = vmatprep.subr.mxu0 0.0
        %3583 = vmatpush1.xpose.msra.mxu0 0.0
        %3584 = vmatprep.subr.mxu0 0.0
        %3585 = vmatpush1.xpose.msra.mxu0 0.0
        %3586 = vmatprep.subr.mxu0 0.0
        %3587 = vmatpush1.xpose.msra.mxu0 0.0
        %3588 = vmatprep.subr.mxu0 0.0
        %3589 = vmatpush1.xpose.msra.mxu0 0.0
        %3590 = vmatprep.subr.mxu0 0.0
        %3591 = vmatpush1.xpose.msra.mxu0 0.0
        %3592 = vmatprep.subr.mxu0 0.0
        %3593 = vmatpush1.xpose.msra.mxu0 0.0
        %3594 = vmatprep.subr.mxu0 0.0
        %3595 = vmatpush1.xpose.msra.mxu0 0.0
        %3596 = vmatprep.subr.mxu0 0.0
        %3597 = vmatpush1.xpose.msra.mxu0 0.0
        %3598 = vmatprep.subr.mxu0 0.0
        %3599 = vmatpush1.xpose.msra.mxu0 0.0
        %3600 = vmatprep.subr.mxu0 0.0
        %3601 = vmatpush1.xpose.msra.mxu0 0.0
        %3602 = vmatprep.subr.mxu0 0.0
        %3603 = vmatpush1.xpose.msra.mxu0 0.0
        %3604 = vmatprep.subr.mxu0 0.0
        %3605 = vmatpush1.xpose.msra.mxu0 0.0
        %3606 = vmatprep.mubr.f32.mxu0 0.0
        %3607 = vmatmul.mubr.f32.gmra.mrb[0].mxu0 %v3536
        %v3608 = vpop.f32.mrb[0].mxu0
        %v3609 = vadd.f32 0.0, %v3608
        %v3610 = vpop.f32.mrb[0].mxu0
        %3611 = vdwg.mxu0
        %v3612 = vmul.f32 %v3609, 0.35355338
        %v3613 = vsel %vm1601, %v3612, -1e+30
        %v3614 = vsel %vm991, %v3613, -inf
        %3615 = vmax.xlane.f32.xlu0 %v3614
        %v3616 = vpop.xlane.xlu0 %3615
        %v3617 = vsub.f32 %v3613, %v3616
        %v3618 = vmul.f32 %v3617, 1.442695
        %v3619 = vpow.pop %v3618
        %v3620 = vsel %vm991, %v3619, 0.0
        %3621 = vadd.xlane.f32.xlu0 %v3620
        %v3622 = vpop.xlane.xlu0 %3621
        %v3623 = vrcp.pop %v3622
        %v3624 = vmul.f32 %v3619, %v3623
        %3625 = vrot.lane.b32.xlu0 %v3030, 112
        %v3626 = vpop.permute.xlu0 %3625
        %3627 = vrot.lane.b32.xlu0 %v3035, 112
        %v3628 = vpop.permute.xlu0 %3627
        %v3632 = vsel %vm991, %v3624, 0
        %3634 = vmatprep.subr.mxu0 0.0
        %3635 = vmatpush1.msra.mxu0 %v3626
        %3636 = vmatprep.subr.mxu0 0.0
        %3637 = vmatpush1.msra.mxu0 %v3628
        %3638 = vmatprep.subr.mxu0 0.0
        %3639 = vmatpush1.msra.mxu0 0.0
        %3640 = vmatprep.subr.mxu0 0.0
        %3641 = vmatpush1.msra.mxu0 0.0
        %3642 = vmatprep.subr.mxu0 0.0
        %3643 = vmatpush1.msra.mxu0 0.0
        %3644 = vmatprep.subr.mxu0 0.0
        %3645 = vmatpush1.msra.mxu0 0.0
        %3646 = vmatprep.subr.mxu0 0.0
        %3647 = vmatpush1.msra.mxu0 0.0
        %3648 = vmatprep.subr.mxu0 0.0
        %3649 = vmatpush1.msra.mxu0 0.0
        %3650 = vmatprep.subr.mxu0 0.0
        %3651 = vmatpush1.msra.mxu0 0.0
        %3652 = vmatprep.subr.mxu0 0.0
        %3653 = vmatpush1.msra.mxu0 0.0
        %3654 = vmatprep.subr.mxu0 0.0
        %3655 = vmatpush1.msra.mxu0 0.0
        %3656 = vmatprep.subr.mxu0 0.0
        %3657 = vmatpush1.msra.mxu0 0.0
        %3658 = vmatprep.subr.mxu0 0.0
        %3659 = vmatpush1.msra.mxu0 0.0
        %3660 = vmatprep.subr.mxu0 0.0
        %3661 = vmatpush1.msra.mxu0 0.0
        %3662 = vmatprep.subr.mxu0 0.0
        %3663 = vmatpush1.msra.mxu0 0.0
        %3664 = vmatprep.subr.mxu0 0.0
        %3665 = vmatpush1.msra.mxu0 0.0
        %3666 = vmatprep.subr.mxu0 0.0
        %3667 = vmatpush1.msra.mxu0 0.0
        %3668 = vmatprep.subr.mxu0 0.0
        %3669 = vmatpush1.msra.mxu0 0.0
        %3670 = vmatprep.subr.mxu0 0.0
        %3671 = vmatpush1.msra.mxu0 0.0
        %3672 = vmatprep.subr.mxu0 0.0
        %3673 = vmatpush1.msra.mxu0 0.0
        %3674 = vmatprep.subr.mxu0 0.0
        %3675 = vmatpush1.msra.mxu0 0.0
        %3676 = vmatprep.subr.mxu0 0.0
        %3677 = vmatpush1.msra.mxu0 0.0
        %3678 = vmatprep.subr.mxu0 0.0
        %3679 = vmatpush1.msra.mxu0 0.0
        %3680 = vmatprep.subr.mxu0 0.0
        %3681 = vmatpush1.msra.mxu0 0.0
        %3682 = vmatprep.subr.mxu0 0.0
        %3683 = vmatpush1.msra.mxu0 0.0
        %3684 = vmatprep.subr.mxu0 0.0
        %3685 = vmatpush1.msra.mxu0 0.0
        %3686 = vmatprep.subr.mxu0 0.0
        %3687 = vmatpush1.msra.mxu0 0.0
        %3688 = vmatprep.subr.mxu0 0.0
        %3689 = vmatpush1.msra.mxu0 0.0
        %3690 = vmatprep.subr.mxu0 0.0
        %3691 = vmatpush1.msra.mxu0 0.0
        %3692 = vmatprep.subr.mxu0 0.0
        %3693 = vmatpush1.msra.mxu0 0.0
        %3694 = vmatprep.subr.mxu0 0.0
        %3695 = vmatpush1.msra.mxu0 0.0
        %3696 = vmatprep.subr.mxu0 0.0
        %3697 = vmatpush1.msra.mxu0 0.0
        %3698 = vmatprep.mubr.f32.mxu0 0.0
        %3699 = vmatmul.mubr.f32.gmra.mrb[0].mxu0 %v3632
        %v3700 = vpop.f32.mrb[0].mxu0
        %v3701 = vadd.f32 0.0, %v3700
        %v3702 = vpop.f32.mrb[0].mxu0
        %3703 = vdwg.mxu0
        %v3705 = vsel %vm1514, %v3701, 0
        %3707 = vmatprep.subr.mxu0 0.0
        %3708 = vmatpush1.msra.mxu0 %v3041
        %3709 = vmatprep.subr.mxu0 0.0
        %3710 = vmatpush1.msra.mxu0 0.0
        %3711 = vmatprep.subr.mxu0 0.0
        %3712 = vmatpush1.msra.mxu0 0.0
        %3713 = vmatprep.subr.mxu0 0.0
        %3714 = vmatpush1.msra.mxu0 0.0
        %3715 = vmatprep.subr.mxu0 0.0
        %3716 = vmatpush1.msra.mxu0 0.0
        %3717 = vmatprep.subr.mxu0 0.0
        %3718 = vmatpush1.msra.mxu0 0.0
        %3719 = vmatprep.subr.mxu0 0.0
        %3720 = vmatpush1.msra.mxu0 0.0
        %3721 = vmatprep.subr.mxu0 0.0
        %3722 = vmatpush1.msra.mxu0 0.0
        %3723 = vmatprep.subr.mxu0 0.0
        %3724 = vmatpush1.msra.mxu0 0.0
        %3725 = vmatprep.subr.mxu0 0.0
        %3726 = vmatpush1.msra.mxu0 0.0
        %3727 = vmatprep.subr.mxu0 0.0
        %3728 = vmatpush1.msra.mxu0 0.0
        %3729 = vmatprep.subr.mxu0 0.0
        %3730 = vmatpush1.msra.mxu0 0.0
        %3731 = vmatprep.subr.mxu0 0.0
        %3732 = vmatpush1.msra.mxu0 0.0
        %3733 = vmatprep.subr.mxu0 0.0
        %3734 = vmatpush1.msra.mxu0 0.0
        %3735 = vmatprep.subr.mxu0 0.0
        %3736 = vmatpush1.msra.mxu0 0.0
        %3737 = vmatprep.subr.mxu0 0.0
        %3738 = vmatpush1.msra.mxu0 0.0
        %3739 = vmatprep.subr.mxu0 0.0
        %3740 = vmatpush1.msra.mxu0 0.0
        %3741 = vmatprep.subr.mxu0 0.0
        %3742 = vmatpush1.msra.mxu0 0.0
        %3743 = vmatprep.subr.mxu0 0.0
        %3744 = vmatpush1.msra.mxu0 0.0
        %3745 = vmatprep.subr.mxu0 0.0
        %3746 = vmatpush1.msra.mxu0 0.0
        %3747 = vmatprep.subr.mxu0 0.0
        %3748 = vmatpush1.msra.mxu0 0.0
        %3749 = vmatprep.subr.mxu0 0.0
        %3750 = vmatpush1.msra.mxu0 0.0
        %3751 = vmatprep.subr.mxu0 0.0
        %3752 = vmatpush1.msra.mxu0 0.0
        %3753 = vmatprep.subr.mxu0 0.0
        %3754 = vmatpush1.msra.mxu0 0.0
        %3755 = vmatprep.subr.mxu0 0.0
        %3756 = vmatpush1.msra.mxu0 0.0
        %3757 = vmatprep.subr.mxu0 0.0
        %3758 = vmatpush1.msra.mxu0 0.0
        %3759 = vmatprep.subr.mxu0 0.0
        %3760 = vmatpush1.msra.mxu0 0.0
        %3761 = vmatprep.subr.mxu0 0.0
        %3762 = vmatpush1.msra.mxu0 0.0
        %3763 = vmatprep.subr.mxu0 0.0
        %3764 = vmatpush1.msra.mxu0 0.0
        %3765 = vmatprep.subr.mxu0 0.0
        %3766 = vmatpush1.msra.mxu0 0.0
        %3767 = vmatprep.subr.mxu0 0.0
        %3768 = vmatpush1.msra.mxu0 0.0
        %3769 = vmatprep.subr.mxu0 0.0
        %3770 = vmatpush1.msra.mxu0 0.0
        %3771 = vmatprep.mubr.f32.mxu0 0.0
        %3772 = vmatmul.mubr.f32.gmra.mrb[0].mxu0 %v3705
        %v3773 = vpop.f32.mrb[0].mxu0
        %v3774 = vadd.f32 0.0, %v3773
        %v3775 = vpop.f32.mrb[0].mxu0
        %3776 = vdwg.mxu0
        %v3777 = vadd.f32 %v3527, %v3774
        %3778 = vrot.lane.b32.xlu0 %v2859, 104
        %v3779 = vpop.permute.xlu0 %3778
        %3780 = vrot.lane.b32.xlu0 %v2942, 104
        %v3781 = vpop.permute.xlu0 %3780
        %3782 = vrot.lane.b32.xlu0 %v2947, 104
        %v3783 = vpop.permute.xlu0 %3782
        %v3784 = vsel %vm1514, %v3779, 0
        %v3786 = vsel %vm1514, %v3781, 0
        %v3788 = vsel %vm1514, %v3783, 0
        %3790 = vmatprep.subr.mxu0 0.0
        %3791 = vmatpush1.xpose.msra.mxu0 %v3786
        %3792 = vmatprep.subr.mxu0 0.0
        %3793 = vmatpush1.xpose.msra.mxu0 %v3788
        %3794 = vmatprep.subr.mxu0 0.0
        %3795 = vmatpush1.xpose.msra.mxu0 0.0
        %3796 = vmatprep.subr.mxu0 0.0
        %3797 = vmatpush1.xpose.msra.mxu0 0.0
        %3798 = vmatprep.subr.mxu0 0.0
        %3799 = vmatpush1.xpose.msra.mxu0 0.0
        %3800 = vmatprep.subr.mxu0 0.0
        %3801 = vmatpush1.xpose.msra.mxu0 0.0
        %3802 = vmatprep.subr.mxu0 0.0
        %3803 = vmatpush1.xpose.msra.mxu0 0.0
        %3804 = vmatprep.subr.mxu0 0.0
        %3805 = vmatpush1.xpose.msra.mxu0 0.0
        %3806 = vmatprep.subr.mxu0 0.0
        %3807 = vmatpush1.xpose.msra.mxu0 0.0
        %3808 = vmatprep.subr.mxu0 0.0
        %3809 = vmatpush1.xpose.msra.mxu0 0.0
        %3810 = vmatprep.subr.mxu0 0.0
        %3811 = vmatpush1.xpose.msra.mxu0 0.0
        %3812 = vmatprep.subr.mxu0 0.0
        %3813 = vmatpush1.xpose.msra.mxu0 0.0
        %3814 = vmatprep.subr.mxu0 0.0
        %3815 = vmatpush1.xpose.msra.mxu0 0.0
        %3816 = vmatprep.subr.mxu0 0.0
        %3817 = vmatpush1.xpose.msra.mxu0 0.0
        %3818 = vmatprep.subr.mxu0 0.0
        %3819 = vmatpush1.xpose.msra.mxu0 0.0
        %3820 = vmatprep.subr.mxu0 0.0
        %3821 = vmatpush1.xpose.msra.mxu0 0.0
        %3822 = vmatprep.subr.mxu0 0.0
        %3823 = vmatpush1.xpose.msra.mxu0 0.0
        %3824 = vmatprep.subr.mxu0 0.0
        %3825 = vmatpush1.xpose.msra.mxu0 0.0
        %3826 = vmatprep.subr.mxu0 0.0
        %3827 = vmatpush1.xpose.msra.mxu0 0.0
        %3828 = vmatprep.subr.mxu0 0.0
        %3829 = vmatpush1.xpose.msra.mxu0 0.0
        %3830 = vmatprep.subr.mxu0 0.0
        %3831 = vmatpush1.xpose.msra.mxu0 0.0
        %3832 = vmatprep.subr.mxu0 0.0
        %3833 = vmatpush1.xpose.msra.mxu0 0.0
        %3834 = vmatprep.subr.mxu0 0.0
        %3835 = vmatpush1.xpose.msra.mxu0 0.0
        %3836 = vmatprep.subr.mxu0 0.0
        %3837 = vmatpush1.xpose.msra.mxu0 0.0
        %3838 = vmatprep.subr.mxu0 0.0
        %3839 = vmatpush1.xpose.msra.mxu0 0.0
        %3840 = vmatprep.subr.mxu0 0.0
        %3841 = vmatpush1.xpose.msra.mxu0 0.0
        %3842 = vmatprep.subr.mxu0 0.0
        %3843 = vmatpush1.xpose.msra.mxu0 0.0
        %3844 = vmatprep.subr.mxu0 0.0
        %3845 = vmatpush1.xpose.msra.mxu0 0.0
        %3846 = vmatprep.subr.mxu0 0.0
        %3847 = vmatpush1.xpose.msra.mxu0 0.0
        %3848 = vmatprep.subr.mxu0 0.0
        %3849 = vmatpush1.xpose.msra.mxu0 0.0
        %3850 = vmatprep.subr.mxu0 0.0
        %3851 = vmatpush1.xpose.msra.mxu0 0.0
        %3852 = vmatprep.subr.mxu0 0.0
        %3853 = vmatpush1.xpose.msra.mxu0 0.0
        %3854 = vmatprep.mubr.f32.mxu0 0.0
        %3855 = vmatmul.mubr.f32.gmra.mrb[0].mxu0 %v3784
        %v3856 = vpop.f32.mrb[0].mxu0
        %v3857 = vadd.f32 0.0, %v3856
        %v3858 = vpop.f32.mrb[0].mxu0
        %3859 = vdwg.mxu0
        %v3860 = vmul.f32 %v3857, 0.35355338
        %v3861 = vsel %vm1601, %v3860, -1e+30
        %v3862 = vsel %vm991, %v3861, -inf
        %3863 = vmax.xlane.f32.xlu0 %v3862
        %v3864 = vpop.xlane.xlu0 %3863
        %v3865 = vsub.f32 %v3861, %v3864
        %v3866 = vmul.f32 %v3865, 1.442695
        %v3867 = vpow.pop %v3866
        %v3868 = vsel %vm991, %v3867, 0.0
        %3869 = vadd.xlane.f32.xlu0 %v3868
        %v3870 = vpop.xlane.xlu0 %3869
        %v3871 = vrcp.pop %v3870
        %v3872 = vmul.f32 %v3867, %v3871
        %3873 = vrot.lane.b32.xlu0 %v3030, 104
        %v3874 = vpop.permute.xlu0 %3873
        %3875 = vrot.lane.b32.xlu0 %v3035, 104
        %v3876 = vpop.permute.xlu0 %3875
        %v3880 = vsel %vm991, %v3872, 0
        %3882 = vmatprep.subr.mxu0 0.0
        %3883 = vmatpush1.msra.mxu0 %v3874
        %3884 = vmatprep.subr.mxu0 0.0
        %3885 = vmatpush1.msra.mxu0 %v3876
        %3886 = vmatprep.subr.mxu0 0.0
        %3887 = vmatpush1.msra.mxu0 0.0
        %3888 = vmatprep.subr.mxu0 0.0
        %3889 = vmatpush1.msra.mxu0 0.0
        %3890 = vmatprep.subr.mxu0 0.0
        %3891 = vmatpush1.msra.mxu0 0.0
        %3892 = vmatprep.subr.mxu0 0.0
        %3893 = vmatpush1.msra.mxu0 0.0
        %3894 = vmatprep.subr.mxu0 0.0
        %3895 = vmatpush1.msra.mxu0 0.0
        %3896 = vmatprep.subr.mxu0 0.0
        %3897 = vmatpush1.msra.mxu0 0.0
        %3898 = vmatprep.subr.mxu0 0.0
        %3899 = vmatpush1.msra.mxu0 0.0
        %3900 = vmatprep.subr.mxu0 0.0
        %3901 = vmatpush1.msra.mxu0 0.0
        %3902 = vmatprep.subr.mxu0 0.0
        %3903 = vmatpush1.msra.mxu0 0.0
        %3904 = vmatprep.subr.mxu0 0.0
        %3905 = vmatpush1.msra.mxu0 0.0
        %3906 = vmatprep.subr.mxu0 0.0
        %3907 = vmatpush1.msra.mxu0 0.0
        %3908 = vmatprep.subr.mxu0 0.0
        %3909 = vmatpush1.msra.mxu0 0.0
        %3910 = vmatprep.subr.mxu0 0.0
        %3911 = vmatpush1.msra.mxu0 0.0
        %3912 = vmatprep.subr.mxu0 0.0
        %3913 = vmatpush1.msra.mxu0 0.0
        %3914 = vmatprep.subr.mxu0 0.0
        %3915 = vmatpush1.msra.mxu0 0.0
        %3916 = vmatprep.subr.mxu0 0.0
        %3917 = vmatpush1.msra.mxu0 0.0
        %3918 = vmatprep.subr.mxu0 0.0
        %3919 = vmatpush1.msra.mxu0 0.0
        %3920 = vmatprep.subr.mxu0 0.0
        %3921 = vmatpush1.msra.mxu0 0.0
        %3922 = vmatprep.subr.mxu0 0.0
        %3923 = vmatpush1.msra.mxu0 0.0
        %3924 = vmatprep.subr.mxu0 0.0
        %3925 = vmatpush1.msra.mxu0 0.0
        %3926 = vmatprep.subr.mxu0 0.0
        %3927 = vmatpush1.msra.mxu0 0.0
        %3928 = vmatprep.subr.mxu0 0.0
        %3929 = vmatpush1.msra.mxu0 0.0
        %3930 = vmatprep.subr.mxu0 0.0
        %3931 = vmatpush1.msra.mxu0 0.0
        %3932 = vmatprep.subr.mxu0 0.0
        %3933 = vmatpush1.msra.mxu0 0.0
        %3934 = vmatprep.subr.mxu0 0.0
        %3935 = vmatpush1.msra.mxu0 0.0
        %3936 = vmatprep.subr.mxu0 0.0
        %3937 = vmatpush1.msra.mxu0 0.0
        %3938 = vmatprep.subr.mxu0 0.0
        %3939 = vmatpush1.msra.mxu0 0.0
        %3940 = vmatprep.subr.mxu0 0.0
        %3941 = vmatpush1.msra.mxu0 0.0
        %3942 = vmatprep.subr.mxu0 0.0
        %3943 = vmatpush1.msra.mxu0 0.0
        %3944 = vmatprep.subr.mxu0 0.0
        %3945 = vmatpush1.msra.mxu0 0.0
        %3946 = vmatprep.mubr.f32.mxu0 0.0
        %3947 = vmatmul.mubr.f32.gmra.mrb[0].mxu0 %v3880
        %v3948 = vpop.f32.mrb[0].mxu0
        %v3949 = vadd.f32 0.0, %v3948
        %v3950 = vpop.f32.mrb[0].mxu0
        %3951 = vdwg.mxu0
        %v3953 = vsel %vm1514, %v3949, 0
        %3955 = vmatprep.subr.mxu0 0.0
        %3956 = vmatpush1.msra.mxu0 %v3042
        %3957 = vmatprep.subr.mxu0 0.0
        %3958 = vmatpush1.msra.mxu0 0.0
        %3959 = vmatprep.subr.mxu0 0.0
        %3960 = vmatpush1.msra.mxu0 0.0
        %3961 = vmatprep.subr.mxu0 0.0
        %3962 = vmatpush1.msra.mxu0 0.0
        %3963 = vmatprep.subr.mxu0 0.0
        %3964 = vmatpush1.msra.mxu0 0.0
        %3965 = vmatprep.subr.mxu0 0.0
        %3966 = vmatpush1.msra.mxu0 0.0
        %3967 = vmatprep.subr.mxu0 0.0
        %3968 = vmatpush1.msra.mxu0 0.0
        %3969 = vmatprep.subr.mxu0 0.0
        %3970 = vmatpush1.msra.mxu0 0.0
        %3971 = vmatprep.subr.mxu0 0.0
        %3972 = vmatpush1.msra.mxu0 0.0
        %3973 = vmatprep.subr.mxu0 0.0
        %3974 = vmatpush1.msra.mxu0 0.0
        %3975 = vmatprep.subr.mxu0 0.0
        %3976 = vmatpush1.msra.mxu0 0.0
        %3977 = vmatprep.subr.mxu0 0.0
        %3978 = vmatpush1.msra.mxu0 0.0
        %3979 = vmatprep.subr.mxu0 0.0
        %3980 = vmatpush1.msra.mxu0 0.0
        %3981 = vmatprep.subr.mxu0 0.0
        %3982 = vmatpush1.msra.mxu0 0.0
        %3983 = vmatprep.subr.mxu0 0.0
        %3984 = vmatpush1.msra.mxu0 0.0
        %3985 = vmatprep.subr.mxu0 0.0
        %3986 = vmatpush1.msra.mxu0 0.0
        %3987 = vmatprep.subr.mxu0 0.0
        %3988 = vmatpush1.msra.mxu0 0.0
        %3989 = vmatprep.subr.mxu0 0.0
        %3990 = vmatpush1.msra.mxu0 0.0
        %3991 = vmatprep.subr.mxu0 0.0
        %3992 = vmatpush1.msra.mxu0 0.0
        %3993 = vmatprep.subr.mxu0 0.0
        %3994 = vmatpush1.msra.mxu0 0.0
        %3995 = vmatprep.subr.mxu0 0.0
        %3996 = vmatpush1.msra.mxu0 0.0
        %3997 = vmatprep.subr.mxu0 0.0
        %3998 = vmatpush1.msra.mxu0 0.0
        %3999 = vmatprep.subr.mxu0 0.0
        %4000 = vmatpush1.msra.mxu0 0.0
        %4001 = vmatprep.subr.mxu0 0.0
        %4002 = vmatpush1.msra.mxu0 0.0
        %4003 = vmatprep.subr.mxu0 0.0
        %4004 = vmatpush1.msra.mxu0 0.0
        %4005 = vmatprep.subr.mxu0 0.0
        %4006 = vmatpush1.msra.mxu0 0.0
        %4007 = vmatprep.subr.mxu0 0.0
        %4008 = vmatpush1.msra.mxu0 0.0
        %4009 = vmatprep.subr.mxu0 0.0
        %4010 = vmatpush1.msra.mxu0 0.0
        %4011 = vmatprep.subr.mxu0 0.0
        %4012 = vmatpush1.msra.mxu0 0.0
        %4013 = vmatprep.subr.mxu0 0.0
        %4014 = vmatpush1.msra.mxu0 0.0
        %4015 = vmatprep.subr.mxu0 0.0
        %4016 = vmatpush1.msra.mxu0 0.0
        %4017 = vmatprep.subr.mxu0 0.0
        %4018 = vmatpush1.msra.mxu0 0.0
        %4019 = vmatprep.mubr.f32.mxu0 0.0
        %4020 = vmatmul.mubr.f32.gmra.mrb[0].mxu0 %v3953
        %v4021 = vpop.f32.mrb[0].mxu0
        %v4022 = vadd.f32 0.0, %v4021
        %v4023 = vpop.f32.mrb[0].mxu0
        %4024 = vdwg.mxu0
        %v4025 = vadd.f32 %v3777, %v4022
        %v4026 = vadd.f32 %v2744, %v4025
        %s4027 = scalar_lea.vmem %s37, 1
        %v4028 = vld [vmem:[%s4027] sm:$0x1]
        %v4030 = vlaneseq
        %v4031 = vshrl.u32 %v4030, 7
        %v4032 = vsub.s32 0, %v4031
        %v4033 = vrot.slane %v4028, %v4032
        %v4035 = vadd.f32 %v4026, %v4033
        %s4036 = scalar_lea.vmem %s39, 1
        %v4037 = vld [vmem:[%s4036] sm:$0x1]
        %s4038 = scalar_lea.vmem %s41, 1
        %v4039 = vld [vmem:[%s4038] sm:$0x1]
        %v4040 = vsel %vm1219, %v4035, 0.0
        %4041 = vadd.xlane.f32.xlu0 %v4040
        %v4042 = vpop.xlane.xlu0 %4041
        %v4043 = vmul.f32 %v4042, %v1223
        %v4044 = vsub.f32 %v4035, %v4043
        %v4045 = vmul.f32 %v4044, %v4044
        %v4046 = vsel %vm1219, %v4045, 0.0
        %4047 = vadd.xlane.f32.xlu0 %v4046
        %v4048 = vpop.xlane.xlu0 %4047
        %v4049 = vmul.f32 %v4048, %v1223
        %v4050 = vadd.f32 %v4049, 1e-05
        %v4051 = vrsqrt.pop %v4050
        %v4052 = vmul.f32 %v4044, %v4051
        %v4054 = vlaneseq
        %v4055 = vshrl.u32 %v4054, 7
        %v4056 = vsub.s32 0, %v4055
        %v4057 = vrot.slane %v4037, %v4056
        %v4059 = vmul.f32 %v4052, %v4057
        %v4061 = vlaneseq
        %v4062 = vshrl.u32 %v4061, 7
        %v4063 = vsub.s32 0, %v4062
        %v4064 = vrot.slane %v4039, %v4063
        %v4066 = vadd.f32 %v4059, %v4064
        %s4067 = scalar_lea.vmem %s43, 32
        %v4068 = vld [vmem:[%s4067] sm:$0xff]
        %v4069 = vld [vmem:[%s4067 + $0x8] sm:$0xff]
        %v4070 = vld [vmem:[%s4067 + $0x10] sm:$0xff]
        %v4071 = vld [vmem:[%s4067 + $0x18] sm:$0xff]
        %s4072 = scalar_lea.vmem %s45, 1
        %v4073 = vld [vmem:[%s4072] sm:$0x1]
        %v4075 = vlaneseq
        %v4076 = vshrl.u32 %v4075, 7
        %v4077 = vsub.s32 0, %v4076
        %v4078 = vrot.slane %v4073, %v4077
        %v4081 = vsel %vm1219, %v4066, 0
        %4083 = vmatprep.subr.mxu0 0.0
        %4084 = vmatpush1.msra.mxu0 %v4068
        %4085 = vmatprep.subr.mxu0 0.0
        %4086 = vmatpush1.msra.mxu0 %v4069
        %4087 = vmatprep.subr.mxu0 0.0
        %4088 = vmatpush1.msra.mxu0 %v4070
        %4089 = vmatprep.subr.mxu0 0.0
        %4090 = vmatpush1.msra.mxu0 %v4071
        %4091 = vmatprep.subr.mxu0 0.0
        %4092 = vmatpush1.msra.mxu0 0.0
        %4093 = vmatprep.subr.mxu0 0.0
        %4094 = vmatpush1.msra.mxu0 0.0
        %4095 = vmatprep.subr.mxu0 0.0
        %4096 = vmatpush1.msra.mxu0 0.0
        %4097 = vmatprep.subr.mxu0 0.0
        %4098 = vmatpush1.msra.mxu0 0.0
        %4099 = vmatprep.subr.mxu0 0.0
        %4100 = vmatpush1.msra.mxu0 0.0
        %4101 = vmatprep.subr.mxu0 0.0
        %4102 = vmatpush1.msra.mxu0 0.0
        %4103 = vmatprep.subr.mxu0 0.0
        %4104 = vmatpush1.msra.mxu0 0.0
        %4105 = vmatprep.subr.mxu0 0.0
        %4106 = vmatpush1.msra.mxu0 0.0
        %4107 = vmatprep.subr.mxu0 0.0
        %4108 = vmatpush1.msra.mxu0 0.0
        %4109 = vmatprep.subr.mxu0 0.0
        %4110 = vmatpush1.msra.mxu0 0.0
        %4111 = vmatprep.subr.mxu0 0.0
        %4112 = vmatpush1.msra.mxu0 0.0
        %4113 = vmatprep.subr.mxu0 0.0
        %4114 = vmatpush1.msra.mxu0 0.0
        %4115 = vmatprep.subr.mxu0 0.0
        %4116 = vmatpush1.msra.mxu0 0.0
        %4117 = vmatprep.subr.mxu0 0.0
        %4118 = vmatpush1.msra.mxu0 0.0
        %4119 = vmatprep.subr.mxu0 0.0
        %4120 = vmatpush1.msra.mxu0 0.0
        %4121 = vmatprep.subr.mxu0 0.0
        %4122 = vmatpush1.msra.mxu0 0.0
        %4123 = vmatprep.subr.mxu0 0.0
        %4124 = vmatpush1.msra.mxu0 0.0
        %4125 = vmatprep.subr.mxu0 0.0
        %4126 = vmatpush1.msra.mxu0 0.0
        %4127 = vmatprep.subr.mxu0 0.0
        %4128 = vmatpush1.msra.mxu0 0.0
        %4129 = vmatprep.subr.mxu0 0.0
        %4130 = vmatpush1.msra.mxu0 0.0
        %4131 = vmatprep.subr.mxu0 0.0
        %4132 = vmatpush1.msra.mxu0 0.0
        %4133 = vmatprep.subr.mxu0 0.0
        %4134 = vmatpush1.msra.mxu0 0.0
        %4135 = vmatprep.subr.mxu0 0.0
        %4136 = vmatpush1.msra.mxu0 0.0
        %4137 = vmatprep.subr.mxu0 0.0
        %4138 = vmatpush1.msra.mxu0 0.0
        %4139 = vmatprep.subr.mxu0 0.0
        %4140 = vmatpush1.msra.mxu0 0.0
        %4141 = vmatprep.subr.mxu0 0.0
        %4142 = vmatpush1.msra.mxu0 0.0
        %4143 = vmatprep.subr.mxu0 0.0
        %4144 = vmatpush1.msra.mxu0 0.0
        %4145 = vmatprep.subr.mxu0 0.0
        %4146 = vmatpush1.msra.mxu0 0.0
        %4147 = vmatprep.mubr.f32.mxu0 0.0
        %4148 = vmatmul.mubr.f32.gmra.mrb[0].mxu0 %v4081
        %v4149 = vpop.f32.mrb[0].mxu0
        %v4150 = vadd.f32 %v4078, %v4149
        %v4151 = vpop.f32.mrb[0].mxu0
        %4152 = vdwg.mxu0
        %v4153 = vmul.f32 %v4150, 0.70710677
        %v4154 = vand.u32 2147483647, %v4153
        %v4155 = vmul.f32 %v4154, 0.3275911
        %v4156 = vadd.f32 %v4155, 1.0
        %v4157 = vrcp.pop %v4156
        %v4158 = vmul.f32 1.0, %v4157
        %v4159 = vmul.f32 %v4158, 1.0614054
        %v4160 = vadd.f32 %v4159, -1.4531521
        %v4161 = vmul.f32 %v4160, %v4158
        %v4162 = vadd.f32 %v4161, 1.4214138
        %v4163 = vmul.f32 %v4162, %v4158
        %v4164 = vadd.f32 %v4163, -0.28449672
        %v4165 = vmul.f32 %v4164, %v4158
        %v4166 = vadd.f32 %v4165, 0.2548296
        %v4167 = vmul.f32 %v4166, %v4158
        %v4168 = vsub.f32 0.0, %v4154
        %v4169 = vmul.f32 %v4168, %v4154
        %v4170 = vmul.f32 %v4169, 1.442695
        %v4171 = vpow.pop %v4170
        %v4172 = vmul.f32 %v4167, %v4171
        %v4173 = vsub.f32 1.0, %v4172
        %vm4174 = vcmp.ge.f32.partialorder %v4153, 0.0
        %v4175 = vsub.f32 0.0, %v4173
        %v4176 = vsel %vm4174, %v4173, %v4175
        %v4177 = vmul.f32 %v4150, 0.5
        %v4178 = vadd.f32 %v4176, 1.0
        %v4179 = vmul.f32 %v4177, %v4178
        %s4180 = scalar_lea.vmem %s47, 64
        %v4181 = vld [vmem:[%s4180] sm:$0xff]
        %v4182 = vld [vmem:[%s4180 + $0x8] sm:$0xff]
        %v4183 = vld [vmem:[%s4180 + $0x10] sm:$0xff]
        %v4184 = vld [vmem:[%s4180 + $0x18] sm:$0xff]
        %v4185 = vld [vmem:[%s4180 + $0x20] sm:$0xff]
        %v4186 = vld [vmem:[%s4180 + $0x28] sm:$0xff]
        %v4187 = vld [vmem:[%s4180 + $0x30] sm:$0xff]
        %v4188 = vld [vmem:[%s4180 + $0x38] sm:$0xff]
        %v4190 = vsel %vm2662, %v4179, 0
        %4192 = vmatprep.subr.mxu0 0.0
        %4193 = vmatpush1.msra.mxu0 %v4181
        %4194 = vmatprep.subr.mxu0 0.0
        %4195 = vmatpush1.msra.mxu0 %v4182
        %4196 = vmatprep.subr.mxu0 0.0
        %4197 = vmatpush1.msra.mxu0 %v4183
        %4198 = vmatprep.subr.mxu0 0.0
        %4199 = vmatpush1.msra.mxu0 %v4184
        %4200 = vmatprep.subr.mxu0 0.0
        %4201 = vmatpush1.msra.mxu0 %v4185
        %4202 = vmatprep.subr.mxu0 0.0
        %4203 = vmatpush1.msra.mxu0 %v4186
        %4204 = vmatprep.subr.mxu0 0.0
        %4205 = vmatpush1.msra.mxu0 %v4187
        %4206 = vmatprep.subr.mxu0 0.0
        %4207 = vmatpush1.msra.mxu0 %v4188
        %4208 = vmatprep.subr.mxu0 0.0
        %4209 = vmatpush1.msra.mxu0 0.0
        %4210 = vmatprep.subr.mxu0 0.0
        %4211 = vmatpush1.msra.mxu0 0.0
        %4212 = vmatprep.subr.mxu0 0.0
        %4213 = vmatpush1.msra.mxu0 0.0
        %4214 = vmatprep.subr.mxu0 0.0
        %4215 = vmatpush1.msra.mxu0 0.0
        %4216 = vmatprep.subr.mxu0 0.0
        %4217 = vmatpush1.msra.mxu0 0.0
        %4218 = vmatprep.subr.mxu0 0.0
        %4219 = vmatpush1.msra.mxu0 0.0
        %4220 = vmatprep.subr.mxu0 0.0
        %4221 = vmatpush1.msra.mxu0 0.0
        %4222 = vmatprep.subr.mxu0 0.0
        %4223 = vmatpush1.msra.mxu0 0.0
        %4224 = vmatprep.subr.mxu0 0.0
        %4225 = vmatpush1.msra.mxu0 0.0
        %4226 = vmatprep.subr.mxu0 0.0
        %4227 = vmatpush1.msra.mxu0 0.0
        %4228 = vmatprep.subr.mxu0 0.0
        %4229 = vmatpush1.msra.mxu0 0.0
        %4230 = vmatprep.subr.mxu0 0.0
        %4231 = vmatpush1.msra.mxu0 0.0
        %4232 = vmatprep.subr.mxu0 0.0
        %4233 = vmatpush1.msra.mxu0 0.0
        %4234 = vmatprep.subr.mxu0 0.0
        %4235 = vmatpush1.msra.mxu0 0.0
        %4236 = vmatprep.subr.mxu0 0.0
        %4237 = vmatpush1.msra.mxu0 0.0
        %4238 = vmatprep.subr.mxu0 0.0
        %4239 = vmatpush1.msra.mxu0 0.0
        %4240 = vmatprep.subr.mxu0 0.0
        %4241 = vmatpush1.msra.mxu0 0.0
        %4242 = vmatprep.subr.mxu0 0.0
        %4243 = vmatpush1.msra.mxu0 0.0
        %4244 = vmatprep.subr.mxu0 0.0
        %4245 = vmatpush1.msra.mxu0 0.0
        %4246 = vmatprep.subr.mxu0 0.0
        %4247 = vmatpush1.msra.mxu0 0.0
        %4248 = vmatprep.subr.mxu0 0.0
        %4249 = vmatpush1.msra.mxu0 0.0
        %4250 = vmatprep.subr.mxu0 0.0
        %4251 = vmatpush1.msra.mxu0 0.0
        %4252 = vmatprep.subr.mxu0 0.0
        %4253 = vmatpush1.msra.mxu0 0.0
        %4254 = vmatprep.subr.mxu0 0.0
        %4255 = vmatpush1.msra.mxu0 0.0
        %4256 = vmatprep.mubr.f32.mxu0 0.0
        %4257 = vmatmul.mubr.f32.gmra.mrb[0].mxu0 %v4190
        %v4258 = vpop.f32.mrb[0].mxu0
        %v4259 = vadd.f32 0.0, %v4258
        %v4260 = vpop.f32.mrb[0].mxu0
        %4261 = vdwg.mxu0
        %v4262 = vadd.f32 %v4035, %v4259
        %s4263 = scalar_lea.vmem %s49, 1
        %v4264 = vld [vmem:[%s4263] sm:$0x1]
        %v4266 = vlaneseq
        %v4267 = vshrl.u32 %v4266, 7
        %v4268 = vsub.s32 0, %v4267
        %v4269 = vrot.slane %v4264, %v4268
        %v4271 = vadd.f32 %v4262, %v4269
        %s4272 = scalar_lea.vmem %s19, 2
        %v4273 = vld [vmem:[%s4272] sm:$0x1]
        %s4274 = scalar_lea.vmem %s21, 2
        %v4275 = vld [vmem:[%s4274] sm:$0x1]
        %v4276 = vsel %vm1219, %v4271, 0.0
        %4277 = vadd.xlane.f32.xlu0 %v4276
        %v4278 = vpop.xlane.xlu0 %4277
        %v4279 = vmul.f32 %v4278, %v1223
        %v4280 = vsub.f32 %v4271, %v4279
        %v4281 = vmul.f32 %v4280, %v4280
        %v4282 = vsel %vm1219, %v4281, 0.0
        %4283 = vadd.xlane.f32.xlu0 %v4282
        %v4284 = vpop.xlane.xlu0 %4283
        %v4285 = vmul.f32 %v4284, %v1223
        %v4286 = vadd.f32 %v4285, 1e-05
        %v4287 = vrsqrt.pop %v4286
        %v4288 = vmul.f32 %v4280, %v4287
        %v4290 = vlaneseq
        %v4291 = vshrl.u32 %v4290, 7
        %v4292 = vsub.s32 0, %v4291
        %v4293 = vrot.slane %v4273, %v4292
        %v4295 = vmul.f32 %v4288, %v4293
        %v4297 = vlaneseq
        %v4298 = vshrl.u32 %v4297, 7
        %v4299 = vsub.s32 0, %v4298
        %v4300 = vrot.slane %v4275, %v4299
        %v4302 = vadd.f32 %v4295, %v4300
        %s4303 = scalar_lea.vmem %s23, 64
        %v4304 = vld [vmem:[%s4303] sm:$0xff]
        %v4305 = vld [vmem:[%s4303 + $0x8] sm:$0xff]
        %v4306 = vld [vmem:[%s4303 + $0x10] sm:$0xff]
        %v4307 = vld [vmem:[%s4303 + $0x18] sm:$0xff]
        %s4308 = scalar_lea.vmem %s25, 2
        %v4309 = vld [vmem:[%s4308] sm:$0x1]
        %v4311 = vlaneseq
        %v4312 = vshrl.u32 %v4311, 7
        %v4313 = vsub.s32 0, %v4312
        %v4314 = vrot.slane %v4309, %v4313
        %v4317 = vsel %vm1219, %v4302, 0
        %4319 = vmatprep.subr.mxu0 0.0
        %4320 = vmatpush1.msra.mxu0 %v4304
        %4321 = vmatprep.subr.mxu0 0.0
        %4322 = vmatpush1.msra.mxu0 %v4305
        %4323 = vmatprep.subr.mxu0 0.0
        %4324 = vmatpush1.msra.mxu0 %v4306
        %4325 = vmatprep.subr.mxu0 0.0
        %4326 = vmatpush1.msra.mxu0 %v4307
        %4327 = vmatprep.subr.mxu0 0.0
        %4328 = vmatpush1.msra.mxu0 0.0
        %4329 = vmatprep.subr.mxu0 0.0
        %4330 = vmatpush1.msra.mxu0 0.0
        %4331 = vmatprep.subr.mxu0 0.0
        %4332 = vmatpush1.msra.mxu0 0.0
        %4333 = vmatprep.subr.mxu0 0.0
        %4334 = vmatpush1.msra.mxu0 0.0
        %4335 = vmatprep.subr.mxu0 0.0
        %4336 = vmatpush1.msra.mxu0 0.0
        %4337 = vmatprep.subr.mxu0 0.0
        %4338 = vmatpush1.msra.mxu0 0.0
        %4339 = vmatprep.subr.mxu0 0.0
        %4340 = vmatpush1.msra.mxu0 0.0
        %4341 = vmatprep.subr.mxu0 0.0
        %4342 = vmatpush1.msra.mxu0 0.0
        %4343 = vmatprep.subr.mxu0 0.0
        %4344 = vmatpush1.msra.mxu0 0.0
        %4345 = vmatprep.subr.mxu0 0.0
        %4346 = vmatpush1.msra.mxu0 0.0
        %4347 = vmatprep.subr.mxu0 0.0
        %4348 = vmatpush1.msra.mxu0 0.0
        %4349 = vmatprep.subr.mxu0 0.0
        %4350 = vmatpush1.msra.mxu0 0.0
        %4351 = vmatprep.subr.mxu0 0.0
        %4352 = vmatpush1.msra.mxu0 0.0
        %4353 = vmatprep.subr.mxu0 0.0
        %4354 = vmatpush1.msra.mxu0 0.0
        %4355 = vmatprep.subr.mxu0 0.0
        %4356 = vmatpush1.msra.mxu0 0.0
        %4357 = vmatprep.subr.mxu0 0.0
        %4358 = vmatpush1.msra.mxu0 0.0
        %4359 = vmatprep.subr.mxu0 0.0
        %4360 = vmatpush1.msra.mxu0 0.0
        %4361 = vmatprep.subr.mxu0 0.0
        %4362 = vmatpush1.msra.mxu0 0.0
        %4363 = vmatprep.subr.mxu0 0.0
        %4364 = vmatpush1.msra.mxu0 0.0
        %4365 = vmatprep.subr.mxu0 0.0
        %4366 = vmatpush1.msra.mxu0 0.0
        %4367 = vmatprep.subr.mxu0 0.0
        %4368 = vmatpush1.msra.mxu0 0.0
        %4369 = vmatprep.subr.mxu0 0.0
        %4370 = vmatpush1.msra.mxu0 0.0
        %4371 = vmatprep.subr.mxu0 0.0
        %4372 = vmatpush1.msra.mxu0 0.0
        %4373 = vmatprep.subr.mxu0 0.0
        %4374 = vmatpush1.msra.mxu0 0.0
        %4375 = vmatprep.subr.mxu0 0.0
        %4376 = vmatpush1.msra.mxu0 0.0
        %4377 = vmatprep.subr.mxu0 0.0
        %4378 = vmatpush1.msra.mxu0 0.0
        %4379 = vmatprep.subr.mxu0 0.0
        %4380 = vmatpush1.msra.mxu0 0.0
        %4381 = vmatprep.subr.mxu0 0.0
        %4382 = vmatpush1.msra.mxu0 0.0
        %4383 = vmatprep.mubr.f32.mxu0 0.0
        %4384 = vmatmul.mubr.f32.gmra.mrb[0].mxu0 %v4317
        %v4385 = vpop.f32.mrb[0].mxu0
        %v4386 = vadd.f32 %v4314, %v4385
        %v4387 = vpop.f32.mrb[0].mxu0
        %4388 = vdwg.mxu0
        %s4389 = scalar_lea.vmem %s27, 64
        %v4390 = vld [vmem:[%s4389] sm:$0xff]
        %v4391 = vld [vmem:[%s4389 + $0x8] sm:$0xff]
        %v4392 = vld [vmem:[%s4389 + $0x10] sm:$0xff]
        %v4393 = vld [vmem:[%s4389 + $0x18] sm:$0xff]
        %s4394 = scalar_lea.vmem %s29, 2
        %v4395 = vld [vmem:[%s4394] sm:$0x1]
        %v4397 = vlaneseq
        %v4398 = vshrl.u32 %v4397, 7
        %v4399 = vsub.s32 0, %v4398
        %v4400 = vrot.slane %v4395, %v4399
        %4402 = vmatprep.subr.mxu0 0.0
        %4403 = vmatpush1.msra.mxu0 %v4390
        %4404 = vmatprep.subr.mxu0 0.0
        %4405 = vmatpush1.msra.mxu0 %v4391
        %4406 = vmatprep.subr.mxu0 0.0
        %4407 = vmatpush1.msra.mxu0 %v4392
        %4408 = vmatprep.subr.mxu0 0.0
        %4409 = vmatpush1.msra.mxu0 %v4393
        %4410 = vmatprep.subr.mxu0 0.0
        %4411 = vmatpush1.msra.mxu0 0.0
        %4412 = vmatprep.subr.mxu0 0.0
        %4413 = vmatpush1.msra.mxu0 0.0
        %4414 = vmatprep.subr.mxu0 0.0
        %4415 = vmatpush1.msra.mxu0 0.0
        %4416 = vmatprep.subr.mxu0 0.0
        %4417 = vmatpush1.msra.mxu0 0.0
        %4418 = vmatprep.subr.mxu0 0.0
        %4419 = vmatpush1.msra.mxu0 0.0
        %4420 = vmatprep.subr.mxu0 0.0
        %4421 = vmatpush1.msra.mxu0 0.0
        %4422 = vmatprep.subr.mxu0 0.0
        %4423 = vmatpush1.msra.mxu0 0.0
        %4424 = vmatprep.subr.mxu0 0.0
        %4425 = vmatpush1.msra.mxu0 0.0
        %4426 = vmatprep.subr.mxu0 0.0
        %4427 = vmatpush1.msra.mxu0 0.0
        %4428 = vmatprep.subr.mxu0 0.0
        %4429 = vmatpush1.msra.mxu0 0.0
        %4430 = vmatprep.subr.mxu0 0.0
        %4431 = vmatpush1.msra.mxu0 0.0
        %4432 = vmatprep.subr.mxu0 0.0
        %4433 = vmatpush1.msra.mxu0 0.0
        %4434 = vmatprep.subr.mxu0 0.0
        %4435 = vmatpush1.msra.mxu0 0.0
        %4436 = vmatprep.subr.mxu0 0.0
        %4437 = vmatpush1.msra.mxu0 0.0
        %4438 = vmatprep.subr.mxu0 0.0
        %4439 = vmatpush1.msra.mxu0 0.0
        %4440 = vmatprep.subr.mxu0 0.0
        %4441 = vmatpush1.msra.mxu0 0.0
        %4442 = vmatprep.subr.mxu0 0.0
        %4443 = vmatpush1.msra.mxu0 0.0
        %4444 = vmatprep.subr.mxu0 0.0
        %4445 = vmatpush1.msra.mxu0 0.0
        %4446 = vmatprep.subr.mxu0 0.0
        %4447 = vmatpush1.msra.mxu0 0.0
        %4448 = vmatprep.subr.mxu0 0.0
        %4449 = vmatpush1.msra.mxu0 0.0
        %4450 = vmatprep.subr.mxu0 0.0
        %4451 = vmatpush1.msra.mxu0 0.0
        %4452 = vmatprep.subr.mxu0 0.0
        %4453 = vmatpush1.msra.mxu0 0.0
        %4454 = vmatprep.subr.mxu0 0.0
        %4455 = vmatpush1.msra.mxu0 0.0
        %4456 = vmatprep.subr.mxu0 0.0
        %4457 = vmatpush1.msra.mxu0 0.0
        %4458 = vmatprep.subr.mxu0 0.0
        %4459 = vmatpush1.msra.mxu0 0.0
        %4460 = vmatprep.subr.mxu0 0.0
        %4461 = vmatpush1.msra.mxu0 0.0
        %4462 = vmatprep.subr.mxu0 0.0
        %4463 = vmatpush1.msra.mxu0 0.0
        %4464 = vmatprep.subr.mxu0 0.0
        %4465 = vmatpush1.msra.mxu0 0.0
        %4466 = vmatprep.mubr.f32.mxu0 0.0
        %4467 = vmatmul.mubr.f32.gmra.mrb[0].mxu0 %v1344
        %v4468 = vpop.f32.mrb[0].mxu0
        %v4469 = vadd.f32 %v4400, %v4468
        %v4470 = vpop.f32.mrb[0].mxu0
        %4471 = vmatprep.mubr.f32.mxu0 0.0
        %4472 = vmatmul.mubr.f32.gmra.mrb[0].mxu0 %v1347
        %v4473 = vpop.f32.mrb[0].mxu0
        %v4474 = vadd.f32 %v4400, %v4473
        %v4475 = vpop.f32.mrb[0].mxu0
        %4476 = vdwg.mxu0
        %s4477 = scalar_lea.vmem %s31, 64
        %v4478 = vld [vmem:[%s4477] sm:$0xff]
        %v4479 = vld [vmem:[%s4477 + $0x8] sm:$0xff]
        %v4480 = vld [vmem:[%s4477 + $0x10] sm:$0xff]
        %v4481 = vld [vmem:[%s4477 + $0x18] sm:$0xff]
        %s4482 = scalar_lea.vmem %s33, 2
        %v4483 = vld [vmem:[%s4482] sm:$0x1]
        %v4485 = vlaneseq
        %v4486 = vshrl.u32 %v4485, 7
        %v4487 = vsub.s32 0, %v4486
        %v4488 = vrot.slane %v4483, %v4487
        %4490 = vmatprep.subr.mxu0 0.0
        %4491 = vmatpush1.msra.mxu0 %v4478
        %4492 = vmatprep.subr.mxu0 0.0
        %4493 = vmatpush1.msra.mxu0 %v4479
        %4494 = vmatprep.subr.mxu0 0.0
        %4495 = vmatpush1.msra.mxu0 %v4480
        %4496 = vmatprep.subr.mxu0 0.0
        %4497 = vmatpush1.msra.mxu0 %v4481
        %4498 = vmatprep.subr.mxu0 0.0
        %4499 = vmatpush1.msra.mxu0 0.0
        %4500 = vmatprep.subr.mxu0 0.0
        %4501 = vmatpush1.msra.mxu0 0.0
        %4502 = vmatprep.subr.mxu0 0.0
        %4503 = vmatpush1.msra.mxu0 0.0
        %4504 = vmatprep.subr.mxu0 0.0
        %4505 = vmatpush1.msra.mxu0 0.0
        %4506 = vmatprep.subr.mxu0 0.0
        %4507 = vmatpush1.msra.mxu0 0.0
        %4508 = vmatprep.subr.mxu0 0.0
        %4509 = vmatpush1.msra.mxu0 0.0
        %4510 = vmatprep.subr.mxu0 0.0
        %4511 = vmatpush1.msra.mxu0 0.0
        %4512 = vmatprep.subr.mxu0 0.0
        %4513 = vmatpush1.msra.mxu0 0.0
        %4514 = vmatprep.subr.mxu0 0.0
        %4515 = vmatpush1.msra.mxu0 0.0
        %4516 = vmatprep.subr.mxu0 0.0
        %4517 = vmatpush1.msra.mxu0 0.0
        %4518 = vmatprep.subr.mxu0 0.0
        %4519 = vmatpush1.msra.mxu0 0.0
        %4520 = vmatprep.subr.mxu0 0.0
        %4521 = vmatpush1.msra.mxu0 0.0
        %4522 = vmatprep.subr.mxu0 0.0
        %4523 = vmatpush1.msra.mxu0 0.0
        %4524 = vmatprep.subr.mxu0 0.0
        %4525 = vmatpush1.msra.mxu0 0.0
        %4526 = vmatprep.subr.mxu0 0.0
        %4527 = vmatpush1.msra.mxu0 0.0
        %4528 = vmatprep.subr.mxu0 0.0
        %4529 = vmatpush1.msra.mxu0 0.0
        %4530 = vmatprep.subr.mxu0 0.0
        %4531 = vmatpush1.msra.mxu0 0.0
        %4532 = vmatprep.subr.mxu0 0.0
        %4533 = vmatpush1.msra.mxu0 0.0
        %4534 = vmatprep.subr.mxu0 0.0
        %4535 = vmatpush1.msra.mxu0 0.0
        %4536 = vmatprep.subr.mxu0 0.0
        %4537 = vmatpush1.msra.mxu0 0.0
        %4538 = vmatprep.subr.mxu0 0.0
        %4539 = vmatpush1.msra.mxu0 0.0
        %4540 = vmatprep.subr.mxu0 0.0
        %4541 = vmatpush1.msra.mxu0 0.0
        %4542 = vmatprep.subr.mxu0 0.0
        %4543 = vmatpush1.msra.mxu0 0.0
        %4544 = vmatprep.subr.mxu0 0.0
        %4545 = vmatpush1.msra.mxu0 0.0
        %4546 = vmatprep.subr.mxu0 0.0
        %4547 = vmatpush1.msra.mxu0 0.0
        %4548 = vmatprep.subr.mxu0 0.0
        %4549 = vmatpush1.msra.mxu0 0.0
        %4550 = vmatprep.subr.mxu0 0.0
        %4551 = vmatpush1.msra.mxu0 0.0
        %4552 = vmatprep.subr.mxu0 0.0
        %4553 = vmatpush1.msra.mxu0 0.0
        %4554 = vmatprep.mubr.f32.mxu0 0.0
        %4555 = vmatmul.mubr.f32.gmra.mrb[0].mxu0 %v1344
        %v4556 = vpop.f32.mrb[0].mxu0
        %v4557 = vadd.f32 %v4488, %v4556
        %v4558 = vpop.f32.mrb[0].mxu0
        %4559 = vmatprep.mubr.f32.mxu0 0.0
        %4560 = vmatmul.mubr.f32.gmra.mrb[0].mxu0 %v1347
        %v4561 = vpop.f32.mrb[0].mxu0
        %v4562 = vadd.f32 %v4488, %v4561
        %v4563 = vpop.f32.mrb[0].mxu0
        %4564 = vdwg.mxu0
        %s4565 = scalar_lea.vmem %s35, 64
        %v4566 = vld [vmem:[%s4565] sm:$0xff]
        %v4567 = vld [vmem:[%s4565 + $0x8] sm:$0xff]
        %v4568 = vld [vmem:[%s4565 + $0x10] sm:$0xff]
        %v4569 = vld [vmem:[%s4565 + $0x18] sm:$0xff]
        %v4571 = vsel %vm1514, %v4386, 0
        %v4574 = vsel %vm1514, %v4469, 0
        %v4577 = vsel %vm1514, %v4474, 0
        %4579 = vmatprep.subr.mxu0 0.0
        %4580 = vmatpush1.xpose.msra.mxu0 %v4574
        %4581 = vmatprep.subr.mxu0 0.0
        %4582 = vmatpush1.xpose.msra.mxu0 %v4577
        %4583 = vmatprep.subr.mxu0 0.0
        %4584 = vmatpush1.xpose.msra.mxu0 0.0
        %4585 = vmatprep.subr.mxu0 0.0
        %4586 = vmatpush1.xpose.msra.mxu0 0.0
        %4587 = vmatprep.subr.mxu0 0.0
        %4588 = vmatpush1.xpose.msra.mxu0 0.0
        %4589 = vmatprep.subr.mxu0 0.0
        %4590 = vmatpush1.xpose.msra.mxu0 0.0
        %4591 = vmatprep.subr.mxu0 0.0
        %4592 = vmatpush1.xpose.msra.mxu0 0.0
        %4593 = vmatprep.subr.mxu0 0.0
        %4594 = vmatpush1.xpose.msra.mxu0 0.0
        %4595 = vmatprep.subr.mxu0 0.0
        %4596 = vmatpush1.xpose.msra.mxu0 0.0
        %4597 = vmatprep.subr.mxu0 0.0
        %4598 = vmatpush1.xpose.msra.mxu0 0.0
        %4599 = vmatprep.subr.mxu0 0.0
        %4600 = vmatpush1.xpose.msra.mxu0 0.0
        %4601 = vmatprep.subr.mxu0 0.0
        %4602 = vmatpush1.xpose.msra.mxu0 0.0
        %4603 = vmatprep.subr.mxu0 0.0
        %4604 = vmatpush1.xpose.msra.mxu0 0.0
        %4605 = vmatprep.subr.mxu0 0.0
        %4606 = vmatpush1.xpose.msra.mxu0 0.0
        %4607 = vmatprep.subr.mxu0 0.0
        %4608 = vmatpush1.xpose.msra.mxu0 0.0
        %4609 = vmatprep.subr.mxu0 0.0
        %4610 = vmatpush1.xpose.msra.mxu0 0.0
        %4611 = vmatprep.subr.mxu0 0.0
        %4612 = vmatpush1.xpose.msra.mxu0 0.0
        %4613 = vmatprep.subr.mxu0 0.0
        %4614 = vmatpush1.xpose.msra.mxu0 0.0
        %4615 = vmatprep.subr.mxu0 0.0
        %4616 = vmatpush1.xpose.msra.mxu0 0.0
        %4617 = vmatprep.subr.mxu0 0.0
        %4618 = vmatpush1.xpose.msra.mxu0 0.0
        %4619 = vmatprep.subr.mxu0 0.0
        %4620 = vmatpush1.xpose.msra.mxu0 0.0
        %4621 = vmatprep.subr.mxu0 0.0
        %4622 = vmatpush1.xpose.msra.mxu0 0.0
        %4623 = vmatprep.subr.mxu0 0.0
        %4624 = vmatpush1.xpose.msra.mxu0 0.0
        %4625 = vmatprep.subr.mxu0 0.0
        %4626 = vmatpush1.xpose.msra.mxu0 0.0
        %4627 = vmatprep.subr.mxu0 0.0
        %4628 = vmatpush1.xpose.msra.mxu0 0.0
        %4629 = vmatprep.subr.mxu0 0.0
        %4630 = vmatpush1.xpose.msra.mxu0 0.0
        %4631 = vmatprep.subr.mxu0 0.0
        %4632 = vmatpush1.xpose.msra.mxu0 0.0
        %4633 = vmatprep.subr.mxu0 0.0
        %4634 = vmatpush1.xpose.msra.mxu0 0.0
        %4635 = vmatprep.subr.mxu0 0.0
        %4636 = vmatpush1.xpose.msra.mxu0 0.0
        %4637 = vmatprep.subr.mxu0 0.0
        %4638 = vmatpush1.xpose.msra.mxu0 0.0
        %4639 = vmatprep.subr.mxu0 0.0
        %4640 = vmatpush1.xpose.msra.mxu0 0.0
        %4641 = vmatprep.subr.mxu0 0.0
        %4642 = vmatpush1.xpose.msra.mxu0 0.0
        %4643 = vmatprep.mubr.f32.mxu0 0.0
        %4644 = vmatmul.mubr.f32.gmra.mrb[0].mxu0 %v4571
        %v4645 = vpop.f32.mrb[0].mxu0
        %v4646 = vadd.f32 0.0, %v4645
        %v4647 = vpop.f32.mrb[0].mxu0
        %4648 = vdwg.mxu0
        %v4649 = vmul.f32 %v4646, 0.35355338
        %v4650 = vsel %vm1601, %v4649, -1e+30
        %v4651 = vsel %vm991, %v4650, -inf
        %4652 = vmax.xlane.f32.xlu0 %v4651
        %v4653 = vpop.xlane.xlu0 %4652
        %v4654 = vsub.f32 %v4650, %v4653
        %v4655 = vmul.f32 %v4654, 1.442695
        %v4656 = vpow.pop %v4655
        %v4657 = vsel %vm991, %v4656, 0.0
        %4658 = vadd.xlane.f32.xlu0 %v4657
        %v4659 = vpop.xlane.xlu0 %4658
        %v4660 = vrcp.pop %v4659
        %v4661 = vmul.f32 %v4656, %v4660
        %v4663 = vsel %vm991, %v4661, 0
        %4665 = vmatprep.subr.mxu0 0.0
        %4666 = vmatpush1.msra.mxu0 %v4557
        %4667 = vmatprep.subr.mxu0 0.0
        %4668 = vmatpush1.msra.mxu0 %v4562
        %4669 = vmatprep.subr.mxu0 0.0
        %4670 = vmatpush1.msra.mxu0 0.0
        %4671 = vmatprep.subr.mxu0 0.0
        %4672 = vmatpush1.msra.mxu0 0.0
        %4673 = vmatprep.subr.mxu0 0.0
        %4674 = vmatpush1.msra.mxu0 0.0
        %4675 = vmatprep.subr.mxu0 0.0
        %4676 = vmatpush1.msra.mxu0 0.0
        %4677 = vmatprep.subr.mxu0 0.0
        %4678 = vmatpush1.msra.mxu0 0.0
        %4679 = vmatprep.subr.mxu0 0.0
        %4680 = vmatpush1.msra.mxu0 0.0
        %4681 = vmatprep.subr.mxu0 0.0
        %4682 = vmatpush1.msra.mxu0 0.0
        %4683 = vmatprep.subr.mxu0 0.0
        %4684 = vmatpush1.msra.mxu0 0.0
        %4685 = vmatprep.subr.mxu0 0.0
        %4686 = vmatpush1.msra.mxu0 0.0
        %4687 = vmatprep.subr.mxu0 0.0
        %4688 = vmatpush1.msra.mxu0 0.0
        %4689 = vmatprep.subr.mxu0 0.0
        %4690 = vmatpush1.msra.mxu0 0.0
        %4691 = vmatprep.subr.mxu0 0.0
        %4692 = vmatpush1.msra.mxu0 0.0
        %4693 = vmatprep.subr.mxu0 0.0
        %4694 = vmatpush1.msra.mxu0 0.0
        %4695 = vmatprep.subr.mxu0 0.0
        %4696 = vmatpush1.msra.mxu0 0.0
        %4697 = vmatprep.subr.mxu0 0.0
        %4698 = vmatpush1.msra.mxu0 0.0
        %4699 = vmatprep.subr.mxu0 0.0
        %4700 = vmatpush1.msra.mxu0 0.0
        %4701 = vmatprep.subr.mxu0 0.0
        %4702 = vmatpush1.msra.mxu0 0.0
        %4703 = vmatprep.subr.mxu0 0.0
        %4704 = vmatpush1.msra.mxu0 0.0
        %4705 = vmatprep.subr.mxu0 0.0
        %4706 = vmatpush1.msra.mxu0 0.0
        %4707 = vmatprep.subr.mxu0 0.0
        %4708 = vmatpush1.msra.mxu0 0.0
        %4709 = vmatprep.subr.mxu0 0.0
        %4710 = vmatpush1.msra.mxu0 0.0
        %4711 = vmatprep.subr.mxu0 0.0
        %4712 = vmatpush1.msra.mxu0 0.0
        %4713 = vmatprep.subr.mxu0 0.0
        %4714 = vmatpush1.msra.mxu0 0.0
        %4715 = vmatprep.subr.mxu0 0.0
        %4716 = vmatpush1.msra.mxu0 0.0
        %4717 = vmatprep.subr.mxu0 0.0
        %4718 = vmatpush1.msra.mxu0 0.0
        %4719 = vmatprep.subr.mxu0 0.0
        %4720 = vmatpush1.msra.mxu0 0.0
        %4721 = vmatprep.subr.mxu0 0.0
        %4722 = vmatpush1.msra.mxu0 0.0
        %4723 = vmatprep.subr.mxu0 0.0
        %4724 = vmatpush1.msra.mxu0 0.0
        %4725 = vmatprep.subr.mxu0 0.0
        %4726 = vmatpush1.msra.mxu0 0.0
        %4727 = vmatprep.subr.mxu0 0.0
        %4728 = vmatpush1.msra.mxu0 0.0
        %4729 = vmatprep.mubr.f32.mxu0 0.0
        %4730 = vmatmul.mubr.f32.gmra.mrb[0].mxu0 %v4663
        %v4731 = vpop.f32.mrb[0].mxu0
        %v4732 = vadd.f32 0.0, %v4731
        %v4733 = vpop.f32.mrb[0].mxu0
        %4734 = vdwg.mxu0
        %4735 = vrot.lane.b32.xlu0 %v4386, 120
        %v4736 = vpop.permute.xlu0 %4735
        %4737 = vrot.lane.b32.xlu0 %v4469, 120
        %v4738 = vpop.permute.xlu0 %4737
        %4739 = vrot.lane.b32.xlu0 %v4474, 120
        %v4740 = vpop.permute.xlu0 %4739
        %v4741 = vsel %vm1514, %v4736, 0
        %v4743 = vsel %vm1514, %v4738, 0
        %v4745 = vsel %vm1514, %v4740, 0
        %4747 = vmatprep.subr.mxu0 0.0
        %4748 = vmatpush1.xpose.msra.mxu0 %v4743
        %4749 = vmatprep.subr.mxu0 0.0
        %4750 = vmatpush1.xpose.msra.mxu0 %v4745
        %4751 = vmatprep.subr.mxu0 0.0
        %4752 = vmatpush1.xpose.msra.mxu0 0.0
        %4753 = vmatprep.subr.mxu0 0.0
        %4754 = vmatpush1.xpose.msra.mxu0 0.0
        %4755 = vmatprep.subr.mxu0 0.0
        %4756 = vmatpush1.xpose.msra.mxu0 0.0
        %4757 = vmatprep.subr.mxu0 0.0
        %4758 = vmatpush1.xpose.msra.mxu0 0.0
        %4759 = vmatprep.subr.mxu0 0.0
        %4760 = vmatpush1.xpose.msra.mxu0 0.0
        %4761 = vmatprep.subr.mxu0 0.0
        %4762 = vmatpush1.xpose.msra.mxu0 0.0
        %4763 = vmatprep.subr.mxu0 0.0
        %4764 = vmatpush1.xpose.msra.mxu0 0.0
        %4765 = vmatprep.subr.mxu0 0.0
        %4766 = vmatpush1.xpose.msra.mxu0 0.0
        %4767 = vmatprep.subr.mxu0 0.0
        %4768 = vmatpush1.xpose.msra.mxu0 0.0
        %4769 = vmatprep.subr.mxu0 0.0
        %4770 = vmatpush1.xpose.msra.mxu0 0.0
        %4771 = vmatprep.subr.mxu0 0.0
        %4772 = vmatpush1.xpose.msra.mxu0 0.0
        %4773 = vmatprep.subr.mxu0 0.0
        %4774 = vmatpush1.xpose.msra.mxu0 0.0
        %4775 = vmatprep.subr.mxu0 0.0
        %4776 = vmatpush1.xpose.msra.mxu0 0.0
        %4777 = vmatprep.subr.mxu0 0.0
        %4778 = vmatpush1.xpose.msra.mxu0 0.0
        %4779 = vmatprep.subr.mxu0 0.0
        %4780 = vmatpush1.xpose.msra.mxu0 0.0
        %4781 = vmatprep.subr.mxu0 0.0
        %4782 = vmatpush1.xpose.msra.mxu0 0.0
        %4783 = vmatprep.subr.mxu0 0.0
        %4784 = vmatpush1.xpose.msra.mxu0 0.0
        %4785 = vmatprep.subr.mxu0 0.0
        %4786 = vmatpush1.xpose.msra.mxu0 0.0
        %4787 = vmatprep.subr.mxu0 0.0
        %4788 = vmatpush1.xpose.msra.mxu0 0.0
        %4789 = vmatprep.subr.mxu0 0.0
        %4790 = vmatpush1.xpose.msra.mxu0 0.0
        %4791 = vmatprep.subr.mxu0 0.0
        %4792 = vmatpush1.xpose.msra.mxu0 0.0
        %4793 = vmatprep.subr.mxu0 0.0
        %4794 = vmatpush1.xpose.msra.mxu0 0.0
        %4795 = vmatprep.subr.mxu0 0.0
        %4796 = vmatpush1.xpose.msra.mxu0 0.0
        %4797 = vmatprep.subr.mxu0 0.0
        %4798 = vmatpush1.xpose.msra.mxu0 0.0
        %4799 = vmatprep.subr.mxu0 0.0
        %4800 = vmatpush1.xpose.msra.mxu0 0.0
        %4801 = vmatprep.subr.mxu0 0.0
        %4802 = vmatpush1.xpose.msra.mxu0 0.0
        %4803 = vmatprep.subr.mxu0 0.0
        %4804 = vmatpush1.xpose.msra.mxu0 0.0
        %4805 = vmatprep.subr.mxu0 0.0
        %4806 = vmatpush1.xpose.msra.mxu0 0.0
        %4807 = vmatprep.subr.mxu0 0.0
        %4808 = vmatpush1.xpose.msra.mxu0 0.0
        %4809 = vmatprep.subr.mxu0 0.0
        %4810 = vmatpush1.xpose.msra.mxu0 0.0
        %4811 = vmatprep.mubr.f32.mxu0 0.0
        %4812 = vmatmul.mubr.f32.gmra.mrb[0].mxu0 %v4741
        %v4813 = vpop.f32.mrb[0].mxu0
        %v4814 = vadd.f32 0.0, %v4813
        %v4815 = vpop.f32.mrb[0].mxu0
        %4816 = vdwg.mxu0
        %v4817 = vmul.f32 %v4814, 0.35355338
        %v4818 = vsel %vm1601, %v4817, -1e+30
        %v4819 = vsel %vm991, %v4818, -inf
        %4820 = vmax.xlane.f32.xlu0 %v4819
        %v4821 = vpop.xlane.xlu0 %4820
        %v4822 = vsub.f32 %v4818, %v4821
        %v4823 = vmul.f32 %v4822, 1.442695
        %v4824 = vpow.pop %v4823
        %v4825 = vsel %vm991, %v4824, 0.0
        %4826 = vadd.xlane.f32.xlu0 %v4825
        %v4827 = vpop.xlane.xlu0 %4826
        %v4828 = vrcp.pop %v4827
        %v4829 = vmul.f32 %v4824, %v4828
        %4832 = vrot.lane.b32.xlu0 %v4557, 120
        %v4833 = vpop.permute.xlu0 %4832
        %4834 = vrot.lane.b32.xlu0 %v4562, 120
        %v4835 = vpop.permute.xlu0 %4834
        %v4839 = vsel %vm991, %v4829, 0
        %4841 = vmatprep.subr.mxu0 0.0
        %4842 = vmatpush1.msra.mxu0 %v4833
        %4843 = vmatprep.subr.mxu0 0.0
        %4844 = vmatpush1.msra.mxu0 %v4835
        %4845 = vmatprep.subr.mxu0 0.0
        %4846 = vmatpush1.msra.mxu0 0.0
        %4847 = vmatprep.subr.mxu0 0.0
        %4848 = vmatpush1.msra.mxu0 0.0
        %4849 = vmatprep.subr.mxu0 0.0
        %4850 = vmatpush1.msra.mxu0 0.0
        %4851 = vmatprep.subr.mxu0 0.0
        %4852 = vmatpush1.msra.mxu0 0.0
        %4853 = vmatprep.subr.mxu0 0.0
        %4854 = vmatpush1.msra.mxu0 0.0
        %4855 = vmatprep.subr.mxu0 0.0
        %4856 = vmatpush1.msra.mxu0 0.0
        %4857 = vmatprep.subr.mxu0 0.0
        %4858 = vmatpush1.msra.mxu0 0.0
        %4859 = vmatprep.subr.mxu0 0.0
        %4860 = vmatpush1.msra.mxu0 0.0
        %4861 = vmatprep.subr.mxu0 0.0
        %4862 = vmatpush1.msra.mxu0 0.0
        %4863 = vmatprep.subr.mxu0 0.0
        %4864 = vmatpush1.msra.mxu0 0.0
        %4865 = vmatprep.subr.mxu0 0.0
        %4866 = vmatpush1.msra.mxu0 0.0
        %4867 = vmatprep.subr.mxu0 0.0
        %4868 = vmatpush1.msra.mxu0 0.0
        %4869 = vmatprep.subr.mxu0 0.0
        %4870 = vmatpush1.msra.mxu0 0.0
        %4871 = vmatprep.subr.mxu0 0.0
        %4872 = vmatpush1.msra.mxu0 0.0
        %4873 = vmatprep.subr.mxu0 0.0
        %4874 = vmatpush1.msra.mxu0 0.0
        %4875 = vmatprep.subr.mxu0 0.0
        %4876 = vmatpush1.msra.mxu0 0.0
        %4877 = vmatprep.subr.mxu0 0.0
        %4878 = vmatpush1.msra.mxu0 0.0
        %4879 = vmatprep.subr.mxu0 0.0
        %4880 = vmatpush1.msra.mxu0 0.0
        %4881 = vmatprep.subr.mxu0 0.0
        %4882 = vmatpush1.msra.mxu0 0.0
        %4883 = vmatprep.subr.mxu0 0.0
        %4884 = vmatpush1.msra.mxu0 0.0
        %4885 = vmatprep.subr.mxu0 0.0
        %4886 = vmatpush1.msra.mxu0 0.0
        %4887 = vmatprep.subr.mxu0 0.0
        %4888 = vmatpush1.msra.mxu0 0.0
        %4889 = vmatprep.subr.mxu0 0.0
        %4890 = vmatpush1.msra.mxu0 0.0
        %4891 = vmatprep.subr.mxu0 0.0
        %4892 = vmatpush1.msra.mxu0 0.0
        %4893 = vmatprep.subr.mxu0 0.0
        %4894 = vmatpush1.msra.mxu0 0.0
        %4895 = vmatprep.subr.mxu0 0.0
        %4896 = vmatpush1.msra.mxu0 0.0
        %4897 = vmatprep.subr.mxu0 0.0
        %4898 = vmatpush1.msra.mxu0 0.0
        %4899 = vmatprep.subr.mxu0 0.0
        %4900 = vmatpush1.msra.mxu0 0.0
        %4901 = vmatprep.subr.mxu0 0.0
        %4902 = vmatpush1.msra.mxu0 0.0
        %4903 = vmatprep.subr.mxu0 0.0
        %4904 = vmatpush1.msra.mxu0 0.0
        %4905 = vmatprep.mubr.f32.mxu0 0.0
        %4906 = vmatmul.mubr.f32.gmra.mrb[0].mxu0 %v4839
        %v4907 = vpop.f32.mrb[0].mxu0
        %v4908 = vadd.f32 0.0, %v4907
        %v4909 = vpop.f32.mrb[0].mxu0
        %4910 = vdwg.mxu0
        %v4912 = vsel %vm1514, %v4908, 0
        %4914 = vmatprep.subr.mxu0 0.0
        %4915 = vmatpush1.msra.mxu0 %v4567
        %4916 = vmatprep.subr.mxu0 0.0
        %4917 = vmatpush1.msra.mxu0 0.0
        %4918 = vmatprep.subr.mxu0 0.0
        %4919 = vmatpush1.msra.mxu0 0.0
        %4920 = vmatprep.subr.mxu0 0.0
        %4921 = vmatpush1.msra.mxu0 0.0
        %4922 = vmatprep.subr.mxu0 0.0
        %4923 = vmatpush1.msra.mxu0 0.0
        %4924 = vmatprep.subr.mxu0 0.0
        %4925 = vmatpush1.msra.mxu0 0.0
        %4926 = vmatprep.subr.mxu0 0.0
        %4927 = vmatpush1.msra.mxu0 0.0
        %4928 = vmatprep.subr.mxu0 0.0
        %4929 = vmatpush1.msra.mxu0 0.0
        %4930 = vmatprep.subr.mxu0 0.0
        %4931 = vmatpush1.msra.mxu0 0.0
        %4932 = vmatprep.subr.mxu0 0.0
        %4933 = vmatpush1.msra.mxu0 0.0
        %4934 = vmatprep.subr.mxu0 0.0
        %4935 = vmatpush1.msra.mxu0 0.0
        %4936 = vmatprep.subr.mxu0 0.0
        %4937 = vmatpush1.msra.mxu0 0.0
        %4938 = vmatprep.subr.mxu0 0.0
        %4939 = vmatpush1.msra.mxu0 0.0
        %4940 = vmatprep.subr.mxu0 0.0
        %4941 = vmatpush1.msra.mxu0 0.0
        %4942 = vmatprep.subr.mxu0 0.0
        %4943 = vmatpush1.msra.mxu0 0.0
        %4944 = vmatprep.subr.mxu0 0.0
        %4945 = vmatpush1.msra.mxu0 0.0
        %4946 = vmatprep.subr.mxu0 0.0
        %4947 = vmatpush1.msra.mxu0 0.0
        %4948 = vmatprep.subr.mxu0 0.0
        %4949 = vmatpush1.msra.mxu0 0.0
        %4950 = vmatprep.subr.mxu0 0.0
        %4951 = vmatpush1.msra.mxu0 0.0
        %4952 = vmatprep.subr.mxu0 0.0
        %4953 = vmatpush1.msra.mxu0 0.0
        %4954 = vmatprep.subr.mxu0 0.0
        %4955 = vmatpush1.msra.mxu0 0.0
        %4956 = vmatprep.subr.mxu0 0.0
        %4957 = vmatpush1.msra.mxu0 0.0
        %4958 = vmatprep.subr.mxu0 0.0
        %4959 = vmatpush1.msra.mxu0 0.0
        %4960 = vmatprep.subr.mxu0 0.0
        %4961 = vmatpush1.msra.mxu0 0.0
        %4962 = vmatprep.subr.mxu0 0.0
        %4963 = vmatpush1.msra.mxu0 0.0
        %4964 = vmatprep.subr.mxu0 0.0
        %4965 = vmatpush1.msra.mxu0 0.0
        %4966 = vmatprep.subr.mxu0 0.0
        %4967 = vmatpush1.msra.mxu0 0.0
        %4968 = vmatprep.subr.mxu0 0.0
        %4969 = vmatpush1.msra.mxu0 0.0
        %4970 = vmatprep.subr.mxu0 0.0
        %4971 = vmatpush1.msra.mxu0 0.0
        %4972 = vmatprep.subr.mxu0 0.0
        %4973 = vmatpush1.msra.mxu0 0.0
        %4974 = vmatprep.subr.mxu0 0.0
        %4975 = vmatpush1.msra.mxu0 0.0
        %4976 = vmatprep.subr.mxu0 0.0
        %4977 = vmatpush1.msra.mxu0 0.0
        %4978 = vmatprep.mubr.f32.mxu0 0.0
        %4979 = vmatmul.mubr.f32.gmra.mrb[0].mxu0 %v4912
        %v4980 = vpop.f32.mrb[0].mxu0
        %v4981 = vadd.f32 0.0, %v4980
        %v4982 = vpop.f32.mrb[0].mxu0
        %4983 = vdwg.mxu0
        %v4985 = vsel %vm1514, %v4732, 0
        %4987 = vmatprep.subr.mxu0 0.0
        %4988 = vmatpush1.msra.mxu0 %v4566
        %4989 = vmatprep.subr.mxu0 0.0
        %4990 = vmatpush1.msra.mxu0 0.0
        %4991 = vmatprep.subr.mxu0 0.0
        %4992 = vmatpush1.msra.mxu0 0.0
        %4993 = vmatprep.subr.mxu0 0.0
        %4994 = vmatpush1.msra.mxu0 0.0
        %4995 = vmatprep.subr.mxu0 0.0
        %4996 = vmatpush1.msra.mxu0 0.0
        %4997 = vmatprep.subr.mxu0 0.0
        %4998 = vmatpush1.msra.mxu0 0.0
        %4999 = vmatprep.subr.mxu0 0.0
        %5000 = vmatpush1.msra.mxu0 0.0
        %5001 = vmatprep.subr.mxu0 0.0
        %5002 = vmatpush1.msra.mxu0 0.0
        %5003 = vmatprep.subr.mxu0 0.0
        %5004 = vmatpush1.msra.mxu0 0.0
        %5005 = vmatprep.subr.mxu0 0.0
        %5006 = vmatpush1.msra.mxu0 0.0
        %5007 = vmatprep.subr.mxu0 0.0
        %5008 = vmatpush1.msra.mxu0 0.0
        %5009 = vmatprep.subr.mxu0 0.0
        %5010 = vmatpush1.msra.mxu0 0.0
        %5011 = vmatprep.subr.mxu0 0.0
        %5012 = vmatpush1.msra.mxu0 0.0
        %5013 = vmatprep.subr.mxu0 0.0
        %5014 = vmatpush1.msra.mxu0 0.0
        %5015 = vmatprep.subr.mxu0 0.0
        %5016 = vmatpush1.msra.mxu0 0.0
        %5017 = vmatprep.subr.mxu0 0.0
        %5018 = vmatpush1.msra.mxu0 0.0
        %5019 = vmatprep.subr.mxu0 0.0
        %5020 = vmatpush1.msra.mxu0 0.0
        %5021 = vmatprep.subr.mxu0 0.0
        %5022 = vmatpush1.msra.mxu0 0.0
        %5023 = vmatprep.subr.mxu0 0.0
        %5024 = vmatpush1.msra.mxu0 0.0
        %5025 = vmatprep.subr.mxu0 0.0
        %5026 = vmatpush1.msra.mxu0 0.0
        %5027 = vmatprep.subr.mxu0 0.0
        %5028 = vmatpush1.msra.mxu0 0.0
        %5029 = vmatprep.subr.mxu0 0.0
        %5030 = vmatpush1.msra.mxu0 0.0
        %5031 = vmatprep.subr.mxu0 0.0
        %5032 = vmatpush1.msra.mxu0 0.0
        %5033 = vmatprep.subr.mxu0 0.0
        %5034 = vmatpush1.msra.mxu0 0.0
        %5035 = vmatprep.subr.mxu0 0.0
        %5036 = vmatpush1.msra.mxu0 0.0
        %5037 = vmatprep.subr.mxu0 0.0
        %5038 = vmatpush1.msra.mxu0 0.0
        %5039 = vmatprep.subr.mxu0 0.0
        %5040 = vmatpush1.msra.mxu0 0.0
        %5041 = vmatprep.subr.mxu0 0.0
        %5042 = vmatpush1.msra.mxu0 0.0
        %5043 = vmatprep.subr.mxu0 0.0
        %5044 = vmatpush1.msra.mxu0 0.0
        %5045 = vmatprep.subr.mxu0 0.0
        %5046 = vmatpush1.msra.mxu0 0.0
        %5047 = vmatprep.subr.mxu0 0.0
        %5048 = vmatpush1.msra.mxu0 0.0
        %5049 = vmatprep.subr.mxu0 0.0
        %5050 = vmatpush1.msra.mxu0 0.0
        %5051 = vmatprep.mubr.f32.mxu0 0.0
        %5052 = vmatmul.mubr.f32.gmra.mrb[0].mxu0 %v4985
        %v5053 = vpop.f32.mrb[0].mxu0
        %v5054 = vadd.f32 %v4981, %v5053
        %v5055 = vpop.f32.mrb[0].mxu0
        %5056 = vdwg.mxu0
        %5057 = vrot.lane.b32.xlu0 %v4386, 112
        %v5058 = vpop.permute.xlu0 %5057
        %5059 = vrot.lane.b32.xlu0 %v4469, 112
        %v5060 = vpop.permute.xlu0 %5059
        %5061 = vrot.lane.b32.xlu0 %v4474, 112
        %v5062 = vpop.permute.xlu0 %5061
        %v5063 = vsel %vm1514, %v5058, 0
        %v5065 = vsel %vm1514, %v5060, 0
        %v5067 = vsel %vm1514, %v5062, 0
        %5069 = vmatprep.subr.mxu0 0.0
        %5070 = vmatpush1.xpose.msra.mxu0 %v5065
        %5071 = vmatprep.subr.mxu0 0.0
        %5072 = vmatpush1.xpose.msra.mxu0 %v5067
        %5073 = vmatprep.subr.mxu0 0.0
        %5074 = vmatpush1.xpose.msra.mxu0 0.0
        %5075 = vmatprep.subr.mxu0 0.0
        %5076 = vmatpush1.xpose.msra.mxu0 0.0
        %5077 = vmatprep.subr.mxu0 0.0
        %5078 = vmatpush1.xpose.msra.mxu0 0.0
        %5079 = vmatprep.subr.mxu0 0.0
        %5080 = vmatpush1.xpose.msra.mxu0 0.0
        %5081 = vmatprep.subr.mxu0 0.0
        %5082 = vmatpush1.xpose.msra.mxu0 0.0
        %5083 = vmatprep.subr.mxu0 0.0
        %5084 = vmatpush1.xpose.msra.mxu0 0.0
        %5085 = vmatprep.subr.mxu0 0.0
        %5086 = vmatpush1.xpose.msra.mxu0 0.0
        %5087 = vmatprep.subr.mxu0 0.0
        %5088 = vmatpush1.xpose.msra.mxu0 0.0
        %5089 = vmatprep.subr.mxu0 0.0
        %5090 = vmatpush1.xpose.msra.mxu0 0.0
        %5091 = vmatprep.subr.mxu0 0.0
        %5092 = vmatpush1.xpose.msra.mxu0 0.0
        %5093 = vmatprep.subr.mxu0 0.0
        %5094 = vmatpush1.xpose.msra.mxu0 0.0
        %5095 = vmatprep.subr.mxu0 0.0
        %5096 = vmatpush1.xpose.msra.mxu0 0.0
        %5097 = vmatprep.subr.mxu0 0.0
        %5098 = vmatpush1.xpose.msra.mxu0 0.0
        %5099 = vmatprep.subr.mxu0 0.0
        %5100 = vmatpush1.xpose.msra.mxu0 0.0
        %5101 = vmatprep.subr.mxu0 0.0
        %5102 = vmatpush1.xpose.msra.mxu0 0.0
        %5103 = vmatprep.subr.mxu0 0.0
        %5104 = vmatpush1.xpose.msra.mxu0 0.0
        %5105 = vmatprep.subr.mxu0 0.0
        %5106 = vmatpush1.xpose.msra.mxu0 0.0
        %5107 = vmatprep.subr.mxu0 0.0
        %5108 = vmatpush1.xpose.msra.mxu0 0.0
        %5109 = vmatprep.subr.mxu0 0.0
        %5110 = vmatpush1.xpose.msra.mxu0 0.0
        %5111 = vmatprep.subr.mxu0 0.0
        %5112 = vmatpush1.xpose.msra.mxu0 0.0
        %5113 = vmatprep.subr.mxu0 0.0
        %5114 = vmatpush1.xpose.msra.mxu0 0.0
        %5115 = vmatprep.subr.mxu0 0.0
        %5116 = vmatpush1.xpose.msra.mxu0 0.0
        %5117 = vmatprep.subr.mxu0 0.0
        %5118 = vmatpush1.xpose.msra.mxu0 0.0
        %5119 = vmatprep.subr.mxu0 0.0
        %5120 = vmatpush1.xpose.msra.mxu0 0.0
        %5121 = vmatprep.subr.mxu0 0.0
        %5122 = vmatpush1.xpose.msra.mxu0 0.0
        %5123 = vmatprep.subr.mxu0 0.0
        %5124 = vmatpush1.xpose.msra.mxu0 0.0
        %5125 = vmatprep.subr.mxu0 0.0
        %5126 = vmatpush1.xpose.msra.mxu0 0.0
        %5127 = vmatprep.subr.mxu0 0.0
        %5128 = vmatpush1.xpose.msra.mxu0 0.0
        %5129 = vmatprep.subr.mxu0 0.0
        %5130 = vmatpush1.xpose.msra.mxu0 0.0
        %5131 = vmatprep.subr.mxu0 0.0
        %5132 = vmatpush1.xpose.msra.mxu0 0.0
        %5133 = vmatprep.mubr.f32.mxu0 0.0
        %5134 = vmatmul.mubr.f32.gmra.mrb[0].mxu0 %v5063
        %v5135 = vpop.f32.mrb[0].mxu0
        %v5136 = vadd.f32 0.0, %v5135
        %v5137 = vpop.f32.mrb[0].mxu0
        %5138 = vdwg.mxu0
        %v5139 = vmul.f32 %v5136, 0.35355338
        %v5140 = vsel %vm1601, %v5139, -1e+30
        %v5141 = vsel %vm991, %v5140, -inf
        %5142 = vmax.xlane.f32.xlu0 %v5141
        %v5143 = vpop.xlane.xlu0 %5142
        %v5144 = vsub.f32 %v5140, %v5143
        %v5145 = vmul.f32 %v5144, 1.442695
        %v5146 = vpow.pop %v5145
        %v5147 = vsel %vm991, %v5146, 0.0
        %5148 = vadd.xlane.f32.xlu0 %v5147
        %v5149 = vpop.xlane.xlu0 %5148
        %v5150 = vrcp.pop %v5149
        %v5151 = vmul.f32 %v5146, %v5150
        %5152 = vrot.lane.b32.xlu0 %v4557, 112
        %v5153 = vpop.permute.xlu0 %5152
        %5154 = vrot.lane.b32.xlu0 %v4562, 112
        %v5155 = vpop.permute.xlu0 %5154
        %v5159 = vsel %vm991, %v5151, 0
        %5161 = vmatprep.subr.mxu0 0.0
        %5162 = vmatpush1.msra.mxu0 %v5153
        %5163 = vmatprep.subr.mxu0 0.0
        %5164 = vmatpush1.msra.mxu0 %v5155
        %5165 = vmatprep.subr.mxu0 0.0
        %5166 = vmatpush1.msra.mxu0 0.0
        %5167 = vmatprep.subr.mxu0 0.0
        %5168 = vmatpush1.msra.mxu0 0.0
        %5169 = vmatprep.subr.mxu0 0.0
        %5170 = vmatpush1.msra.mxu0 0.0
        %5171 = vmatprep.subr.mxu0 0.0
        %5172 = vmatpush1.msra.mxu0 0.0
        %5173 = vmatprep.subr.mxu0 0.0
        %5174 = vmatpush1.msra.mxu0 0.0
        %5175 = vmatprep.subr.mxu0 0.0
        %5176 = vmatpush1.msra.mxu0 0.0
        %5177 = vmatprep.subr.mxu0 0.0
        %5178 = vmatpush1.msra.mxu0 0.0
        %5179 = vmatprep.subr.mxu0 0.0
        %5180 = vmatpush1.msra.mxu0 0.0
        %5181 = vmatprep.subr.mxu0 0.0
        %5182 = vmatpush1.msra.mxu0 0.0
        %5183 = vmatprep.subr.mxu0 0.0
        %5184 = vmatpush1.msra.mxu0 0.0
        %5185 = vmatprep.subr.mxu0 0.0
        %5186 = vmatpush1.msra.mxu0 0.0
        %5187 = vmatprep.subr.mxu0 0.0
        %5188 = vmatpush1.msra.mxu0 0.0
        %5189 = vmatprep.subr.mxu0 0.0
        %5190 = vmatpush1.msra.mxu0 0.0
        %5191 = vmatprep.subr.mxu0 0.0
        %5192 = vmatpush1.msra.mxu0 0.0
        %5193 = vmatprep.subr.mxu0 0.0
        %5194 = vmatpush1.msra.mxu0 0.0
        %5195 = vmatprep.subr.mxu0 0.0
        %5196 = vmatpush1.msra.mxu0 0.0
        %5197 = vmatprep.subr.mxu0 0.0
        %5198 = vmatpush1.msra.mxu0 0.0
        %5199 = vmatprep.subr.mxu0 0.0
        %5200 = vmatpush1.msra.mxu0 0.0
        %5201 = vmatprep.subr.mxu0 0.0
        %5202 = vmatpush1.msra.mxu0 0.0
        %5203 = vmatprep.subr.mxu0 0.0
        %5204 = vmatpush1.msra.mxu0 0.0
        %5205 = vmatprep.subr.mxu0 0.0
        %5206 = vmatpush1.msra.mxu0 0.0
        %5207 = vmatprep.subr.mxu0 0.0
        %5208 = vmatpush1.msra.mxu0 0.0
        %5209 = vmatprep.subr.mxu0 0.0
        %5210 = vmatpush1.msra.mxu0 0.0
        %5211 = vmatprep.subr.mxu0 0.0
        %5212 = vmatpush1.msra.mxu0 0.0
        %5213 = vmatprep.subr.mxu0 0.0
        %5214 = vmatpush1.msra.mxu0 0.0
        %5215 = vmatprep.subr.mxu0 0.0
        %5216 = vmatpush1.msra.mxu0 0.0
        %5217 = vmatprep.subr.mxu0 0.0
        %5218 = vmatpush1.msra.mxu0 0.0
        %5219 = vmatprep.subr.mxu0 0.0
        %5220 = vmatpush1.msra.mxu0 0.0
        %5221 = vmatprep.subr.mxu0 0.0
        %5222 = vmatpush1.msra.mxu0 0.0
        %5223 = vmatprep.subr.mxu0 0.0
        %5224 = vmatpush1.msra.mxu0 0.0
        %5225 = vmatprep.mubr.f32.mxu0 0.0
        %5226 = vmatmul.mubr.f32.gmra.mrb[0].mxu0 %v5159
        %v5227 = vpop.f32.mrb[0].mxu0
        %v5228 = vadd.f32 0.0, %v5227
        %v5229 = vpop.f32.mrb[0].mxu0
        %5230 = vdwg.mxu0
        %v5232 = vsel %vm1514, %v5228, 0
        %5234 = vmatprep.subr.mxu0 0.0
        %5235 = vmatpush1.msra.mxu0 %v4568
        %5236 = vmatprep.subr.mxu0 0.0
        %5237 = vmatpush1.msra.mxu0 0.0
        %5238 = vmatprep.subr.mxu0 0.0
        %5239 = vmatpush1.msra.mxu0 0.0
        %5240 = vmatprep.subr.mxu0 0.0
        %5241 = vmatpush1.msra.mxu0 0.0
        %5242 = vmatprep.subr.mxu0 0.0
        %5243 = vmatpush1.msra.mxu0 0.0
        %5244 = vmatprep.subr.mxu0 0.0
        %5245 = vmatpush1.msra.mxu0 0.0
        %5246 = vmatprep.subr.mxu0 0.0
        %5247 = vmatpush1.msra.mxu0 0.0
        %5248 = vmatprep.subr.mxu0 0.0
        %5249 = vmatpush1.msra.mxu0 0.0
        %5250 = vmatprep.subr.mxu0 0.0
        %5251 = vmatpush1.msra.mxu0 0.0
        %5252 = vmatprep.subr.mxu0 0.0
        %5253 = vmatpush1.msra.mxu0 0.0
        %5254 = vmatprep.subr.mxu0 0.0
        %5255 = vmatpush1.msra.mxu0 0.0
        %5256 = vmatprep.subr.mxu0 0.0
        %5257 = vmatpush1.msra.mxu0 0.0
        %5258 = vmatprep.subr.mxu0 0.0
        %5259 = vmatpush1.msra.mxu0 0.0
        %5260 = vmatprep.subr.mxu0 0.0
        %5261 = vmatpush1.msra.mxu0 0.0
        %5262 = vmatprep.subr.mxu0 0.0
        %5263 = vmatpush1.msra.mxu0 0.0
        %5264 = vmatprep.subr.mxu0 0.0
        %5265 = vmatpush1.msra.mxu0 0.0
        %5266 = vmatprep.subr.mxu0 0.0
        %5267 = vmatpush1.msra.mxu0 0.0
        %5268 = vmatprep.subr.mxu0 0.0
        %5269 = vmatpush1.msra.mxu0 0.0
        %5270 = vmatprep.subr.mxu0 0.0
        %5271 = vmatpush1.msra.mxu0 0.0
        %5272 = vmatprep.subr.mxu0 0.0
        %5273 = vmatpush1.msra.mxu0 0.0
        %5274 = vmatprep.subr.mxu0 0.0
        %5275 = vmatpush1.msra.mxu0 0.0
        %5276 = vmatprep.subr.mxu0 0.0
        %5277 = vmatpush1.msra.mxu0 0.0
        %5278 = vmatprep.subr.mxu0 0.0
        %5279 = vmatpush1.msra.mxu0 0.0
        %5280 = vmatprep.subr.mxu0 0.0
        %5281 = vmatpush1.msra.mxu0 0.0
        %5282 = vmatprep.subr.mxu0 0.0
        %5283 = vmatpush1.msra.mxu0 0.0
        %5284 = vmatprep.subr.mxu0 0.0
        %5285 = vmatpush1.msra.mxu0 0.0
        %5286 = vmatprep.subr.mxu0 0.0
        %5287 = vmatpush1.msra.mxu0 0.0
        %5288 = vmatprep.subr.mxu0 0.0
        %5289 = vmatpush1.msra.mxu0 0.0
        %5290 = vmatprep.subr.mxu0 0.0
        %5291 = vmatpush1.msra.mxu0 0.0
        %5292 = vmatprep.subr.mxu0 0.0
        %5293 = vmatpush1.msra.mxu0 0.0
        %5294 = vmatprep.subr.mxu0 0.0
        %5295 = vmatpush1.msra.mxu0 0.0
        %5296 = vmatprep.subr.mxu0 0.0
        %5297 = vmatpush1.msra.mxu0 0.0
        %5298 = vmatprep.mubr.f32.mxu0 0.0
        %5299 = vmatmul.mubr.f32.gmra.mrb[0].mxu0 %v5232
        %v5300 = vpop.f32.mrb[0].mxu0
        %v5301 = vadd.f32 0.0, %v5300
        %v5302 = vpop.f32.mrb[0].mxu0
        %5303 = vdwg.mxu0
        %v5304 = vadd.f32 %v5054, %v5301
        %5305 = vrot.lane.b32.xlu0 %v4386, 104
        %v5306 = vpop.permute.xlu0 %5305
        %5307 = vrot.lane.b32.xlu0 %v4469, 104
        %v5308 = vpop.permute.xlu0 %5307
        %5309 = vrot.lane.b32.xlu0 %v4474, 104
        %v5310 = vpop.permute.xlu0 %5309
        %v5311 = vsel %vm1514, %v5306, 0
        %v5313 = vsel %vm1514, %v5308, 0
        %v5315 = vsel %vm1514, %v5310, 0
        %5317 = vmatprep.subr.mxu0 0.0
        %5318 = vmatpush1.xpose.msra.mxu0 %v5313
        %5319 = vmatprep.subr.mxu0 0.0
        %5320 = vmatpush1.xpose.msra.mxu0 %v5315
        %5321 = vmatprep.subr.mxu0 0.0
        %5322 = vmatpush1.xpose.msra.mxu0 0.0
        %5323 = vmatprep.subr.mxu0 0.0
        %5324 = vmatpush1.xpose.msra.mxu0 0.0
        %5325 = vmatprep.subr.mxu0 0.0
        %5326 = vmatpush1.xpose.msra.mxu0 0.0
        %5327 = vmatprep.subr.mxu0 0.0
        %5328 = vmatpush1.xpose.msra.mxu0 0.0
        %5329 = vmatprep.subr.mxu0 0.0
        %5330 = vmatpush1.xpose.msra.mxu0 0.0
        %5331 = vmatprep.subr.mxu0 0.0
        %5332 = vmatpush1.xpose.msra.mxu0 0.0
        %5333 = vmatprep.subr.mxu0 0.0
        %5334 = vmatpush1.xpose.msra.mxu0 0.0
        %5335 = vmatprep.subr.mxu0 0.0
        %5336 = vmatpush1.xpose.msra.mxu0 0.0
        %5337 = vmatprep.subr.mxu0 0.0
        %5338 = vmatpush1.xpose.msra.mxu0 0.0
        %5339 = vmatprep.subr.mxu0 0.0
        %5340 = vmatpush1.xpose.msra.mxu0 0.0
        %5341 = vmatprep.subr.mxu0 0.0
        %5342 = vmatpush1.xpose.msra.mxu0 0.0
        %5343 = vmatprep.subr.mxu0 0.0
        %5344 = vmatpush1.xpose.msra.mxu0 0.0
        %5345 = vmatprep.subr.mxu0 0.0
        %5346 = vmatpush1.xpose.msra.mxu0 0.0
        %5347 = vmatprep.subr.mxu0 0.0
        %5348 = vmatpush1.xpose.msra.mxu0 0.0
        %5349 = vmatprep.subr.mxu0 0.0
        %5350 = vmatpush1.xpose.msra.mxu0 0.0
        %5351 = vmatprep.subr.mxu0 0.0
        %5352 = vmatpush1.xpose.msra.mxu0 0.0
        %5353 = vmatprep.subr.mxu0 0.0
        %5354 = vmatpush1.xpose.msra.mxu0 0.0
        %5355 = vmatprep.subr.mxu0 0.0
        %5356 = vmatpush1.xpose.msra.mxu0 0.0
        %5357 = vmatprep.subr.mxu0 0.0
        %5358 = vmatpush1.xpose.msra.mxu0 0.0
        %5359 = vmatprep.subr.mxu0 0.0
        %5360 = vmatpush1.xpose.msra.mxu0 0.0
        %5361 = vmatprep.subr.mxu0 0.0
        %5362 = vmatpush1.xpose.msra.mxu0 0.0
        %5363 = vmatprep.subr.mxu0 0.0
        %5364 = vmatpush1.xpose.msra.mxu0 0.0
        %5365 = vmatprep.subr.mxu0 0.0
        %5366 = vmatpush1.xpose.msra.mxu0 0.0
        %5367 = vmatprep.subr.mxu0 0.0
        %5368 = vmatpush1.xpose.msra.mxu0 0.0
        %5369 = vmatprep.subr.mxu0 0.0
        %5370 = vmatpush1.xpose.msra.mxu0 0.0
        %5371 = vmatprep.subr.mxu0 0.0
        %5372 = vmatpush1.xpose.msra.mxu0 0.0
        %5373 = vmatprep.subr.mxu0 0.0
        %5374 = vmatpush1.xpose.msra.mxu0 0.0
        %5375 = vmatprep.subr.mxu0 0.0
        %5376 = vmatpush1.xpose.msra.mxu0 0.0
        %5377 = vmatprep.subr.mxu0 0.0
        %5378 = vmatpush1.xpose.msra.mxu0 0.0
        %5379 = vmatprep.subr.mxu0 0.0
        %5380 = vmatpush1.xpose.msra.mxu0 0.0
        %5381 = vmatprep.mubr.f32.mxu0 0.0
        %5382 = vmatmul.mubr.f32.gmra.mrb[0].mxu0 %v5311
        %v5383 = vpop.f32.mrb[0].mxu0
        %v5384 = vadd.f32 0.0, %v5383
        %v5385 = vpop.f32.mrb[0].mxu0
        %5386 = vdwg.mxu0
        %v5387 = vmul.f32 %v5384, 0.35355338
        %v5388 = vsel %vm1601, %v5387, -1e+30
        %v5389 = vsel %vm991, %v5388, -inf
        %5390 = vmax.xlane.f32.xlu0 %v5389
        %v5391 = vpop.xlane.xlu0 %5390
        %v5392 = vsub.f32 %v5388, %v5391
        %v5393 = vmul.f32 %v5392, 1.442695
        %v5394 = vpow.pop %v5393
        %v5395 = vsel %vm991, %v5394, 0.0
        %5396 = vadd.xlane.f32.xlu0 %v5395
        %v5397 = vpop.xlane.xlu0 %5396
        %v5398 = vrcp.pop %v5397
        %v5399 = vmul.f32 %v5394, %v5398
        %5400 = vrot.lane.b32.xlu0 %v4557, 104
        %v5401 = vpop.permute.xlu0 %5400
        %5402 = vrot.lane.b32.xlu0 %v4562, 104
        %v5403 = vpop.permute.xlu0 %5402
        %v5407 = vsel %vm991, %v5399, 0
        %5409 = vmatprep.subr.mxu0 0.0
        %5410 = vmatpush1.msra.mxu0 %v5401
        %5411 = vmatprep.subr.mxu0 0.0
        %5412 = vmatpush1.msra.mxu0 %v5403
        %5413 = vmatprep.subr.mxu0 0.0
        %5414 = vmatpush1.msra.mxu0 0.0
        %5415 = vmatprep.subr.mxu0 0.0
        %5416 = vmatpush1.msra.mxu0 0.0
        %5417 = vmatprep.subr.mxu0 0.0
        %5418 = vmatpush1.msra.mxu0 0.0
        %5419 = vmatprep.subr.mxu0 0.0
        %5420 = vmatpush1.msra.mxu0 0.0
        %5421 = vmatprep.subr.mxu0 0.0
        %5422 = vmatpush1.msra.mxu0 0.0
        %5423 = vmatprep.subr.mxu0 0.0
        %5424 = vmatpush1.msra.mxu0 0.0
        %5425 = vmatprep.subr.mxu0 0.0
        %5426 = vmatpush1.msra.mxu0 0.0
        %5427 = vmatprep.subr.mxu0 0.0
        %5428 = vmatpush1.msra.mxu0 0.0
        %5429 = vmatprep.subr.mxu0 0.0
        %5430 = vmatpush1.msra.mxu0 0.0
        %5431 = vmatprep.subr.mxu0 0.0
        %5432 = vmatpush1.msra.mxu0 0.0
        %5433 = vmatprep.subr.mxu0 0.0
        %5434 = vmatpush1.msra.mxu0 0.0
        %5435 = vmatprep.subr.mxu0 0.0
        %5436 = vmatpush1.msra.mxu0 0.0
        %5437 = vmatprep.subr.mxu0 0.0
        %5438 = vmatpush1.msra.mxu0 0.0
        %5439 = vmatprep.subr.mxu0 0.0
        %5440 = vmatpush1.msra.mxu0 0.0
        %5441 = vmatprep.subr.mxu0 0.0
        %5442 = vmatpush1.msra.mxu0 0.0
        %5443 = vmatprep.subr.mxu0 0.0
        %5444 = vmatpush1.msra.mxu0 0.0
        %5445 = vmatprep.subr.mxu0 0.0
        %5446 = vmatpush1.msra.mxu0 0.0
        %5447 = vmatprep.subr.mxu0 0.0
        %5448 = vmatpush1.msra.mxu0 0.0
        %5449 = vmatprep.subr.mxu0 0.0
        %5450 = vmatpush1.msra.mxu0 0.0
        %5451 = vmatprep.subr.mxu0 0.0
        %5452 = vmatpush1.msra.mxu0 0.0
        %5453 = vmatprep.subr.mxu0 0.0
        %5454 = vmatpush1.msra.mxu0 0.0
        %5455 = vmatprep.subr.mxu0 0.0
        %5456 = vmatpush1.msra.mxu0 0.0
        %5457 = vmatprep.subr.mxu0 0.0
        %5458 = vmatpush1.msra.mxu0 0.0
        %5459 = vmatprep.subr.mxu0 0.0
        %5460 = vmatpush1.msra.mxu0 0.0
        %5461 = vmatprep.subr.mxu0 0.0
        %5462 = vmatpush1.msra.mxu0 0.0
        %5463 = vmatprep.subr.mxu0 0.0
        %5464 = vmatpush1.msra.mxu0 0.0
        %5465 = vmatprep.subr.mxu0 0.0
        %5466 = vmatpush1.msra.mxu0 0.0
        %5467 = vmatprep.subr.mxu0 0.0
        %5468 = vmatpush1.msra.mxu0 0.0
        %5469 = vmatprep.subr.mxu0 0.0
        %5470 = vmatpush1.msra.mxu0 0.0
        %5471 = vmatprep.subr.mxu0 0.0
        %5472 = vmatpush1.msra.mxu0 0.0
        %5473 = vmatprep.mubr.f32.mxu0 0.0
        %5474 = vmatmul.mubr.f32.gmra.mrb[0].mxu0 %v5407
        %v5475 = vpop.f32.mrb[0].mxu0
        %v5476 = vadd.f32 0.0, %v5475
        %v5477 = vpop.f32.mrb[0].mxu0
        %5478 = vdwg.mxu0
        %v5480 = vsel %vm1514, %v5476, 0
        %5482 = vmatprep.subr.mxu0 0.0
        %5483 = vmatpush1.msra.mxu0 %v4569
        %5484 = vmatprep.subr.mxu0 0.0
        %5485 = vmatpush1.msra.mxu0 0.0
        %5486 = vmatprep.subr.mxu0 0.0
        %5487 = vmatpush1.msra.mxu0 0.0
        %5488 = vmatprep.subr.mxu0 0.0
        %5489 = vmatpush1.msra.mxu0 0.0
        %5490 = vmatprep.subr.mxu0 0.0
        %5491 = vmatpush1.msra.mxu0 0.0
        %5492 = vmatprep.subr.mxu0 0.0
        %5493 = vmatpush1.msra.mxu0 0.0
        %5494 = vmatprep.subr.mxu0 0.0
        %5495 = vmatpush1.msra.mxu0 0.0
        %5496 = vmatprep.subr.mxu0 0.0
        %5497 = vmatpush1.msra.mxu0 0.0
        %5498 = vmatprep.subr.mxu0 0.0
        %5499 = vmatpush1.msra.mxu0 0.0
        %5500 = vmatprep.subr.mxu0 0.0
        %5501 = vmatpush1.msra.mxu0 0.0
        %5502 = vmatprep.subr.mxu0 0.0
        %5503 = vmatpush1.msra.mxu0 0.0
        %5504 = vmatprep.subr.mxu0 0.0
        %5505 = vmatpush1.msra.mxu0 0.0
        %5506 = vmatprep.subr.mxu0 0.0
        %5507 = vmatpush1.msra.mxu0 0.0
        %5508 = vmatprep.subr.mxu0 0.0
        %5509 = vmatpush1.msra.mxu0 0.0
        %5510 = vmatprep.subr.mxu0 0.0
        %5511 = vmatpush1.msra.mxu0 0.0
        %5512 = vmatprep.subr.mxu0 0.0
        %5513 = vmatpush1.msra.mxu0 0.0
        %5514 = vmatprep.subr.mxu0 0.0
        %5515 = vmatpush1.msra.mxu0 0.0
        %5516 = vmatprep.subr.mxu0 0.0
        %5517 = vmatpush1.msra.mxu0 0.0
        %5518 = vmatprep.subr.mxu0 0.0
        %5519 = vmatpush1.msra.mxu0 0.0
        %5520 = vmatprep.subr.mxu0 0.0
        %5521 = vmatpush1.msra.mxu0 0.0
        %5522 = vmatprep.subr.mxu0 0.0
        %5523 = vmatpush1.msra.mxu0 0.0
        %5524 = vmatprep.subr.mxu0 0.0
        %5525 = vmatpush1.msra.mxu0 0.0
        %5526 = vmatprep.subr.mxu0 0.0
        %5527 = vmatpush1.msra.mxu0 0.0
        %5528 = vmatprep.subr.mxu0 0.0
        %5529 = vmatpush1.msra.mxu0 0.0
        %5530 = vmatprep.subr.mxu0 0.0
        %5531 = vmatpush1.msra.mxu0 0.0
        %5532 = vmatprep.subr.mxu0 0.0
        %5533 = vmatpush1.msra.mxu0 0.0
        %5534 = vmatprep.subr.mxu0 0.0
        %5535 = vmatpush1.msra.mxu0 0.0
        %5536 = vmatprep.subr.mxu0 0.0
        %5537 = vmatpush1.msra.mxu0 0.0
        %5538 = vmatprep.subr.mxu0 0.0
        %5539 = vmatpush1.msra.mxu0 0.0
        %5540 = vmatprep.subr.mxu0 0.0
        %5541 = vmatpush1.msra.mxu0 0.0
        %5542 = vmatprep.subr.mxu0 0.0
        %5543 = vmatpush1.msra.mxu0 0.0
        %5544 = vmatprep.subr.mxu0 0.0
        %5545 = vmatpush1.msra.mxu0 0.0
        %5546 = vmatprep.mubr.f32.mxu0 0.0
        %5547 = vmatmul.mubr.f32.gmra.mrb[0].mxu0 %v5480
        %v5548 = vpop.f32.mrb[0].mxu0
        %v5549 = vadd.f32 0.0, %v5548
        %v5550 = vpop.f32.mrb[0].mxu0
        %5551 = vdwg.mxu0
        %v5552 = vadd.f32 %v5304, %v5549
        %v5553 = vadd.f32 %v4271, %v5552
        %s5554 = scalar_lea.vmem %s37, 2
        %v5555 = vld [vmem:[%s5554] sm:$0x1]
        %v5557 = vlaneseq
        %v5558 = vshrl.u32 %v5557, 7
        %v5559 = vsub.s32 0, %v5558
        %v5560 = vrot.slane %v5555, %v5559
        %v5562 = vadd.f32 %v5553, %v5560
        %s5563 = scalar_lea.vmem %s39, 2
        %v5564 = vld [vmem:[%s5563] sm:$0x1]
        %s5565 = scalar_lea.vmem %s41, 2
        %v5566 = vld [vmem:[%s5565] sm:$0x1]
        %v5567 = vsel %vm1219, %v5562, 0.0
        %5568 = vadd.xlane.f32.xlu0 %v5567
        %v5569 = vpop.xlane.xlu0 %5568
        %v5570 = vmul.f32 %v5569, %v1223
        %v5571 = vsub.f32 %v5562, %v5570
        %v5572 = vmul.f32 %v5571, %v5571
        %v5573 = vsel %vm1219, %v5572, 0.0
        %5574 = vadd.xlane.f32.xlu0 %v5573
        %v5575 = vpop.xlane.xlu0 %5574
        %v5576 = vmul.f32 %v5575, %v1223
        %v5577 = vadd.f32 %v5576, 1e-05
        %v5578 = vrsqrt.pop %v5577
        %v5579 = vmul.f32 %v5571, %v5578
        %v5581 = vlaneseq
        %v5582 = vshrl.u32 %v5581, 7
        %v5583 = vsub.s32 0, %v5582
        %v5584 = vrot.slane %v5564, %v5583
        %v5586 = vmul.f32 %v5579, %v5584
        %v5588 = vlaneseq
        %v5589 = vshrl.u32 %v5588, 7
        %v5590 = vsub.s32 0, %v5589
        %v5591 = vrot.slane %v5566, %v5590
        %v5593 = vadd.f32 %v5586, %v5591
        %s5594 = scalar_lea.vmem %s43, 64
        %v5595 = vld [vmem:[%s5594] sm:$0xff]
        %v5596 = vld [vmem:[%s5594 + $0x8] sm:$0xff]
        %v5597 = vld [vmem:[%s5594 + $0x10] sm:$0xff]
        %v5598 = vld [vmem:[%s5594 + $0x18] sm:$0xff]
        %s5599 = scalar_lea.vmem %s45, 2
        %v5600 = vld [vmem:[%s5599] sm:$0x1]
        %v5602 = vlaneseq
        %v5603 = vshrl.u32 %v5602, 7
        %v5604 = vsub.s32 0, %v5603
        %v5605 = vrot.slane %v5600, %v5604
        %v5608 = vsel %vm1219, %v5593, 0
        %5610 = vmatprep.subr.mxu0 0.0
        %5611 = vmatpush1.msra.mxu0 %v5595
        %5612 = vmatprep.subr.mxu0 0.0
        %5613 = vmatpush1.msra.mxu0 %v5596
        %5614 = vmatprep.subr.mxu0 0.0
        %5615 = vmatpush1.msra.mxu0 %v5597
        %5616 = vmatprep.subr.mxu0 0.0
        %5617 = vmatpush1.msra.mxu0 %v5598
        %5618 = vmatprep.subr.mxu0 0.0
        %5619 = vmatpush1.msra.mxu0 0.0
        %5620 = vmatprep.subr.mxu0 0.0
        %5621 = vmatpush1.msra.mxu0 0.0
        %5622 = vmatprep.subr.mxu0 0.0
        %5623 = vmatpush1.msra.mxu0 0.0
        %5624 = vmatprep.subr.mxu0 0.0
        %5625 = vmatpush1.msra.mxu0 0.0
        %5626 = vmatprep.subr.mxu0 0.0
        %5627 = vmatpush1.msra.mxu0 0.0
        %5628 = vmatprep.subr.mxu0 0.0
        %5629 = vmatpush1.msra.mxu0 0.0
        %5630 = vmatprep.subr.mxu0 0.0
        %5631 = vmatpush1.msra.mxu0 0.0
        %5632 = vmatprep.subr.mxu0 0.0
        %5633 = vmatpush1.msra.mxu0 0.0
        %5634 = vmatprep.subr.mxu0 0.0
        %5635 = vmatpush1.msra.mxu0 0.0
        %5636 = vmatprep.subr.mxu0 0.0
        %5637 = vmatpush1.msra.mxu0 0.0
        %5638 = vmatprep.subr.mxu0 0.0
        %5639 = vmatpush1.msra.mxu0 0.0
        %5640 = vmatprep.subr.mxu0 0.0
        %5641 = vmatpush1.msra.mxu0 0.0
        %5642 = vmatprep.subr.mxu0 0.0
        %5643 = vmatpush1.msra.mxu0 0.0
        %5644 = vmatprep.subr.mxu0 0.0
        %5645 = vmatpush1.msra.mxu0 0.0
        %5646 = vmatprep.subr.mxu0 0.0
        %5647 = vmatpush1.msra.mxu0 0.0
        %5648 = vmatprep.subr.mxu0 0.0
        %5649 = vmatpush1.msra.mxu0 0.0
        %5650 = vmatprep.subr.mxu0 0.0
        %5651 = vmatpush1.msra.mxu0 0.0
        %5652 = vmatprep.subr.mxu0 0.0
        %5653 = vmatpush1.msra.mxu0 0.0
        %5654 = vmatprep.subr.mxu0 0.0
        %5655 = vmatpush1.msra.mxu0 0.0
        %5656 = vmatprep.subr.mxu0 0.0
        %5657 = vmatpush1.msra.mxu0 0.0
        %5658 = vmatprep.subr.mxu0 0.0
        %5659 = vmatpush1.msra.mxu0 0.0
        %5660 = vmatprep.subr.mxu0 0.0
        %5661 = vmatpush1.msra.mxu0 0.0
        %5662 = vmatprep.subr.mxu0 0.0
        %5663 = vmatpush1.msra.mxu0 0.0
        %5664 = vmatprep.subr.mxu0 0.0
        %5665 = vmatpush1.msra.mxu0 0.0
        %5666 = vmatprep.subr.mxu0 0.0
        %5667 = vmatpush1.msra.mxu0 0.0
        %5668 = vmatprep.subr.mxu0 0.0
        %5669 = vmatpush1.msra.mxu0 0.0
        %5670 = vmatprep.subr.mxu0 0.0
        %5671 = vmatpush1.msra.mxu0 0.0
        %5672 = vmatprep.subr.mxu0 0.0
        %5673 = vmatpush1.msra.mxu0 0.0
        %5674 = vmatprep.mubr.f32.mxu0 0.0
        %5675 = vmatmul.mubr.f32.gmra.mrb[0].mxu0 %v5608
        %v5676 = vpop.f32.mrb[0].mxu0
        %v5677 = vadd.f32 %v5605, %v5676
        %v5678 = vpop.f32.mrb[0].mxu0
        %5679 = vdwg.mxu0
        %v5680 = vmul.f32 %v5677, 0.70710677
        %v5681 = vand.u32 2147483647, %v5680
        %v5682 = vmul.f32 %v5681, 0.3275911
        %v5683 = vadd.f32 %v5682, 1.0
        %v5684 = vrcp.pop %v5683
        %v5685 = vmul.f32 1.0, %v5684
        %v5686 = vmul.f32 %v5685, 1.0614054
        %v5687 = vadd.f32 %v5686, -1.4531521
        %v5688 = vmul.f32 %v5687, %v5685
        %v5689 = vadd.f32 %v5688, 1.4214138
        %v5690 = vmul.f32 %v5689, %v5685
        %v5691 = vadd.f32 %v5690, -0.28449672
        %v5692 = vmul.f32 %v5691, %v5685
        %v5693 = vadd.f32 %v5692, 0.2548296
        %v5694 = vmul.f32 %v5693, %v5685
        %v5695 = vsub.f32 0.0, %v5681
        %v5696 = vmul.f32 %v5695, %v5681
        %v5697 = vmul.f32 %v5696, 1.442695
        %v5698 = vpow.pop %v5697
        %v5699 = vmul.f32 %v5694, %v5698
        %v5700 = vsub.f32 1.0, %v5699
        %vm5701 = vcmp.ge.f32.partialorder %v5680, 0.0
        %v5702 = vsub.f32 0.0, %v5700
        %v5703 = vsel %vm5701, %v5700, %v5702
        %v5704 = vmul.f32 %v5677, 0.5
        %v5705 = vadd.f32 %v5703, 1.0
        %v5706 = vmul.f32 %v5704, %v5705
        %s5707 = scalar_lea.vmem %s47, 128
        %v5708 = vld [vmem:[%s5707] sm:$0xff]
        %v5709 = vld [vmem:[%s5707 + $0x8] sm:$0xff]
        %v5710 = vld [vmem:[%s5707 + $0x10] sm:$0xff]
        %v5711 = vld [vmem:[%s5707 + $0x18] sm:$0xff]
        %v5712 = vld [vmem:[%s5707 + $0x20] sm:$0xff]
        %v5713 = vld [vmem:[%s5707 + $0x28] sm:$0xff]
        %v5714 = vld [vmem:[%s5707 + $0x30] sm:$0xff]
        %v5715 = vld [vmem:[%s5707 + $0x38] sm:$0xff]
        %v5717 = vsel %vm2662, %v5706, 0
        %5719 = vmatprep.subr.mxu0 0.0
        %5720 = vmatpush1.msra.mxu0 %v5708
        %5721 = vmatprep.subr.mxu0 0.0
        %5722 = vmatpush1.msra.mxu0 %v5709
        %5723 = vmatprep.subr.mxu0 0.0
        %5724 = vmatpush1.msra.mxu0 %v5710
        %5725 = vmatprep.subr.mxu0 0.0
        %5726 = vmatpush1.msra.mxu0 %v5711
        %5727 = vmatprep.subr.mxu0 0.0
        %5728 = vmatpush1.msra.mxu0 %v5712
        %5729 = vmatprep.subr.mxu0 0.0
        %5730 = vmatpush1.msra.mxu0 %v5713
        %5731 = vmatprep.subr.mxu0 0.0
        %5732 = vmatpush1.msra.mxu0 %v5714
        %5733 = vmatprep.subr.mxu0 0.0
        %5734 = vmatpush1.msra.mxu0 %v5715
        %5735 = vmatprep.subr.mxu0 0.0
        %5736 = vmatpush1.msra.mxu0 0.0
        %5737 = vmatprep.subr.mxu0 0.0
        %5738 = vmatpush1.msra.mxu0 0.0
        %5739 = vmatprep.subr.mxu0 0.0
        %5740 = vmatpush1.msra.mxu0 0.0
        %5741 = vmatprep.subr.mxu0 0.0
        %5742 = vmatpush1.msra.mxu0 0.0
        %5743 = vmatprep.subr.mxu0 0.0
        %5744 = vmatpush1.msra.mxu0 0.0
        %5745 = vmatprep.subr.mxu0 0.0
        %5746 = vmatpush1.msra.mxu0 0.0
        %5747 = vmatprep.subr.mxu0 0.0
        %5748 = vmatpush1.msra.mxu0 0.0
        %5749 = vmatprep.subr.mxu0 0.0
        %5750 = vmatpush1.msra.mxu0 0.0
        %5751 = vmatprep.subr.mxu0 0.0
        %5752 = vmatpush1.msra.mxu0 0.0
        %5753 = vmatprep.subr.mxu0 0.0
        %5754 = vmatpush1.msra.mxu0 0.0
        %5755 = vmatprep.subr.mxu0 0.0
        %5756 = vmatpush1.msra.mxu0 0.0
        %5757 = vmatprep.subr.mxu0 0.0
        %5758 = vmatpush1.msra.mxu0 0.0
        %5759 = vmatprep.subr.mxu0 0.0
        %5760 = vmatpush1.msra.mxu0 0.0
        %5761 = vmatprep.subr.mxu0 0.0
        %5762 = vmatpush1.msra.mxu0 0.0
        %5763 = vmatprep.subr.mxu0 0.0
        %5764 = vmatpush1.msra.mxu0 0.0
        %5765 = vmatprep.subr.mxu0 0.0
        %5766 = vmatpush1.msra.mxu0 0.0
        %5767 = vmatprep.subr.mxu0 0.0
        %5768 = vmatpush1.msra.mxu0 0.0
        %5769 = vmatprep.subr.mxu0 0.0
        %5770 = vmatpush1.msra.mxu0 0.0
        %5771 = vmatprep.subr.mxu0 0.0
        %5772 = vmatpush1.msra.mxu0 0.0
        %5773 = vmatprep.subr.mxu0 0.0
        %5774 = vmatpush1.msra.mxu0 0.0
        %5775 = vmatprep.subr.mxu0 0.0
        %5776 = vmatpush1.msra.mxu0 0.0
        %5777 = vmatprep.subr.mxu0 0.0
        %5778 = vmatpush1.msra.mxu0 0.0
        %5779 = vmatprep.subr.mxu0 0.0
        %5780 = vmatpush1.msra.mxu0 0.0
        %5781 = vmatprep.subr.mxu0 0.0
        %5782 = vmatpush1.msra.mxu0 0.0
        %5783 = vmatprep.mubr.f32.mxu0 0.0
        %5784 = vmatmul.mubr.f32.gmra.mrb[0].mxu0 %v5717
        %v5785 = vpop.f32.mrb[0].mxu0
        %v5786 = vadd.f32 0.0, %v5785
        %v5787 = vpop.f32.mrb[0].mxu0
        %5788 = vdwg.mxu0
        %v5789 = vadd.f32 %v5562, %v5786
        %s5790 = scalar_lea.vmem %s49, 2
        %v5791 = vld [vmem:[%s5790] sm:$0x1]
        %v5793 = vlaneseq
        %v5794 = vshrl.u32 %v5793, 7
        %v5795 = vsub.s32 0, %v5794
        %v5796 = vrot.slane %v5791, %v5795
        %v5798 = vadd.f32 %v5789, %v5796
        %s5799 = scalar_lea.vmem %s19, 3
        %v5800 = vld [vmem:[%s5799] sm:$0x1]
        %s5801 = scalar_lea.vmem %s21, 3
        %v5802 = vld [vmem:[%s5801] sm:$0x1]
        %v5803 = vsel %vm1219, %v5798, 0.0
        %5804 = vadd.xlane.f32.xlu0 %v5803
        %v5805 = vpop.xlane.xlu0 %5804
        %v5806 = vmul.f32 %v5805, %v1223
        %v5807 = vsub.f32 %v5798, %v5806
        %v5808 = vmul.f32 %v5807, %v5807
        %v5809 = vsel %vm1219, %v5808, 0.0
        %5810 = vadd.xlane.f32.xlu0 %v5809
        %v5811 = vpop.xlane.xlu0 %5810
        %v5812 = vmul.f32 %v5811, %v1223
        %v5813 = vadd.f32 %v5812, 1e-05
        %v5814 = vrsqrt.pop %v5813
        %v5815 = vmul.f32 %v5807, %v5814
        %v5817 = vlaneseq
        %v5818 = vshrl.u32 %v5817, 7
        %v5819 = vsub.s32 0, %v5818
        %v5820 = vrot.slane %v5800, %v5819
        %v5822 = vmul.f32 %v5815, %v5820
        %v5824 = vlaneseq
        %v5825 = vshrl.u32 %v5824, 7
        %v5826 = vsub.s32 0, %v5825
        %v5827 = vrot.slane %v5802, %v5826
        %v5829 = vadd.f32 %v5822, %v5827
        %s5830 = scalar_lea.vmem %s23, 96
        %v5831 = vld [vmem:[%s5830] sm:$0xff]
        %v5832 = vld [vmem:[%s5830 + $0x8] sm:$0xff]
        %v5833 = vld [vmem:[%s5830 + $0x10] sm:$0xff]
        %v5834 = vld [vmem:[%s5830 + $0x18] sm:$0xff]
        %s5835 = scalar_lea.vmem %s25, 3
        %v5836 = vld [vmem:[%s5835] sm:$0x1]
        %v5838 = vlaneseq
        %v5839 = vshrl.u32 %v5838, 7
        %v5840 = vsub.s32 0, %v5839
        %v5841 = vrot.slane %v5836, %v5840
        %v5844 = vsel %vm1219, %v5829, 0
        %5846 = vmatprep.subr.mxu0 0.0
        %5847 = vmatpush1.msra.mxu0 %v5831
        %5848 = vmatprep.subr.mxu0 0.0
        %5849 = vmatpush1.msra.mxu0 %v5832
        %5850 = vmatprep.subr.mxu0 0.0
        %5851 = vmatpush1.msra.mxu0 %v5833
        %5852 = vmatprep.subr.mxu0 0.0
        %5853 = vmatpush1.msra.mxu0 %v5834
        %5854 = vmatprep.subr.mxu0 0.0
        %5855 = vmatpush1.msra.mxu0 0.0
        %5856 = vmatprep.subr.mxu0 0.0
        %5857 = vmatpush1.msra.mxu0 0.0
        %5858 = vmatprep.subr.mxu0 0.0
        %5859 = vmatpush1.msra.mxu0 0.0
        %5860 = vmatprep.subr.mxu0 0.0
        %5861 = vmatpush1.msra.mxu0 0.0
        %5862 = vmatprep.subr.mxu0 0.0
        %5863 = vmatpush1.msra.mxu0 0.0
        %5864 = vmatprep.subr.mxu0 0.0
        %5865 = vmatpush1.msra.mxu0 0.0
        %5866 = vmatprep.subr.mxu0 0.0
        %5867 = vmatpush1.msra.mxu0 0.0
        %5868 = vmatprep.subr.mxu0 0.0
        %5869 = vmatpush1.msra.mxu0 0.0
        %5870 = vmatprep.subr.mxu0 0.0
        %5871 = vmatpush1.msra.mxu0 0.0
        %5872 = vmatprep.subr.mxu0 0.0
        %5873 = vmatpush1.msra.mxu0 0.0
        %5874 = vmatprep.subr.mxu0 0.0
        %5875 = vmatpush1.msra.mxu0 0.0
        %5876 = vmatprep.subr.mxu0 0.0
        %5877 = vmatpush1.msra.mxu0 0.0
        %5878 = vmatprep.subr.mxu0 0.0
        %5879 = vmatpush1.msra.mxu0 0.0
        %5880 = vmatprep.subr.mxu0 0.0
        %5881 = vmatpush1.msra.mxu0 0.0
        %5882 = vmatprep.subr.mxu0 0.0
        %5883 = vmatpush1.msra.mxu0 0.0
        %5884 = vmatprep.subr.mxu0 0.0
        %5885 = vmatpush1.msra.mxu0 0.0
        %5886 = vmatprep.subr.mxu0 0.0
        %5887 = vmatpush1.msra.mxu0 0.0
        %5888 = vmatprep.subr.mxu0 0.0
        %5889 = vmatpush1.msra.mxu0 0.0
        %5890 = vmatprep.subr.mxu0 0.0
        %5891 = vmatpush1.msra.mxu0 0.0
        %5892 = vmatprep.subr.mxu0 0.0
        %5893 = vmatpush1.msra.mxu0 0.0
        %5894 = vmatprep.subr.mxu0 0.0
        %5895 = vmatpush1.msra.mxu0 0.0
        %5896 = vmatprep.subr.mxu0 0.0
        %5897 = vmatpush1.msra.mxu0 0.0
        %5898 = vmatprep.subr.mxu0 0.0
        %5899 = vmatpush1.msra.mxu0 0.0
        %5900 = vmatprep.subr.mxu0 0.0
        %5901 = vmatpush1.msra.mxu0 0.0
        %5902 = vmatprep.subr.mxu0 0.0
        %5903 = vmatpush1.msra.mxu0 0.0
        %5904 = vmatprep.subr.mxu0 0.0
        %5905 = vmatpush1.msra.mxu0 0.0
        %5906 = vmatprep.subr.mxu0 0.0
        %5907 = vmatpush1.msra.mxu0 0.0
        %5908 = vmatprep.subr.mxu0 0.0
        %5909 = vmatpush1.msra.mxu0 0.0
        %5910 = vmatprep.mubr.f32.mxu0 0.0
        %5911 = vmatmul.mubr.f32.gmra.mrb[0].mxu0 %v5844
        %v5912 = vpop.f32.mrb[0].mxu0
        %v5913 = vadd.f32 %v5841, %v5912
        %v5914 = vpop.f32.mrb[0].mxu0
        %5915 = vdwg.mxu0
        %s5916 = scalar_lea.vmem %s27, 96
        %v5917 = vld [vmem:[%s5916] sm:$0xff]
        %v5918 = vld [vmem:[%s5916 + $0x8] sm:$0xff]
        %v5919 = vld [vmem:[%s5916 + $0x10] sm:$0xff]
        %v5920 = vld [vmem:[%s5916 + $0x18] sm:$0xff]
        %s5921 = scalar_lea.vmem %s29, 3
        %v5922 = vld [vmem:[%s5921] sm:$0x1]
        %v5924 = vlaneseq
        %v5925 = vshrl.u32 %v5924, 7
        %v5926 = vsub.s32 0, %v5925
        %v5927 = vrot.slane %v5922, %v5926
        %5929 = vmatprep.subr.mxu0 0.0
        %5930 = vmatpush1.msra.mxu0 %v5917
        %5931 = vmatprep.subr.mxu0 0.0
        %5932 = vmatpush1.msra.mxu0 %v5918
        %5933 = vmatprep.subr.mxu0 0.0
        %5934 = vmatpush1.msra.mxu0 %v5919
        %5935 = vmatprep.subr.mxu0 0.0
        %5936 = vmatpush1.msra.mxu0 %v5920
        %5937 = vmatprep.subr.mxu0 0.0
        %5938 = vmatpush1.msra.mxu0 0.0
        %5939 = vmatprep.subr.mxu0 0.0
        %5940 = vmatpush1.msra.mxu0 0.0
        %5941 = vmatprep.subr.mxu0 0.0
        %5942 = vmatpush1.msra.mxu0 0.0
        %5943 = vmatprep.subr.mxu0 0.0
        %5944 = vmatpush1.msra.mxu0 0.0
        %5945 = vmatprep.subr.mxu0 0.0
        %5946 = vmatpush1.msra.mxu0 0.0
        %5947 = vmatprep.subr.mxu0 0.0
        %5948 = vmatpush1.msra.mxu0 0.0
        %5949 = vmatprep.subr.mxu0 0.0
        %5950 = vmatpush1.msra.mxu0 0.0
        %5951 = vmatprep.subr.mxu0 0.0
        %5952 = vmatpush1.msra.mxu0 0.0
        %5953 = vmatprep.subr.mxu0 0.0
        %5954 = vmatpush1.msra.mxu0 0.0
        %5955 = vmatprep.subr.mxu0 0.0
        %5956 = vmatpush1.msra.mxu0 0.0
        %5957 = vmatprep.subr.mxu0 0.0
        %5958 = vmatpush1.msra.mxu0 0.0
        %5959 = vmatprep.subr.mxu0 0.0
        %5960 = vmatpush1.msra.mxu0 0.0
        %5961 = vmatprep.subr.mxu0 0.0
        %5962 = vmatpush1.msra.mxu0 0.0
        %5963 = vmatprep.subr.mxu0 0.0
        %5964 = vmatpush1.msra.mxu0 0.0
        %5965 = vmatprep.subr.mxu0 0.0
        %5966 = vmatpush1.msra.mxu0 0.0
        %5967 = vmatprep.subr.mxu0 0.0
        %5968 = vmatpush1.msra.mxu0 0.0
        %5969 = vmatprep.subr.mxu0 0.0
        %5970 = vmatpush1.msra.mxu0 0.0
        %5971 = vmatprep.subr.mxu0 0.0
        %5972 = vmatpush1.msra.mxu0 0.0
        %5973 = vmatprep.subr.mxu0 0.0
        %5974 = vmatpush1.msra.mxu0 0.0
        %5975 = vmatprep.subr.mxu0 0.0
        %5976 = vmatpush1.msra.mxu0 0.0
        %5977 = vmatprep.subr.mxu0 0.0
        %5978 = vmatpush1.msra.mxu0 0.0
        %5979 = vmatprep.subr.mxu0 0.0
        %5980 = vmatpush1.msra.mxu0 0.0
        %5981 = vmatprep.subr.mxu0 0.0
        %5982 = vmatpush1.msra.mxu0 0.0
        %5983 = vmatprep.subr.mxu0 0.0
        %5984 = vmatpush1.msra.mxu0 0.0
        %5985 = vmatprep.subr.mxu0 0.0
        %5986 = vmatpush1.msra.mxu0 0.0
        %5987 = vmatprep.subr.mxu0 0.0
        %5988 = vmatpush1.msra.mxu0 0.0
        %5989 = vmatprep.subr.mxu0 0.0
        %5990 = vmatpush1.msra.mxu0 0.0
        %5991 = vmatprep.subr.mxu0 0.0
        %5992 = vmatpush1.msra.mxu0 0.0
        %5993 = vmatprep.mubr.f32.mxu0 0.0
        %5994 = vmatmul.mubr.f32.gmra.mrb[0].mxu0 %v1344
        %v5995 = vpop.f32.mrb[0].mxu0
        %v5996 = vadd.f32 %v5927, %v5995
        %v5997 = vpop.f32.mrb[0].mxu0
        %5998 = vmatprep.mubr.f32.mxu0 0.0
        %5999 = vmatmul.mubr.f32.gmra.mrb[0].mxu0 %v1347
        %v6000 = vpop.f32.mrb[0].mxu0
        %v6001 = vadd.f32 %v5927, %v6000
        %v6002 = vpop.f32.mrb[0].mxu0
        %6003 = vdwg.mxu0
        %s6004 = scalar_lea.vmem %s31, 96
        %v6005 = vld [vmem:[%s6004] sm:$0xff]
        %v6006 = vld [vmem:[%s6004 + $0x8] sm:$0xff]
        %v6007 = vld [vmem:[%s6004 + $0x10] sm:$0xff]
        %v6008 = vld [vmem:[%s6004 + $0x18] sm:$0xff]
        %s6009 = scalar_lea.vmem %s33, 3
        %v6010 = vld [vmem:[%s6009] sm:$0x1]
        %v6012 = vlaneseq
        %v6013 = vshrl.u32 %v6012, 7
        %v6014 = vsub.s32 0, %v6013
        %v6015 = vrot.slane %v6010, %v6014
        %6017 = vmatprep.subr.mxu0 0.0
        %6018 = vmatpush1.msra.mxu0 %v6005
        %6019 = vmatprep.subr.mxu0 0.0
        %6020 = vmatpush1.msra.mxu0 %v6006
        %6021 = vmatprep.subr.mxu0 0.0
        %6022 = vmatpush1.msra.mxu0 %v6007
        %6023 = vmatprep.subr.mxu0 0.0
        %6024 = vmatpush1.msra.mxu0 %v6008
        %6025 = vmatprep.subr.mxu0 0.0
        %6026 = vmatpush1.msra.mxu0 0.0
        %6027 = vmatprep.subr.mxu0 0.0
        %6028 = vmatpush1.msra.mxu0 0.0
        %6029 = vmatprep.subr.mxu0 0.0
        %6030 = vmatpush1.msra.mxu0 0.0
        %6031 = vmatprep.subr.mxu0 0.0
        %6032 = vmatpush1.msra.mxu0 0.0
        %6033 = vmatprep.subr.mxu0 0.0
        %6034 = vmatpush1.msra.mxu0 0.0
        %6035 = vmatprep.subr.mxu0 0.0
        %6036 = vmatpush1.msra.mxu0 0.0
        %6037 = vmatprep.subr.mxu0 0.0
        %6038 = vmatpush1.msra.mxu0 0.0
        %6039 = vmatprep.subr.mxu0 0.0
        %6040 = vmatpush1.msra.mxu0 0.0
        %6041 = vmatprep.subr.mxu0 0.0
        %6042 = vmatpush1.msra.mxu0 0.0
        %6043 = vmatprep.subr.mxu0 0.0
        %6044 = vmatpush1.msra.mxu0 0.0
        %6045 = vmatprep.subr.mxu0 0.0
        %6046 = vmatpush1.msra.mxu0 0.0
        %6047 = vmatprep.subr.mxu0 0.0
        %6048 = vmatpush1.msra.mxu0 0.0
        %6049 = vmatprep.subr.mxu0 0.0
        %6050 = vmatpush1.msra.mxu0 0.0
        %6051 = vmatprep.subr.mxu0 0.0
        %6052 = vmatpush1.msra.mxu0 0.0
        %6053 = vmatprep.subr.mxu0 0.0
        %6054 = vmatpush1.msra.mxu0 0.0
        %6055 = vmatprep.subr.mxu0 0.0
        %6056 = vmatpush1.msra.mxu0 0.0
        %6057 = vmatprep.subr.mxu0 0.0
        %6058 = vmatpush1.msra.mxu0 0.0
        %6059 = vmatprep.subr.mxu0 0.0
        %6060 = vmatpush1.msra.mxu0 0.0
        %6061 = vmatprep.subr.mxu0 0.0
        %6062 = vmatpush1.msra.mxu0 0.0
        %6063 = vmatprep.subr.mxu0 0.0
        %6064 = vmatpush1.msra.mxu0 0.0
        %6065 = vmatprep.subr.mxu0 0.0
        %6066 = vmatpush1.msra.mxu0 0.0
        %6067 = vmatprep.subr.mxu0 0.0
        %6068 = vmatpush1.msra.mxu0 0.0
        %6069 = vmatprep.subr.mxu0 0.0
        %6070 = vmatpush1.msra.mxu0 0.0
        %6071 = vmatprep.subr.mxu0 0.0
        %6072 = vmatpush1.msra.mxu0 0.0
        %6073 = vmatprep.subr.mxu0 0.0
        %6074 = vmatpush1.msra.mxu0 0.0
        %6075 = vmatprep.subr.mxu0 0.0
        %6076 = vmatpush1.msra.mxu0 0.0
        %6077 = vmatprep.subr.mxu0 0.0
        %6078 = vmatpush1.msra.mxu0 0.0
        %6079 = vmatprep.subr.mxu0 0.0
        %6080 = vmatpush1.msra.mxu0 0.0
        %6081 = vmatprep.mubr.f32.mxu0 0.0
        %6082 = vmatmul.mubr.f32.gmra.mrb[0].mxu0 %v1344
        %v6083 = vpop.f32.mrb[0].mxu0
        %v6084 = vadd.f32 %v6015, %v6083
        %v6085 = vpop.f32.mrb[0].mxu0
        %6086 = vmatprep.mubr.f32.mxu0 0.0
        %6087 = vmatmul.mubr.f32.gmra.mrb[0].mxu0 %v1347
        %v6088 = vpop.f32.mrb[0].mxu0
        %v6089 = vadd.f32 %v6015, %v6088
        %v6090 = vpop.f32.mrb[0].mxu0
        %6091 = vdwg.mxu0
        %s6092 = scalar_lea.vmem %s35, 96
        %v6093 = vld [vmem:[%s6092] sm:$0xff]
        %v6094 = vld [vmem:[%s6092 + $0x8] sm:$0xff]
        %v6095 = vld [vmem:[%s6092 + $0x10] sm:$0xff]
        %v6096 = vld [vmem:[%s6092 + $0x18] sm:$0xff]
        %v6098 = vsel %vm1514, %v5913, 0
        %v6101 = vsel %vm1514, %v5996, 0
        %v6104 = vsel %vm1514, %v6001, 0
        %6106 = vmatprep.subr.mxu0 0.0
        %6107 = vmatpush1.xpose.msra.mxu0 %v6101
        %6108 = vmatprep.subr.mxu0 0.0
        %6109 = vmatpush1.xpose.msra.mxu0 %v6104
        %6110 = vmatprep.subr.mxu0 0.0
        %6111 = vmatpush1.xpose.msra.mxu0 0.0
        %6112 = vmatprep.subr.mxu0 0.0
        %6113 = vmatpush1.xpose.msra.mxu0 0.0
        %6114 = vmatprep.subr.mxu0 0.0
        %6115 = vmatpush1.xpose.msra.mxu0 0.0
        %6116 = vmatprep.subr.mxu0 0.0
        %6117 = vmatpush1.xpose.msra.mxu0 0.0
        %6118 = vmatprep.subr.mxu0 0.0
        %6119 = vmatpush1.xpose.msra.mxu0 0.0
        %6120 = vmatprep.subr.mxu0 0.0
        %6121 = vmatpush1.xpose.msra.mxu0 0.0
        %6122 = vmatprep.subr.mxu0 0.0
        %6123 = vmatpush1.xpose.msra.mxu0 0.0
        %6124 = vmatprep.subr.mxu0 0.0
        %6125 = vmatpush1.xpose.msra.mxu0 0.0
        %6126 = vmatprep.subr.mxu0 0.0
        %6127 = vmatpush1.xpose.msra.mxu0 0.0
        %6128 = vmatprep.subr.mxu0 0.0
        %6129 = vmatpush1.xpose.msra.mxu0 0.0
        %6130 = vmatprep.subr.mxu0 0.0
        %6131 = vmatpush1.xpose.msra.mxu0 0.0
        %6132 = vmatprep.subr.mxu0 0.0
        %6133 = vmatpush1.xpose.msra.mxu0 0.0
        %6134 = vmatprep.subr.mxu0 0.0
        %6135 = vmatpush1.xpose.msra.mxu0 0.0
        %6136 = vmatprep.subr.mxu0 0.0
        %6137 = vmatpush1.xpose.msra.mxu0 0.0
        %6138 = vmatprep.subr.mxu0 0.0
        %6139 = vmatpush1.xpose.msra.mxu0 0.0
        %6140 = vmatprep.subr.mxu0 0.0
        %6141 = vmatpush1.xpose.msra.mxu0 0.0
        %6142 = vmatprep.subr.mxu0 0.0
        %6143 = vmatpush1.xpose.msra.mxu0 0.0
        %6144 = vmatprep.subr.mxu0 0.0
        %6145 = vmatpush1.xpose.msra.mxu0 0.0
        %6146 = vmatprep.subr.mxu0 0.0
        %6147 = vmatpush1.xpose.msra.mxu0 0.0
        %6148 = vmatprep.subr.mxu0 0.0
        %6149 = vmatpush1.xpose.msra.mxu0 0.0
        %6150 = vmatprep.subr.mxu0 0.0
        %6151 = vmatpush1.xpose.msra.mxu0 0.0
        %6152 = vmatprep.subr.mxu0 0.0
        %6153 = vmatpush1.xpose.msra.mxu0 0.0
        %6154 = vmatprep.subr.mxu0 0.0
        %6155 = vmatpush1.xpose.msra.mxu0 0.0
        %6156 = vmatprep.subr.mxu0 0.0
        %6157 = vmatpush1.xpose.msra.mxu0 0.0
        %6158 = vmatprep.subr.mxu0 0.0
        %6159 = vmatpush1.xpose.msra.mxu0 0.0
        %6160 = vmatprep.subr.mxu0 0.0
        %6161 = vmatpush1.xpose.msra.mxu0 0.0
        %6162 = vmatprep.subr.mxu0 0.0
        %6163 = vmatpush1.xpose.msra.mxu0 0.0
        %6164 = vmatprep.subr.mxu0 0.0
        %6165 = vmatpush1.xpose.msra.mxu0 0.0
        %6166 = vmatprep.subr.mxu0 0.0
        %6167 = vmatpush1.xpose.msra.mxu0 0.0
        %6168 = vmatprep.subr.mxu0 0.0
        %6169 = vmatpush1.xpose.msra.mxu0 0.0
        %6170 = vmatprep.mubr.f32.mxu0 0.0
        %6171 = vmatmul.mubr.f32.gmra.mrb[0].mxu0 %v6098
        %v6172 = vpop.f32.mrb[0].mxu0
        %v6173 = vadd.f32 0.0, %v6172
        %v6174 = vpop.f32.mrb[0].mxu0
        %6175 = vdwg.mxu0
        %v6176 = vmul.f32 %v6173, 0.35355338
        %v6177 = vsel %vm1601, %v6176, -1e+30
        %v6178 = vsel %vm991, %v6177, -inf
        %6179 = vmax.xlane.f32.xlu0 %v6178
        %v6180 = vpop.xlane.xlu0 %6179
        %v6181 = vsub.f32 %v6177, %v6180
        %v6182 = vmul.f32 %v6181, 1.442695
        %v6183 = vpow.pop %v6182
        %v6184 = vsel %vm991, %v6183, 0.0
        %6185 = vadd.xlane.f32.xlu0 %v6184
        %v6186 = vpop.xlane.xlu0 %6185
        %v6187 = vrcp.pop %v6186
        %v6188 = vmul.f32 %v6183, %v6187
        %v6190 = vsel %vm991, %v6188, 0
        %6192 = vmatprep.subr.mxu0 0.0
        %6193 = vmatpush1.msra.mxu0 %v6084
        %6194 = vmatprep.subr.mxu0 0.0
        %6195 = vmatpush1.msra.mxu0 %v6089
        %6196 = vmatprep.subr.mxu0 0.0
        %6197 = vmatpush1.msra.mxu0 0.0
        %6198 = vmatprep.subr.mxu0 0.0
        %6199 = vmatpush1.msra.mxu0 0.0
        %6200 = vmatprep.subr.mxu0 0.0
        %6201 = vmatpush1.msra.mxu0 0.0
        %6202 = vmatprep.subr.mxu0 0.0
        %6203 = vmatpush1.msra.mxu0 0.0
        %6204 = vmatprep.subr.mxu0 0.0
        %6205 = vmatpush1.msra.mxu0 0.0
        %6206 = vmatprep.subr.mxu0 0.0
        %6207 = vmatpush1.msra.mxu0 0.0
        %6208 = vmatprep.subr.mxu0 0.0
        %6209 = vmatpush1.msra.mxu0 0.0
        %6210 = vmatprep.subr.mxu0 0.0
        %6211 = vmatpush1.msra.mxu0 0.0
        %6212 = vmatprep.subr.mxu0 0.0
        %6213 = vmatpush1.msra.mxu0 0.0
        %6214 = vmatprep.subr.mxu0 0.0
        %6215 = vmatpush1.msra.mxu0 0.0
        %6216 = vmatprep.subr.mxu0 0.0
        %6217 = vmatpush1.msra.mxu0 0.0
        %6218 = vmatprep.subr.mxu0 0.0
        %6219 = vmatpush1.msra.mxu0 0.0
        %6220 = vmatprep.subr.mxu0 0.0
        %6221 = vmatpush1.msra.mxu0 0.0
        %6222 = vmatprep.subr.mxu0 0.0
        %6223 = vmatpush1.msra.mxu0 0.0
        %6224 = vmatprep.subr.mxu0 0.0
        %6225 = vmatpush1.msra.mxu0 0.0
        %6226 = vmatprep.subr.mxu0 0.0
        %6227 = vmatpush1.msra.mxu0 0.0
        %6228 = vmatprep.subr.mxu0 0.0
        %6229 = vmatpush1.msra.mxu0 0.0
        %6230 = vmatprep.subr.mxu0 0.0
        %6231 = vmatpush1.msra.mxu0 0.0
        %6232 = vmatprep.subr.mxu0 0.0
        %6233 = vmatpush1.msra.mxu0 0.0
        %6234 = vmatprep.subr.mxu0 0.0
        %6235 = vmatpush1.msra.mxu0 0.0
        %6236 = vmatprep.subr.mxu0 0.0
        %6237 = vmatpush1.msra.mxu0 0.0
        %6238 = vmatprep.subr.mxu0 0.0
        %6239 = vmatpush1.msra.mxu0 0.0
        %6240 = vmatprep.subr.mxu0 0.0
        %6241 = vmatpush1.msra.mxu0 0.0
        %6242 = vmatprep.subr.mxu0 0.0
        %6243 = vmatpush1.msra.mxu0 0.0
        %6244 = vmatprep.subr.mxu0 0.0
        %6245 = vmatpush1.msra.mxu0 0.0
        %6246 = vmatprep.subr.mxu0 0.0
        %6247 = vmatpush1.msra.mxu0 0.0
        %6248 = vmatprep.subr.mxu0 0.0
        %6249 = vmatpush1.msra.mxu0 0.0
        %6250 = vmatprep.subr.mxu0 0.0
        %6251 = vmatpush1.msra.mxu0 0.0
        %6252 = vmatprep.subr.mxu0 0.0
        %6253 = vmatpush1.msra.mxu0 0.0
        %6254 = vmatprep.subr.mxu0 0.0
        %6255 = vmatpush1.msra.mxu0 0.0
        %6256 = vmatprep.mubr.f32.mxu0 0.0
        %6257 = vmatmul.mubr.f32.gmra.mrb[0].mxu0 %v6190
        %v6258 = vpop.f32.mrb[0].mxu0
        %v6259 = vadd.f32 0.0, %v6258
        %v6260 = vpop.f32.mrb[0].mxu0
        %6261 = vdwg.mxu0
        %6262 = vrot.lane.b32.xlu0 %v5913, 120
        %v6263 = vpop.permute.xlu0 %6262
        %6264 = vrot.lane.b32.xlu0 %v5996, 120
        %v6265 = vpop.permute.xlu0 %6264
        %6266 = vrot.lane.b32.xlu0 %v6001, 120
        %v6267 = vpop.permute.xlu0 %6266
        %v6268 = vsel %vm1514, %v6263, 0
        %v6270 = vsel %vm1514, %v6265, 0
        %v6272 = vsel %vm1514, %v6267, 0
        %6274 = vmatprep.subr.mxu0 0.0
        %6275 = vmatpush1.xpose.msra.mxu0 %v6270
        %6276 = vmatprep.subr.mxu0 0.0
        %6277 = vmatpush1.xpose.msra.mxu0 %v6272
        %6278 = vmatprep.subr.mxu0 0.0
        %6279 = vmatpush1.xpose.msra.mxu0 0.0
        %6280 = vmatprep.subr.mxu0 0.0
        %6281 = vmatpush1.xpose.msra.mxu0 0.0
        %6282 = vmatprep.subr.mxu0 0.0
        %6283 = vmatpush1.xpose.msra.mxu0 0.0
        %6284 = vmatprep.subr.mxu0 0.0
        %6285 = vmatpush1.xpose.msra.mxu0 0.0
        %6286 = vmatprep.subr.mxu0 0.0
        %6287 = vmatpush1.xpose.msra.mxu0 0.0
        %6288 = vmatprep.subr.mxu0 0.0
        %6289 = vmatpush1.xpose.msra.mxu0 0.0
        %6290 = vmatprep.subr.mxu0 0.0
        %6291 = vmatpush1.xpose.msra.mxu0 0.0
        %6292 = vmatprep.subr.mxu0 0.0
        %6293 = vmatpush1.xpose.msra.mxu0 0.0
        %6294 = vmatprep.subr.mxu0 0.0
        %6295 = vmatpush1.xpose.msra.mxu0 0.0
        %6296 = vmatprep.subr.mxu0 0.0
        %6297 = vmatpush1.xpose.msra.mxu0 0.0
        %6298 = vmatprep.subr.mxu0 0.0
        %6299 = vmatpush1.xpose.msra.mxu0 0.0
        %6300 = vmatprep.subr.mxu0 0.0
        %6301 = vmatpush1.xpose.msra.mxu0 0.0
        %6302 = vmatprep.subr.mxu0 0.0
        %6303 = vmatpush1.xpose.msra.mxu0 0.0
        %6304 = vmatprep.subr.mxu0 0.0
        %6305 = vmatpush1.xpose.msra.mxu0 0.0
        %6306 = vmatprep.subr.mxu0 0.0
        %6307 = vmatpush1.xpose.msra.mxu0 0.0
        %6308 = vmatprep.subr.mxu0 0.0
        %6309 = vmatpush1.xpose.msra.mxu0 0.0
        %6310 = vmatprep.subr.mxu0 0.0
        %6311 = vmatpush1.xpose.msra.mxu0 0.0
        %6312 = vmatprep.subr.mxu0 0.0
        %6313 = vmatpush1.xpose.msra.mxu0 0.0
        %6314 = vmatprep.subr.mxu0 0.0
        %6315 = vmatpush1.xpose.msra.mxu0 0.0
        %6316 = vmatprep.subr.mxu0 0.0
        %6317 = vmatpush1.xpose.msra.mxu0 0.0
        %6318 = vmatprep.subr.mxu0 0.0
        %6319 = vmatpush1.xpose.msra.mxu0 0.0
        %6320 = vmatprep.subr.mxu0 0.0
        %6321 = vmatpush1.xpose.msra.mxu0 0.0
        %6322 = vmatprep.subr.mxu0 0.0
        %6323 = vmatpush1.xpose.msra.mxu0 0.0
        %6324 = vmatprep.subr.mxu0 0.0
        %6325 = vmatpush1.xpose.msra.mxu0 0.0
        %6326 = vmatprep.subr.mxu0 0.0
        %6327 = vmatpush1.xpose.msra.mxu0 0.0
        %6328 = vmatprep.subr.mxu0 0.0
        %6329 = vmatpush1.xpose.msra.mxu0 0.0
        %6330 = vmatprep.subr.mxu0 0.0
        %6331 = vmatpush1.xpose.msra.mxu0 0.0
        %6332 = vmatprep.subr.mxu0 0.0
        %6333 = vmatpush1.xpose.msra.mxu0 0.0
        %6334 = vmatprep.subr.mxu0 0.0
        %6335 = vmatpush1.xpose.msra.mxu0 0.0
        %6336 = vmatprep.subr.mxu0 0.0
        %6337 = vmatpush1.xpose.msra.mxu0 0.0
        %6338 = vmatprep.mubr.f32.mxu0 0.0
        %6339 = vmatmul.mubr.f32.gmra.mrb[0].mxu0 %v6268
        %v6340 = vpop.f32.mrb[0].mxu0
        %v6341 = vadd.f32 0.0, %v6340
        %v6342 = vpop.f32.mrb[0].mxu0
        %6343 = vdwg.mxu0
        %v6344 = vmul.f32 %v6341, 0.35355338
        %v6345 = vsel %vm1601, %v6344, -1e+30
        %v6346 = vsel %vm991, %v6345, -inf
        %6347 = vmax.xlane.f32.xlu0 %v6346
        %v6348 = vpop.xlane.xlu0 %6347
        %v6349 = vsub.f32 %v6345, %v6348
        %v6350 = vmul.f32 %v6349, 1.442695
        %v6351 = vpow.pop %v6350
        %v6352 = vsel %vm991, %v6351, 0.0
        %6353 = vadd.xlane.f32.xlu0 %v6352
        %v6354 = vpop.xlane.xlu0 %6353
        %v6355 = vrcp.pop %v6354
        %v6356 = vmul.f32 %v6351, %v6355
        %6359 = vrot.lane.b32.xlu0 %v6084, 120
        %v6360 = vpop.permute.xlu0 %6359
        %6361 = vrot.lane.b32.xlu0 %v6089, 120
        %v6362 = vpop.permute.xlu0 %6361
        %v6366 = vsel %vm991, %v6356, 0
        %6368 = vmatprep.subr.mxu0 0.0
        %6369 = vmatpush1.msra.mxu0 %v6360
        %6370 = vmatprep.subr.mxu0 0.0
        %6371 = vmatpush1.msra.mxu0 %v6362
        %6372 = vmatprep.subr.mxu0 0.0
        %6373 = vmatpush1.msra.mxu0 0.0
        %6374 = vmatprep.subr.mxu0 0.0
        %6375 = vmatpush1.msra.mxu0 0.0
        %6376 = vmatprep.subr.mxu0 0.0
        %6377 = vmatpush1.msra.mxu0 0.0
        %6378 = vmatprep.subr.mxu0 0.0
        %6379 = vmatpush1.msra.mxu0 0.0
        %6380 = vmatprep.subr.mxu0 0.0
        %6381 = vmatpush1.msra.mxu0 0.0
        %6382 = vmatprep.subr.mxu0 0.0
        %6383 = vmatpush1.msra.mxu0 0.0
        %6384 = vmatprep.subr.mxu0 0.0
        %6385 = vmatpush1.msra.mxu0 0.0
        %6386 = vmatprep.subr.mxu0 0.0
        %6387 = vmatpush1.msra.mxu0 0.0
        %6388 = vmatprep.subr.mxu0 0.0
        %6389 = vmatpush1.msra.mxu0 0.0
        %6390 = vmatprep.subr.mxu0 0.0
        %6391 = vmatpush1.msra.mxu0 0.0
        %6392 = vmatprep.subr.mxu0 0.0
        %6393 = vmatpush1.msra.mxu0 0.0
        %6394 = vmatprep.subr.mxu0 0.0
        %6395 = vmatpush1.msra.mxu0 0.0
        %6396 = vmatprep.subr.mxu0 0.0
        %6397 = vmatpush1.msra.mxu0 0.0
        %6398 = vmatprep.subr.mxu0 0.0
        %6399 = vmatpush1.msra.mxu0 0.0
        %6400 = vmatprep.subr.mxu0 0.0
        %6401 = vmatpush1.msra.mxu0 0.0
        %6402 = vmatprep.subr.mxu0 0.0
        %6403 = vmatpush1.msra.mxu0 0.0
        %6404 = vmatprep.subr.mxu0 0.0
        %6405 = vmatpush1.msra.mxu0 0.0
        %6406 = vmatprep.subr.mxu0 0.0
        %6407 = vmatpush1.msra.mxu0 0.0
        %6408 = vmatprep.subr.mxu0 0.0
        %6409 = vmatpush1.msra.mxu0 0.0
        %6410 = vmatprep.subr.mxu0 0.0
        %6411 = vmatpush1.msra.mxu0 0.0
        %6412 = vmatprep.subr.mxu0 0.0
        %6413 = vmatpush1.msra.mxu0 0.0
        %6414 = vmatprep.subr.mxu0 0.0
        %6415 = vmatpush1.msra.mxu0 0.0
        %6416 = vmatprep.subr.mxu0 0.0
        %6417 = vmatpush1.msra.mxu0 0.0
        %6418 = vmatprep.subr.mxu0 0.0
        %6419 = vmatpush1.msra.mxu0 0.0
        %6420 = vmatprep.subr.mxu0 0.0
        %6421 = vmatpush1.msra.mxu0 0.0
        %6422 = vmatprep.subr.mxu0 0.0
        %6423 = vmatpush1.msra.mxu0 0.0
        %6424 = vmatprep.subr.mxu0 0.0
        %6425 = vmatpush1.msra.mxu0 0.0
        %6426 = vmatprep.subr.mxu0 0.0
        %6427 = vmatpush1.msra.mxu0 0.0
        %6428 = vmatprep.subr.mxu0 0.0
        %6429 = vmatpush1.msra.mxu0 0.0
        %6430 = vmatprep.subr.mxu0 0.0
        %6431 = vmatpush1.msra.mxu0 0.0
        %6432 = vmatprep.mubr.f32.mxu0 0.0
        %6433 = vmatmul.mubr.f32.gmra.mrb[0].mxu0 %v6366
        %v6434 = vpop.f32.mrb[0].mxu0
        %v6435 = vadd.f32 0.0, %v6434
        %v6436 = vpop.f32.mrb[0].mxu0
        %6437 = vdwg.mxu0
        %v6439 = vsel %vm1514, %v6435, 0
        %6441 = vmatprep.subr.mxu0 0.0
        %6442 = vmatpush1.msra.mxu0 %v6094
        %6443 = vmatprep.subr.mxu0 0.0
        %6444 = vmatpush1.msra.mxu0 0.0
        %6445 = vmatprep.subr.mxu0 0.0
        %6446 = vmatpush1.msra.mxu0 0.0
        %6447 = vmatprep.subr.mxu0 0.0
        %6448 = vmatpush1.msra.mxu0 0.0
        %6449 = vmatprep.subr.mxu0 0.0
        %6450 = vmatpush1.msra.mxu0 0.0
        %6451 = vmatprep.subr.mxu0 0.0
        %6452 = vmatpush1.msra.mxu0 0.0
        %6453 = vmatprep.subr.mxu0 0.0
        %6454 = vmatpush1.msra.mxu0 0.0
        %6455 = vmatprep.subr.mxu0 0.0
        %6456 = vmatpush1.msra.mxu0 0.0
        %6457 = vmatprep.subr.mxu0 0.0
        %6458 = vmatpush1.msra.mxu0 0.0
        %6459 = vmatprep.subr.mxu0 0.0
        %6460 = vmatpush1.msra.mxu0 0.0
        %6461 = vmatprep.subr.mxu0 0.0
        %6462 = vmatpush1.msra.mxu0 0.0
        %6463 = vmatprep.subr.mxu0 0.0
        %6464 = vmatpush1.msra.mxu0 0.0
        %6465 = vmatprep.subr.mxu0 0.0
        %6466 = vmatpush1.msra.mxu0 0.0
        %6467 = vmatprep.subr.mxu0 0.0
        %6468 = vmatpush1.msra.mxu0 0.0
        %6469 = vmatprep.subr.mxu0 0.0
        %6470 = vmatpush1.msra.mxu0 0.0
        %6471 = vmatprep.subr.mxu0 0.0
        %6472 = vmatpush1.msra.mxu0 0.0
        %6473 = vmatprep.subr.mxu0 0.0
        %6474 = vmatpush1.msra.mxu0 0.0
        %6475 = vmatprep.subr.mxu0 0.0
        %6476 = vmatpush1.msra.mxu0 0.0
        %6477 = vmatprep.subr.mxu0 0.0
        %6478 = vmatpush1.msra.mxu0 0.0
        %6479 = vmatprep.subr.mxu0 0.0
        %6480 = vmatpush1.msra.mxu0 0.0
        %6481 = vmatprep.subr.mxu0 0.0
        %6482 = vmatpush1.msra.mxu0 0.0
        %6483 = vmatprep.subr.mxu0 0.0
        %6484 = vmatpush1.msra.mxu0 0.0
        %6485 = vmatprep.subr.mxu0 0.0
        %6486 = vmatpush1.msra.mxu0 0.0
        %6487 = vmatprep.subr.mxu0 0.0
        %6488 = vmatpush1.msra.mxu0 0.0
        %6489 = vmatprep.subr.mxu0 0.0
        %6490 = vmatpush1.msra.mxu0 0.0
        %6491 = vmatprep.subr.mxu0 0.0
        %6492 = vmatpush1.msra.mxu0 0.0
        %6493 = vmatprep.subr.mxu0 0.0
        %6494 = vmatpush1.msra.mxu0 0.0
        %6495 = vmatprep.subr.mxu0 0.0
        %6496 = vmatpush1.msra.mxu0 0.0
        %6497 = vmatprep.subr.mxu0 0.0
        %6498 = vmatpush1.msra.mxu0 0.0
        %6499 = vmatprep.subr.mxu0 0.0
        %6500 = vmatpush1.msra.mxu0 0.0
        %6501 = vmatprep.subr.mxu0 0.0
        %6502 = vmatpush1.msra.mxu0 0.0
        %6503 = vmatprep.subr.mxu0 0.0
        %6504 = vmatpush1.msra.mxu0 0.0
        %6505 = vmatprep.mubr.f32.mxu0 0.0
        %6506 = vmatmul.mubr.f32.gmra.mrb[0].mxu0 %v6439
        %v6507 = vpop.f32.mrb[0].mxu0
        %v6508 = vadd.f32 0.0, %v6507
        %v6509 = vpop.f32.mrb[0].mxu0
        %6510 = vdwg.mxu0
        %v6512 = vsel %vm1514, %v6259, 0
        %6514 = vmatprep.subr.mxu0 0.0
        %6515 = vmatpush1.msra.mxu0 %v6093
        %6516 = vmatprep.subr.mxu0 0.0
        %6517 = vmatpush1.msra.mxu0 0.0
        %6518 = vmatprep.subr.mxu0 0.0
        %6519 = vmatpush1.msra.mxu0 0.0
        %6520 = vmatprep.subr.mxu0 0.0
        %6521 = vmatpush1.msra.mxu0 0.0
        %6522 = vmatprep.subr.mxu0 0.0
        %6523 = vmatpush1.msra.mxu0 0.0
        %6524 = vmatprep.subr.mxu0 0.0
        %6525 = vmatpush1.msra.mxu0 0.0
        %6526 = vmatprep.subr.mxu0 0.0
        %6527 = vmatpush1.msra.mxu0 0.0
        %6528 = vmatprep.subr.mxu0 0.0
        %6529 = vmatpush1.msra.mxu0 0.0
        %6530 = vmatprep.subr.mxu0 0.0
        %6531 = vmatpush1.msra.mxu0 0.0
        %6532 = vmatprep.subr.mxu0 0.0
        %6533 = vmatpush1.msra.mxu0 0.0
        %6534 = vmatprep.subr.mxu0 0.0
        %6535 = vmatpush1.msra.mxu0 0.0
        %6536 = vmatprep.subr.mxu0 0.0
        %6537 = vmatpush1.msra.mxu0 0.0
        %6538 = vmatprep.subr.mxu0 0.0
        %6539 = vmatpush1.msra.mxu0 0.0
        %6540 = vmatprep.subr.mxu0 0.0
        %6541 = vmatpush1.msra.mxu0 0.0
        %6542 = vmatprep.subr.mxu0 0.0
        %6543 = vmatpush1.msra.mxu0 0.0
        %6544 = vmatprep.subr.mxu0 0.0
        %6545 = vmatpush1.msra.mxu0 0.0
        %6546 = vmatprep.subr.mxu0 0.0
        %6547 = vmatpush1.msra.mxu0 0.0
        %6548 = vmatprep.subr.mxu0 0.0
        %6549 = vmatpush1.msra.mxu0 0.0
        %6550 = vmatprep.subr.mxu0 0.0
        %6551 = vmatpush1.msra.mxu0 0.0
        %6552 = vmatprep.subr.mxu0 0.0
        %6553 = vmatpush1.msra.mxu0 0.0
        %6554 = vmatprep.subr.mxu0 0.0
        %6555 = vmatpush1.msra.mxu0 0.0
        %6556 = vmatprep.subr.mxu0 0.0
        %6557 = vmatpush1.msra.mxu0 0.0
        %6558 = vmatprep.subr.mxu0 0.0
        %6559 = vmatpush1.msra.mxu0 0.0
        %6560 = vmatprep.subr.mxu0 0.0
        %6561 = vmatpush1.msra.mxu0 0.0
        %6562 = vmatprep.subr.mxu0 0.0
        %6563 = vmatpush1.msra.mxu0 0.0
        %6564 = vmatprep.subr.mxu0 0.0
        %6565 = vmatpush1.msra.mxu0 0.0
        %6566 = vmatprep.subr.mxu0 0.0
        %6567 = vmatpush1.msra.mxu0 0.0
        %6568 = vmatprep.subr.mxu0 0.0
        %6569 = vmatpush1.msra.mxu0 0.0
        %6570 = vmatprep.subr.mxu0 0.0
        %6571 = vmatpush1.msra.mxu0 0.0
        %6572 = vmatprep.subr.mxu0 0.0
        %6573 = vmatpush1.msra.mxu0 0.0
        %6574 = vmatprep.subr.mxu0 0.0
        %6575 = vmatpush1.msra.mxu0 0.0
        %6576 = vmatprep.subr.mxu0 0.0
        %6577 = vmatpush1.msra.mxu0 0.0
        %6578 = vmatprep.mubr.f32.mxu0 0.0
        %6579 = vmatmul.mubr.f32.gmra.mrb[0].mxu0 %v6512
        %v6580 = vpop.f32.mrb[0].mxu0
        %v6581 = vadd.f32 %v6508, %v6580
        %v6582 = vpop.f32.mrb[0].mxu0
        %6583 = vdwg.mxu0
        %6584 = vrot.lane.b32.xlu0 %v5913, 112
        %v6585 = vpop.permute.xlu0 %6584
        %6586 = vrot.lane.b32.xlu0 %v5996, 112
        %v6587 = vpop.permute.xlu0 %6586
        %6588 = vrot.lane.b32.xlu0 %v6001, 112
        %v6589 = vpop.permute.xlu0 %6588
        %v6590 = vsel %vm1514, %v6585, 0
        %v6592 = vsel %vm1514, %v6587, 0
        %v6594 = vsel %vm1514, %v6589, 0
        %6596 = vmatprep.subr.mxu0 0.0
        %6597 = vmatpush1.xpose.msra.mxu0 %v6592
        %6598 = vmatprep.subr.mxu0 0.0
        %6599 = vmatpush1.xpose.msra.mxu0 %v6594
        %6600 = vmatprep.subr.mxu0 0.0
        %6601 = vmatpush1.xpose.msra.mxu0 0.0
        %6602 = vmatprep.subr.mxu0 0.0
        %6603 = vmatpush1.xpose.msra.mxu0 0.0
        %6604 = vmatprep.subr.mxu0 0.0
        %6605 = vmatpush1.xpose.msra.mxu0 0.0
        %6606 = vmatprep.subr.mxu0 0.0
        %6607 = vmatpush1.xpose.msra.mxu0 0.0
        %6608 = vmatprep.subr.mxu0 0.0
        %6609 = vmatpush1.xpose.msra.mxu0 0.0
        %6610 = vmatprep.subr.mxu0 0.0
        %6611 = vmatpush1.xpose.msra.mxu0 0.0
        %6612 = vmatprep.subr.mxu0 0.0
        %6613 = vmatpush1.xpose.msra.mxu0 0.0
        %6614 = vmatprep.subr.mxu0 0.0
        %6615 = vmatpush1.xpose.msra.mxu0 0.0
        %6616 = vmatprep.subr.mxu0 0.0
        %6617 = vmatpush1.xpose.msra.mxu0 0.0
        %6618 = vmatprep.subr.mxu0 0.0
        %6619 = vmatpush1.xpose.msra.mxu0 0.0
        %6620 = vmatprep.subr.mxu0 0.0
        %6621 = vmatpush1.xpose.msra.mxu0 0.0
        %6622 = vmatprep.subr.mxu0 0.0
        %6623 = vmatpush1.xpose.msra.mxu0 0.0
        %6624 = vmatprep.subr.mxu0 0.0
        %6625 = vmatpush1.xpose.msra.mxu0 0.0
        %6626 = vmatprep.subr.mxu0 0.0
        %6627 = vmatpush1.xpose.msra.mxu0 0.0
        %6628 = vmatprep.subr.mxu0 0.0
        %6629 = vmatpush1.xpose.msra.mxu0 0.0
        %6630 = vmatprep.subr.mxu0 0.0
        %6631 = vmatpush1.xpose.msra.mxu0 0.0
        %6632 = vmatprep.subr.mxu0 0.0
        %6633 = vmatpush1.xpose.msra.mxu0 0.0
        %6634 = vmatprep.subr.mxu0 0.0
        %6635 = vmatpush1.xpose.msra.mxu0 0.0
        %6636 = vmatprep.subr.mxu0 0.0
        %6637 = vmatpush1.xpose.msra.mxu0 0.0
        %6638 = vmatprep.subr.mxu0 0.0
        %6639 = vmatpush1.xpose.msra.mxu0 0.0
        %6640 = vmatprep.subr.mxu0 0.0
        %6641 = vmatpush1.xpose.msra.mxu0 0.0
        %6642 = vmatprep.subr.mxu0 0.0
        %6643 = vmatpush1.xpose.msra.mxu0 0.0
        %6644 = vmatprep.subr.mxu0 0.0
        %6645 = vmatpush1.xpose.msra.mxu0 0.0
        %6646 = vmatprep.subr.mxu0 0.0
        %6647 = vmatpush1.xpose.msra.mxu0 0.0
        %6648 = vmatprep.subr.mxu0 0.0
        %6649 = vmatpush1.xpose.msra.mxu0 0.0
        %6650 = vmatprep.subr.mxu0 0.0
        %6651 = vmatpush1.xpose.msra.mxu0 0.0
        %6652 = vmatprep.subr.mxu0 0.0
        %6653 = vmatpush1.xpose.msra.mxu0 0.0
        %6654 = vmatprep.subr.mxu0 0.0
        %6655 = vmatpush1.xpose.msra.mxu0 0.0
        %6656 = vmatprep.subr.mxu0 0.0
        %6657 = vmatpush1.xpose.msra.mxu0 0.0
        %6658 = vmatprep.subr.mxu0 0.0
        %6659 = vmatpush1.xpose.msra.mxu0 0.0
        %6660 = vmatprep.mubr.f32.mxu0 0.0
        %6661 = vmatmul.mubr.f32.gmra.mrb[0].mxu0 %v6590
        %v6662 = vpop.f32.mrb[0].mxu0
        %v6663 = vadd.f32 0.0, %v6662
        %v6664 = vpop.f32.mrb[0].mxu0
        %6665 = vdwg.mxu0
        %v6666 = vmul.f32 %v6663, 0.35355338
        %v6667 = vsel %vm1601, %v6666, -1e+30
        %v6668 = vsel %vm991, %v6667, -inf
        %6669 = vmax.xlane.f32.xlu0 %v6668
        %v6670 = vpop.xlane.xlu0 %6669
        %v6671 = vsub.f32 %v6667, %v6670
        %v6672 = vmul.f32 %v6671, 1.442695
        %v6673 = vpow.pop %v6672
        %v6674 = vsel %vm991, %v6673, 0.0
        %6675 = vadd.xlane.f32.xlu0 %v6674
        %v6676 = vpop.xlane.xlu0 %6675
        %v6677 = vrcp.pop %v6676
        %v6678 = vmul.f32 %v6673, %v6677
        %6679 = vrot.lane.b32.xlu0 %v6084, 112
        %v6680 = vpop.permute.xlu0 %6679
        %6681 = vrot.lane.b32.xlu0 %v6089, 112
        %v6682 = vpop.permute.xlu0 %6681
        %v6686 = vsel %vm991, %v6678, 0
        %6688 = vmatprep.subr.mxu0 0.0
        %6689 = vmatpush1.msra.mxu0 %v6680
        %6690 = vmatprep.subr.mxu0 0.0
        %6691 = vmatpush1.msra.mxu0 %v6682
        %6692 = vmatprep.subr.mxu0 0.0
        %6693 = vmatpush1.msra.mxu0 0.0
        %6694 = vmatprep.subr.mxu0 0.0
        %6695 = vmatpush1.msra.mxu0 0.0
        %6696 = vmatprep.subr.mxu0 0.0
        %6697 = vmatpush1.msra.mxu0 0.0
        %6698 = vmatprep.subr.mxu0 0.0
        %6699 = vmatpush1.msra.mxu0 0.0
        %6700 = vmatprep.subr.mxu0 0.0
        %6701 = vmatpush1.msra.mxu0 0.0
        %6702 = vmatprep.subr.mxu0 0.0
        %6703 = vmatpush1.msra.mxu0 0.0
        %6704 = vmatprep.subr.mxu0 0.0
        %6705 = vmatpush1.msra.mxu0 0.0
        %6706 = vmatprep.subr.mxu0 0.0
        %6707 = vmatpush1.msra.mxu0 0.0
        %6708 = vmatprep.subr.mxu0 0.0
        %6709 = vmatpush1.msra.mxu0 0.0
        %6710 = vmatprep.subr.mxu0 0.0
        %6711 = vmatpush1.msra.mxu0 0.0
        %6712 = vmatprep.subr.mxu0 0.0
        %6713 = vmatpush1.msra.mxu0 0.0
        %6714 = vmatprep.subr.mxu0 0.0
        %6715 = vmatpush1.msra.mxu0 0.0
        %6716 = vmatprep.subr.mxu0 0.0
        %6717 = vmatpush1.msra.mxu0 0.0
        %6718 = vmatprep.subr.mxu0 0.0
        %6719 = vmatpush1.msra.mxu0 0.0
        %6720 = vmatprep.subr.mxu0 0.0
        %6721 = vmatpush1.msra.mxu0 0.0
        %6722 = vmatprep.subr.mxu0 0.0
        %6723 = vmatpush1.msra.mxu0 0.0
        %6724 = vmatprep.subr.mxu0 0.0
        %6725 = vmatpush1.msra.mxu0 0.0
        %6726 = vmatprep.subr.mxu0 0.0
        %6727 = vmatpush1.msra.mxu0 0.0
        %6728 = vmatprep.subr.mxu0 0.0
        %6729 = vmatpush1.msra.mxu0 0.0
        %6730 = vmatprep.subr.mxu0 0.0
        %6731 = vmatpush1.msra.mxu0 0.0
        %6732 = vmatprep.subr.mxu0 0.0
        %6733 = vmatpush1.msra.mxu0 0.0
        %6734 = vmatprep.subr.mxu0 0.0
        %6735 = vmatpush1.msra.mxu0 0.0
        %6736 = vmatprep.subr.mxu0 0.0
        %6737 = vmatpush1.msra.mxu0 0.0
        %6738 = vmatprep.subr.mxu0 0.0
        %6739 = vmatpush1.msra.mxu0 0.0
        %6740 = vmatprep.subr.mxu0 0.0
        %6741 = vmatpush1.msra.mxu0 0.0
        %6742 = vmatprep.subr.mxu0 0.0
        %6743 = vmatpush1.msra.mxu0 0.0
        %6744 = vmatprep.subr.mxu0 0.0
        %6745 = vmatpush1.msra.mxu0 0.0
        %6746 = vmatprep.subr.mxu0 0.0
        %6747 = vmatpush1.msra.mxu0 0.0
        %6748 = vmatprep.subr.mxu0 0.0
        %6749 = vmatpush1.msra.mxu0 0.0
        %6750 = vmatprep.subr.mxu0 0.0
        %6751 = vmatpush1.msra.mxu0 0.0
        %6752 = vmatprep.mubr.f32.mxu0 0.0
        %6753 = vmatmul.mubr.f32.gmra.mrb[0].mxu0 %v6686
        %v6754 = vpop.f32.mrb[0].mxu0
        %v6755 = vadd.f32 0.0, %v6754
        %v6756 = vpop.f32.mrb[0].mxu0
        %6757 = vdwg.mxu0
        %v6759 = vsel %vm1514, %v6755, 0
        %6761 = vmatprep.subr.mxu0 0.0
        %6762 = vmatpush1.msra.mxu0 %v6095
        %6763 = vmatprep.subr.mxu0 0.0
        %6764 = vmatpush1.msra.mxu0 0.0
        %6765 = vmatprep.subr.mxu0 0.0
        %6766 = vmatpush1.msra.mxu0 0.0
        %6767 = vmatprep.subr.mxu0 0.0
        %6768 = vmatpush1.msra.mxu0 0.0
        %6769 = vmatprep.subr.mxu0 0.0
        %6770 = vmatpush1.msra.mxu0 0.0
        %6771 = vmatprep.subr.mxu0 0.0
        %6772 = vmatpush1.msra.mxu0 0.0
        %6773 = vmatprep.subr.mxu0 0.0
        %6774 = vmatpush1.msra.mxu0 0.0
        %6775 = vmatprep.subr.mxu0 0.0
        %6776 = vmatpush1.msra.mxu0 0.0
        %6777 = vmatprep.subr.mxu0 0.0
        %6778 = vmatpush1.msra.mxu0 0.0
        %6779 = vmatprep.subr.mxu0 0.0
        %6780 = vmatpush1.msra.mxu0 0.0
        %6781 = vmatprep.subr.mxu0 0.0
        %6782 = vmatpush1.msra.mxu0 0.0
        %6783 = vmatprep.subr.mxu0 0.0
        %6784 = vmatpush1.msra.mxu0 0.0
        %6785 = vmatprep.subr.mxu0 0.0
        %6786 = vmatpush1.msra.mxu0 0.0
        %6787 = vmatprep.subr.mxu0 0.0
        %6788 = vmatpush1.msra.mxu0 0.0
        %6789 = vmatprep.subr.mxu0 0.0
        %6790 = vmatpush1.msra.mxu0 0.0
        %6791 = vmatprep.subr.mxu0 0.0
        %6792 = vmatpush1.msra.mxu0 0.0
        %6793 = vmatprep.subr.mxu0 0.0
        %6794 = vmatpush1.msra.mxu0 0.0
        %6795 = vmatprep.subr.mxu0 0.0
        %6796 = vmatpush1.msra.mxu0 0.0
        %6797 = vmatprep.subr.mxu0 0.0
        %6798 = vmatpush1.msra.mxu0 0.0
        %6799 = vmatprep.subr.mxu0 0.0
        %6800 = vmatpush1.msra.mxu0 0.0
        %6801 = vmatprep.subr.mxu0 0.0
        %6802 = vmatpush1.msra.mxu0 0.0
        %6803 = vmatprep.subr.mxu0 0.0
        %6804 = vmatpush1.msra.mxu0 0.0
        %6805 = vmatprep.subr.mxu0 0.0
        %6806 = vmatpush1.msra.mxu0 0.0
        %6807 = vmatprep.subr.mxu0 0.0
        %6808 = vmatpush1.msra.mxu0 0.0
        %6809 = vmatprep.subr.mxu0 0.0
        %6810 = vmatpush1.msra.mxu0 0.0
        %6811 = vmatprep.subr.mxu0 0.0
        %6812 = vmatpush1.msra.mxu0 0.0
        %6813 = vmatprep.subr.mxu0 0.0
        %6814 = vmatpush1.msra.mxu0 0.0
        %6815 = vmatprep.subr.mxu0 0.0
        %6816 = vmatpush1.msra.mxu0 0.0
        %6817 = vmatprep.subr.mxu0 0.0
        %6818 = vmatpush1.msra.mxu0 0.0
        %6819 = vmatprep.subr.mxu0 0.0
        %6820 = vmatpush1.msra.mxu0 0.0
        %6821 = vmatprep.subr.mxu0 0.0
        %6822 = vmatpush1.msra.mxu0 0.0
        %6823 = vmatprep.subr.mxu0 0.0
        %6824 = vmatpush1.msra.mxu0 0.0
        %6825 = vmatprep.mubr.f32.mxu0 0.0
        %6826 = vmatmul.mubr.f32.gmra.mrb[0].mxu0 %v6759
        %v6827 = vpop.f32.mrb[0].mxu0
        %v6828 = vadd.f32 0.0, %v6827
        %v6829 = vpop.f32.mrb[0].mxu0
        %6830 = vdwg.mxu0
        %v6831 = vadd.f32 %v6581, %v6828
        %6832 = vrot.lane.b32.xlu0 %v5913, 104
        %v6833 = vpop.permute.xlu0 %6832
        %6834 = vrot.lane.b32.xlu0 %v5996, 104
        %v6835 = vpop.permute.xlu0 %6834
        %6836 = vrot.lane.b32.xlu0 %v6001, 104
        %v6837 = vpop.permute.xlu0 %6836
        %v6838 = vsel %vm1514, %v6833, 0
        %v6840 = vsel %vm1514, %v6835, 0
        %v6842 = vsel %vm1514, %v6837, 0
        %6844 = vmatprep.subr.mxu0 0.0
        %6845 = vmatpush1.xpose.msra.mxu0 %v6840
        %6846 = vmatprep.subr.mxu0 0.0
        %6847 = vmatpush1.xpose.msra.mxu0 %v6842
        %6848 = vmatprep.subr.mxu0 0.0
        %6849 = vmatpush1.xpose.msra.mxu0 0.0
        %6850 = vmatprep.subr.mxu0 0.0
        %6851 = vmatpush1.xpose.msra.mxu0 0.0
        %6852 = vmatprep.subr.mxu0 0.0
        %6853 = vmatpush1.xpose.msra.mxu0 0.0
        %6854 = vmatprep.subr.mxu0 0.0
        %6855 = vmatpush1.xpose.msra.mxu0 0.0
        %6856 = vmatprep.subr.mxu0 0.0
        %6857 = vmatpush1.xpose.msra.mxu0 0.0
        %6858 = vmatprep.subr.mxu0 0.0
        %6859 = vmatpush1.xpose.msra.mxu0 0.0
        %6860 = vmatprep.subr.mxu0 0.0
        %6861 = vmatpush1.xpose.msra.mxu0 0.0
        %6862 = vmatprep.subr.mxu0 0.0
        %6863 = vmatpush1.xpose.msra.mxu0 0.0
        %6864 = vmatprep.subr.mxu0 0.0
        %6865 = vmatpush1.xpose.msra.mxu0 0.0
        %6866 = vmatprep.subr.mxu0 0.0
        %6867 = vmatpush1.xpose.msra.mxu0 0.0
        %6868 = vmatprep.subr.mxu0 0.0
        %6869 = vmatpush1.xpose.msra.mxu0 0.0
        %6870 = vmatprep.subr.mxu0 0.0
        %6871 = vmatpush1.xpose.msra.mxu0 0.0
        %6872 = vmatprep.subr.mxu0 0.0
        %6873 = vmatpush1.xpose.msra.mxu0 0.0
        %6874 = vmatprep.subr.mxu0 0.0
        %6875 = vmatpush1.xpose.msra.mxu0 0.0
        %6876 = vmatprep.subr.mxu0 0.0
        %6877 = vmatpush1.xpose.msra.mxu0 0.0
        %6878 = vmatprep.subr.mxu0 0.0
        %6879 = vmatpush1.xpose.msra.mxu0 0.0
        %6880 = vmatprep.subr.mxu0 0.0
        %6881 = vmatpush1.xpose.msra.mxu0 0.0
        %6882 = vmatprep.subr.mxu0 0.0
        %6883 = vmatpush1.xpose.msra.mxu0 0.0
        %6884 = vmatprep.subr.mxu0 0.0
        %6885 = vmatpush1.xpose.msra.mxu0 0.0
        %6886 = vmatprep.subr.mxu0 0.0
        %6887 = vmatpush1.xpose.msra.mxu0 0.0
        %6888 = vmatprep.subr.mxu0 0.0
        %6889 = vmatpush1.xpose.msra.mxu0 0.0
        %6890 = vmatprep.subr.mxu0 0.0
        %6891 = vmatpush1.xpose.msra.mxu0 0.0
        %6892 = vmatprep.subr.mxu0 0.0
        %6893 = vmatpush1.xpose.msra.mxu0 0.0
        %6894 = vmatprep.subr.mxu0 0.0
        %6895 = vmatpush1.xpose.msra.mxu0 0.0
        %6896 = vmatprep.subr.mxu0 0.0
        %6897 = vmatpush1.xpose.msra.mxu0 0.0
        %6898 = vmatprep.subr.mxu0 0.0
        %6899 = vmatpush1.xpose.msra.mxu0 0.0
        %6900 = vmatprep.subr.mxu0 0.0
        %6901 = vmatpush1.xpose.msra.mxu0 0.0
        %6902 = vmatprep.subr.mxu0 0.0
        %6903 = vmatpush1.xpose.msra.mxu0 0.0
        %6904 = vmatprep.subr.mxu0 0.0
        %6905 = vmatpush1.xpose.msra.mxu0 0.0
        %6906 = vmatprep.subr.mxu0 0.0
        %6907 = vmatpush1.xpose.msra.mxu0 0.0
        %6908 = vmatprep.mubr.f32.mxu0 0.0
        %6909 = vmatmul.mubr.f32.gmra.mrb[0].mxu0 %v6838
        %v6910 = vpop.f32.mrb[0].mxu0
        %v6911 = vadd.f32 0.0, %v6910
        %v6912 = vpop.f32.mrb[0].mxu0
        %6913 = vdwg.mxu0
        %v6914 = vmul.f32 %v6911, 0.35355338
        %v6915 = vsel %vm1601, %v6914, -1e+30
        %v6916 = vsel %vm991, %v6915, -inf
        %6917 = vmax.xlane.f32.xlu0 %v6916
        %v6918 = vpop.xlane.xlu0 %6917
        %v6919 = vsub.f32 %v6915, %v6918
        %v6920 = vmul.f32 %v6919, 1.442695
        %v6921 = vpow.pop %v6920
        %v6922 = vsel %vm991, %v6921, 0.0
        %6923 = vadd.xlane.f32.xlu0 %v6922
        %v6924 = vpop.xlane.xlu0 %6923
        %v6925 = vrcp.pop %v6924
        %v6926 = vmul.f32 %v6921, %v6925
        %6927 = vrot.lane.b32.xlu0 %v6084, 104
        %v6928 = vpop.permute.xlu0 %6927
        %6929 = vrot.lane.b32.xlu0 %v6089, 104
        %v6930 = vpop.permute.xlu0 %6929
        %v6934 = vsel %vm991, %v6926, 0
        %6936 = vmatprep.subr.mxu0 0.0
        %6937 = vmatpush1.msra.mxu0 %v6928
        %6938 = vmatprep.subr.mxu0 0.0
        %6939 = vmatpush1.msra.mxu0 %v6930
        %6940 = vmatprep.subr.mxu0 0.0
        %6941 = vmatpush1.msra.mxu0 0.0
        %6942 = vmatprep.subr.mxu0 0.0
        %6943 = vmatpush1.msra.mxu0 0.0
        %6944 = vmatprep.subr.mxu0 0.0
        %6945 = vmatpush1.msra.mxu0 0.0
        %6946 = vmatprep.subr.mxu0 0.0
        %6947 = vmatpush1.msra.mxu0 0.0
        %6948 = vmatprep.subr.mxu0 0.0
        %6949 = vmatpush1.msra.mxu0 0.0
        %6950 = vmatprep.subr.mxu0 0.0
        %6951 = vmatpush1.msra.mxu0 0.0
        %6952 = vmatprep.subr.mxu0 0.0
        %6953 = vmatpush1.msra.mxu0 0.0
        %6954 = vmatprep.subr.mxu0 0.0
        %6955 = vmatpush1.msra.mxu0 0.0
        %6956 = vmatprep.subr.mxu0 0.0
        %6957 = vmatpush1.msra.mxu0 0.0
        %6958 = vmatprep.subr.mxu0 0.0
        %6959 = vmatpush1.msra.mxu0 0.0
        %6960 = vmatprep.subr.mxu0 0.0
        %6961 = vmatpush1.msra.mxu0 0.0
        %6962 = vmatprep.subr.mxu0 0.0
        %6963 = vmatpush1.msra.mxu0 0.0
        %6964 = vmatprep.subr.mxu0 0.0
        %6965 = vmatpush1.msra.mxu0 0.0
        %6966 = vmatprep.subr.mxu0 0.0
        %6967 = vmatpush1.msra.mxu0 0.0
        %6968 = vmatprep.subr.mxu0 0.0
        %6969 = vmatpush1.msra.mxu0 0.0
        %6970 = vmatprep.subr.mxu0 0.0
        %6971 = vmatpush1.msra.mxu0 0.0
        %6972 = vmatprep.subr.mxu0 0.0
        %6973 = vmatpush1.msra.mxu0 0.0
        %6974 = vmatprep.subr.mxu0 0.0
        %6975 = vmatpush1.msra.mxu0 0.0
        %6976 = vmatprep.subr.mxu0 0.0
        %6977 = vmatpush1.msra.mxu0 0.0
        %6978 = vmatprep.subr.mxu0 0.0
        %6979 = vmatpush1.msra.mxu0 0.0
        %6980 = vmatprep.subr.mxu0 0.0
        %6981 = vmatpush1.msra.mxu0 0.0
        %6982 = vmatprep.subr.mxu0 0.0
        %6983 = vmatpush1.msra.mxu0 0.0
        %6984 = vmatprep.subr.mxu0 0.0
        %6985 = vmatpush1.msra.mxu0 0.0
        %6986 = vmatprep.subr.mxu0 0.0
        %6987 = vmatpush1.msra.mxu0 0.0
        %6988 = vmatprep.subr.mxu0 0.0
        %6989 = vmatpush1.msra.mxu0 0.0
        %6990 = vmatprep.subr.mxu0 0.0
        %6991 = vmatpush1.msra.mxu0 0.0
        %6992 = vmatprep.subr.mxu0 0.0
        %6993 = vmatpush1.msra.mxu0 0.0
        %6994 = vmatprep.subr.mxu0 0.0
        %6995 = vmatpush1.msra.mxu0 0.0
        %6996 = vmatprep.subr.mxu0 0.0
        %6997 = vmatpush1.msra.mxu0 0.0
        %6998 = vmatprep.subr.mxu0 0.0
        %6999 = vmatpush1.msra.mxu0 0.0
        %7000 = vmatprep.mubr.f32.mxu0 0.0
        %7001 = vmatmul.mubr.f32.gmra.mrb[0].mxu0 %v6934
        %v7002 = vpop.f32.mrb[0].mxu0
        %v7003 = vadd.f32 0.0, %v7002
        %v7004 = vpop.f32.mrb[0].mxu0
        %7005 = vdwg.mxu0
        %v7007 = vsel %vm1514, %v7003, 0
        %7009 = vmatprep.subr.mxu0 0.0
        %7010 = vmatpush1.msra.mxu0 %v6096
        %7011 = vmatprep.subr.mxu0 0.0
        %7012 = vmatpush1.msra.mxu0 0.0
        %7013 = vmatprep.subr.mxu0 0.0
        %7014 = vmatpush1.msra.mxu0 0.0
        %7015 = vmatprep.subr.mxu0 0.0
        %7016 = vmatpush1.msra.mxu0 0.0
        %7017 = vmatprep.subr.mxu0 0.0
        %7018 = vmatpush1.msra.mxu0 0.0
        %7019 = vmatprep.subr.mxu0 0.0
        %7020 = vmatpush1.msra.mxu0 0.0
        %7021 = vmatprep.subr.mxu0 0.0
        %7022 = vmatpush1.msra.mxu0 0.0
        %7023 = vmatprep.subr.mxu0 0.0
        %7024 = vmatpush1.msra.mxu0 0.0
        %7025 = vmatprep.subr.mxu0 0.0
        %7026 = vmatpush1.msra.mxu0 0.0
        %7027 = vmatprep.subr.mxu0 0.0
        %7028 = vmatpush1.msra.mxu0 0.0
        %7029 = vmatprep.subr.mxu0 0.0
        %7030 = vmatpush1.msra.mxu0 0.0
        %7031 = vmatprep.subr.mxu0 0.0
        %7032 = vmatpush1.msra.mxu0 0.0
        %7033 = vmatprep.subr.mxu0 0.0
        %7034 = vmatpush1.msra.mxu0 0.0
        %7035 = vmatprep.subr.mxu0 0.0
        %7036 = vmatpush1.msra.mxu0 0.0
        %7037 = vmatprep.subr.mxu0 0.0
        %7038 = vmatpush1.msra.mxu0 0.0
        %7039 = vmatprep.subr.mxu0 0.0
        %7040 = vmatpush1.msra.mxu0 0.0
        %7041 = vmatprep.subr.mxu0 0.0
        %7042 = vmatpush1.msra.mxu0 0.0
        %7043 = vmatprep.subr.mxu0 0.0
        %7044 = vmatpush1.msra.mxu0 0.0
        %7045 = vmatprep.subr.mxu0 0.0
        %7046 = vmatpush1.msra.mxu0 0.0
        %7047 = vmatprep.subr.mxu0 0.0
        %7048 = vmatpush1.msra.mxu0 0.0
        %7049 = vmatprep.subr.mxu0 0.0
        %7050 = vmatpush1.msra.mxu0 0.0
        %7051 = vmatprep.subr.mxu0 0.0
        %7052 = vmatpush1.msra.mxu0 0.0
        %7053 = vmatprep.subr.mxu0 0.0
        %7054 = vmatpush1.msra.mxu0 0.0
        %7055 = vmatprep.subr.mxu0 0.0
        %7056 = vmatpush1.msra.mxu0 0.0
        %7057 = vmatprep.subr.mxu0 0.0
        %7058 = vmatpush1.msra.mxu0 0.0
        %7059 = vmatprep.subr.mxu0 0.0
        %7060 = vmatpush1.msra.mxu0 0.0
        %7061 = vmatprep.subr.mxu0 0.0
        %7062 = vmatpush1.msra.mxu0 0.0
        %7063 = vmatprep.subr.mxu0 0.0
        %7064 = vmatpush1.msra.mxu0 0.0
        %7065 = vmatprep.subr.mxu0 0.0
        %7066 = vmatpush1.msra.mxu0 0.0
        %7067 = vmatprep.subr.mxu0 0.0
        %7068 = vmatpush1.msra.mxu0 0.0
        %7069 = vmatprep.subr.mxu0 0.0
        %7070 = vmatpush1.msra.mxu0 0.0
        %7071 = vmatprep.subr.mxu0 0.0
        %7072 = vmatpush1.msra.mxu0 0.0
        %7073 = vmatprep.mubr.f32.mxu0 0.0
        %7074 = vmatmul.mubr.f32.gmra.mrb[0].mxu0 %v7007
        %v7075 = vpop.f32.mrb[0].mxu0
        %v7076 = vadd.f32 0.0, %v7075
        %v7077 = vpop.f32.mrb[0].mxu0
        %7078 = vdwg.mxu0
        %v7079 = vadd.f32 %v6831, %v7076
        %v7080 = vadd.f32 %v5798, %v7079
        %s7081 = scalar_lea.vmem %s37, 3
        %v7082 = vld [vmem:[%s7081] sm:$0x1]
        %v7084 = vlaneseq
        %v7085 = vshrl.u32 %v7084, 7
        %v7086 = vsub.s32 0, %v7085
        %v7087 = vrot.slane %v7082, %v7086
        %v7089 = vadd.f32 %v7080, %v7087
        %s7090 = scalar_lea.vmem %s39, 3
        %v7091 = vld [vmem:[%s7090] sm:$0x1]
        %s7092 = scalar_lea.vmem %s41, 3
        %v7093 = vld [vmem:[%s7092] sm:$0x1]
        %v7094 = vsel %vm1219, %v7089, 0.0
        %7095 = vadd.xlane.f32.xlu0 %v7094
        %v7096 = vpop.xlane.xlu0 %7095
        %v7097 = vmul.f32 %v7096, %v1223
        %v7098 = vsub.f32 %v7089, %v7097
        %v7099 = vmul.f32 %v7098, %v7098
        %v7100 = vsel %vm1219, %v7099, 0.0
        %7101 = vadd.xlane.f32.xlu0 %v7100
        %v7102 = vpop.xlane.xlu0 %7101
        %v7103 = vmul.f32 %v7102, %v1223
        %v7104 = vadd.f32 %v7103, 1e-05
        %v7105 = vrsqrt.pop %v7104
        %v7106 = vmul.f32 %v7098, %v7105
        %v7108 = vlaneseq
        %v7109 = vshrl.u32 %v7108, 7
        %v7110 = vsub.s32 0, %v7109
        %v7111 = vrot.slane %v7091, %v7110
        %v7113 = vmul.f32 %v7106, %v7111
        %v7115 = vlaneseq
        %v7116 = vshrl.u32 %v7115, 7
        %v7117 = vsub.s32 0, %v7116
        %v7118 = vrot.slane %v7093, %v7117
        %v7120 = vadd.f32 %v7113, %v7118
        %s7121 = scalar_lea.vmem %s43, 96
        %v7122 = vld [vmem:[%s7121] sm:$0xff]
        %v7123 = vld [vmem:[%s7121 + $0x8] sm:$0xff]
        %v7124 = vld [vmem:[%s7121 + $0x10] sm:$0xff]
        %v7125 = vld [vmem:[%s7121 + $0x18] sm:$0xff]
        %s7126 = scalar_lea.vmem %s45, 3
        %v7127 = vld [vmem:[%s7126] sm:$0x1]
        %v7129 = vlaneseq
        %v7130 = vshrl.u32 %v7129, 7
        %v7131 = vsub.s32 0, %v7130
        %v7132 = vrot.slane %v7127, %v7131
        %v7135 = vsel %vm1219, %v7120, 0
        %7137 = vmatprep.subr.mxu0 0.0
        %7138 = vmatpush1.msra.mxu0 %v7122
        %7139 = vmatprep.subr.mxu0 0.0
        %7140 = vmatpush1.msra.mxu0 %v7123
        %7141 = vmatprep.subr.mxu0 0.0
        %7142 = vmatpush1.msra.mxu0 %v7124
        %7143 = vmatprep.subr.mxu0 0.0
        %7144 = vmatpush1.msra.mxu0 %v7125
        %7145 = vmatprep.subr.mxu0 0.0
        %7146 = vmatpush1.msra.mxu0 0.0
        %7147 = vmatprep.subr.mxu0 0.0
        %7148 = vmatpush1.msra.mxu0 0.0
        %7149 = vmatprep.subr.mxu0 0.0
        %7150 = vmatpush1.msra.mxu0 0.0
        %7151 = vmatprep.subr.mxu0 0.0
        %7152 = vmatpush1.msra.mxu0 0.0
        %7153 = vmatprep.subr.mxu0 0.0
        %7154 = vmatpush1.msra.mxu0 0.0
        %7155 = vmatprep.subr.mxu0 0.0
        %7156 = vmatpush1.msra.mxu0 0.0
        %7157 = vmatprep.subr.mxu0 0.0
        %7158 = vmatpush1.msra.mxu0 0.0
        %7159 = vmatprep.subr.mxu0 0.0
        %7160 = vmatpush1.msra.mxu0 0.0
        %7161 = vmatprep.subr.mxu0 0.0
        %7162 = vmatpush1.msra.mxu0 0.0
        %7163 = vmatprep.subr.mxu0 0.0
        %7164 = vmatpush1.msra.mxu0 0.0
        %7165 = vmatprep.subr.mxu0 0.0
        %7166 = vmatpush1.msra.mxu0 0.0
        %7167 = vmatprep.subr.mxu0 0.0
        %7168 = vmatpush1.msra.mxu0 0.0
        %7169 = vmatprep.subr.mxu0 0.0
        %7170 = vmatpush1.msra.mxu0 0.0
        %7171 = vmatprep.subr.mxu0 0.0
        %7172 = vmatpush1.msra.mxu0 0.0
        %7173 = vmatprep.subr.mxu0 0.0
        %7174 = vmatpush1.msra.mxu0 0.0
        %7175 = vmatprep.subr.mxu0 0.0
        %7176 = vmatpush1.msra.mxu0 0.0
        %7177 = vmatprep.subr.mxu0 0.0
        %7178 = vmatpush1.msra.mxu0 0.0
        %7179 = vmatprep.subr.mxu0 0.0
        %7180 = vmatpush1.msra.mxu0 0.0
        %7181 = vmatprep.subr.mxu0 0.0
        %7182 = vmatpush1.msra.mxu0 0.0
        %7183 = vmatprep.subr.mxu0 0.0
        %7184 = vmatpush1.msra.mxu0 0.0
        %7185 = vmatprep.subr.mxu0 0.0
        %7186 = vmatpush1.msra.mxu0 0.0
        %7187 = vmatprep.subr.mxu0 0.0
        %7188 = vmatpush1.msra.mxu0 0.0
        %7189 = vmatprep.subr.mxu0 0.0
        %7190 = vmatpush1.msra.mxu0 0.0
        %7191 = vmatprep.subr.mxu0 0.0
        %7192 = vmatpush1.msra.mxu0 0.0
        %7193 = vmatprep.subr.mxu0 0.0
        %7194 = vmatpush1.msra.mxu0 0.0
        %7195 = vmatprep.subr.mxu0 0.0
        %7196 = vmatpush1.msra.mxu0 0.0
        %7197 = vmatprep.subr.mxu0 0.0
        %7198 = vmatpush1.msra.mxu0 0.0
        %7199 = vmatprep.subr.mxu0 0.0
        %7200 = vmatpush1.msra.mxu0 0.0
        %7201 = vmatprep.mubr.f32.mxu0 0.0
        %7202 = vmatmul.mubr.f32.gmra.mrb[0].mxu0 %v7135
        %v7203 = vpop.f32.mrb[0].mxu0
        %v7204 = vadd.f32 %v7132, %v7203
        %v7205 = vpop.f32.mrb[0].mxu0
        %7206 = vdwg.mxu0
        %v7207 = vmul.f32 %v7204, 0.70710677
        %v7208 = vand.u32 2147483647, %v7207
        %v7209 = vmul.f32 %v7208, 0.3275911
        %v7210 = vadd.f32 %v7209, 1.0
        %v7211 = vrcp.pop %v7210
        %v7212 = vmul.f32 1.0, %v7211
        %v7213 = vmul.f32 %v7212, 1.0614054
        %v7214 = vadd.f32 %v7213, -1.4531521
        %v7215 = vmul.f32 %v7214, %v7212
        %v7216 = vadd.f32 %v7215, 1.4214138
        %v7217 = vmul.f32 %v7216, %v7212
        %v7218 = vadd.f32 %v7217, -0.28449672
        %v7219 = vmul.f32 %v7218, %v7212
        %v7220 = vadd.f32 %v7219, 0.2548296
        %v7221 = vmul.f32 %v7220, %v7212
        %v7222 = vsub.f32 0.0, %v7208
        %v7223 = vmul.f32 %v7222, %v7208
        %v7224 = vmul.f32 %v7223, 1.442695
        %v7225 = vpow.pop %v7224
        %v7226 = vmul.f32 %v7221, %v7225
        %v7227 = vsub.f32 1.0, %v7226
        %vm7228 = vcmp.ge.f32.partialorder %v7207, 0.0
        %v7229 = vsub.f32 0.0, %v7227
        %v7230 = vsel %vm7228, %v7227, %v7229
        %v7231 = vmul.f32 %v7204, 0.5
        %v7232 = vadd.f32 %v7230, 1.0
        %v7233 = vmul.f32 %v7231, %v7232
        %s7234 = scalar_lea.vmem %s47, 192
        %v7235 = vld [vmem:[%s7234] sm:$0xff]
        %v7236 = vld [vmem:[%s7234 + $0x8] sm:$0xff]
        %v7237 = vld [vmem:[%s7234 + $0x10] sm:$0xff]
        %v7238 = vld [vmem:[%s7234 + $0x18] sm:$0xff]
        %v7239 = vld [vmem:[%s7234 + $0x20] sm:$0xff]
        %v7240 = vld [vmem:[%s7234 + $0x28] sm:$0xff]
        %v7241 = vld [vmem:[%s7234 + $0x30] sm:$0xff]
        %v7242 = vld [vmem:[%s7234 + $0x38] sm:$0xff]
        %v7244 = vsel %vm2662, %v7233, 0
        %7246 = vmatprep.subr.mxu0 0.0
        %7247 = vmatpush1.msra.mxu0 %v7235
        %7248 = vmatprep.subr.mxu0 0.0
        %7249 = vmatpush1.msra.mxu0 %v7236
        %7250 = vmatprep.subr.mxu0 0.0
        %7251 = vmatpush1.msra.mxu0 %v7237
        %7252 = vmatprep.subr.mxu0 0.0
        %7253 = vmatpush1.msra.mxu0 %v7238
        %7254 = vmatprep.subr.mxu0 0.0
        %7255 = vmatpush1.msra.mxu0 %v7239
        %7256 = vmatprep.subr.mxu0 0.0
        %7257 = vmatpush1.msra.mxu0 %v7240
        %7258 = vmatprep.subr.mxu0 0.0
        %7259 = vmatpush1.msra.mxu0 %v7241
        %7260 = vmatprep.subr.mxu0 0.0
        %7261 = vmatpush1.msra.mxu0 %v7242
        %7262 = vmatprep.subr.mxu0 0.0
        %7263 = vmatpush1.msra.mxu0 0.0
        %7264 = vmatprep.subr.mxu0 0.0
        %7265 = vmatpush1.msra.mxu0 0.0
        %7266 = vmatprep.subr.mxu0 0.0
        %7267 = vmatpush1.msra.mxu0 0.0
        %7268 = vmatprep.subr.mxu0 0.0
        %7269 = vmatpush1.msra.mxu0 0.0
        %7270 = vmatprep.subr.mxu0 0.0
        %7271 = vmatpush1.msra.mxu0 0.0
        %7272 = vmatprep.subr.mxu0 0.0
        %7273 = vmatpush1.msra.mxu0 0.0
        %7274 = vmatprep.subr.mxu0 0.0
        %7275 = vmatpush1.msra.mxu0 0.0
        %7276 = vmatprep.subr.mxu0 0.0
        %7277 = vmatpush1.msra.mxu0 0.0
        %7278 = vmatprep.subr.mxu0 0.0
        %7279 = vmatpush1.msra.mxu0 0.0
        %7280 = vmatprep.subr.mxu0 0.0
        %7281 = vmatpush1.msra.mxu0 0.0
        %7282 = vmatprep.subr.mxu0 0.0
        %7283 = vmatpush1.msra.mxu0 0.0
        %7284 = vmatprep.subr.mxu0 0.0
        %7285 = vmatpush1.msra.mxu0 0.0
        %7286 = vmatprep.subr.mxu0 0.0
        %7287 = vmatpush1.msra.mxu0 0.0
        %7288 = vmatprep.subr.mxu0 0.0
        %7289 = vmatpush1.msra.mxu0 0.0
        %7290 = vmatprep.subr.mxu0 0.0
        %7291 = vmatpush1.msra.mxu0 0.0
        %7292 = vmatprep.subr.mxu0 0.0
        %7293 = vmatpush1.msra.mxu0 0.0
        %7294 = vmatprep.subr.mxu0 0.0
        %7295 = vmatpush1.msra.mxu0 0.0
        %7296 = vmatprep.subr.mxu0 0.0
        %7297 = vmatpush1.msra.mxu0 0.0
        %7298 = vmatprep.subr.mxu0 0.0
        %7299 = vmatpush1.msra.mxu0 0.0
        %7300 = vmatprep.subr.mxu0 0.0
        %7301 = vmatpush1.msra.mxu0 0.0
        %7302 = vmatprep.subr.mxu0 0.0
        %7303 = vmatpush1.msra.mxu0 0.0
        %7304 = vmatprep.subr.mxu0 0.0
        %7305 = vmatpush1.msra.mxu0 0.0
        %7306 = vmatprep.subr.mxu0 0.0
        %7307 = vmatpush1.msra.mxu0 0.0
        %7308 = vmatprep.subr.mxu0 0.0
        %7309 = vmatpush1.msra.mxu0 0.0
        %7310 = vmatprep.mubr.f32.mxu0 0.0
        %7311 = vmatmul.mubr.f32.gmra.mrb[0].mxu0 %v7244
        %v7312 = vpop.f32.mrb[0].mxu0
        %v7313 = vadd.f32 0.0, %v7312
        %v7314 = vpop.f32.mrb[0].mxu0
        %7315 = vdwg.mxu0
        %v7316 = vadd.f32 %v7089, %v7313
        %s7317 = scalar_lea.vmem %s49, 3
        %v7318 = vld [vmem:[%s7317] sm:$0x1]
        %v7320 = vlaneseq
        %v7321 = vshrl.u32 %v7320, 7
        %v7322 = vsub.s32 0, %v7321
        %v7323 = vrot.slane %v7318, %v7322
        %v7325 = vadd.f32 %v7316, %v7323
        %v7326 = vld [vmem:[%s51] sm:$0xff]
        %v7327 = vld [vmem:[%s51 + $0x8] sm:$0xff]
        %v7328 = vld [vmem:[%s51 + $0x10] sm:$0xff]
        %v7329 = vld [vmem:[%s51 + $0x18] sm:$0xff]
        %v7330 = vld [vmem:[%s53] sm:$0x1]
        %v7332 = vlaneseq
        %v7333 = vshrl.u32 %v7332, 7
        %v7334 = vsub.s32 0, %v7333
        %v7335 = vrot.slane %v7330, %v7334
        %v7338 = vsel %vm1219, %v7325, 0
        %7340 = vmatprep.subr.mxu0 0.0
        %7341 = vmatpush1.msra.mxu0 %v7326
        %7342 = vmatprep.subr.mxu0 0.0
        %7343 = vmatpush1.msra.mxu0 %v7327
        %7344 = vmatprep.subr.mxu0 0.0
        %7345 = vmatpush1.msra.mxu0 %v7328
        %7346 = vmatprep.subr.mxu0 0.0
        %7347 = vmatpush1.msra.mxu0 %v7329
        %7348 = vmatprep.subr.mxu0 0.0
        %7349 = vmatpush1.msra.mxu0 0.0
        %7350 = vmatprep.subr.mxu0 0.0
        %7351 = vmatpush1.msra.mxu0 0.0
        %7352 = vmatprep.subr.mxu0 0.0
        %7353 = vmatpush1.msra.mxu0 0.0
        %7354 = vmatprep.subr.mxu0 0.0
        %7355 = vmatpush1.msra.mxu0 0.0
        %7356 = vmatprep.subr.mxu0 0.0
        %7357 = vmatpush1.msra.mxu0 0.0
        %7358 = vmatprep.subr.mxu0 0.0
        %7359 = vmatpush1.msra.mxu0 0.0
        %7360 = vmatprep.subr.mxu0 0.0
        %7361 = vmatpush1.msra.mxu0 0.0
        %7362 = vmatprep.subr.mxu0 0.0
        %7363 = vmatpush1.msra.mxu0 0.0
        %7364 = vmatprep.subr.mxu0 0.0
        %7365 = vmatpush1.msra.mxu0 0.0
        %7366 = vmatprep.subr.mxu0 0.0
        %7367 = vmatpush1.msra.mxu0 0.0
        %7368 = vmatprep.subr.mxu0 0.0
        %7369 = vmatpush1.msra.mxu0 0.0
        %7370 = vmatprep.subr.mxu0 0.0
        %7371 = vmatpush1.msra.mxu0 0.0
        %7372 = vmatprep.subr.mxu0 0.0
        %7373 = vmatpush1.msra.mxu0 0.0
        %7374 = vmatprep.subr.mxu0 0.0
        %7375 = vmatpush1.msra.mxu0 0.0
        %7376 = vmatprep.subr.mxu0 0.0
        %7377 = vmatpush1.msra.mxu0 0.0
        %7378 = vmatprep.subr.mxu0 0.0
        %7379 = vmatpush1.msra.mxu0 0.0
        %7380 = vmatprep.subr.mxu0 0.0
        %7381 = vmatpush1.msra.mxu0 0.0
        %7382 = vmatprep.subr.mxu0 0.0
        %7383 = vmatpush1.msra.mxu0 0.0
        %7384 = vmatprep.subr.mxu0 0.0
        %7385 = vmatpush1.msra.mxu0 0.0
        %7386 = vmatprep.subr.mxu0 0.0
        %7387 = vmatpush1.msra.mxu0 0.0
        %7388 = vmatprep.subr.mxu0 0.0
        %7389 = vmatpush1.msra.mxu0 0.0
        %7390 = vmatprep.subr.mxu0 0.0
        %7391 = vmatpush1.msra.mxu0 0.0
        %7392 = vmatprep.subr.mxu0 0.0
        %7393 = vmatpush1.msra.mxu0 0.0
        %7394 = vmatprep.subr.mxu0 0.0
        %7395 = vmatpush1.msra.mxu0 0.0
        %7396 = vmatprep.subr.mxu0 0.0
        %7397 = vmatpush1.msra.mxu0 0.0
        %7398 = vmatprep.subr.mxu0 0.0
        %7399 = vmatpush1.msra.mxu0 0.0
        %7400 = vmatprep.subr.mxu0 0.0
        %7401 = vmatpush1.msra.mxu0 0.0
        %7402 = vmatprep.subr.mxu0 0.0
        %7403 = vmatpush1.msra.mxu0 0.0
        %7404 = vmatprep.mubr.f32.mxu0 0.0
        %7405 = vmatmul.mubr.f32.gmra.mrb[0].mxu0 %v7338
        %v7406 = vpop.f32.mrb[0].mxu0
        %v7407 = vadd.f32 %v7335, %v7406
        %v7408 = vpop.f32.mrb[0].mxu0
        %7409 = vdwg.mxu0
        %vm7410 = vcmask 48128
        %7411 = vst.msk [vmem:[%s987] sm:$0xff] %vm7410, %v7407
        %v7412 = vld [vmem:[%s55] sm:$0xff]
        %v7413 = vld [vmem:[%s55 + $0x8] sm:$0xff]
        %v7414 = vld [vmem:[%s55 + $0x10] sm:$0xff]
        %v7415 = vld [vmem:[%s55 + $0x18] sm:$0xff]
        %v7416 = vld [vmem:[%s57] sm:$0x1]
        %v7418 = vlaneseq
        %v7419 = vshrl.u32 %v7418, 7
        %v7420 = vsub.s32 0, %v7419
        %v7421 = vrot.slane %v7416, %v7420
        %7423 = vmatprep.subr.mxu0 0.0
        %7424 = vmatpush1.msra.mxu0 %v7412
        %7425 = vmatprep.subr.mxu0 0.0
        %7426 = vmatpush1.msra.mxu0 %v7413
        %7427 = vmatprep.subr.mxu0 0.0
        %7428 = vmatpush1.msra.mxu0 %v7414
        %7429 = vmatprep.subr.mxu0 0.0
        %7430 = vmatpush1.msra.mxu0 %v7415
        %7431 = vmatprep.subr.mxu0 0.0
        %7432 = vmatpush1.msra.mxu0 0.0
        %7433 = vmatprep.subr.mxu0 0.0
        %7434 = vmatpush1.msra.mxu0 0.0
        %7435 = vmatprep.subr.mxu0 0.0
        %7436 = vmatpush1.msra.mxu0 0.0
        %7437 = vmatprep.subr.mxu0 0.0
        %7438 = vmatpush1.msra.mxu0 0.0
        %7439 = vmatprep.subr.mxu0 0.0
        %7440 = vmatpush1.msra.mxu0 0.0
        %7441 = vmatprep.subr.mxu0 0.0
        %7442 = vmatpush1.msra.mxu0 0.0
        %7443 = vmatprep.subr.mxu0 0.0
        %7444 = vmatpush1.msra.mxu0 0.0
        %7445 = vmatprep.subr.mxu0 0.0
        %7446 = vmatpush1.msra.mxu0 0.0
        %7447 = vmatprep.subr.mxu0 0.0
        %7448 = vmatpush1.msra.mxu0 0.0
        %7449 = vmatprep.subr.mxu0 0.0
        %7450 = vmatpush1.msra.mxu0 0.0
        %7451 = vmatprep.subr.mxu0 0.0
        %7452 = vmatpush1.msra.mxu0 0.0
        %7453 = vmatprep.subr.mxu0 0.0
        %7454 = vmatpush1.msra.mxu0 0.0
        %7455 = vmatprep.subr.mxu0 0.0
        %7456 = vmatpush1.msra.mxu0 0.0
        %7457 = vmatprep.subr.mxu0 0.0
        %7458 = vmatpush1.msra.mxu0 0.0
        %7459 = vmatprep.subr.mxu0 0.0
        %7460 = vmatpush1.msra.mxu0 0.0
        %7461 = vmatprep.subr.mxu0 0.0
        %7462 = vmatpush1.msra.mxu0 0.0
        %7463 = vmatprep.subr.mxu0 0.0
        %7464 = vmatpush1.msra.mxu0 0.0
        %7465 = vmatprep.subr.mxu0 0.0
        %7466 = vmatpush1.msra.mxu0 0.0
        %7467 = vmatprep.subr.mxu0 0.0
        %7468 = vmatpush1.msra.mxu0 0.0
        %7469 = vmatprep.subr.mxu0 0.0
        %7470 = vmatpush1.msra.mxu0 0.0
        %7471 = vmatprep.subr.mxu0 0.0
        %7472 = vmatpush1.msra.mxu0 0.0
        %7473 = vmatprep.subr.mxu0 0.0
        %7474 = vmatpush1.msra.mxu0 0.0
        %7475 = vmatprep.subr.mxu0 0.0
        %7476 = vmatpush1.msra.mxu0 0.0
        %7477 = vmatprep.subr.mxu0 0.0
        %7478 = vmatpush1.msra.mxu0 0.0
        %7479 = vmatprep.subr.mxu0 0.0
        %7480 = vmatpush1.msra.mxu0 0.0
        %7481 = vmatprep.subr.mxu0 0.0
        %7482 = vmatpush1.msra.mxu0 0.0
        %7483 = vmatprep.subr.mxu0 0.0
        %7484 = vmatpush1.msra.mxu0 0.0
        %7485 = vmatprep.subr.mxu0 0.0
        %7486 = vmatpush1.msra.mxu0 0.0
        %7487 = vmatprep.mubr.f32.mxu0 0.0
        %7488 = vmatmul.mubr.f32.gmra.mrb[0].mxu0 %v7338
        %v7489 = vpop.f32.mrb[0].mxu0
        %v7490 = vadd.f32 %v7421, %v7489
        %v7491 = vpop.f32.mrb[0].mxu0
        %7492 = vdwg.mxu0
        %v7493 = vmax.f32 %v7490, 0.0
        %s7494 = scalar_lea.vmem %s55, 32
        %v7495 = vld [vmem:[%s7494] sm:$0xff]
        %v7496 = vld [vmem:[%s7494 + $0x8] sm:$0xff]
        %v7497 = vld [vmem:[%s7494 + $0x10] sm:$0xff]
        %v7498 = vld [vmem:[%s7494 + $0x18] sm:$0xff]
        %s7499 = scalar_lea.vmem %s57, 1
        %v7500 = vld [vmem:[%s7499] sm:$0x1]
        %v7502 = vlaneseq
        %v7503 = vshrl.u32 %v7502, 7
        %v7504 = vsub.s32 0, %v7503
        %v7505 = vrot.slane %v7500, %v7504
        %v7508 = vsel %vm1219, %v7493, 0
        %7510 = vmatprep.subr.mxu0 0.0
        %7511 = vmatpush1.msra.mxu0 %v7495
        %7512 = vmatprep.subr.mxu0 0.0
        %7513 = vmatpush1.msra.mxu0 %v7496
        %7514 = vmatprep.subr.mxu0 0.0
        %7515 = vmatpush1.msra.mxu0 %v7497
        %7516 = vmatprep.subr.mxu0 0.0
        %7517 = vmatpush1.msra.mxu0 %v7498
        %7518 = vmatprep.subr.mxu0 0.0
        %7519 = vmatpush1.msra.mxu0 0.0
        %7520 = vmatprep.subr.mxu0 0.0
        %7521 = vmatpush1.msra.mxu0 0.0
        %7522 = vmatprep.subr.mxu0 0.0
        %7523 = vmatpush1.msra.mxu0 0.0
        %7524 = vmatprep.subr.mxu0 0.0
        %7525 = vmatpush1.msra.mxu0 0.0
        %7526 = vmatprep.subr.mxu0 0.0
        %7527 = vmatpush1.msra.mxu0 0.0
        %7528 = vmatprep.subr.mxu0 0.0
        %7529 = vmatpush1.msra.mxu0 0.0
        %7530 = vmatprep.subr.mxu0 0.0
        %7531 = vmatpush1.msra.mxu0 0.0
        %7532 = vmatprep.subr.mxu0 0.0
        %7533 = vmatpush1.msra.mxu0 0.0
        %7534 = vmatprep.subr.mxu0 0.0
        %7535 = vmatpush1.msra.mxu0 0.0
        %7536 = vmatprep.subr.mxu0 0.0
        %7537 = vmatpush1.msra.mxu0 0.0
        %7538 = vmatprep.subr.mxu0 0.0
        %7539 = vmatpush1.msra.mxu0 0.0
        %7540 = vmatprep.subr.mxu0 0.0
        %7541 = vmatpush1.msra.mxu0 0.0
        %7542 = vmatprep.subr.mxu0 0.0
        %7543 = vmatpush1.msra.mxu0 0.0
        %7544 = vmatprep.subr.mxu0 0.0
        %7545 = vmatpush1.msra.mxu0 0.0
        %7546 = vmatprep.subr.mxu0 0.0
        %7547 = vmatpush1.msra.mxu0 0.0
        %7548 = vmatprep.subr.mxu0 0.0
        %7549 = vmatpush1.msra.mxu0 0.0
        %7550 = vmatprep.subr.mxu0 0.0
        %7551 = vmatpush1.msra.mxu0 0.0
        %7552 = vmatprep.subr.mxu0 0.0
        %7553 = vmatpush1.msra.mxu0 0.0
        %7554 = vmatprep.subr.mxu0 0.0
        %7555 = vmatpush1.msra.mxu0 0.0
        %7556 = vmatprep.subr.mxu0 0.0
        %7557 = vmatpush1.msra.mxu0 0.0
        %7558 = vmatprep.subr.mxu0 0.0
        %7559 = vmatpush1.msra.mxu0 0.0
        %7560 = vmatprep.subr.mxu0 0.0
        %7561 = vmatpush1.msra.mxu0 0.0
        %7562 = vmatprep.subr.mxu0 0.0
        %7563 = vmatpush1.msra.mxu0 0.0
        %7564 = vmatprep.subr.mxu0 0.0
        %7565 = vmatpush1.msra.mxu0 0.0
        %7566 = vmatprep.subr.mxu0 0.0
        %7567 = vmatpush1.msra.mxu0 0.0
        %7568 = vmatprep.subr.mxu0 0.0
        %7569 = vmatpush1.msra.mxu0 0.0
        %7570 = vmatprep.subr.mxu0 0.0
        %7571 = vmatpush1.msra.mxu0 0.0
        %7572 = vmatprep.subr.mxu0 0.0
        %7573 = vmatpush1.msra.mxu0 0.0
        %7574 = vmatprep.mubr.f32.mxu0 0.0
        %7575 = vmatmul.mubr.f32.gmra.mrb[0].mxu0 %v7508
        %v7576 = vpop.f32.mrb[0].mxu0
        %v7577 = vadd.f32 %v7505, %v7576
        %v7578 = vpop.f32.mrb[0].mxu0
        %7579 = vdwg.mxu0
        %v7580 = vmax.f32 %v7577, 0.0
        %s7581 = scalar_lea.vmem %s55, 64
        %v7582 = vld [vmem:[%s7581] sm:$0xff]
        %v7583 = vld [vmem:[%s7581 + $0x8] sm:$0xff]
        %v7584 = vld [vmem:[%s7581 + $0x10] sm:$0xff]
        %v7585 = vld [vmem:[%s7581 + $0x18] sm:$0xff]
        %s7586 = scalar_lea.vmem %s57, 2
        %v7587 = vld [vmem:[%s7586] sm:$0x1]
        %v7589 = vlaneseq
        %v7590 = vshrl.u32 %v7589, 7
        %v7591 = vsub.s32 0, %v7590
        %v7592 = vrot.slane %v7587, %v7591
        %v7595 = vsel %vm1219, %v7580, 0
        %7597 = vmatprep.subr.mxu0 0.0
        %7598 = vmatpush1.msra.mxu0 %v7582
        %7599 = vmatprep.subr.mxu0 0.0
        %7600 = vmatpush1.msra.mxu0 %v7583
        %7601 = vmatprep.subr.mxu0 0.0
        %7602 = vmatpush1.msra.mxu0 %v7584
        %7603 = vmatprep.subr.mxu0 0.0
        %7604 = vmatpush1.msra.mxu0 %v7585
        %7605 = vmatprep.subr.mxu0 0.0
        %7606 = vmatpush1.msra.mxu0 0.0
        %7607 = vmatprep.subr.mxu0 0.0
        %7608 = vmatpush1.msra.mxu0 0.0
        %7609 = vmatprep.subr.mxu0 0.0
        %7610 = vmatpush1.msra.mxu0 0.0
        %7611 = vmatprep.subr.mxu0 0.0
        %7612 = vmatpush1.msra.mxu0 0.0
        %7613 = vmatprep.subr.mxu0 0.0
        %7614 = vmatpush1.msra.mxu0 0.0
        %7615 = vmatprep.subr.mxu0 0.0
        %7616 = vmatpush1.msra.mxu0 0.0
        %7617 = vmatprep.subr.mxu0 0.0
        %7618 = vmatpush1.msra.mxu0 0.0
        %7619 = vmatprep.subr.mxu0 0.0
        %7620 = vmatpush1.msra.mxu0 0.0
        %7621 = vmatprep.subr.mxu0 0.0
        %7622 = vmatpush1.msra.mxu0 0.0
        %7623 = vmatprep.subr.mxu0 0.0
        %7624 = vmatpush1.msra.mxu0 0.0
        %7625 = vmatprep.subr.mxu0 0.0
        %7626 = vmatpush1.msra.mxu0 0.0
        %7627 = vmatprep.subr.mxu0 0.0
        %7628 = vmatpush1.msra.mxu0 0.0
        %7629 = vmatprep.subr.mxu0 0.0
        %7630 = vmatpush1.msra.mxu0 0.0
        %7631 = vmatprep.subr.mxu0 0.0
        %7632 = vmatpush1.msra.mxu0 0.0
        %7633 = vmatprep.subr.mxu0 0.0
        %7634 = vmatpush1.msra.mxu0 0.0
        %7635 = vmatprep.subr.mxu0 0.0
        %7636 = vmatpush1.msra.mxu0 0.0
        %7637 = vmatprep.subr.mxu0 0.0
        %7638 = vmatpush1.msra.mxu0 0.0
        %7639 = vmatprep.subr.mxu0 0.0
        %7640 = vmatpush1.msra.mxu0 0.0
        %7641 = vmatprep.subr.mxu0 0.0
        %7642 = vmatpush1.msra.mxu0 0.0
        %7643 = vmatprep.subr.mxu0 0.0
        %7644 = vmatpush1.msra.mxu0 0.0
        %7645 = vmatprep.subr.mxu0 0.0
        %7646 = vmatpush1.msra.mxu0 0.0
        %7647 = vmatprep.subr.mxu0 0.0
        %7648 = vmatpush1.msra.mxu0 0.0
        %7649 = vmatprep.subr.mxu0 0.0
        %7650 = vmatpush1.msra.mxu0 0.0
        %7651 = vmatprep.subr.mxu0 0.0
        %7652 = vmatpush1.msra.mxu0 0.0
        %7653 = vmatprep.subr.mxu0 0.0
        %7654 = vmatpush1.msra.mxu0 0.0
        %7655 = vmatprep.subr.mxu0 0.0
        %7656 = vmatpush1.msra.mxu0 0.0
        %7657 = vmatprep.subr.mxu0 0.0
        %7658 = vmatpush1.msra.mxu0 0.0
        %7659 = vmatprep.subr.mxu0 0.0
        %7660 = vmatpush1.msra.mxu0 0.0
        %7661 = vmatprep.mubr.f32.mxu0 0.0
        %7662 = vmatmul.mubr.f32.gmra.mrb[0].mxu0 %v7595
        %v7663 = vpop.f32.mrb[0].mxu0
        %v7664 = vadd.f32 %v7592, %v7663
        %v7665 = vpop.f32.mrb[0].mxu0
        %7666 = vdwg.mxu0
        %v7667 = vld [vmem:[%s980] sm:$0xff]
        %v7668 = vld [vmem:[%s980 + $0x8] sm:$0xff]
        %v7669 = vld [vmem:[%s980 + $0x10] sm:$0xff]
        %v7670 = vld [vmem:[%s980 + $0x18] sm:$0xff]
        %v7672 = vsel %vm1219, %v7664, 0
        %7674 = vmatprep.subr.mxu0 0.0
        %7675 = vmatpush1.msra.mxu0 %v7667
        %7676 = vmatprep.subr.mxu0 0.0
        %7677 = vmatpush1.msra.mxu0 %v7668
        %7678 = vmatprep.subr.mxu0 0.0
        %7679 = vmatpush1.msra.mxu0 %v7669
        %7680 = vmatprep.subr.mxu0 0.0
        %7681 = vmatpush1.msra.mxu0 %v7670
        %7682 = vmatprep.subr.mxu0 0.0
        %7683 = vmatpush1.msra.mxu0 0.0
        %7684 = vmatprep.subr.mxu0 0.0
        %7685 = vmatpush1.msra.mxu0 0.0
        %7686 = vmatprep.subr.mxu0 0.0
        %7687 = vmatpush1.msra.mxu0 0.0
        %7688 = vmatprep.subr.mxu0 0.0
        %7689 = vmatpush1.msra.mxu0 0.0
        %7690 = vmatprep.subr.mxu0 0.0
        %7691 = vmatpush1.msra.mxu0 0.0
        %7692 = vmatprep.subr.mxu0 0.0
        %7693 = vmatpush1.msra.mxu0 0.0
        %7694 = vmatprep.subr.mxu0 0.0
        %7695 = vmatpush1.msra.mxu0 0.0
        %7696 = vmatprep.subr.mxu0 0.0
        %7697 = vmatpush1.msra.mxu0 0.0
        %7698 = vmatprep.subr.mxu0 0.0
        %7699 = vmatpush1.msra.mxu0 0.0
        %7700 = vmatprep.subr.mxu0 0.0
        %7701 = vmatpush1.msra.mxu0 0.0
        %7702 = vmatprep.subr.mxu0 0.0
        %7703 = vmatpush1.msra.mxu0 0.0
        %7704 = vmatprep.subr.mxu0 0.0
        %7705 = vmatpush1.msra.mxu0 0.0
        %7706 = vmatprep.subr.mxu0 0.0
        %7707 = vmatpush1.msra.mxu0 0.0
        %7708 = vmatprep.subr.mxu0 0.0
        %7709 = vmatpush1.msra.mxu0 0.0
        %7710 = vmatprep.subr.mxu0 0.0
        %7711 = vmatpush1.msra.mxu0 0.0
        %7712 = vmatprep.subr.mxu0 0.0
        %7713 = vmatpush1.msra.mxu0 0.0
        %7714 = vmatprep.subr.mxu0 0.0
        %7715 = vmatpush1.msra.mxu0 0.0
        %7716 = vmatprep.subr.mxu0 0.0
        %7717 = vmatpush1.msra.mxu0 0.0
        %7718 = vmatprep.subr.mxu0 0.0
        %7719 = vmatpush1.msra.mxu0 0.0
        %7720 = vmatprep.subr.mxu0 0.0
        %7721 = vmatpush1.msra.mxu0 0.0
        %7722 = vmatprep.subr.mxu0 0.0
        %7723 = vmatpush1.msra.mxu0 0.0
        %7724 = vmatprep.subr.mxu0 0.0
        %7725 = vmatpush1.msra.mxu0 0.0
        %7726 = vmatprep.subr.mxu0 0.0
        %7727 = vmatpush1.msra.mxu0 0.0
        %7728 = vmatprep.subr.mxu0 0.0
        %7729 = vmatpush1.msra.mxu0 0.0
        %7730 = vmatprep.subr.mxu0 0.0
        %7731 = vmatpush1.msra.mxu0 0.0
        %7732 = vmatprep.subr.mxu0 0.0
        %7733 = vmatpush1.msra.mxu0 0.0
        %7734 = vmatprep.subr.mxu0 0.0
        %7735 = vmatpush1.msra.mxu0 0.0
        %7736 = vmatprep.subr.mxu0 0.0
        %7737 = vmatpush1.msra.mxu0 0.0
        %7738 = vmatprep.mubr.f32.mxu0 0.0
        %7739 = vmatmul.mubr.f32.gmra.mrb[0].mxu0 %v7672
        %v7740 = vpop.f32.mrb[0].mxu0
        %v7741 = vadd.f32 0.0, %v7740
        %v7742 = vpop.f32.mrb[0].mxu0
        %7743 = vdwg.mxu0
        %v7744 = vld [vmem:[%s983] sm:$0x1]
        %vm7745 = vcmp.gt.f32.partialorder %v7744, 0.5
        %v7746 = vsel %vm7745, 1, 0
        %v7747 = vlaneseq
        %v7748 = vshrl.u32 %v7747, 7
        %v7749 = vsub.s32 0, %v7748
        %v7750 = vrot.slane %v7746, %v7749
        %vm7751 = vcmp.eq.s32.totalorder %v7750, 1
        %v7752 = vsel %vm7751, %v7741, -10.0
        %7753 = vst.msk [vmem:[%s967] sm:$0xff] %vm991, %v7752
        %p7754 = scmp.lt.s32.totalorder %s76, 1
        %s7755 = scalar_select %p7754, %s76, 1
        %s7756 = smul.addr %s7755, 8
        %s7757 = scalar_lea.vmem %s59, %s7756
        %s7758 = sand.u32 %s739, 1
        %s7759 = scalar_lea.sflag [#allocation3], %s7758
        %s7760 = sand.u32 %s739, 1
        %s7761 = smul.addr %s7760, 8
        %s7762 = scalar_lea.vmem [#allocation2], %s7761
        // Predicated region
        $region137: #{masked_transformer_predictor.1} parent=135 // pred_check
          %p7763 = pneg %p723
        $region138: #{masked_transformer_predictor.1} parent=135 // pred_check_branch
          %7765 = sbr.rel (%p7763) target = $region140
        $region139: #{masked_transformer_predictor.1} parent=135 // pred_region
          _
        $region140: #{masked_transformer_predictor.1} parent=135 // pred_fallthru
          _
        // Predicated region
        $region141: #{masked_transformer_predictor.1} parent=135 // pred_check
          %p7766 = pneg %p749
        $region142: #{masked_transformer_predictor.1} parent=135 // pred_check_branch
          %7768 = sbr.rel (%p7766) target = $region144
        $region143: #{masked_transformer_predictor.1} parent=135 // pred_region
          %s7770 = ssub.s32 128, 128
          %7771 = vsyncadd %s7759, %s7770
          %s7772 = smul.addr %s76, 128
          %s7773 = scalar_lea.hbm %s61, %s7772
          %s7775 = sshll.u32 %s7762, 4
          %s7776 = int_to_ptr.vmem [resolvable:$true] %s7775
          %7778 = dma.vmem_to_hbm [thread:$0]  %s7776, 128, %s7773, %s7759
        $region144: #{masked_transformer_predictor.1} parent=135 // pred_fallthru
          _
      $region136: #{masked_transformer_predictor.1} parent=5 // pred_fallthru
        _
      %p7779 = scmp.le.s32.totalorder 2, %s71
      // Predicated region
      $region145: #{masked_transformer_predictor.1} parent=5 // pred_check
        %p7780 = pneg %p7779
      $region146: #{masked_transformer_predictor.1} parent=5 // pred_check_branch
        %7782 = sbr.rel (%p7780) target = $region148
      $region147: #{masked_transformer_predictor.1} parent=5 // pred_region
        %s7783 = ssub.s32 %s71, 2
        // Predicated region
        $region149: #{masked_transformer_predictor.1} parent=147 // pred_check
          %p7784 = pneg %p729
        $region150: #{masked_transformer_predictor.1} parent=147 // pred_check_branch
          %7786 = sbr.rel (%p7784) target = $region152
        $region151: #{masked_transformer_predictor.1} parent=147 // pred_region
          %p7787 = scmp.lt.s32.totalorder %s77, 1
          %s7788 = scalar_select %p7787, %s77, 1
          %s7789 = smul.addr %s7788, 8
          %s7790 = scalar_lea.vmem %s59, %s7789
        $region152: #{masked_transformer_predictor.1} parent=147 // pred_fallthru
          _
        // Predicated region
        $region153: #{masked_transformer_predictor.1} parent=147 // pred_check
          %p7791 = pneg %p755
        $region154: #{masked_transformer_predictor.1} parent=147 // pred_check_branch
          %7793 = sbr.rel (%p7791) target = $region156
        $region155: #{masked_transformer_predictor.1} parent=147 // pred_region
          %s7794 = sand.u32 %s740, 1
          %s7795 = scalar_lea.sflag [#allocation3], %s7794
          %s7796 = sand.u32 %s740, 1
          %s7797 = smul.addr %s7796, 8
          %s7798 = scalar_lea.vmem [#allocation2], %s7797
          %7799 = dma.done %s7795, 128
        $region156: #{masked_transformer_predictor.1} parent=147 // pred_fallthru
          _
      $region148: #{masked_transformer_predictor.1} parent=5 // pred_fallthru
        _
    $region6: #{masked_transformer_predictor.1} parent=1 // loop_footer
      %s75 = sadd.s32 1, %s71
    $region7: #{masked_transformer_predictor.1} parent=1 // loop_footer_branch
      %70 = sbr.rel target = $region3
    $region8: #{masked_transformer_predictor.1} parent=1 // loop_exit
      _
    %7800 = vsyncpa [#allocation3], 1
    %s7801 = scalar_lea.sflag [#allocation3], 1
    %7802 = vsyncpa %s7801, 1

</llo_original>
